<compile_context>
chip_gen: v6e
topology: v6e:2x2x1
jax: 0.10.0
libtpu: 0.0.40
codegen_flags: <defaults>
</compile_context>

<pallas_src>
import jax
import jax.numpy as jnp
from jax import lax
from jax.experimental import pallas as pl
from jax.experimental.pallas import tpu as pltpu

_LANE = 128


def _round_up(x, m):
    return (x + m - 1) // m * m


def _selective_decoder_kernel(
    d_ref, txt_ref,
    w1d_ref, b1d_ref, wi2h_ref, bi2h_ref, whf_ref, wscore_ref,
    wig_ref, wihc_ref, blstm_ref, wgen_ref, bgen_ref,
    out_ref,
    dprime_ref, i2h_ref, ohg_ref, hs_ref,
):
    TB, T, H = d_ref.shape
    S = txt_ref.shape[1]                       # num_steps
    Hp = wi2h_ref.shape[0]
    Cp = wihc_ref.shape[0]
    f32 = jnp.float32
    bf16 = jnp.bfloat16

    def dot(a, b):
        return jnp.dot(a.astype(bf16), b.astype(bf16), preferred_element_type=f32)

    # ---- attention_1d + gating:  D' = sigmoid(W1d D + b) * (W1d D + b) ----
    d2 = d_ref[...].reshape(TB * T, H)
    lin = dot(d2, w1d_ref[...]) + b1d_ref[...]               # (TB*T, Hp) f32
    dp2 = jax.nn.sigmoid(lin) * lin
    dprime_ref[...] = dp2.reshape(TB, T, Hp).astype(dprime_ref.dtype)

    # ---- hidden-independent precomputes (hoisted off the serial decode chain) ----
    # i2h(D')
    i2h_ref[...] = (dot(dp2, wi2h_ref[...]) + bi2h_ref[...]
                    ).reshape(TB, T, Hp).astype(i2h_ref.dtype)

    # per-step char-onehot contribution to the LSTM gates (+ fused i/f/g/o bias):
    # onehot built in-kernel from int32 indices (no dense one-hot DMA), one matmul
    # for all steps, so the per-step gates matmul carries only the g_t part (K = Hp).
    cls = lax.broadcasted_iota(jnp.int32, (TB, S, Cp), 2)
    oh = (cls == txt_ref[...][:, :, None]).astype(f32)       # (TB, S, Cp)
    ohg = dot(oh.reshape(TB * S, Cp), wihc_ref[...]) + blstm_ref[...]
    ohg_ref[...] = ohg.reshape(TB, S, 4 * Hp).astype(ohg_ref.dtype)

    wscore_b = wscore_ref[...].reshape(1, 1, Hp)             # hoisted broadcast operand

    h = jnp.zeros((TB, Hp), f32)
    c = jnp.zeros((TB, Hp), f32)

    # Fully-unrolled decode loop: static step index -> static slab loads/stores, and
    # the scheduler can overlap the off-chain work with the attention math.
    # TODO(synk): for very long sequences switch to lax.fori_loop with partial unroll.
    for i in range(S):
        # All h-dependent projections in ONE matmul at the top of the step:
        # columns = [attention h2h (Hp) | LSTM W_hh for gates i,f,g,o (4Hp)].
        hproj = dot(h, whf_ref[...])                         # (TB, 5Hp) f32
        h2h = hproj[:, :Hp]
        h_gates = hproj[:, Hp:]

        # additive attention + stable softmax over the sequence axis
        e = jnp.tanh(i2h_ref[...] + h2h[:, None, :])         # (TB, T, Hp) f32
        e_t = jnp.sum(e * wscore_b, axis=-1, keepdims=True)  # (TB, T, 1)
        m = jnp.max(e_t, axis=1, keepdims=True)
        p = jnp.exp(e_t - m)
        denom = jnp.sum(p, axis=1, keepdims=True)
        a_t = p * pl.reciprocal(denom, approx=True)          # (TB, T, 1)

        # context vector on the VPU/XLU path (keeps the MXU free)
        g_t = jnp.sum(a_t * dprime_ref[...], axis=1)         # (TB, Hp)

        # LSTMCell: only the g_t projection sits on the post-attention chain; the h
        # and onehot gate partials (+ bias) were precomputed above.
        gates = dot(g_t, wig_ref[...]) + h_gates + ohg_ref[:, i, :]
        i_g = jax.nn.sigmoid(gates[:, 0 * Hp:1 * Hp])
        f_g = jax.nn.sigmoid(gates[:, 1 * Hp:2 * Hp])
        g_g = jnp.tanh(gates[:, 2 * Hp:3 * Hp])
        o_g = jax.nn.sigmoid(gates[:, 3 * Hp:4 * Hp])
        c = f_g * c + i_g * g_g
        h = o_g * jnp.tanh(c)
        hs_ref[:, i, :] = h                                  # collect b-major for generator

    # ---- generator: one batched matmul, output directly in torch (B, S, Cp) layout ----
    hs = hs_ref[...].reshape(TB * S, Hp)
    probs = dot(hs, wgen_ref[...]) + bgen_ref[...]           # (TB*S, Cp) lane-dense
    out_ref[...] = probs.reshape(TB, S, Cp)


def make_params(key, input_size, num_classes):
    """Torch-equivalent parameters at true sizes (pre-transposed for x @ W)."""
    H, C = input_size, num_classes
    ks = jax.random.split(key, 8)
    s = 0.2
    rnd = lambda k, shape: jax.random.normal(k, shape, jnp.float32) * s
    return dict(
        # attention_1d
        w1d=rnd(ks[0], (H, H)), b1d=jnp.full((1, H), 0.01, jnp.float32),
        # AttentionCell
        wi2h=rnd(ks[1], (H, H)), bi2h=jnp.full((1, H), 0.01, jnp.float32),
        wh2h=rnd(ks[2], (H, H)),
        wscore=rnd(ks[3], (1, H)),
        # LSTMCell (input split [g_t | onehot]; gate order i,f,g,o along 4H)
        wih_g=rnd(ks[4], (H, 4 * H)), wih_c=rnd(ks[5], (C, 4 * H)),
        bih=jnp.full((1, 4 * H), 0.01, jnp.float32),
        whh=rnd(ks[6], (H, 4 * H)), bhh=jnp.zeros((1, 4 * H), jnp.float32),
        # generator
        wgen=rnd(ks[7], (H, C)), bgen=jnp.zeros((1, C), jnp.float32),
    )


def _prepare_params(p, H, C, Hp, Cp):
    """Lane-pad to 128, fuse/stack the recurrent weights, cast matmul weights to bf16."""
    bf16 = jnp.bfloat16

    def pad2(w, r, c):
        return jnp.pad(w, ((0, r - w.shape[0]), (0, c - w.shape[1])))

    out = {}
    out["w1d"] = pad2(p["w1d"], H, Hp).astype(bf16)          # D input stays unpadded
    out["b1d"] = pad2(p["b1d"], 1, Hp)
    out["wi2h"] = pad2(p["wi2h"], Hp, Hp).astype(bf16)
    out["bi2h"] = pad2(p["bi2h"], 1, Hp)
    out["wscore"] = pad2(p["wscore"], 1, Hp)                 # stays f32 (VPU multiply)

    # Fused h-projection: columns = [attention h2h | W_hh for gates i,f,g,o].
    cols = [pad2(p["wh2h"], Hp, Hp)]
    cols += [pad2(p["whh"][:, k * H:(k + 1) * H], Hp, Hp) for k in range(4)]
    out["whf"] = jnp.concatenate(cols, axis=1).astype(bf16)              # (Hp, 5Hp)

    # g_t -> gates projection (the only matmul on the post-attention critical path).
    out["wig"] = jnp.concatenate(
        [pad2(p["wih_g"][:, k * H:(k + 1) * H], Hp, Hp) for k in range(4)],
        axis=1).astype(bf16)                                             # (Hp, 4Hp)

    # onehot -> gates projection (hoisted out of the loop inside the kernel).
    out["wihc"] = jnp.concatenate(
        [pad2(p["wih_c"][:, k * H:(k + 1) * H], Cp, Hp) for k in range(4)],
        axis=1).astype(bf16)                                             # (Cp, 4Hp)

    out["blstm"] = jnp.concatenate(
        [pad2(p["bih"][:, k * H:(k + 1) * H] + p["bhh"][:, k * H:(k + 1) * H], 1, Hp)
         for k in range(4)], axis=1)                                     # (1, 4Hp)

    out["wgen"] = pad2(p["wgen"], Hp, Cp).astype(bf16)
    out["bgen"] = pad2(p["bgen"], 1, Cp)
    return out


def _chip_info():
    """(per-core VMEM bytes, has >=2 TensorCores, has bf16 VPU) with safe fallbacks."""
    kind = ""
    try:
        kind = (jax.devices()[0].device_kind or "").lower()
    except Exception:
        pass
    vmem_cap = 0
    try:
        vmem_cap = int(pltpu.get_tpu_info().vmem_capacity_bytes)
    except Exception:
        vmem_cap = 0
    if vmem_cap <= 0:
        # v2-v6 have 128 MiB / TensorCore; be conservative (64 MiB, v7x) otherwise.
        vmem_cap = (128 << 20) if any(s in kind for s in ("v2", "v3", "v4", "v5", "v6")) \
            else (64 << 20)
    single_core = any(s in kind for s in ("v5e", "v5 lite", "v6e", "v6 lite"))
    bf16_vpu = any(s in kind for s in ("v6", "v7", "7x"))
    return vmem_cap, (not single_core), bf16_vpu


def _pick_tile(B, est, budget, multi_core):
    """Largest batch tile that fits VMEM; on 2-TC chips prefer a 2-step parallel grid."""
    cands = []
    if multi_core and B >= 16 and B % 2 == 0 and (B // 2) % 8 == 0:
        cands.append(B // 2)          # >= 2 grid steps so both TensorCores get work
    cands.append(B)                   # single grid step (no serial-loop replay)
    cands += [t for t in range(8 * (B // 8), 0, -8) if B % t == 0]
    seen = set()
    for t in cands:
        if t <= 0 or t in seen:
            continue
        seen.add(t)
        if est(t) <= budget:
            return t
    # TODO(synk): pad ragged / oversized batches instead of falling back to TB=B.
    return B


def selective_decoder(D, text, params, *, num_classes, batch_max_length, is_train=True):
    if not is_train:
        # TODO(synk): greedy-decode (is_train=False, argmax feedback) path not implemented.
        raise NotImplementedError("only the teacher-forcing (is_train=True) path is implemented")

    B, T, H = D.shape
    C = num_classes
    S = batch_max_length + 1
    Hp = _round_up(H, _LANE)
    Cp = _round_up(C, _LANE)

    prep = _prepare_params(params, H, C, Hp, Cp)
    txt = text[:, :S].astype(jnp.int32)                       # tiny index input, no one-hot

    vmem_cap, multi_core, bf16_vpu = _chip_info()
    act_dtype = jnp.bfloat16 if bf16_vpu else jnp.float32     # f32 on v5e (no bf16 VPU)
    act_item = 2 if bf16_vpu else 4
    # ~80% of physical per-core VMEM: ~51 MiB on v7x, ~102 MiB on v5e/v6e.
    budget = int(min(vmem_cap * 0.8, 112 << 20))

    weights = (prep["w1d"], prep["b1d"], prep["wi2h"], prep["bi2h"], prep["whf"],
               prep["wscore"], prep["wig"], prep["wihc"], prep["blstm"],
               prep["wgen"], prep["bgen"])
    w_bytes = sum(w.size * w.dtype.itemsize for w in weights)

    def est(tb):
        tiles = 2 * (tb * T * H * 4 + tb * S * 4 + tb * S * Cp * 4)   # double-buffered tiles
        scr = (2 * tb * T * Hp * act_item                             # D', i2h
               + tb * S * 4 * Hp * 2                                  # onehot gate partials
               + tb * S * Hp * 4)                                     # collected hiddens
        tmp = 2 * tb * T * Hp * 4 + tb * S * (4 * Hp * 4 + Cp * 4)    # in-flight values
        return tiles + 2 * w_bytes + scr + tmp + (8 << 20)

    TB = _pick_tile(B, est, budget, multi_core)
    grid = (B // TB,)

    def full_spec(a):
        nd = a.ndim
        return pl.BlockSpec(a.shape, lambda b, _nd=nd: (0,) * _nd)

    in_specs = [
        pl.BlockSpec((TB, T, H), lambda b: (b, 0, 0)),        # D tile
        pl.BlockSpec((TB, S), lambda b: (b, 0)),              # text indices (int32)
    ] + [full_spec(w) for w in weights]
    out_spec = pl.BlockSpec((TB, S, Cp), lambda b: (b, 0, 0))  # torch layout, lane-dense

    out = pl.pallas_call(
        _selective_decoder_kernel,
        out_shape=jax.ShapeDtypeStruct((B, S, Cp), jnp.float32),
        grid_spec=pltpu.PrefetchScalarGridSpec(
            num_scalar_prefetch=0,
            grid=grid,
            in_specs=in_specs,
            out_specs=out_spec,
            scratch_shapes=[
                pltpu.VMEM((TB, T, Hp), act_dtype),           # D'
                pltpu.VMEM((TB, T, Hp), act_dtype),           # i2h(D')
                pltpu.VMEM((TB, S, 4 * Hp), jnp.bfloat16),    # onehot gate partials + bias
                pltpu.VMEM((TB, S, Hp), jnp.float32),         # collected hidden states
            ]),
        compiler_params=pltpu.CompilerParams(
            dimension_semantics=("parallel",),
            vmem_limit_bytes=int(budget)),
    )(D, txt, *weights)

    return out[:, :, :C]                                      # (B, num_steps, C), no transpose


if __name__ == "__main__":
    B, T = 2, 8
    input_size = 32
    num_classes = 16
    batch_max_length = 7                                      # -> num_steps = 8

    key = jax.random.PRNGKey(0)
    k_d, k_t, k_p = jax.random.split(key, 3)
    D = jax.random.normal(k_d, (B, T, input_size), jnp.float32)
    text = jax.random.randint(k_t, (B, batch_max_length + 1), 0, num_classes)
    params = make_params(k_p, input_size, num_classes)

    probs = selective_decoder(D, text, params,
                              num_classes=num_classes,
                              batch_max_length=batch_max_length,
                              is_train=True)
    jax.block_until_ready(probs)
    assert probs.shape == (B, batch_max_length + 1, num_classes)
    assert bool(jnp.all(jnp.isfinite(probs)))
    print("KERNEL_OK")
</pallas_src>

<mosaic_0001>
module attributes {stable_mosaic.version = 11 : i64} {
  func.func @_selective_decoder_kernel(%arg0: i32, %arg1: memref<2x8x32xf32, #tpu.memory_space<vmem>>, %arg2: memref<2x8xi32, #tpu.memory_space<vmem>>, %arg3: memref<32x128xbf16, #tpu.memory_space<vmem>>, %arg4: memref<1x128xf32, #tpu.memory_space<vmem>>, %arg5: memref<128x128xbf16, #tpu.memory_space<vmem>>, %arg6: memref<1x128xf32, #tpu.memory_space<vmem>>, %arg7: memref<128x640xbf16, #tpu.memory_space<vmem>>, %arg8: memref<1x128xf32, #tpu.memory_space<vmem>>, %arg9: memref<128x512xbf16, #tpu.memory_space<vmem>>, %arg10: memref<128x512xbf16, #tpu.memory_space<vmem>>, %arg11: memref<1x512xf32, #tpu.memory_space<vmem>>, %arg12: memref<128x128xbf16, #tpu.memory_space<vmem>>, %arg13: memref<1x128xf32, #tpu.memory_space<vmem>>, %arg14: memref<2x8x128xf32, #tpu.memory_space<vmem>>, %arg15: memref<2x8x128xf32, #tpu.memory_space<vmem>>, %arg16: memref<2x8x128xf32, #tpu.memory_space<vmem>>, %arg17: memref<2x8x512xbf16, #tpu.memory_space<vmem>>, %arg18: memref<2x8x128xf32, #tpu.memory_space<vmem>>) attributes {dimension_semantics = [#tpu.dimension_semantics<parallel>], iteration_bounds = array<i64: 1>, scalar_prefetch = 0 : i64, scratch_operands = 4 : i64, tpu.core_type = #tpu.core_type<tc>, window_params = [{transform_indices = @transform_0, window_bounds = array<i64: 2, 8, 32>}, {transform_indices = @transform_1, window_bounds = array<i64: 2, 8>}, {pipeline_mode = #tpu.pipeline_mode<synchronous>, transform_indices = @transform_2, window_bounds = array<i64: 32, 128>}, {pipeline_mode = #tpu.pipeline_mode<synchronous>, transform_indices = @transform_3, window_bounds = array<i64: 1, 128>}, {pipeline_mode = #tpu.pipeline_mode<synchronous>, transform_indices = @transform_4, window_bounds = array<i64: 128, 128>}, {pipeline_mode = #tpu.pipeline_mode<synchronous>, transform_indices = @transform_5, window_bounds = array<i64: 1, 128>}, {pipeline_mode = #tpu.pipeline_mode<synchronous>, transform_indices = @transform_6, window_bounds = array<i64: 128, 640>}, {pipeline_mode = #tpu.pipeline_mode<synchronous>, transform_indices = @transform_7, window_bounds = array<i64: 1, 128>}, {pipeline_mode = #tpu.pipeline_mode<synchronous>, transform_indices = @transform_8, window_bounds = array<i64: 128, 512>}, {pipeline_mode = #tpu.pipeline_mode<synchronous>, transform_indices = @transform_9, window_bounds = array<i64: 128, 512>}, {pipeline_mode = #tpu.pipeline_mode<synchronous>, transform_indices = @transform_10, window_bounds = array<i64: 1, 512>}, {pipeline_mode = #tpu.pipeline_mode<synchronous>, transform_indices = @transform_11, window_bounds = array<i64: 128, 128>}, {pipeline_mode = #tpu.pipeline_mode<synchronous>, transform_indices = @transform_12, window_bounds = array<i64: 1, 128>}, {transform_indices = @transform_13, window_bounds = array<i64: 2, 8, 128>}]} {
    %c0 = arith.constant 0 : index
    %c0_0 = arith.constant 0 : index
    %c0_1 = arith.constant 0 : index
    %0 = vector.load %arg1[%c0, %c0_0, %c0_1] : memref<2x8x32xf32, #tpu.memory_space<vmem>>, vector<2x8x32xf32>
    %1 = vector.shape_cast %0 : vector<2x8x32xf32> to vector<16x32xf32>
    %c0_2 = arith.constant 0 : index
    %c0_3 = arith.constant 0 : index
    %2 = vector.load %arg3[%c0_2, %c0_3] : memref<32x128xbf16, #tpu.memory_space<vmem>>, vector<32x128xbf16>
    %3 = arith.truncf %1 : vector<16x32xf32> to vector<16x32xbf16>
    %cst = arith.constant dense<0.000000e+00> : vector<16x128xf32>
    %4 = tpu.matmul %3, %2, %cst {dimension_numbers = #tpu.dot_dimension_numbers<[1], [0], [0], [1], [0, 0, 1, 1], [], []>} : vector<16x32xbf16>, vector<32x128xbf16>, vector<16x128xf32> -> vector<16x128xf32>
    %c0_4 = arith.constant 0 : index
    %c0_5 = arith.constant 0 : index
    %5 = vector.load %arg4[%c0_4, %c0_5] : memref<1x128xf32, #tpu.memory_space<vmem>>, vector<1x128xf32>
    %6 = vector.broadcast %5 : vector<1x128xf32> to vector<16x128xf32>
    %7 = arith.addf %4, %6 : vector<16x128xf32>
    %8 = arith.negf %7 : vector<16x128xf32>
    %9 = math.exp %8 : vector<16x128xf32>
    %cst_6 = arith.constant 1.000000e+00 : f32
    %10 = vector.broadcast %cst_6 : f32 to vector<16x128xf32>
    %11 = arith.addf %10, %9 : vector<16x128xf32>
    %12 = arith.divf %10, %11 : vector<16x128xf32>
    %13 = arith.mulf %12, %7 : vector<16x128xf32>
    %14 = vector.shape_cast %13 : vector<16x128xf32> to vector<2x8x128xf32>
    %c0_7 = arith.constant 0 : index
    %c0_8 = arith.constant 0 : index
    %c0_9 = arith.constant 0 : index
    %15 = vector.load %arg15[%c0_7, %c0_8, %c0_9] : memref<2x8x128xf32, #tpu.memory_space<vmem>>, vector<2x8x128xf32>
    tpu.vector_store %arg15[%c0_7, %c0_8, %c0_9], %14 {strides = array<i32>} : memref<2x8x128xf32, #tpu.memory_space<vmem>>, vector<2x8x128xf32>,
    %c0_10 = arith.constant 0 : index
    %c0_11 = arith.constant 0 : index
    %16 = vector.load %arg5[%c0_10, %c0_11] : memref<128x128xbf16, #tpu.memory_space<vmem>>, vector<128x128xbf16>
    %17 = arith.truncf %13 : vector<16x128xf32> to vector<16x128xbf16>
    %cst_12 = arith.constant dense<0.000000e+00> : vector<16x128xf32>
    %18 = tpu.matmul %17, %16, %cst_12 {dimension_numbers = #tpu.dot_dimension_numbers<[1], [0], [0], [1], [0, 0, 1, 1], [], []>} : vector<16x128xbf16>, vector<128x128xbf16>, vector<16x128xf32> -> vector<16x128xf32>
    %c0_13 = arith.constant 0 : index
    %c0_14 = arith.constant 0 : index
    %19 = vector.load %arg6[%c0_13, %c0_14] : memref<1x128xf32, #tpu.memory_space<vmem>>, vector<1x128xf32>
    %20 = vector.broadcast %19 : vector<1x128xf32> to vector<16x128xf32>
    %21 = arith.addf %18, %20 : vector<16x128xf32>
    %22 = vector.shape_cast %21 : vector<16x128xf32> to vector<2x8x128xf32>
    %c0_15 = arith.constant 0 : index
    %c0_16 = arith.constant 0 : index
    %c0_17 = arith.constant 0 : index
    %23 = vector.load %arg16[%c0_15, %c0_16, %c0_17] : memref<2x8x128xf32, #tpu.memory_space<vmem>>, vector<2x8x128xf32>
    tpu.vector_store %arg16[%c0_15, %c0_16, %c0_17], %22 {strides = array<i32>} : memref<2x8x128xf32, #tpu.memory_space<vmem>>, vector<2x8x128xf32>,
    %24 = tpu.iota {dimensions = array<i32: 2>} : vector<2x8x128xi32>
    %c0_18 = arith.constant 0 : index
    %c0_19 = arith.constant 0 : index
    %25 = vector.load %arg2[%c0_18, %c0_19] : memref<2x8xi32, #tpu.memory_space<vmem>>, vector<2x8xi32>
    %26 = vector.shape_cast %25 : vector<2x8xi32> to vector<2x8x1xi32>
    %27 = vector.broadcast %26 : vector<2x8x1xi32> to vector<2x8x128xi32>
    %28 = arith.cmpi eq, %24, %27 : vector<2x8x128xi32>
    %29 = arith.extui %28 : vector<2x8x128xi1> to vector<2x8x128xi32>
    %30 = arith.sitofp %29 : vector<2x8x128xi32> to vector<2x8x128xf32>
    %31 = vector.shape_cast %30 : vector<2x8x128xf32> to vector<16x128xf32>
    %c0_20 = arith.constant 0 : index
    %c0_21 = arith.constant 0 : index
    %32 = vector.load %arg10[%c0_20, %c0_21] : memref<128x512xbf16, #tpu.memory_space<vmem>>, vector<128x512xbf16>
    %33 = arith.truncf %31 : vector<16x128xf32> to vector<16x128xbf16>
    %cst_22 = arith.constant dense<0.000000e+00> : vector<16x512xf32>
    %34 = tpu.matmul %33, %32, %cst_22 {dimension_numbers = #tpu.dot_dimension_numbers<[1], [0], [0], [1], [0, 0, 1, 1], [], []>} : vector<16x128xbf16>, vector<128x512xbf16>, vector<16x512xf32> -> vector<16x512xf32>
    %c0_23 = arith.constant 0 : index
    %c0_24 = arith.constant 0 : index
    %35 = vector.load %arg11[%c0_23, %c0_24] : memref<1x512xf32, #tpu.memory_space<vmem>>, vector<1x512xf32>
    %36 = vector.broadcast %35 : vector<1x512xf32> to vector<16x512xf32>
    %37 = arith.addf %34, %36 : vector<16x512xf32>
    %38 = vector.shape_cast %37 : vector<16x512xf32> to vector<2x8x512xf32>
    %39 = arith.truncf %38 : vector<2x8x512xf32> to vector<2x8x512xbf16>
    %c0_25 = arith.constant 0 : index
    %c0_26 = arith.constant 0 : index
    %c0_27 = arith.constant 0 : index
    %40 = vector.load %arg17[%c0_25, %c0_26, %c0_27] : memref<2x8x512xbf16, #tpu.memory_space<vmem>>, vector<2x8x512xbf16>
    tpu.vector_store %arg17[%c0_25, %c0_26, %c0_27], %39 {strides = array<i32>} : memref<2x8x512xbf16, #tpu.memory_space<vmem>>, vector<2x8x512xbf16>,
    %c0_28 = arith.constant 0 : index
    %c0_29 = arith.constant 0 : index
    %41 = vector.load %arg8[%c0_28, %c0_29] : memref<1x128xf32, #tpu.memory_space<vmem>>, vector<1x128xf32>
    %42 = vector.shape_cast %41 : vector<1x128xf32> to vector<1x1x128xf32>
    %cst_30 = arith.constant 0.000000e+00 : f32
    %43 = vector.broadcast %cst_30 : f32 to vector<2x128xf32>
    %cst_31 = arith.constant 0.000000e+00 : f32
    %44 = vector.broadcast %cst_31 : f32 to vector<2x128xf32>
    %c0_32 = arith.constant 0 : index
    %c0_33 = arith.constant 0 : index
    %45 = vector.load %arg7[%c0_32, %c0_33] : memref<128x640xbf16, #tpu.memory_space<vmem>>, vector<128x640xbf16>
    %46 = arith.truncf %43 : vector<2x128xf32> to vector<2x128xbf16>
    %cst_34 = arith.constant dense<0.000000e+00> : vector<2x640xf32>
    %47 = tpu.matmul %46, %45, %cst_34 {dimension_numbers = #tpu.dot_dimension_numbers<[1], [0], [0], [1], [0, 0, 1, 1], [], []>} : vector<2x128xbf16>, vector<128x640xbf16>, vector<2x640xf32> -> vector<2x640xf32>
    %48 = vector.extract_strided_slice %47 {offsets = [0, 0], sizes = [2, 128], strides = [1, 1]} : vector<2x640xf32> to vector<2x128xf32>
    %49 = vector.extract_strided_slice %47 {offsets = [0, 128], sizes = [2, 512], strides = [1, 1]} : vector<2x640xf32> to vector<2x512xf32>
    %c0_35 = arith.constant 0 : index
    %c0_36 = arith.constant 0 : index
    %c0_37 = arith.constant 0 : index
    %50 = vector.load %arg16[%c0_35, %c0_36, %c0_37] : memref<2x8x128xf32, #tpu.memory_space<vmem>>, vector<2x8x128xf32>
    %51 = vector.shape_cast %48 : vector<2x128xf32> to vector<2x1x128xf32>
    %52 = vector.broadcast %51 : vector<2x1x128xf32> to vector<2x8x128xf32>
    %53 = arith.addf %50, %52 : vector<2x8x128xf32>
    %54 = math.tanh %53 : vector<2x8x128xf32>
    %55 = vector.broadcast %42 : vector<1x1x128xf32> to vector<2x8x128xf32>
    %56 = arith.mulf %54, %55 : vector<2x8x128xf32>
    %cst_38 = arith.constant dense<0.000000e+00> : vector<2x8xf32>
    %57 = vector.multi_reduction <add>, %56, %cst_38 [2] : vector<2x8x128xf32> to vector<2x8xf32>
    %58 = vector.shape_cast %57 : vector<2x8xf32> to vector<2x8x1xf32>
    %cst_39 = arith.constant dense<0xFF800000> : vector<2x1xf32>
    %59 = vector.multi_reduction <maximumf>, %58, %cst_39 [1] : vector<2x8x1xf32> to vector<2x1xf32>
    %60 = vector.shape_cast %59 : vector<2x1xf32> to vector<2x1x1xf32>
    %61 = vector.broadcast %60 : vector<2x1x1xf32> to vector<2x8x1xf32>
    %62 = arith.subf %58, %61 : vector<2x8x1xf32>
    %63 = math.exp %62 : vector<2x8x1xf32>
    %cst_40 = arith.constant dense<0.000000e+00> : vector<2x1xf32>
    %64 = vector.multi_reduction <add>, %63, %cst_40 [1] : vector<2x8x1xf32> to vector<2x1xf32>
    %65 = vector.shape_cast %64 : vector<2x1xf32> to vector<2x1x1xf32>
    %66 = tpu.reciprocal %65 {approx = true} : vector<2x1x1xf32> -> vector<2x1x1xf32>
    %67 = vector.broadcast %66 : vector<2x1x1xf32> to vector<2x8x1xf32>
    %68 = arith.mulf %63, %67 : vector<2x8x1xf32>
    %c0_41 = arith.constant 0 : index
    %c0_42 = arith.constant 0 : index
    %c0_43 = arith.constant 0 : index
    %69 = vector.load %arg15[%c0_41, %c0_42, %c0_43] : memref<2x8x128xf32, #tpu.memory_space<vmem>>, vector<2x8x128xf32>
    %70 = vector.broadcast %68 : vector<2x8x1xf32> to vector<2x8x128xf32>
    %71 = arith.mulf %70, %69 : vector<2x8x128xf32>
    %cst_44 = arith.constant dense<0.000000e+00> : vector<2x128xf32>
    %72 = vector.multi_reduction <add>, %71, %cst_44 [1] : vector<2x8x128xf32> to vector<2x128xf32>
    %c0_45 = arith.constant 0 : index
    %c0_46 = arith.constant 0 : index
    %73 = vector.load %arg9[%c0_45, %c0_46] : memref<128x512xbf16, #tpu.memory_space<vmem>>, vector<128x512xbf16>
    %74 = arith.truncf %72 : vector<2x128xf32> to vector<2x128xbf16>
    %cst_47 = arith.constant dense<0.000000e+00> : vector<2x512xf32>
    %75 = tpu.matmul %74, %73, %cst_47 {dimension_numbers = #tpu.dot_dimension_numbers<[1], [0], [0], [1], [0, 0, 1, 1], [], []>} : vector<2x128xbf16>, vector<128x512xbf16>, vector<2x512xf32> -> vector<2x512xf32>
    %76 = arith.addf %75, %49 : vector<2x512xf32>
    %c0_48 = arith.constant 0 : index
    %c0_49 = arith.constant 0 : index
    %c0_50 = arith.constant 0 : index
    %77 = vector.load %arg17[%c0_48, %c0_49, %c0_50] : memref<2x8x512xbf16, #tpu.memory_space<vmem>>, vector<2x1x512xbf16>
    %78 = vector.shape_cast %77 : vector<2x1x512xbf16> to vector<2x512xbf16>
    %79 = arith.extf %78 : vector<2x512xbf16> to vector<2x512xf32>
    %80 = arith.addf %76, %79 : vector<2x512xf32>
    %81 = vector.extract_strided_slice %80 {offsets = [0, 0], sizes = [2, 128], strides = [1, 1]} : vector<2x512xf32> to vector<2x128xf32>
    %82 = arith.negf %81 : vector<2x128xf32>
    %83 = math.exp %82 : vector<2x128xf32>
    %cst_51 = arith.constant 1.000000e+00 : f32
    %84 = vector.broadcast %cst_51 : f32 to vector<2x128xf32>
    %85 = arith.addf %84, %83 : vector<2x128xf32>
    %86 = arith.divf %84, %85 : vector<2x128xf32>
    %87 = vector.extract_strided_slice %80 {offsets = [0, 128], sizes = [2, 128], strides = [1, 1]} : vector<2x512xf32> to vector<2x128xf32>
    %88 = arith.negf %87 : vector<2x128xf32>
    %89 = math.exp %88 : vector<2x128xf32>
    %cst_52 = arith.constant 1.000000e+00 : f32
    %90 = vector.broadcast %cst_52 : f32 to vector<2x128xf32>
    %91 = arith.addf %90, %89 : vector<2x128xf32>
    %92 = arith.divf %90, %91 : vector<2x128xf32>
    %93 = vector.extract_strided_slice %80 {offsets = [0, 256], sizes = [2, 128], strides = [1, 1]} : vector<2x512xf32> to vector<2x128xf32>
    %94 = math.tanh %93 : vector<2x128xf32>
    %95 = vector.extract_strided_slice %80 {offsets = [0, 384], sizes = [2, 128], strides = [1, 1]} : vector<2x512xf32> to vector<2x128xf32>
    %96 = arith.negf %95 : vector<2x128xf32>
    %97 = math.exp %96 : vector<2x128xf32>
    %cst_53 = arith.constant 1.000000e+00 : f32
    %98 = vector.broadcast %cst_53 : f32 to vector<2x128xf32>
    %99 = arith.addf %98, %97 : vector<2x128xf32>
    %100 = arith.divf %98, %99 : vector<2x128xf32>
    %101 = arith.mulf %92, %44 : vector<2x128xf32>
    %102 = arith.mulf %86, %94 : vector<2x128xf32>
    %103 = arith.addf %101, %102 : vector<2x128xf32>
    %104 = math.tanh %103 : vector<2x128xf32>
    %105 = arith.mulf %100, %104 : vector<2x128xf32>
    %c0_54 = arith.constant 0 : index
    %c0_55 = arith.constant 0 : index
    %c0_56 = arith.constant 0 : index
    %106 = vector.load %arg18[%c0_54, %c0_55, %c0_56] : memref<2x8x128xf32, #tpu.memory_space<vmem>>, vector<2x1x128xf32>
    %107 = vector.shape_cast %106 : vector<2x1x128xf32> to vector<2x128xf32>
    %108 = vector.shape_cast %105 : vector<2x128xf32> to vector<2x1x128xf32>
    tpu.vector_store %arg18[%c0_54, %c0_55, %c0_56], %108 {strides = array<i32>} : memref<2x8x128xf32, #tpu.memory_space<vmem>>, vector<2x1x128xf32>,
    %c0_57 = arith.constant 0 : index
    %c0_58 = arith.constant 0 : index
    %109 = vector.load %arg7[%c0_57, %c0_58] : memref<128x640xbf16, #tpu.memory_space<vmem>>, vector<128x640xbf16>
    %110 = arith.truncf %105 : vector<2x128xf32> to vector<2x128xbf16>
    %cst_59 = arith.constant dense<0.000000e+00> : vector<2x640xf32>
    %111 = tpu.matmul %110, %109, %cst_59 {dimension_numbers = #tpu.dot_dimension_numbers<[1], [0], [0], [1], [0, 0, 1, 1], [], []>} : vector<2x128xbf16>, vector<128x640xbf16>, vector<2x640xf32> -> vector<2x640xf32>
    %112 = vector.extract_strided_slice %111 {offsets = [0, 0], sizes = [2, 128], strides = [1, 1]} : vector<2x640xf32> to vector<2x128xf32>
    %113 = vector.extract_strided_slice %111 {offsets = [0, 128], sizes = [2, 512], strides = [1, 1]} : vector<2x640xf32> to vector<2x512xf32>
    %c0_60 = arith.constant 0 : index
    %c0_61 = arith.constant 0 : index
    %c0_62 = arith.constant 0 : index
    %114 = vector.load %arg16[%c0_60, %c0_61, %c0_62] : memref<2x8x128xf32, #tpu.memory_space<vmem>>, vector<2x8x128xf32>
    %115 = vector.shape_cast %112 : vector<2x128xf32> to vector<2x1x128xf32>
    %116 = vector.broadcast %115 : vector<2x1x128xf32> to vector<2x8x128xf32>
    %117 = arith.addf %114, %116 : vector<2x8x128xf32>
    %118 = math.tanh %117 : vector<2x8x128xf32>
    %119 = vector.broadcast %42 : vector<1x1x128xf32> to vector<2x8x128xf32>
    %120 = arith.mulf %118, %119 : vector<2x8x128xf32>
    %cst_63 = arith.constant dense<0.000000e+00> : vector<2x8xf32>
    %121 = vector.multi_reduction <add>, %120, %cst_63 [2] : vector<2x8x128xf32> to vector<2x8xf32>
    %122 = vector.shape_cast %121 : vector<2x8xf32> to vector<2x8x1xf32>
    %cst_64 = arith.constant dense<0xFF800000> : vector<2x1xf32>
    %123 = vector.multi_reduction <maximumf>, %122, %cst_64 [1] : vector<2x8x1xf32> to vector<2x1xf32>
    %124 = vector.shape_cast %123 : vector<2x1xf32> to vector<2x1x1xf32>
    %125 = vector.broadcast %124 : vector<2x1x1xf32> to vector<2x8x1xf32>
    %126 = arith.subf %122, %125 : vector<2x8x1xf32>
    %127 = math.exp %126 : vector<2x8x1xf32>
    %cst_65 = arith.constant dense<0.000000e+00> : vector<2x1xf32>
    %128 = vector.multi_reduction <add>, %127, %cst_65 [1] : vector<2x8x1xf32> to vector<2x1xf32>
    %129 = vector.shape_cast %128 : vector<2x1xf32> to vector<2x1x1xf32>
    %130 = tpu.reciprocal %129 {approx = true} : vector<2x1x1xf32> -> vector<2x1x1xf32>
    %131 = vector.broadcast %130 : vector<2x1x1xf32> to vector<2x8x1xf32>
    %132 = arith.mulf %127, %131 : vector<2x8x1xf32>
    %c0_66 = arith.constant 0 : index
    %c0_67 = arith.constant 0 : index
    %c0_68 = arith.constant 0 : index
    %133 = vector.load %arg15[%c0_66, %c0_67, %c0_68] : memref<2x8x128xf32, #tpu.memory_space<vmem>>, vector<2x8x128xf32>
    %134 = vector.broadcast %132 : vector<2x8x1xf32> to vector<2x8x128xf32>
    %135 = arith.mulf %134, %133 : vector<2x8x128xf32>
    %cst_69 = arith.constant dense<0.000000e+00> : vector<2x128xf32>
    %136 = vector.multi_reduction <add>, %135, %cst_69 [1] : vector<2x8x128xf32> to vector<2x128xf32>
    %c0_70 = arith.constant 0 : index
    %c0_71 = arith.constant 0 : index
    %137 = vector.load %arg9[%c0_70, %c0_71] : memref<128x512xbf16, #tpu.memory_space<vmem>>, vector<128x512xbf16>
    %138 = arith.truncf %136 : vector<2x128xf32> to vector<2x128xbf16>
    %cst_72 = arith.constant dense<0.000000e+00> : vector<2x512xf32>
    %139 = tpu.matmul %138, %137, %cst_72 {dimension_numbers = #tpu.dot_dimension_numbers<[1], [0], [0], [1], [0, 0, 1, 1], [], []>} : vector<2x128xbf16>, vector<128x512xbf16>, vector<2x512xf32> -> vector<2x512xf32>
    %140 = arith.addf %139, %113 : vector<2x512xf32>
    %c0_73 = arith.constant 0 : index
    %c1 = arith.constant 1 : index
    %c0_74 = arith.constant 0 : index
    %141 = vector.load %arg17[%c0_73, %c1, %c0_74] : memref<2x8x512xbf16, #tpu.memory_space<vmem>>, vector<2x1x512xbf16>
    %142 = vector.shape_cast %141 : vector<2x1x512xbf16> to vector<2x512xbf16>
    %143 = arith.extf %142 : vector<2x512xbf16> to vector<2x512xf32>
    %144 = arith.addf %140, %143 : vector<2x512xf32>
    %145 = vector.extract_strided_slice %144 {offsets = [0, 0], sizes = [2, 128], strides = [1, 1]} : vector<2x512xf32> to vector<2x128xf32>
    %146 = arith.negf %145 : vector<2x128xf32>
    %147 = math.exp %146 : vector<2x128xf32>
    %cst_75 = arith.constant 1.000000e+00 : f32
    %148 = vector.broadcast %cst_75 : f32 to vector<2x128xf32>
    %149 = arith.addf %148, %147 : vector<2x128xf32>
    %150 = arith.divf %148, %149 : vector<2x128xf32>
    %151 = vector.extract_strided_slice %144 {offsets = [0, 128], sizes = [2, 128], strides = [1, 1]} : vector<2x512xf32> to vector<2x128xf32>
    %152 = arith.negf %151 : vector<2x128xf32>
    %153 = math.exp %152 : vector<2x128xf32>
    %cst_76 = arith.constant 1.000000e+00 : f32
    %154 = vector.broadcast %cst_76 : f32 to vector<2x128xf32>
    %155 = arith.addf %154, %153 : vector<2x128xf32>
    %156 = arith.divf %154, %155 : vector<2x128xf32>
    %157 = vector.extract_strided_slice %144 {offsets = [0, 256], sizes = [2, 128], strides = [1, 1]} : vector<2x512xf32> to vector<2x128xf32>
    %158 = math.tanh %157 : vector<2x128xf32>
    %159 = vector.extract_strided_slice %144 {offsets = [0, 384], sizes = [2, 128], strides = [1, 1]} : vector<2x512xf32> to vector<2x128xf32>
    %160 = arith.negf %159 : vector<2x128xf32>
    %161 = math.exp %160 : vector<2x128xf32>
    %cst_77 = arith.constant 1.000000e+00 : f32
    %162 = vector.broadcast %cst_77 : f32 to vector<2x128xf32>
    %163 = arith.addf %162, %161 : vector<2x128xf32>
    %164 = arith.divf %162, %163 : vector<2x128xf32>
    %165 = arith.mulf %156, %103 : vector<2x128xf32>
    %166 = arith.mulf %150, %158 : vector<2x128xf32>
    %167 = arith.addf %165, %166 : vector<2x128xf32>
    %168 = math.tanh %167 : vector<2x128xf32>
    %169 = arith.mulf %164, %168 : vector<2x128xf32>
    %c0_78 = arith.constant 0 : index
    %c1_79 = arith.constant 1 : index
    %c0_80 = arith.constant 0 : index
    %170 = vector.load %arg18[%c0_78, %c1_79, %c0_80] : memref<2x8x128xf32, #tpu.memory_space<vmem>>, vector<2x1x128xf32>
    %171 = vector.shape_cast %170 : vector<2x1x128xf32> to vector<2x128xf32>
    %172 = vector.shape_cast %169 : vector<2x128xf32> to vector<2x1x128xf32>
    tpu.vector_store %arg18[%c0_78, %c1_79, %c0_80], %172 {strides = array<i32>} : memref<2x8x128xf32, #tpu.memory_space<vmem>>, vector<2x1x128xf32>,
    %c0_81 = arith.constant 0 : index
    %c0_82 = arith.constant 0 : index
    %173 = vector.load %arg7[%c0_81, %c0_82] : memref<128x640xbf16, #tpu.memory_space<vmem>>, vector<128x640xbf16>
    %174 = arith.truncf %169 : vector<2x128xf32> to vector<2x128xbf16>
    %cst_83 = arith.constant dense<0.000000e+00> : vector<2x640xf32>
    %175 = tpu.matmul %174, %173, %cst_83 {dimension_numbers = #tpu.dot_dimension_numbers<[1], [0], [0], [1], [0, 0, 1, 1], [], []>} : vector<2x128xbf16>, vector<128x640xbf16>, vector<2x640xf32> -> vector<2x640xf32>
    %176 = vector.extract_strided_slice %175 {offsets = [0, 0], sizes = [2, 128], strides = [1, 1]} : vector<2x640xf32> to vector<2x128xf32>
    %177 = vector.extract_strided_slice %175 {offsets = [0, 128], sizes = [2, 512], strides = [1, 1]} : vector<2x640xf32> to vector<2x512xf32>
    %c0_84 = arith.constant 0 : index
    %c0_85 = arith.constant 0 : index
    %c0_86 = arith.constant 0 : index
    %178 = vector.load %arg16[%c0_84, %c0_85, %c0_86] : memref<2x8x128xf32, #tpu.memory_space<vmem>>, vector<2x8x128xf32>
    %179 = vector.shape_cast %176 : vector<2x128xf32> to vector<2x1x128xf32>
    %180 = vector.broadcast %179 : vector<2x1x128xf32> to vector<2x8x128xf32>
    %181 = arith.addf %178, %180 : vector<2x8x128xf32>
    %182 = math.tanh %181 : vector<2x8x128xf32>
    %183 = vector.broadcast %42 : vector<1x1x128xf32> to vector<2x8x128xf32>
    %184 = arith.mulf %182, %183 : vector<2x8x128xf32>
    %cst_87 = arith.constant dense<0.000000e+00> : vector<2x8xf32>
    %185 = vector.multi_reduction <add>, %184, %cst_87 [2] : vector<2x8x128xf32> to vector<2x8xf32>
    %186 = vector.shape_cast %185 : vector<2x8xf32> to vector<2x8x1xf32>
    %cst_88 = arith.constant dense<0xFF800000> : vector<2x1xf32>
    %187 = vector.multi_reduction <maximumf>, %186, %cst_88 [1] : vector<2x8x1xf32> to vector<2x1xf32>
    %188 = vector.shape_cast %187 : vector<2x1xf32> to vector<2x1x1xf32>
    %189 = vector.broadcast %188 : vector<2x1x1xf32> to vector<2x8x1xf32>
    %190 = arith.subf %186, %189 : vector<2x8x1xf32>
    %191 = math.exp %190 : vector<2x8x1xf32>
    %cst_89 = arith.constant dense<0.000000e+00> : vector<2x1xf32>
    %192 = vector.multi_reduction <add>, %191, %cst_89 [1] : vector<2x8x1xf32> to vector<2x1xf32>
    %193 = vector.shape_cast %192 : vector<2x1xf32> to vector<2x1x1xf32>
    %194 = tpu.reciprocal %193 {approx = true} : vector<2x1x1xf32> -> vector<2x1x1xf32>
    %195 = vector.broadcast %194 : vector<2x1x1xf32> to vector<2x8x1xf32>
    %196 = arith.mulf %191, %195 : vector<2x8x1xf32>
    %c0_90 = arith.constant 0 : index
    %c0_91 = arith.constant 0 : index
    %c0_92 = arith.constant 0 : index
    %197 = vector.load %arg15[%c0_90, %c0_91, %c0_92] : memref<2x8x128xf32, #tpu.memory_space<vmem>>, vector<2x8x128xf32>
    %198 = vector.broadcast %196 : vector<2x8x1xf32> to vector<2x8x128xf32>
    %199 = arith.mulf %198, %197 : vector<2x8x128xf32>
    %cst_93 = arith.constant dense<0.000000e+00> : vector<2x128xf32>
    %200 = vector.multi_reduction <add>, %199, %cst_93 [1] : vector<2x8x128xf32> to vector<2x128xf32>
    %c0_94 = arith.constant 0 : index
    %c0_95 = arith.constant 0 : index
    %201 = vector.load %arg9[%c0_94, %c0_95] : memref<128x512xbf16, #tpu.memory_space<vmem>>, vector<128x512xbf16>
    %202 = arith.truncf %200 : vector<2x128xf32> to vector<2x128xbf16>
    %cst_96 = arith.constant dense<0.000000e+00> : vector<2x512xf32>
    %203 = tpu.matmul %202, %201, %cst_96 {dimension_numbers = #tpu.dot_dimension_numbers<[1], [0], [0], [1], [0, 0, 1, 1], [], []>} : vector<2x128xbf16>, vector<128x512xbf16>, vector<2x512xf32> -> vector<2x512xf32>
    %204 = arith.addf %203, %177 : vector<2x512xf32>
    %c0_97 = arith.constant 0 : index
    %c2 = arith.constant 2 : index
    %c0_98 = arith.constant 0 : index
    %205 = vector.load %arg17[%c0_97, %c2, %c0_98] : memref<2x8x512xbf16, #tpu.memory_space<vmem>>, vector<2x1x512xbf16>
    %206 = vector.shape_cast %205 : vector<2x1x512xbf16> to vector<2x512xbf16>
    %207 = arith.extf %206 : vector<2x512xbf16> to vector<2x512xf32>
    %208 = arith.addf %204, %207 : vector<2x512xf32>
    %209 = vector.extract_strided_slice %208 {offsets = [0, 0], sizes = [2, 128], strides = [1, 1]} : vector<2x512xf32> to vector<2x128xf32>
    %210 = arith.negf %209 : vector<2x128xf32>
    %211 = math.exp %210 : vector<2x128xf32>
    %cst_99 = arith.constant 1.000000e+00 : f32
    %212 = vector.broadcast %cst_99 : f32 to vector<2x128xf32>
    %213 = arith.addf %212, %211 : vector<2x128xf32>
    %214 = arith.divf %212, %213 : vector<2x128xf32>
    %215 = vector.extract_strided_slice %208 {offsets = [0, 128], sizes = [2, 128], strides = [1, 1]} : vector<2x512xf32> to vector<2x128xf32>
    %216 = arith.negf %215 : vector<2x128xf32>
    %217 = math.exp %216 : vector<2x128xf32>
    %cst_100 = arith.constant 1.000000e+00 : f32
    %218 = vector.broadcast %cst_100 : f32 to vector<2x128xf32>
    %219 = arith.addf %218, %217 : vector<2x128xf32>
    %220 = arith.divf %218, %219 : vector<2x128xf32>
    %221 = vector.extract_strided_slice %208 {offsets = [0, 256], sizes = [2, 128], strides = [1, 1]} : vector<2x512xf32> to vector<2x128xf32>
    %222 = math.tanh %221 : vector<2x128xf32>
    %223 = vector.extract_strided_slice %208 {offsets = [0, 384], sizes = [2, 128], strides = [1, 1]} : vector<2x512xf32> to vector<2x128xf32>
    %224 = arith.negf %223 : vector<2x128xf32>
    %225 = math.exp %224 : vector<2x128xf32>
    %cst_101 = arith.constant 1.000000e+00 : f32
    %226 = vector.broadcast %cst_101 : f32 to vector<2x128xf32>
    %227 = arith.addf %226, %225 : vector<2x128xf32>
    %228 = arith.divf %226, %227 : vector<2x128xf32>
    %229 = arith.mulf %220, %167 : vector<2x128xf32>
    %230 = arith.mulf %214, %222 : vector<2x128xf32>
    %231 = arith.addf %229, %230 : vector<2x128xf32>
    %232 = math.tanh %231 : vector<2x128xf32>
    %233 = arith.mulf %228, %232 : vector<2x128xf32>
    %c0_102 = arith.constant 0 : index
    %c2_103 = arith.constant 2 : index
    %c0_104 = arith.constant 0 : index
    %234 = vector.load %arg18[%c0_102, %c2_103, %c0_104] : memref<2x8x128xf32, #tpu.memory_space<vmem>>, vector<2x1x128xf32>
    %235 = vector.shape_cast %234 : vector<2x1x128xf32> to vector<2x128xf32>
    %236 = vector.shape_cast %233 : vector<2x128xf32> to vector<2x1x128xf32>
    tpu.vector_store %arg18[%c0_102, %c2_103, %c0_104], %236 {strides = array<i32>} : memref<2x8x128xf32, #tpu.memory_space<vmem>>, vector<2x1x128xf32>,
    %c0_105 = arith.constant 0 : index
    %c0_106 = arith.constant 0 : index
    %237 = vector.load %arg7[%c0_105, %c0_106] : memref<128x640xbf16, #tpu.memory_space<vmem>>, vector<128x640xbf16>
    %238 = arith.truncf %233 : vector<2x128xf32> to vector<2x128xbf16>
    %cst_107 = arith.constant dense<0.000000e+00> : vector<2x640xf32>
    %239 = tpu.matmul %238, %237, %cst_107 {dimension_numbers = #tpu.dot_dimension_numbers<[1], [0], [0], [1], [0, 0, 1, 1], [], []>} : vector<2x128xbf16>, vector<128x640xbf16>, vector<2x640xf32> -> vector<2x640xf32>
    %240 = vector.extract_strided_slice %239 {offsets = [0, 0], sizes = [2, 128], strides = [1, 1]} : vector<2x640xf32> to vector<2x128xf32>
    %241 = vector.extract_strided_slice %239 {offsets = [0, 128], sizes = [2, 512], strides = [1, 1]} : vector<2x640xf32> to vector<2x512xf32>
    %c0_108 = arith.constant 0 : index
    %c0_109 = arith.constant 0 : index
    %c0_110 = arith.constant 0 : index
    %242 = vector.load %arg16[%c0_108, %c0_109, %c0_110] : memref<2x8x128xf32, #tpu.memory_space<vmem>>, vector<2x8x128xf32>
    %243 = vector.shape_cast %240 : vector<2x128xf32> to vector<2x1x128xf32>
    %244 = vector.broadcast %243 : vector<2x1x128xf32> to vector<2x8x128xf32>
    %245 = arith.addf %242, %244 : vector<2x8x128xf32>
    %246 = math.tanh %245 : vector<2x8x128xf32>
    %247 = vector.broadcast %42 : vector<1x1x128xf32> to vector<2x8x128xf32>
    %248 = arith.mulf %246, %247 : vector<2x8x128xf32>
    %cst_111 = arith.constant dense<0.000000e+00> : vector<2x8xf32>
    %249 = vector.multi_reduction <add>, %248, %cst_111 [2] : vector<2x8x128xf32> to vector<2x8xf32>
    %250 = vector.shape_cast %249 : vector<2x8xf32> to vector<2x8x1xf32>
    %cst_112 = arith.constant dense<0xFF800000> : vector<2x1xf32>
    %251 = vector.multi_reduction <maximumf>, %250, %cst_112 [1] : vector<2x8x1xf32> to vector<2x1xf32>
    %252 = vector.shape_cast %251 : vector<2x1xf32> to vector<2x1x1xf32>
    %253 = vector.broadcast %252 : vector<2x1x1xf32> to vector<2x8x1xf32>
    %254 = arith.subf %250, %253 : vector<2x8x1xf32>
    %255 = math.exp %254 : vector<2x8x1xf32>
    %cst_113 = arith.constant dense<0.000000e+00> : vector<2x1xf32>
    %256 = vector.multi_reduction <add>, %255, %cst_113 [1] : vector<2x8x1xf32> to vector<2x1xf32>
    %257 = vector.shape_cast %256 : vector<2x1xf32> to vector<2x1x1xf32>
    %258 = tpu.reciprocal %257 {approx = true} : vector<2x1x1xf32> -> vector<2x1x1xf32>
    %259 = vector.broadcast %258 : vector<2x1x1xf32> to vector<2x8x1xf32>
    %260 = arith.mulf %255, %259 : vector<2x8x1xf32>
    %c0_114 = arith.constant 0 : index
    %c0_115 = arith.constant 0 : index
    %c0_116 = arith.constant 0 : index
    %261 = vector.load %arg15[%c0_114, %c0_115, %c0_116] : memref<2x8x128xf32, #tpu.memory_space<vmem>>, vector<2x8x128xf32>
    %262 = vector.broadcast %260 : vector<2x8x1xf32> to vector<2x8x128xf32>
    %263 = arith.mulf %262, %261 : vector<2x8x128xf32>
    %cst_117 = arith.constant dense<0.000000e+00> : vector<2x128xf32>
    %264 = vector.multi_reduction <add>, %263, %cst_117 [1] : vector<2x8x128xf32> to vector<2x128xf32>
    %c0_118 = arith.constant 0 : index
    %c0_119 = arith.constant 0 : index
    %265 = vector.load %arg9[%c0_118, %c0_119] : memref<128x512xbf16, #tpu.memory_space<vmem>>, vector<128x512xbf16>
    %266 = arith.truncf %264 : vector<2x128xf32> to vector<2x128xbf16>
    %cst_120 = arith.constant dense<0.000000e+00> : vector<2x512xf32>
    %267 = tpu.matmul %266, %265, %cst_120 {dimension_numbers = #tpu.dot_dimension_numbers<[1], [0], [0], [1], [0, 0, 1, 1], [], []>} : vector<2x128xbf16>, vector<128x512xbf16>, vector<2x512xf32> -> vector<2x512xf32>
    %268 = arith.addf %267, %241 : vector<2x512xf32>
    %c0_121 = arith.constant 0 : index
    %c3 = arith.constant 3 : index
    %c0_122 = arith.constant 0 : index
    %269 = vector.load %arg17[%c0_121, %c3, %c0_122] : memref<2x8x512xbf16, #tpu.memory_space<vmem>>, vector<2x1x512xbf16>
    %270 = vector.shape_cast %269 : vector<2x1x512xbf16> to vector<2x512xbf16>
    %271 = arith.extf %270 : vector<2x512xbf16> to vector<2x512xf32>
    %272 = arith.addf %268, %271 : vector<2x512xf32>
    %273 = vector.extract_strided_slice %272 {offsets = [0, 0], sizes = [2, 128], strides = [1, 1]} : vector<2x512xf32> to vector<2x128xf32>
    %274 = arith.negf %273 : vector<2x128xf32>
    %275 = math.exp %274 : vector<2x128xf32>
    %cst_123 = arith.constant 1.000000e+00 : f32
    %276 = vector.broadcast %cst_123 : f32 to vector<2x128xf32>
    %277 = arith.addf %276, %275 : vector<2x128xf32>
    %278 = arith.divf %276, %277 : vector<2x128xf32>
    %279 = vector.extract_strided_slice %272 {offsets = [0, 128], sizes = [2, 128], strides = [1, 1]} : vector<2x512xf32> to vector<2x128xf32>
    %280 = arith.negf %279 : vector<2x128xf32>
    %281 = math.exp %280 : vector<2x128xf32>
    %cst_124 = arith.constant 1.000000e+00 : f32
    %282 = vector.broadcast %cst_124 : f32 to vector<2x128xf32>
    %283 = arith.addf %282, %281 : vector<2x128xf32>
    %284 = arith.divf %282, %283 : vector<2x128xf32>
    %285 = vector.extract_strided_slice %272 {offsets = [0, 256], sizes = [2, 128], strides = [1, 1]} : vector<2x512xf32> to vector<2x128xf32>
    %286 = math.tanh %285 : vector<2x128xf32>
    %287 = vector.extract_strided_slice %272 {offsets = [0, 384], sizes = [2, 128], strides = [1, 1]} : vector<2x512xf32> to vector<2x128xf32>
    %288 = arith.negf %287 : vector<2x128xf32>
    %289 = math.exp %288 : vector<2x128xf32>
    %cst_125 = arith.constant 1.000000e+00 : f32
    %290 = vector.broadcast %cst_125 : f32 to vector<2x128xf32>
    %291 = arith.addf %290, %289 : vector<2x128xf32>
    %292 = arith.divf %290, %291 : vector<2x128xf32>
    %293 = arith.mulf %284, %231 : vector<2x128xf32>
    %294 = arith.mulf %278, %286 : vector<2x128xf32>
    %295 = arith.addf %293, %294 : vector<2x128xf32>
    %296 = math.tanh %295 : vector<2x128xf32>
    %297 = arith.mulf %292, %296 : vector<2x128xf32>
    %c0_126 = arith.constant 0 : index
    %c3_127 = arith.constant 3 : index
    %c0_128 = arith.constant 0 : index
    %298 = vector.load %arg18[%c0_126, %c3_127, %c0_128] : memref<2x8x128xf32, #tpu.memory_space<vmem>>, vector<2x1x128xf32>
    %299 = vector.shape_cast %298 : vector<2x1x128xf32> to vector<2x128xf32>
    %300 = vector.shape_cast %297 : vector<2x128xf32> to vector<2x1x128xf32>
    tpu.vector_store %arg18[%c0_126, %c3_127, %c0_128], %300 {strides = array<i32>} : memref<2x8x128xf32, #tpu.memory_space<vmem>>, vector<2x1x128xf32>,
    %c0_129 = arith.constant 0 : index
    %c0_130 = arith.constant 0 : index
    %301 = vector.load %arg7[%c0_129, %c0_130] : memref<128x640xbf16, #tpu.memory_space<vmem>>, vector<128x640xbf16>
    %302 = arith.truncf %297 : vector<2x128xf32> to vector<2x128xbf16>
    %cst_131 = arith.constant dense<0.000000e+00> : vector<2x640xf32>
    %303 = tpu.matmul %302, %301, %cst_131 {dimension_numbers = #tpu.dot_dimension_numbers<[1], [0], [0], [1], [0, 0, 1, 1], [], []>} : vector<2x128xbf16>, vector<128x640xbf16>, vector<2x640xf32> -> vector<2x640xf32>
    %304 = vector.extract_strided_slice %303 {offsets = [0, 0], sizes = [2, 128], strides = [1, 1]} : vector<2x640xf32> to vector<2x128xf32>
    %305 = vector.extract_strided_slice %303 {offsets = [0, 128], sizes = [2, 512], strides = [1, 1]} : vector<2x640xf32> to vector<2x512xf32>
    %c0_132 = arith.constant 0 : index
    %c0_133 = arith.constant 0 : index
    %c0_134 = arith.constant 0 : index
    %306 = vector.load %arg16[%c0_132, %c0_133, %c0_134] : memref<2x8x128xf32, #tpu.memory_space<vmem>>, vector<2x8x128xf32>
    %307 = vector.shape_cast %304 : vector<2x128xf32> to vector<2x1x128xf32>
    %308 = vector.broadcast %307 : vector<2x1x128xf32> to vector<2x8x128xf32>
    %309 = arith.addf %306, %308 : vector<2x8x128xf32>
    %310 = math.tanh %309 : vector<2x8x128xf32>
    %311 = vector.broadcast %42 : vector<1x1x128xf32> to vector<2x8x128xf32>
    %312 = arith.mulf %310, %311 : vector<2x8x128xf32>
    %cst_135 = arith.constant dense<0.000000e+00> : vector<2x8xf32>
    %313 = vector.multi_reduction <add>, %312, %cst_135 [2] : vector<2x8x128xf32> to vector<2x8xf32>
    %314 = vector.shape_cast %313 : vector<2x8xf32> to vector<2x8x1xf32>
    %cst_136 = arith.constant dense<0xFF800000> : vector<2x1xf32>
    %315 = vector.multi_reduction <maximumf>, %314, %cst_136 [1] : vector<2x8x1xf32> to vector<2x1xf32>
    %316 = vector.shape_cast %315 : vector<2x1xf32> to vector<2x1x1xf32>
    %317 = vector.broadcast %316 : vector<2x1x1xf32> to vector<2x8x1xf32>
    %318 = arith.subf %314, %317 : vector<2x8x1xf32>
    %319 = math.exp %318 : vector<2x8x1xf32>
    %cst_137 = arith.constant dense<0.000000e+00> : vector<2x1xf32>
    %320 = vector.multi_reduction <add>, %319, %cst_137 [1] : vector<2x8x1xf32> to vector<2x1xf32>
    %321 = vector.shape_cast %320 : vector<2x1xf32> to vector<2x1x1xf32>
    %322 = tpu.reciprocal %321 {approx = true} : vector<2x1x1xf32> -> vector<2x1x1xf32>
    %323 = vector.broadcast %322 : vector<2x1x1xf32> to vector<2x8x1xf32>
    %324 = arith.mulf %319, %323 : vector<2x8x1xf32>
    %c0_138 = arith.constant 0 : index
    %c0_139 = arith.constant 0 : index
    %c0_140 = arith.constant 0 : index
    %325 = vector.load %arg15[%c0_138, %c0_139, %c0_140] : memref<2x8x128xf32, #tpu.memory_space<vmem>>, vector<2x8x128xf32>
    %326 = vector.broadcast %324 : vector<2x8x1xf32> to vector<2x8x128xf32>
    %327 = arith.mulf %326, %325 : vector<2x8x128xf32>
    %cst_141 = arith.constant dense<0.000000e+00> : vector<2x128xf32>
    %328 = vector.multi_reduction <add>, %327, %cst_141 [1] : vector<2x8x128xf32> to vector<2x128xf32>
    %c0_142 = arith.constant 0 : index
    %c0_143 = arith.constant 0 : index
    %329 = vector.load %arg9[%c0_142, %c0_143] : memref<128x512xbf16, #tpu.memory_space<vmem>>, vector<128x512xbf16>
    %330 = arith.truncf %328 : vector<2x128xf32> to vector<2x128xbf16>
    %cst_144 = arith.constant dense<0.000000e+00> : vector<2x512xf32>
    %331 = tpu.matmul %330, %329, %cst_144 {dimension_numbers = #tpu.dot_dimension_numbers<[1], [0], [0], [1], [0, 0, 1, 1], [], []>} : vector<2x128xbf16>, vector<128x512xbf16>, vector<2x512xf32> -> vector<2x512xf32>
    %332 = arith.addf %331, %305 : vector<2x512xf32>
    %c0_145 = arith.constant 0 : index
    %c4 = arith.constant 4 : index
    %c0_146 = arith.constant 0 : index
    %333 = vector.load %arg17[%c0_145, %c4, %c0_146] : memref<2x8x512xbf16, #tpu.memory_space<vmem>>, vector<2x1x512xbf16>
    %334 = vector.shape_cast %333 : vector<2x1x512xbf16> to vector<2x512xbf16>
    %335 = arith.extf %334 : vector<2x512xbf16> to vector<2x512xf32>
    %336 = arith.addf %332, %335 : vector<2x512xf32>
    %337 = vector.extract_strided_slice %336 {offsets = [0, 0], sizes = [2, 128], strides = [1, 1]} : vector<2x512xf32> to vector<2x128xf32>
    %338 = arith.negf %337 : vector<2x128xf32>
    %339 = math.exp %338 : vector<2x128xf32>
    %cst_147 = arith.constant 1.000000e+00 : f32
    %340 = vector.broadcast %cst_147 : f32 to vector<2x128xf32>
    %341 = arith.addf %340, %339 : vector<2x128xf32>
    %342 = arith.divf %340, %341 : vector<2x128xf32>
    %343 = vector.extract_strided_slice %336 {offsets = [0, 128], sizes = [2, 128], strides = [1, 1]} : vector<2x512xf32> to vector<2x128xf32>
    %344 = arith.negf %343 : vector<2x128xf32>
    %345 = math.exp %344 : vector<2x128xf32>
    %cst_148 = arith.constant 1.000000e+00 : f32
    %346 = vector.broadcast %cst_148 : f32 to vector<2x128xf32>
    %347 = arith.addf %346, %345 : vector<2x128xf32>
    %348 = arith.divf %346, %347 : vector<2x128xf32>
    %349 = vector.extract_strided_slice %336 {offsets = [0, 256], sizes = [2, 128], strides = [1, 1]} : vector<2x512xf32> to vector<2x128xf32>
    %350 = math.tanh %349 : vector<2x128xf32>
    %351 = vector.extract_strided_slice %336 {offsets = [0, 384], sizes = [2, 128], strides = [1, 1]} : vector<2x512xf32> to vector<2x128xf32>
    %352 = arith.negf %351 : vector<2x128xf32>
    %353 = math.exp %352 : vector<2x128xf32>
    %cst_149 = arith.constant 1.000000e+00 : f32
    %354 = vector.broadcast %cst_149 : f32 to vector<2x128xf32>
    %355 = arith.addf %354, %353 : vector<2x128xf32>
    %356 = arith.divf %354, %355 : vector<2x128xf32>
    %357 = arith.mulf %348, %295 : vector<2x128xf32>
    %358 = arith.mulf %342, %350 : vector<2x128xf32>
    %359 = arith.addf %357, %358 : vector<2x128xf32>
    %360 = math.tanh %359 : vector<2x128xf32>
    %361 = arith.mulf %356, %360 : vector<2x128xf32>
    %c0_150 = arith.constant 0 : index
    %c4_151 = arith.constant 4 : index
    %c0_152 = arith.constant 0 : index
    %362 = vector.load %arg18[%c0_150, %c4_151, %c0_152] : memref<2x8x128xf32, #tpu.memory_space<vmem>>, vector<2x1x128xf32>
    %363 = vector.shape_cast %362 : vector<2x1x128xf32> to vector<2x128xf32>
    %364 = vector.shape_cast %361 : vector<2x128xf32> to vector<2x1x128xf32>
    tpu.vector_store %arg18[%c0_150, %c4_151, %c0_152], %364 {strides = array<i32>} : memref<2x8x128xf32, #tpu.memory_space<vmem>>, vector<2x1x128xf32>,
    %c0_153 = arith.constant 0 : index
    %c0_154 = arith.constant 0 : index
    %365 = vector.load %arg7[%c0_153, %c0_154] : memref<128x640xbf16, #tpu.memory_space<vmem>>, vector<128x640xbf16>
    %366 = arith.truncf %361 : vector<2x128xf32> to vector<2x128xbf16>
    %cst_155 = arith.constant dense<0.000000e+00> : vector<2x640xf32>
    %367 = tpu.matmul %366, %365, %cst_155 {dimension_numbers = #tpu.dot_dimension_numbers<[1], [0], [0], [1], [0, 0, 1, 1], [], []>} : vector<2x128xbf16>, vector<128x640xbf16>, vector<2x640xf32> -> vector<2x640xf32>
    %368 = vector.extract_strided_slice %367 {offsets = [0, 0], sizes = [2, 128], strides = [1, 1]} : vector<2x640xf32> to vector<2x128xf32>
    %369 = vector.extract_strided_slice %367 {offsets = [0, 128], sizes = [2, 512], strides = [1, 1]} : vector<2x640xf32> to vector<2x512xf32>
    %c0_156 = arith.constant 0 : index
    %c0_157 = arith.constant 0 : index
    %c0_158 = arith.constant 0 : index
    %370 = vector.load %arg16[%c0_156, %c0_157, %c0_158] : memref<2x8x128xf32, #tpu.memory_space<vmem>>, vector<2x8x128xf32>
    %371 = vector.shape_cast %368 : vector<2x128xf32> to vector<2x1x128xf32>
    %372 = vector.broadcast %371 : vector<2x1x128xf32> to vector<2x8x128xf32>
    %373 = arith.addf %370, %372 : vector<2x8x128xf32>
    %374 = math.tanh %373 : vector<2x8x128xf32>
    %375 = vector.broadcast %42 : vector<1x1x128xf32> to vector<2x8x128xf32>
    %376 = arith.mulf %374, %375 : vector<2x8x128xf32>
    %cst_159 = arith.constant dense<0.000000e+00> : vector<2x8xf32>
    %377 = vector.multi_reduction <add>, %376, %cst_159 [2] : vector<2x8x128xf32> to vector<2x8xf32>
    %378 = vector.shape_cast %377 : vector<2x8xf32> to vector<2x8x1xf32>
    %cst_160 = arith.constant dense<0xFF800000> : vector<2x1xf32>
    %379 = vector.multi_reduction <maximumf>, %378, %cst_160 [1] : vector<2x8x1xf32> to vector<2x1xf32>
    %380 = vector.shape_cast %379 : vector<2x1xf32> to vector<2x1x1xf32>
    %381 = vector.broadcast %380 : vector<2x1x1xf32> to vector<2x8x1xf32>
    %382 = arith.subf %378, %381 : vector<2x8x1xf32>
    %383 = math.exp %382 : vector<2x8x1xf32>
    %cst_161 = arith.constant dense<0.000000e+00> : vector<2x1xf32>
    %384 = vector.multi_reduction <add>, %383, %cst_161 [1] : vector<2x8x1xf32> to vector<2x1xf32>
    %385 = vector.shape_cast %384 : vector<2x1xf32> to vector<2x1x1xf32>
    %386 = tpu.reciprocal %385 {approx = true} : vector<2x1x1xf32> -> vector<2x1x1xf32>
    %387 = vector.broadcast %386 : vector<2x1x1xf32> to vector<2x8x1xf32>
    %388 = arith.mulf %383, %387 : vector<2x8x1xf32>
    %c0_162 = arith.constant 0 : index
    %c0_163 = arith.constant 0 : index
    %c0_164 = arith.constant 0 : index
    %389 = vector.load %arg15[%c0_162, %c0_163, %c0_164] : memref<2x8x128xf32, #tpu.memory_space<vmem>>, vector<2x8x128xf32>
    %390 = vector.broadcast %388 : vector<2x8x1xf32> to vector<2x8x128xf32>
    %391 = arith.mulf %390, %389 : vector<2x8x128xf32>
    %cst_165 = arith.constant dense<0.000000e+00> : vector<2x128xf32>
    %392 = vector.multi_reduction <add>, %391, %cst_165 [1] : vector<2x8x128xf32> to vector<2x128xf32>
    %c0_166 = arith.constant 0 : index
    %c0_167 = arith.constant 0 : index
    %393 = vector.load %arg9[%c0_166, %c0_167] : memref<128x512xbf16, #tpu.memory_space<vmem>>, vector<128x512xbf16>
    %394 = arith.truncf %392 : vector<2x128xf32> to vector<2x128xbf16>
    %cst_168 = arith.constant dense<0.000000e+00> : vector<2x512xf32>
    %395 = tpu.matmul %394, %393, %cst_168 {dimension_numbers = #tpu.dot_dimension_numbers<[1], [0], [0], [1], [0, 0, 1, 1], [], []>} : vector<2x128xbf16>, vector<128x512xbf16>, vector<2x512xf32> -> vector<2x512xf32>
    %396 = arith.addf %395, %369 : vector<2x512xf32>
    %c0_169 = arith.constant 0 : index
    %c5 = arith.constant 5 : index
    %c0_170 = arith.constant 0 : index
    %397 = vector.load %arg17[%c0_169, %c5, %c0_170] : memref<2x8x512xbf16, #tpu.memory_space<vmem>>, vector<2x1x512xbf16>
    %398 = vector.shape_cast %397 : vector<2x1x512xbf16> to vector<2x512xbf16>
    %399 = arith.extf %398 : vector<2x512xbf16> to vector<2x512xf32>
    %400 = arith.addf %396, %399 : vector<2x512xf32>
    %401 = vector.extract_strided_slice %400 {offsets = [0, 0], sizes = [2, 128], strides = [1, 1]} : vector<2x512xf32> to vector<2x128xf32>
    %402 = arith.negf %401 : vector<2x128xf32>
    %403 = math.exp %402 : vector<2x128xf32>
    %cst_171 = arith.constant 1.000000e+00 : f32
    %404 = vector.broadcast %cst_171 : f32 to vector<2x128xf32>
    %405 = arith.addf %404, %403 : vector<2x128xf32>
    %406 = arith.divf %404, %405 : vector<2x128xf32>
    %407 = vector.extract_strided_slice %400 {offsets = [0, 128], sizes = [2, 128], strides = [1, 1]} : vector<2x512xf32> to vector<2x128xf32>
    %408 = arith.negf %407 : vector<2x128xf32>
    %409 = math.exp %408 : vector<2x128xf32>
    %cst_172 = arith.constant 1.000000e+00 : f32
    %410 = vector.broadcast %cst_172 : f32 to vector<2x128xf32>
    %411 = arith.addf %410, %409 : vector<2x128xf32>
    %412 = arith.divf %410, %411 : vector<2x128xf32>
    %413 = vector.extract_strided_slice %400 {offsets = [0, 256], sizes = [2, 128], strides = [1, 1]} : vector<2x512xf32> to vector<2x128xf32>
    %414 = math.tanh %413 : vector<2x128xf32>
    %415 = vector.extract_strided_slice %400 {offsets = [0, 384], sizes = [2, 128], strides = [1, 1]} : vector<2x512xf32> to vector<2x128xf32>
    %416 = arith.negf %415 : vector<2x128xf32>
    %417 = math.exp %416 : vector<2x128xf32>
    %cst_173 = arith.constant 1.000000e+00 : f32
    %418 = vector.broadcast %cst_173 : f32 to vector<2x128xf32>
    %419 = arith.addf %418, %417 : vector<2x128xf32>
    %420 = arith.divf %418, %419 : vector<2x128xf32>
    %421 = arith.mulf %412, %359 : vector<2x128xf32>
    %422 = arith.mulf %406, %414 : vector<2x128xf32>
    %423 = arith.addf %421, %422 : vector<2x128xf32>
    %424 = math.tanh %423 : vector<2x128xf32>
    %425 = arith.mulf %420, %424 : vector<2x128xf32>
    %c0_174 = arith.constant 0 : index
    %c5_175 = arith.constant 5 : index
    %c0_176 = arith.constant 0 : index
    %426 = vector.load %arg18[%c0_174, %c5_175, %c0_176] : memref<2x8x128xf32, #tpu.memory_space<vmem>>, vector<2x1x128xf32>
    %427 = vector.shape_cast %426 : vector<2x1x128xf32> to vector<2x128xf32>
    %428 = vector.shape_cast %425 : vector<2x128xf32> to vector<2x1x128xf32>
    tpu.vector_store %arg18[%c0_174, %c5_175, %c0_176], %428 {strides = array<i32>} : memref<2x8x128xf32, #tpu.memory_space<vmem>>, vector<2x1x128xf32>,
    %c0_177 = arith.constant 0 : index
    %c0_178 = arith.constant 0 : index
    %429 = vector.load %arg7[%c0_177, %c0_178] : memref<128x640xbf16, #tpu.memory_space<vmem>>, vector<128x640xbf16>
    %430 = arith.truncf %425 : vector<2x128xf32> to vector<2x128xbf16>
    %cst_179 = arith.constant dense<0.000000e+00> : vector<2x640xf32>
    %431 = tpu.matmul %430, %429, %cst_179 {dimension_numbers = #tpu.dot_dimension_numbers<[1], [0], [0], [1], [0, 0, 1, 1], [], []>} : vector<2x128xbf16>, vector<128x640xbf16>, vector<2x640xf32> -> vector<2x640xf32>
    %432 = vector.extract_strided_slice %431 {offsets = [0, 0], sizes = [2, 128], strides = [1, 1]} : vector<2x640xf32> to vector<2x128xf32>
    %433 = vector.extract_strided_slice %431 {offsets = [0, 128], sizes = [2, 512], strides = [1, 1]} : vector<2x640xf32> to vector<2x512xf32>
    %c0_180 = arith.constant 0 : index
    %c0_181 = arith.constant 0 : index
    %c0_182 = arith.constant 0 : index
    %434 = vector.load %arg16[%c0_180, %c0_181, %c0_182] : memref<2x8x128xf32, #tpu.memory_space<vmem>>, vector<2x8x128xf32>
    %435 = vector.shape_cast %432 : vector<2x128xf32> to vector<2x1x128xf32>
    %436 = vector.broadcast %435 : vector<2x1x128xf32> to vector<2x8x128xf32>
    %437 = arith.addf %434, %436 : vector<2x8x128xf32>
    %438 = math.tanh %437 : vector<2x8x128xf32>
    %439 = vector.broadcast %42 : vector<1x1x128xf32> to vector<2x8x128xf32>
    %440 = arith.mulf %438, %439 : vector<2x8x128xf32>
    %cst_183 = arith.constant dense<0.000000e+00> : vector<2x8xf32>
    %441 = vector.multi_reduction <add>, %440, %cst_183 [2] : vector<2x8x128xf32> to vector<2x8xf32>
    %442 = vector.shape_cast %441 : vector<2x8xf32> to vector<2x8x1xf32>
    %cst_184 = arith.constant dense<0xFF800000> : vector<2x1xf32>
    %443 = vector.multi_reduction <maximumf>, %442, %cst_184 [1] : vector<2x8x1xf32> to vector<2x1xf32>
    %444 = vector.shape_cast %443 : vector<2x1xf32> to vector<2x1x1xf32>
    %445 = vector.broadcast %444 : vector<2x1x1xf32> to vector<2x8x1xf32>
    %446 = arith.subf %442, %445 : vector<2x8x1xf32>
    %447 = math.exp %446 : vector<2x8x1xf32>
    %cst_185 = arith.constant dense<0.000000e+00> : vector<2x1xf32>
    %448 = vector.multi_reduction <add>, %447, %cst_185 [1] : vector<2x8x1xf32> to vector<2x1xf32>
    %449 = vector.shape_cast %448 : vector<2x1xf32> to vector<2x1x1xf32>
    %450 = tpu.reciprocal %449 {approx = true} : vector<2x1x1xf32> -> vector<2x1x1xf32>
    %451 = vector.broadcast %450 : vector<2x1x1xf32> to vector<2x8x1xf32>
    %452 = arith.mulf %447, %451 : vector<2x8x1xf32>
    %c0_186 = arith.constant 0 : index
    %c0_187 = arith.constant 0 : index
    %c0_188 = arith.constant 0 : index
    %453 = vector.load %arg15[%c0_186, %c0_187, %c0_188] : memref<2x8x128xf32, #tpu.memory_space<vmem>>, vector<2x8x128xf32>
    %454 = vector.broadcast %452 : vector<2x8x1xf32> to vector<2x8x128xf32>
    %455 = arith.mulf %454, %453 : vector<2x8x128xf32>
    %cst_189 = arith.constant dense<0.000000e+00> : vector<2x128xf32>
    %456 = vector.multi_reduction <add>, %455, %cst_189 [1] : vector<2x8x128xf32> to vector<2x128xf32>
    %c0_190 = arith.constant 0 : index
    %c0_191 = arith.constant 0 : index
    %457 = vector.load %arg9[%c0_190, %c0_191] : memref<128x512xbf16, #tpu.memory_space<vmem>>, vector<128x512xbf16>
    %458 = arith.truncf %456 : vector<2x128xf32> to vector<2x128xbf16>
    %cst_192 = arith.constant dense<0.000000e+00> : vector<2x512xf32>
    %459 = tpu.matmul %458, %457, %cst_192 {dimension_numbers = #tpu.dot_dimension_numbers<[1], [0], [0], [1], [0, 0, 1, 1], [], []>} : vector<2x128xbf16>, vector<128x512xbf16>, vector<2x512xf32> -> vector<2x512xf32>
    %460 = arith.addf %459, %433 : vector<2x512xf32>
    %c0_193 = arith.constant 0 : index
    %c6 = arith.constant 6 : index
    %c0_194 = arith.constant 0 : index
    %461 = vector.load %arg17[%c0_193, %c6, %c0_194] : memref<2x8x512xbf16, #tpu.memory_space<vmem>>, vector<2x1x512xbf16>
    %462 = vector.shape_cast %461 : vector<2x1x512xbf16> to vector<2x512xbf16>
    %463 = arith.extf %462 : vector<2x512xbf16> to vector<2x512xf32>
    %464 = arith.addf %460, %463 : vector<2x512xf32>
    %465 = vector.extract_strided_slice %464 {offsets = [0, 0], sizes = [2, 128], strides = [1, 1]} : vector<2x512xf32> to vector<2x128xf32>
    %466 = arith.negf %465 : vector<2x128xf32>
    %467 = math.exp %466 : vector<2x128xf32>
    %cst_195 = arith.constant 1.000000e+00 : f32
    %468 = vector.broadcast %cst_195 : f32 to vector<2x128xf32>
    %469 = arith.addf %468, %467 : vector<2x128xf32>
    %470 = arith.divf %468, %469 : vector<2x128xf32>
    %471 = vector.extract_strided_slice %464 {offsets = [0, 128], sizes = [2, 128], strides = [1, 1]} : vector<2x512xf32> to vector<2x128xf32>
    %472 = arith.negf %471 : vector<2x128xf32>
    %473 = math.exp %472 : vector<2x128xf32>
    %cst_196 = arith.constant 1.000000e+00 : f32
    %474 = vector.broadcast %cst_196 : f32 to vector<2x128xf32>
    %475 = arith.addf %474, %473 : vector<2x128xf32>
    %476 = arith.divf %474, %475 : vector<2x128xf32>
    %477 = vector.extract_strided_slice %464 {offsets = [0, 256], sizes = [2, 128], strides = [1, 1]} : vector<2x512xf32> to vector<2x128xf32>
    %478 = math.tanh %477 : vector<2x128xf32>
    %479 = vector.extract_strided_slice %464 {offsets = [0, 384], sizes = [2, 128], strides = [1, 1]} : vector<2x512xf32> to vector<2x128xf32>
    %480 = arith.negf %479 : vector<2x128xf32>
    %481 = math.exp %480 : vector<2x128xf32>
    %cst_197 = arith.constant 1.000000e+00 : f32
    %482 = vector.broadcast %cst_197 : f32 to vector<2x128xf32>
    %483 = arith.addf %482, %481 : vector<2x128xf32>
    %484 = arith.divf %482, %483 : vector<2x128xf32>
    %485 = arith.mulf %476, %423 : vector<2x128xf32>
    %486 = arith.mulf %470, %478 : vector<2x128xf32>
    %487 = arith.addf %485, %486 : vector<2x128xf32>
    %488 = math.tanh %487 : vector<2x128xf32>
    %489 = arith.mulf %484, %488 : vector<2x128xf32>
    %c0_198 = arith.constant 0 : index
    %c6_199 = arith.constant 6 : index
    %c0_200 = arith.constant 0 : index
    %490 = vector.load %arg18[%c0_198, %c6_199, %c0_200] : memref<2x8x128xf32, #tpu.memory_space<vmem>>, vector<2x1x128xf32>
    %491 = vector.shape_cast %490 : vector<2x1x128xf32> to vector<2x128xf32>
    %492 = vector.shape_cast %489 : vector<2x128xf32> to vector<2x1x128xf32>
    tpu.vector_store %arg18[%c0_198, %c6_199, %c0_200], %492 {strides = array<i32>} : memref<2x8x128xf32, #tpu.memory_space<vmem>>, vector<2x1x128xf32>,
    %c0_201 = arith.constant 0 : index
    %c0_202 = arith.constant 0 : index
    %493 = vector.load %arg7[%c0_201, %c0_202] : memref<128x640xbf16, #tpu.memory_space<vmem>>, vector<128x640xbf16>
    %494 = arith.truncf %489 : vector<2x128xf32> to vector<2x128xbf16>
    %cst_203 = arith.constant dense<0.000000e+00> : vector<2x640xf32>
    %495 = tpu.matmul %494, %493, %cst_203 {dimension_numbers = #tpu.dot_dimension_numbers<[1], [0], [0], [1], [0, 0, 1, 1], [], []>} : vector<2x128xbf16>, vector<128x640xbf16>, vector<2x640xf32> -> vector<2x640xf32>
    %496 = vector.extract_strided_slice %495 {offsets = [0, 0], sizes = [2, 128], strides = [1, 1]} : vector<2x640xf32> to vector<2x128xf32>
    %497 = vector.extract_strided_slice %495 {offsets = [0, 128], sizes = [2, 512], strides = [1, 1]} : vector<2x640xf32> to vector<2x512xf32>
    %c0_204 = arith.constant 0 : index
    %c0_205 = arith.constant 0 : index
    %c0_206 = arith.constant 0 : index
    %498 = vector.load %arg16[%c0_204, %c0_205, %c0_206] : memref<2x8x128xf32, #tpu.memory_space<vmem>>, vector<2x8x128xf32>
    %499 = vector.shape_cast %496 : vector<2x128xf32> to vector<2x1x128xf32>
    %500 = vector.broadcast %499 : vector<2x1x128xf32> to vector<2x8x128xf32>
    %501 = arith.addf %498, %500 : vector<2x8x128xf32>
    %502 = math.tanh %501 : vector<2x8x128xf32>
    %503 = vector.broadcast %42 : vector<1x1x128xf32> to vector<2x8x128xf32>
    %504 = arith.mulf %502, %503 : vector<2x8x128xf32>
    %cst_207 = arith.constant dense<0.000000e+00> : vector<2x8xf32>
    %505 = vector.multi_reduction <add>, %504, %cst_207 [2] : vector<2x8x128xf32> to vector<2x8xf32>
    %506 = vector.shape_cast %505 : vector<2x8xf32> to vector<2x8x1xf32>
    %cst_208 = arith.constant dense<0xFF800000> : vector<2x1xf32>
    %507 = vector.multi_reduction <maximumf>, %506, %cst_208 [1] : vector<2x8x1xf32> to vector<2x1xf32>
    %508 = vector.shape_cast %507 : vector<2x1xf32> to vector<2x1x1xf32>
    %509 = vector.broadcast %508 : vector<2x1x1xf32> to vector<2x8x1xf32>
    %510 = arith.subf %506, %509 : vector<2x8x1xf32>
    %511 = math.exp %510 : vector<2x8x1xf32>
    %cst_209 = arith.constant dense<0.000000e+00> : vector<2x1xf32>
    %512 = vector.multi_reduction <add>, %511, %cst_209 [1] : vector<2x8x1xf32> to vector<2x1xf32>
    %513 = vector.shape_cast %512 : vector<2x1xf32> to vector<2x1x1xf32>
    %514 = tpu.reciprocal %513 {approx = true} : vector<2x1x1xf32> -> vector<2x1x1xf32>
    %515 = vector.broadcast %514 : vector<2x1x1xf32> to vector<2x8x1xf32>
    %516 = arith.mulf %511, %515 : vector<2x8x1xf32>
    %c0_210 = arith.constant 0 : index
    %c0_211 = arith.constant 0 : index
    %c0_212 = arith.constant 0 : index
    %517 = vector.load %arg15[%c0_210, %c0_211, %c0_212] : memref<2x8x128xf32, #tpu.memory_space<vmem>>, vector<2x8x128xf32>
    %518 = vector.broadcast %516 : vector<2x8x1xf32> to vector<2x8x128xf32>
    %519 = arith.mulf %518, %517 : vector<2x8x128xf32>
    %cst_213 = arith.constant dense<0.000000e+00> : vector<2x128xf32>
    %520 = vector.multi_reduction <add>, %519, %cst_213 [1] : vector<2x8x128xf32> to vector<2x128xf32>
    %c0_214 = arith.constant 0 : index
    %c0_215 = arith.constant 0 : index
    %521 = vector.load %arg9[%c0_214, %c0_215] : memref<128x512xbf16, #tpu.memory_space<vmem>>, vector<128x512xbf16>
    %522 = arith.truncf %520 : vector<2x128xf32> to vector<2x128xbf16>
    %cst_216 = arith.constant dense<0.000000e+00> : vector<2x512xf32>
    %523 = tpu.matmul %522, %521, %cst_216 {dimension_numbers = #tpu.dot_dimension_numbers<[1], [0], [0], [1], [0, 0, 1, 1], [], []>} : vector<2x128xbf16>, vector<128x512xbf16>, vector<2x512xf32> -> vector<2x512xf32>
    %524 = arith.addf %523, %497 : vector<2x512xf32>
    %c0_217 = arith.constant 0 : index
    %c7 = arith.constant 7 : index
    %c0_218 = arith.constant 0 : index
    %525 = vector.load %arg17[%c0_217, %c7, %c0_218] : memref<2x8x512xbf16, #tpu.memory_space<vmem>>, vector<2x1x512xbf16>
    %526 = vector.shape_cast %525 : vector<2x1x512xbf16> to vector<2x512xbf16>
    %527 = arith.extf %526 : vector<2x512xbf16> to vector<2x512xf32>
    %528 = arith.addf %524, %527 : vector<2x512xf32>
    %529 = vector.extract_strided_slice %528 {offsets = [0, 0], sizes = [2, 128], strides = [1, 1]} : vector<2x512xf32> to vector<2x128xf32>
    %530 = arith.negf %529 : vector<2x128xf32>
    %531 = math.exp %530 : vector<2x128xf32>
    %cst_219 = arith.constant 1.000000e+00 : f32
    %532 = vector.broadcast %cst_219 : f32 to vector<2x128xf32>
    %533 = arith.addf %532, %531 : vector<2x128xf32>
    %534 = arith.divf %532, %533 : vector<2x128xf32>
    %535 = vector.extract_strided_slice %528 {offsets = [0, 128], sizes = [2, 128], strides = [1, 1]} : vector<2x512xf32> to vector<2x128xf32>
    %536 = arith.negf %535 : vector<2x128xf32>
    %537 = math.exp %536 : vector<2x128xf32>
    %cst_220 = arith.constant 1.000000e+00 : f32
    %538 = vector.broadcast %cst_220 : f32 to vector<2x128xf32>
    %539 = arith.addf %538, %537 : vector<2x128xf32>
    %540 = arith.divf %538, %539 : vector<2x128xf32>
    %541 = vector.extract_strided_slice %528 {offsets = [0, 256], sizes = [2, 128], strides = [1, 1]} : vector<2x512xf32> to vector<2x128xf32>
    %542 = math.tanh %541 : vector<2x128xf32>
    %543 = vector.extract_strided_slice %528 {offsets = [0, 384], sizes = [2, 128], strides = [1, 1]} : vector<2x512xf32> to vector<2x128xf32>
    %544 = arith.negf %543 : vector<2x128xf32>
    %545 = math.exp %544 : vector<2x128xf32>
    %cst_221 = arith.constant 1.000000e+00 : f32
    %546 = vector.broadcast %cst_221 : f32 to vector<2x128xf32>
    %547 = arith.addf %546, %545 : vector<2x128xf32>
    %548 = arith.divf %546, %547 : vector<2x128xf32>
    %549 = arith.mulf %540, %487 : vector<2x128xf32>
    %550 = arith.mulf %534, %542 : vector<2x128xf32>
    %551 = arith.addf %549, %550 : vector<2x128xf32>
    %552 = math.tanh %551 : vector<2x128xf32>
    %553 = arith.mulf %548, %552 : vector<2x128xf32>
    %c0_222 = arith.constant 0 : index
    %c7_223 = arith.constant 7 : index
    %c0_224 = arith.constant 0 : index
    %554 = vector.load %arg18[%c0_222, %c7_223, %c0_224] : memref<2x8x128xf32, #tpu.memory_space<vmem>>, vector<2x1x128xf32>
    %555 = vector.shape_cast %554 : vector<2x1x128xf32> to vector<2x128xf32>
    %556 = vector.shape_cast %553 : vector<2x128xf32> to vector<2x1x128xf32>
    tpu.vector_store %arg18[%c0_222, %c7_223, %c0_224], %556 {strides = array<i32>} : memref<2x8x128xf32, #tpu.memory_space<vmem>>, vector<2x1x128xf32>,
    %c0_225 = arith.constant 0 : index
    %c0_226 = arith.constant 0 : index
    %c0_227 = arith.constant 0 : index
    %557 = vector.load %arg18[%c0_225, %c0_226, %c0_227] : memref<2x8x128xf32, #tpu.memory_space<vmem>>, vector<2x8x128xf32>
    %558 = vector.shape_cast %557 : vector<2x8x128xf32> to vector<16x128xf32>
    %c0_228 = arith.constant 0 : index
    %c0_229 = arith.constant 0 : index
    %559 = vector.load %arg12[%c0_228, %c0_229] : memref<128x128xbf16, #tpu.memory_space<vmem>>, vector<128x128xbf16>
    %560 = arith.truncf %558 : vector<16x128xf32> to vector<16x128xbf16>
    %cst_230 = arith.constant dense<0.000000e+00> : vector<16x128xf32>
    %561 = tpu.matmul %560, %559, %cst_230 {dimension_numbers = #tpu.dot_dimension_numbers<[1], [0], [0], [1], [0, 0, 1, 1], [], []>} : vector<16x128xbf16>, vector<128x128xbf16>, vector<16x128xf32> -> vector<16x128xf32>
    %c0_231 = arith.constant 0 : index
    %c0_232 = arith.constant 0 : index
    %562 = vector.load %arg13[%c0_231, %c0_232] : memref<1x128xf32, #tpu.memory_space<vmem>>, vector<1x128xf32>
    %563 = vector.broadcast %562 : vector<1x128xf32> to vector<16x128xf32>
    %564 = arith.addf %561, %563 : vector<16x128xf32>
    %565 = vector.shape_cast %564 : vector<16x128xf32> to vector<2x8x128xf32>
    %c0_233 = arith.constant 0 : index
    %c0_234 = arith.constant 0 : index
    %c0_235 = arith.constant 0 : index
    %566 = vector.load %arg14[%c0_233, %c0_234, %c0_235] : memref<2x8x128xf32, #tpu.memory_space<vmem>>, vector<2x8x128xf32>
    tpu.vector_store %arg14[%c0_233, %c0_234, %c0_235], %565 {strides = array<i32>} : memref<2x8x128xf32, #tpu.memory_space<vmem>>, vector<2x8x128xf32>,
    return
  }
  func.func @transform_0(%arg0: i32) -> (i32, i32, i32) {
    %c0_i32 = arith.constant 0 : i32
    %c0_i32_0 = arith.constant 0 : i32
    %c0_i32_1 = arith.constant 0 : i32
    return %arg0, %c0_i32, %c0_i32_0 : i32, i32, i32
  }
  func.func @transform_1(%arg0: i32) -> (i32, i32) {
    %c0_i32 = arith.constant 0 : i32
    %c0_i32_0 = arith.constant 0 : i32
    return %arg0, %c0_i32 : i32, i32
  }
  func.func @transform_2(%arg0: i32) -> (i32, i32) {
    %c0_i32 = arith.constant 0 : i32
    %c0_i32_0 = arith.constant 0 : i32
    %c0_i32_1 = arith.constant 0 : i32
    return %c0_i32, %c0_i32_0 : i32, i32
  }
  func.func @transform_3(%arg0: i32) -> (i32, i32) {
    %c0_i32 = arith.constant 0 : i32
    %c0_i32_0 = arith.constant 0 : i32
    %c0_i32_1 = arith.constant 0 : i32
    return %c0_i32, %c0_i32_0 : i32, i32
  }
  func.func @transform_4(%arg0: i32) -> (i32, i32) {
    %c0_i32 = arith.constant 0 : i32
    %c0_i32_0 = arith.constant 0 : i32
    %c0_i32_1 = arith.constant 0 : i32
    return %c0_i32, %c0_i32_0 : i32, i32
  }
  func.func @transform_5(%arg0: i32) -> (i32, i32) {
    %c0_i32 = arith.constant 0 : i32
    %c0_i32_0 = arith.constant 0 : i32
    %c0_i32_1 = arith.constant 0 : i32
    return %c0_i32, %c0_i32_0 : i32, i32
  }
  func.func @transform_6(%arg0: i32) -> (i32, i32) {
    %c0_i32 = arith.constant 0 : i32
    %c0_i32_0 = arith.constant 0 : i32
    %c0_i32_1 = arith.constant 0 : i32
    return %c0_i32, %c0_i32_0 : i32, i32
  }
  func.func @transform_7(%arg0: i32) -> (i32, i32) {
    %c0_i32 = arith.constant 0 : i32
    %c0_i32_0 = arith.constant 0 : i32
    %c0_i32_1 = arith.constant 0 : i32
    return %c0_i32, %c0_i32_0 : i32, i32
  }
  func.func @transform_8(%arg0: i32) -> (i32, i32) {
    %c0_i32 = arith.constant 0 : i32
    %c0_i32_0 = arith.constant 0 : i32
    %c0_i32_1 = arith.constant 0 : i32
    return %c0_i32, %c0_i32_0 : i32, i32
  }
  func.func @transform_9(%arg0: i32) -> (i32, i32) {
    %c0_i32 = arith.constant 0 : i32
    %c0_i32_0 = arith.constant 0 : i32
    %c0_i32_1 = arith.constant 0 : i32
    return %c0_i32, %c0_i32_0 : i32, i32
  }
  func.func @transform_10(%arg0: i32) -> (i32, i32) {
    %c0_i32 = arith.constant 0 : i32
    %c0_i32_0 = arith.constant 0 : i32
    %c0_i32_1 = arith.constant 0 : i32
    return %c0_i32, %c0_i32_0 : i32, i32
  }
  func.func @transform_11(%arg0: i32) -> (i32, i32) {
    %c0_i32 = arith.constant 0 : i32
    %c0_i32_0 = arith.constant 0 : i32
    %c0_i32_1 = arith.constant 0 : i32
    return %c0_i32, %c0_i32_0 : i32, i32
  }
  func.func @transform_12(%arg0: i32) -> (i32, i32) {
    %c0_i32 = arith.constant 0 : i32
    %c0_i32_0 = arith.constant 0 : i32
    %c0_i32_1 = arith.constant 0 : i32
    return %c0_i32, %c0_i32_0 : i32, i32
  }
  func.func @transform_13(%arg0: i32) -> (i32, i32, i32) {
    %c0_i32 = arith.constant 0 : i32
    %c0_i32_0 = arith.constant 0 : i32
    %c0_i32_1 = arith.constant 0 : i32
    return %arg0, %c0_i32, %c0_i32_0 : i32, i32, i32
  }
}

</mosaic_0001>

<llo_original>
// kernel: tpu_custom_call.1
$region0: #{tpu_custom_call.1}
  #allocation0 [shape = 'u32[]', space=smem, size = 0x4, offset = 0x4, fixed_abs, tag = 'smem constant byte address 0x4 - core index']
  #allocation1 [shape = 'u32[144,128]{1,0:T(1,128)}', space=vmem, size = 0x12000, scoped, tag = 'internal scratch']
  #allocation2 [shape = 'f32[2,8,128]{2,1,0:T(8,128)}', space=vmem, size = 0x2000, scoped, tag = 'scratch operand']
  #allocation3 [shape = 'f32[2,8,128]{2,1,0:T(8,128)}', space=vmem, size = 0x2000, scoped, tag = 'scratch operand']
  #allocation4 [shape = 'bf16[2,8,512]{2,1,0:T(8,128)(2,1)}', space=vmem, size = 0x4000, scoped, tag = 'scratch operand']
  #allocation5 [shape = 'f32[2,8,128]{2,1,0:T(8,128)}', space=vmem, size = 0x2000, scoped, tag = 'scratch operand']
  %s0 = inlined_call_operand.hbm [shape: f32[2,8,32], index: 0, kind: input, shape index: {}]
  %s1 = inlined_call_operand.hbm [shape: s32[2,8], index: 1, kind: input, shape index: {}]
  %s2 = inlined_call_operand.hbm [shape: bf16[32,128], index: 2, kind: input, shape index: {}]
  %s3 = inlined_call_operand.vmem [shape: f32[1,128], index: 3, kind: input, shape index: {}]
  %s4 = inlined_call_operand.hbm [shape: bf16[128,128], index: 4, kind: input, shape index: {}]
  %s5 = inlined_call_operand.vmem [shape: f32[1,128], index: 5, kind: input, shape index: {}]
  %s6 = inlined_call_operand.hbm [shape: bf16[128,640], index: 6, kind: input, shape index: {}]
  %s7 = inlined_call_operand.vmem [shape: f32[1,128], index: 7, kind: input, shape index: {}]
  %s8 = inlined_call_operand.hbm [shape: bf16[128,512], index: 8, kind: input, shape index: {}]
  %s9 = inlined_call_operand.hbm [shape: bf16[128,512], index: 9, kind: input, shape index: {}]
  %s10 = inlined_call_operand.vmem [shape: f32[1,512], index: 10, kind: input, shape index: {}]
  %s11 = inlined_call_operand.hbm [shape: bf16[128,128], index: 11, kind: input, shape index: {}]
  %s12 = inlined_call_operand.vmem [shape: f32[1,128], index: 12, kind: input, shape index: {}]
  %s13 = inlined_call_operand.hbm [shape: f32[2,8,128], index: 13, kind: output, shape index: {}]
  %s14 = sld [smem:[#allocation0]]
  $region94: #{tpu_custom_call.1} parent=0
    _
  %s16 = ssub.s32 1, %s14
  %s17 = scalar_select 0, %s16, %s14
  $region1: #{tpu_custom_call.1} parent=0
    #allocation6 [shape = 'u8[8192]{0}', space=vmem, size = 0x2000, scoped, tag = 'input window, operand 0, single buffered']
    #allocation7 [shape = 's32[1]{0}', space=sflag, size = 0x4, scoped, tag = 'scoped memory for tpu_custom_call.1']
    #allocation8 [shape = 's32[1]{0}', space=sflag, size = 0x4, scoped, tag = 'scoped memory for tpu_custom_call.1']
    #allocation9 [shape = 'u8[1024]{0}', space=vmem, size = 0x400, scoped, tag = 'input window, operand 1, single buffered']
    #allocation10 [shape = 's32[1]{0}', space=sflag, size = 0x4, scoped, tag = 'scoped memory for tpu_custom_call.1']
    #allocation11 [shape = 'u8[8192]{0}', space=vmem, size = 0x2000, scoped, tag = 'input window, operand 2, single buffered']
    #allocation12 [shape = 'u8[32768]{0}', space=vmem, size = 0x8000, scoped, tag = 'input window, operand 4, single buffered']
    #allocation13 [shape = 's32[1]{0}', space=sflag, size = 0x4, scoped, tag = 'scoped memory for tpu_custom_call.1']
    #allocation14 [shape = 'u8[163840]{0}', space=vmem, size = 0x28000, scoped, tag = 'input window, operand 6, single buffered']
    #allocation15 [shape = 'u8[131072]{0}', space=vmem, size = 0x20000, scoped, tag = 'input window, operand 8, single buffered']
    #allocation16 [shape = 's32[1]{0}', space=sflag, size = 0x4, scoped, tag = 'scoped memory for tpu_custom_call.1']
    #allocation17 [shape = 'u8[131072]{0}', space=vmem, size = 0x20000, scoped, tag = 'input window, operand 9, single buffered']
    #allocation18 [shape = 'u8[32768]{0}', space=vmem, size = 0x8000, scoped, tag = 'input window, operand 11, single buffered']
    #allocation19 [shape = 's32[1]{0}', space=sflag, size = 0x4, scoped, tag = 'scoped memory for tpu_custom_call.1']
    #allocation20 [shape = 'u8[8192]{0}', space=vmem, size = 0x2000, scoped, tag = 'output window, operand 0, single buffered']
    %18 = vsyncpa [#allocation7], 0
    %19 = vsyncpa [#allocation10], 0
    %20 = vsyncpa [#allocation13], 0
    %21 = vsyncpa [#allocation16], 0
    %22 = vsyncpa [#allocation19], 0
    %23 = vsyncpa [#allocation8], 0
    // Predicated region
    $region2: #{tpu_custom_call.1} parent=1 // pred_check
      _
    $region3: #{tpu_custom_call.1} parent=1 // pred_check_branch
      %25 = sbr.rel (0) target = $region5
    $region4: #{tpu_custom_call.1} parent=1 // pred_region
      %s27 = ssub.s32 256, 256
      %28 = vsyncadd [#allocation7], %s27
      %s29 = sshll.u32 [#allocation6], 4
      %s30 = int_to_ptr.vmem [resolvable:$true] %s29
      %35 = dma.hbm_to_vmem [thread:$0]  %s0, 256, %s30, [#allocation7], 128, 128, 8
    $region5: #{tpu_custom_call.1} parent=1 // pred_fallthru
      _
    // Predicated region
    $region6: #{tpu_custom_call.1} parent=1 // pred_check
      _
    $region7: #{tpu_custom_call.1} parent=1 // pred_check_branch
      %37 = sbr.rel (0) target = $region9
    $region8: #{tpu_custom_call.1} parent=1 // pred_region
      %s39 = ssub.s32 32, 32
      %40 = vsyncadd [#allocation10], %s39
      %s42 = sshll.u32 [#allocation9], 4
      %s43 = int_to_ptr.vmem [resolvable:$true] %s42
      %45 = dma.hbm_to_vmem [thread:$0]  %s1, 32, %s43, [#allocation10]
    $region9: #{tpu_custom_call.1} parent=1 // pred_fallthru
      _
    // Predicated region
    $region10: #{tpu_custom_call.1} parent=1 // pred_check
      _
    $region11: #{tpu_custom_call.1} parent=1 // pred_check_branch
      %47 = sbr.rel (0) target = $region13
    $region12: #{tpu_custom_call.1} parent=1 // pred_region
      %s49 = ssub.s32 256, 256
      %50 = vsyncadd [#allocation10], %s49
      %s51 = sshll.u32 [#allocation11], 4
      %s52 = int_to_ptr.vmem [resolvable:$true] %s51
      %57 = dma.hbm_to_vmem [thread:$0]  %s2, 256, %s52, [#allocation10], 64, 64, 4
    $region13: #{tpu_custom_call.1} parent=1 // pred_fallthru
      _
    // Predicated region
    $region14: #{tpu_custom_call.1} parent=1 // pred_check
      _
    $region15: #{tpu_custom_call.1} parent=1 // pred_check_branch
      %59 = sbr.rel (0) target = $region17
    $region16: #{tpu_custom_call.1} parent=1 // pred_region
      _
    $region17: #{tpu_custom_call.1} parent=1 // pred_fallthru
      _
    // Predicated region
    $region18: #{tpu_custom_call.1} parent=1 // pred_check
      _
    $region19: #{tpu_custom_call.1} parent=1 // pred_check_branch
      %61 = sbr.rel (0) target = $region21
    $region20: #{tpu_custom_call.1} parent=1 // pred_region
      %s63 = ssub.s32 1024, 1024
      %64 = vsyncadd [#allocation13], %s63
      %s65 = sshll.u32 [#allocation12], 4
      %s66 = int_to_ptr.vmem [resolvable:$true] %s65
      %71 = dma.hbm_to_vmem [thread:$0]  %s4, 1024, %s66, [#allocation13], 64, 64, 4
    $region21: #{tpu_custom_call.1} parent=1 // pred_fallthru
      _
    // Predicated region
    $region22: #{tpu_custom_call.1} parent=1 // pred_check
      _
    $region23: #{tpu_custom_call.1} parent=1 // pred_check_branch
      %73 = sbr.rel (0) target = $region25
    $region24: #{tpu_custom_call.1} parent=1 // pred_region
      _
    $region25: #{tpu_custom_call.1} parent=1 // pred_fallthru
      _
    // Predicated region
    $region26: #{tpu_custom_call.1} parent=1 // pred_check
      _
    $region27: #{tpu_custom_call.1} parent=1 // pred_check_branch
      %75 = sbr.rel (0) target = $region29
    $region28: #{tpu_custom_call.1} parent=1 // pred_region
      %s77 = ssub.s32 5120, 5120
      %78 = vsyncadd [#allocation13], %s77
      %s79 = sshll.u32 [#allocation14], 4
      %s80 = int_to_ptr.vmem [resolvable:$true] %s79
      %85 = dma.hbm_to_vmem [thread:$0]  %s6, 5120, %s80, [#allocation13], 320, 320, 20
    $region29: #{tpu_custom_call.1} parent=1 // pred_fallthru
      _
    // Predicated region
    $region30: #{tpu_custom_call.1} parent=1 // pred_check
      _
    $region31: #{tpu_custom_call.1} parent=1 // pred_check_branch
      %87 = sbr.rel (0) target = $region33
    $region32: #{tpu_custom_call.1} parent=1 // pred_region
      _
    $region33: #{tpu_custom_call.1} parent=1 // pred_fallthru
      _
    // Predicated region
    $region34: #{tpu_custom_call.1} parent=1 // pred_check
      _
    $region35: #{tpu_custom_call.1} parent=1 // pred_check_branch
      %89 = sbr.rel (0) target = $region37
    $region36: #{tpu_custom_call.1} parent=1 // pred_region
      %s91 = ssub.s32 4096, 4096
      %92 = vsyncadd [#allocation16], %s91
      %s93 = sshll.u32 [#allocation15], 4
      %s94 = int_to_ptr.vmem [resolvable:$true] %s93
      %99 = dma.hbm_to_vmem [thread:$0]  %s8, 4096, %s94, [#allocation16], 256, 256, 16
    $region37: #{tpu_custom_call.1} parent=1 // pred_fallthru
      _
    // Predicated region
    $region38: #{tpu_custom_call.1} parent=1 // pred_check
      _
    $region39: #{tpu_custom_call.1} parent=1 // pred_check_branch
      %101 = sbr.rel (0) target = $region41
    $region40: #{tpu_custom_call.1} parent=1 // pred_region
      %s103 = ssub.s32 4096, 4096
      %104 = vsyncadd [#allocation16], %s103
      %s105 = sshll.u32 [#allocation17], 4
      %s106 = int_to_ptr.vmem [resolvable:$true] %s105
      %111 = dma.hbm_to_vmem [thread:$0]  %s9, 4096, %s106, [#allocation16], 256, 256, 16
    $region41: #{tpu_custom_call.1} parent=1 // pred_fallthru
      _
    // Predicated region
    $region42: #{tpu_custom_call.1} parent=1 // pred_check
      _
    $region43: #{tpu_custom_call.1} parent=1 // pred_check_branch
      %113 = sbr.rel (0) target = $region45
    $region44: #{tpu_custom_call.1} parent=1 // pred_region
      _
    $region45: #{tpu_custom_call.1} parent=1 // pred_fallthru
      _
    // Predicated region
    $region46: #{tpu_custom_call.1} parent=1 // pred_check
      _
    $region47: #{tpu_custom_call.1} parent=1 // pred_check_branch
      %115 = sbr.rel (0) target = $region49
    $region48: #{tpu_custom_call.1} parent=1 // pred_region
      %s117 = ssub.s32 1024, 1024
      %118 = vsyncadd [#allocation19], %s117
      %s119 = sshll.u32 [#allocation18], 4
      %s120 = int_to_ptr.vmem [resolvable:$true] %s119
      %125 = dma.hbm_to_vmem [thread:$0]  %s11, 1024, %s120, [#allocation19], 64, 64, 4
    $region49: #{tpu_custom_call.1} parent=1 // pred_fallthru
      _
    // Predicated region
    $region50: #{tpu_custom_call.1} parent=1 // pred_check
      _
    $region51: #{tpu_custom_call.1} parent=1 // pred_check_branch
      %127 = sbr.rel (0) target = $region53
    $region52: #{tpu_custom_call.1} parent=1 // pred_region
      _
    $region53: #{tpu_custom_call.1} parent=1 // pred_fallthru
      _
    // Predicated region
    $region54: #{tpu_custom_call.1} parent=1 // pred_check
      _
    $region55: #{tpu_custom_call.1} parent=1 // pred_check_branch
      %129 = sbr.rel (0) target = $region57
    $region56: #{tpu_custom_call.1} parent=1 // pred_region
      %130 = dma.done [#allocation7], 256
    $region57: #{tpu_custom_call.1} parent=1 // pred_fallthru
      _
    // Predicated region
    $region58: #{tpu_custom_call.1} parent=1 // pred_check
      _
    $region59: #{tpu_custom_call.1} parent=1 // pred_check_branch
      %132 = sbr.rel (0) target = $region61
    $region60: #{tpu_custom_call.1} parent=1 // pred_region
      %133 = dma.done [#allocation10], 32
    $region61: #{tpu_custom_call.1} parent=1 // pred_fallthru
      _
    // Predicated region
    $region62: #{tpu_custom_call.1} parent=1 // pred_check
      _
    $region63: #{tpu_custom_call.1} parent=1 // pred_check_branch
      %135 = sbr.rel (0) target = $region65
    $region64: #{tpu_custom_call.1} parent=1 // pred_region
      %136 = dma.done [#allocation10], 256
    $region65: #{tpu_custom_call.1} parent=1 // pred_fallthru
      _
    // Predicated region
    $region66: #{tpu_custom_call.1} parent=1 // pred_check
      _
    $region67: #{tpu_custom_call.1} parent=1 // pred_check_branch
      %138 = sbr.rel (0) target = $region69
    $region68: #{tpu_custom_call.1} parent=1 // pred_region
      %139 = dma.done [#allocation13], 1024
    $region69: #{tpu_custom_call.1} parent=1 // pred_fallthru
      _
    // Predicated region
    $region70: #{tpu_custom_call.1} parent=1 // pred_check
      _
    $region71: #{tpu_custom_call.1} parent=1 // pred_check_branch
      %141 = sbr.rel (0) target = $region73
    $region72: #{tpu_custom_call.1} parent=1 // pred_region
      %142 = dma.done [#allocation13], 5120
    $region73: #{tpu_custom_call.1} parent=1 // pred_fallthru
      _
    // Predicated region
    $region74: #{tpu_custom_call.1} parent=1 // pred_check
      _
    $region75: #{tpu_custom_call.1} parent=1 // pred_check_branch
      %144 = sbr.rel (0) target = $region77
    $region76: #{tpu_custom_call.1} parent=1 // pred_region
      %145 = dma.done [#allocation16], 4096
    $region77: #{tpu_custom_call.1} parent=1 // pred_fallthru
      _
    // Predicated region
    $region78: #{tpu_custom_call.1} parent=1 // pred_check
      _
    $region79: #{tpu_custom_call.1} parent=1 // pred_check_branch
      %147 = sbr.rel (0) target = $region81
    $region80: #{tpu_custom_call.1} parent=1 // pred_region
      %148 = dma.done [#allocation16], 4096
    $region81: #{tpu_custom_call.1} parent=1 // pred_fallthru
      _
    // Predicated region
    $region82: #{tpu_custom_call.1} parent=1 // pred_check
      _
    $region83: #{tpu_custom_call.1} parent=1 // pred_check_branch
      %150 = sbr.rel (0) target = $region85
    $region84: #{tpu_custom_call.1} parent=1 // pred_region
      %151 = dma.done [#allocation19], 1024
    $region85: #{tpu_custom_call.1} parent=1 // pred_fallthru
      _
    %v153 = vld [vmem:[#allocation6] sm:$0xff]
    %v154 = vld [vmem:[#allocation6 + $0x8] sm:$0xff]
    %v155 = vld [vmem:[#allocation11] sm:$0xf]
    %v156 = vld [vmem:[#allocation11 + $0x4] sm:$0xf]
    %v157 = vld [vmem:[#allocation11 + $0x8] sm:$0xf]
    %v158 = vld [vmem:[#allocation11 + $0xc] sm:$0xf]
    %v159 = vpack.c.bf16 %v154, %v153
    %v160 = vld [vmem:[%s3] sm:$0x1]
    %v162 = vlaneseq
    %v163 = vshrl.u32 %v162, 7
    %v164 = vsub.s32 0, %v163
    %v165 = vrot.slane %v160, %v164
    %v171 = vunpack.c.l.b16 %v155
    %v172 = vunpack.c.l.b16 %v156
    %v173 = vunpack.c.l.b16 %v157
    %v174 = vunpack.c.l.b16 %v158
    %v175 = vpack.c.b16 %v172, %v171
    %v176 = vpack.c.b16 %v174, %v173
    %vm179 = vcmask 261120
    %v181 = vsel %vm179, %v159, 0
    %183 = vmatprep.subr.bf16.mxu0 0
    %184 = vmatpush1.bf16.msra.mxu0 0
    %185 = vmatprep.subr.bf16.mxu0 0
    %186 = vmatpush1.bf16.msra.mxu0 0
    %187 = vmatprep.subr.bf16.mxu0 0
    %188 = vmatpush1.bf16.msra.mxu0 0
    %189 = vmatprep.subr.bf16.mxu0 0
    %190 = vmatpush1.bf16.msra.mxu0 0
    %191 = vmatprep.subr.bf16.mxu0 0
    %192 = vmatpush1.bf16.msra.mxu0 0
    %193 = vmatprep.subr.bf16.mxu0 0
    %194 = vmatpush1.bf16.msra.mxu0 0
    %195 = vmatprep.subr.bf16.mxu0 0
    %196 = vmatpush1.bf16.msra.mxu0 %v176
    %197 = vmatprep.subr.bf16.mxu0 0
    %198 = vmatpush1.bf16.msra.mxu0 %v175
    %199 = vmatprep.subr.bf16.mxu0 0
    %200 = vmatpush2.bf16.msra.mxu0 0
    %201 = vmatprep.subr.bf16.mxu0 0
    %202 = vmatpush2.bf16.msra.mxu0 0
    %203 = vmatprep.subr.bf16.mxu0 0
    %204 = vmatpush2.bf16.msra.mxu0 0
    %205 = vmatprep.subr.bf16.mxu0 0
    %206 = vmatpush2.bf16.msra.mxu0 0
    %207 = vmatprep.subr.bf16.mxu0 0
    %208 = vmatpush2.bf16.msra.mxu0 0
    %209 = vmatprep.subr.bf16.mxu0 0
    %210 = vmatpush2.bf16.msra.mxu0 0
    %211 = vmatprep.subr.bf16.mxu0 0
    %212 = vmatpush2.bf16.msra.mxu0 0
    %213 = vmatprep.subr.bf16.mxu0 0
    %214 = vmatpush2.bf16.msra.mxu0 0
    %215 = vmatprep.mubr.bf16.mxu0 0
    %216 = vmatmul.mubr.bf16.gmra.mxu0 %v181
    %v217 = vpop.f32.mrf.mxu0
    %v218 = vadd.f32 %v165, %v217
    %v219 = vpop.f32.mrf.mxu0
    %v220 = vpop.f32.mrf.mxu0
    %v221 = vadd.f32 %v165, %v220
    %v222 = vpop.f32.mrf.mxu0
    %223 = vdwg.mxu0
    %v224 = vxor.u32 %v218, 2147483648
    %v225 = vxor.u32 %v221, 2147483648
    %v226 = vmul.f32 %v224, 1.442695
    %v227 = vpow.pop %v226
    %v228 = vmul.f32 %v225, 1.442695
    %v229 = vpow.pop %v228
    %v230 = vadd.f32 %v227, 1.0
    %v231 = vadd.f32 %v229, 1.0
    %v232 = vrcp.pop %v230
    %v233 = vmul.f32 1.0, %v232
    %v234 = vrcp.pop %v231
    %v235 = vmul.f32 1.0, %v234
    %v236 = vmul.f32 %v233, %v218
    %v237 = vmul.f32 %v235, %v221
    %238 = vst [vmem:[#allocation2] sm:$0xff] %v236
    %239 = vst [vmem:[#allocation2 + $0x8] sm:$0xff] %v237
    %v240 = vld [vmem:[#allocation12] sm:$0xf]
    %v241 = vld [vmem:[#allocation12 + $0x4] sm:$0xf]
    %v242 = vld [vmem:[#allocation12 + $0x8] sm:$0xf]
    %v243 = vld [vmem:[#allocation12 + $0xc] sm:$0xf]
    %v244 = vld [vmem:[#allocation12 + $0x10] sm:$0xf]
    %v245 = vld [vmem:[#allocation12 + $0x14] sm:$0xf]
    %v246 = vld [vmem:[#allocation12 + $0x18] sm:$0xf]
    %v247 = vld [vmem:[#allocation12 + $0x1c] sm:$0xf]
    %v248 = vld [vmem:[#allocation12 + $0x20] sm:$0xf]
    %v249 = vld [vmem:[#allocation12 + $0x24] sm:$0xf]
    %v250 = vld [vmem:[#allocation12 + $0x28] sm:$0xf]
    %v251 = vld [vmem:[#allocation12 + $0x2c] sm:$0xf]
    %v252 = vld [vmem:[#allocation12 + $0x30] sm:$0xf]
    %v253 = vld [vmem:[#allocation12 + $0x34] sm:$0xf]
    %v254 = vld [vmem:[#allocation12 + $0x38] sm:$0xf]
    %v255 = vld [vmem:[#allocation12 + $0x3c] sm:$0xf]
    %v256 = vpack.c.bf16 %v237, %v236
    %v257 = vld [vmem:[%s5] sm:$0x1]
    %v259 = vlaneseq
    %v260 = vshrl.u32 %v259, 7
    %v261 = vsub.s32 0, %v260
    %v262 = vrot.slane %v257, %v261
    %v280 = vunpack.c.l.b16 %v240
    %v281 = vunpack.c.l.b16 %v241
    %v282 = vunpack.c.l.b16 %v242
    %v283 = vunpack.c.l.b16 %v243
    %v284 = vunpack.c.l.b16 %v244
    %v285 = vunpack.c.l.b16 %v245
    %v286 = vunpack.c.l.b16 %v246
    %v287 = vunpack.c.l.b16 %v247
    %v288 = vunpack.c.l.b16 %v248
    %v289 = vunpack.c.l.b16 %v249
    %v290 = vunpack.c.l.b16 %v250
    %v291 = vunpack.c.l.b16 %v251
    %v292 = vunpack.c.l.b16 %v252
    %v293 = vunpack.c.l.b16 %v253
    %v294 = vunpack.c.l.b16 %v254
    %v295 = vunpack.c.l.b16 %v255
    %v296 = vpack.c.b16 %v281, %v280
    %v297 = vpack.c.b16 %v283, %v282
    %v298 = vpack.c.b16 %v285, %v284
    %v299 = vpack.c.b16 %v287, %v286
    %v300 = vpack.c.b16 %v289, %v288
    %v301 = vpack.c.b16 %v291, %v290
    %v302 = vpack.c.b16 %v293, %v292
    %v303 = vpack.c.b16 %v295, %v294
    %312 = vmatprep.subr.bf16.mxu0 0
    %313 = vmatpush1.bf16.msra.mxu0 %v303
    %314 = vmatprep.subr.bf16.mxu0 0
    %315 = vmatpush1.bf16.msra.mxu0 %v302
    %316 = vmatprep.subr.bf16.mxu0 0
    %317 = vmatpush1.bf16.msra.mxu0 %v301
    %318 = vmatprep.subr.bf16.mxu0 0
    %319 = vmatpush1.bf16.msra.mxu0 %v300
    %320 = vmatprep.subr.bf16.mxu0 0
    %321 = vmatpush1.bf16.msra.mxu0 %v299
    %322 = vmatprep.subr.bf16.mxu0 0
    %323 = vmatpush1.bf16.msra.mxu0 %v298
    %324 = vmatprep.subr.bf16.mxu0 0
    %325 = vmatpush1.bf16.msra.mxu0 %v297
    %326 = vmatprep.subr.bf16.mxu0 0
    %327 = vmatpush1.bf16.msra.mxu0 %v296
    %328 = vmatprep.subr.bf16.mxu0 0
    %329 = vmatpush2.bf16.msra.mxu0 0
    %330 = vmatprep.subr.bf16.mxu0 0
    %331 = vmatpush2.bf16.msra.mxu0 0
    %332 = vmatprep.subr.bf16.mxu0 0
    %333 = vmatpush2.bf16.msra.mxu0 0
    %334 = vmatprep.subr.bf16.mxu0 0
    %335 = vmatpush2.bf16.msra.mxu0 0
    %336 = vmatprep.subr.bf16.mxu0 0
    %337 = vmatpush2.bf16.msra.mxu0 0
    %338 = vmatprep.subr.bf16.mxu0 0
    %339 = vmatpush2.bf16.msra.mxu0 0
    %340 = vmatprep.subr.bf16.mxu0 0
    %341 = vmatpush2.bf16.msra.mxu0 0
    %342 = vmatprep.subr.bf16.mxu0 0
    %343 = vmatpush2.bf16.msra.mxu0 0
    %344 = vmatprep.mubr.bf16.mxu0 0
    %345 = vmatmul.mubr.bf16.gmra.mxu0 %v256
    %v346 = vpop.f32.mrf.mxu0
    %v347 = vadd.f32 %v262, %v346
    %v348 = vpop.f32.mrf.mxu0
    %v349 = vpop.f32.mrf.mxu0
    %v350 = vadd.f32 %v262, %v349
    %v351 = vpop.f32.mrf.mxu0
    %352 = vdwg.mxu0
    %353 = vst [vmem:[#allocation3] sm:$0xff] %v347
    %354 = vst [vmem:[#allocation3 + $0x8] sm:$0xff] %v350
    %v355 = vlaneseq
    %v356 = vand.u32 %v355, 127
    %v357 = vld [vmem:[#allocation9] sm:$0x3]
    %v358 = vlaneseq
    %v359 = vshrl.u32 %v358, 7
    %v360 = vsub.s32 0, %v359
    %v361 = vrot.slane %v357, %v360
    %363 = vbcast.lane.b32.xlu0 %v361, 256
    %v364 = vpop.permute.xlu0 %363
    %v365 = vlaneseq
    %v366 = vshrl.u32 %v365, 7
    %v367 = vsub.s32 1, %v366
    %v368 = vrot.slane %v357, %v367
    %370 = vbcast.lane.b32.xlu0 %v368, 256
    %v371 = vpop.permute.xlu0 %370
    %vm372 = vcmp.eq.s32.totalorder %v356, %v364
    %vm373 = vcmp.eq.s32.totalorder %v356, %v371
    %v374 = vsel %vm372, 1, 0
    %v375 = vsel %vm373, 1, 0
    %v376 = vcvt.s32.f32 %v374
    %v377 = vcvt.s32.f32 %v375
    %v378 = vld [vmem:[#allocation17] sm:$0xff]
    %v379 = vld [vmem:[#allocation17 + $0x8] sm:$0xff]
    %v380 = vld [vmem:[#allocation17 + $0x10] sm:$0xff]
    %v381 = vld [vmem:[#allocation17 + $0x18] sm:$0xff]
    %v382 = vld [vmem:[#allocation17 + $0x20] sm:$0xff]
    %v383 = vld [vmem:[#allocation17 + $0x28] sm:$0xff]
    %v384 = vld [vmem:[#allocation17 + $0x30] sm:$0xff]
    %v385 = vld [vmem:[#allocation17 + $0x38] sm:$0xff]
    %v386 = vld [vmem:[#allocation17 + $0x40] sm:$0xff]
    %v387 = vld [vmem:[#allocation17 + $0x48] sm:$0xff]
    %v388 = vld [vmem:[#allocation17 + $0x50] sm:$0xff]
    %v389 = vld [vmem:[#allocation17 + $0x58] sm:$0xff]
    %v390 = vld [vmem:[#allocation17 + $0x60] sm:$0xff]
    %v391 = vld [vmem:[#allocation17 + $0x68] sm:$0xff]
    %v392 = vld [vmem:[#allocation17 + $0x70] sm:$0xff]
    %v393 = vld [vmem:[#allocation17 + $0x78] sm:$0xff]
    %v394 = vld [vmem:[#allocation17 + $0x80] sm:$0xff]
    %v395 = vld [vmem:[#allocation17 + $0x88] sm:$0xff]
    %v396 = vld [vmem:[#allocation17 + $0x90] sm:$0xff]
    %v397 = vld [vmem:[#allocation17 + $0x98] sm:$0xff]
    %v398 = vld [vmem:[#allocation17 + $0xa0] sm:$0xff]
    %v399 = vld [vmem:[#allocation17 + $0xa8] sm:$0xff]
    %v400 = vld [vmem:[#allocation17 + $0xb0] sm:$0xff]
    %v401 = vld [vmem:[#allocation17 + $0xb8] sm:$0xff]
    %v402 = vld [vmem:[#allocation17 + $0xc0] sm:$0xff]
    %v403 = vld [vmem:[#allocation17 + $0xc8] sm:$0xff]
    %v404 = vld [vmem:[#allocation17 + $0xd0] sm:$0xff]
    %v405 = vld [vmem:[#allocation17 + $0xd8] sm:$0xff]
    %v406 = vld [vmem:[#allocation17 + $0xe0] sm:$0xff]
    %v407 = vld [vmem:[#allocation17 + $0xe8] sm:$0xff]
    %v408 = vld [vmem:[#allocation17 + $0xf0] sm:$0xff]
    %v409 = vld [vmem:[#allocation17 + $0xf8] sm:$0xff]
    %v410 = vpack.c.bf16 %v377, %v376
    %v411 = vld [vmem:[%s10] sm:$0xf]
    %v413 = vlaneseq
    %v414 = vshrl.u32 %v413, 7
    %v415 = vsub.s32 0, %v414
    %v416 = vrot.slane %v411, %v415
    %v417 = vlaneseq
    %v418 = vshrl.u32 %v417, 7
    %v419 = vsub.s32 1, %v418
    %v420 = vrot.slane %v411, %v419
    %v421 = vlaneseq
    %v422 = vshrl.u32 %v421, 7
    %v423 = vsub.s32 2, %v422
    %v424 = vrot.slane %v411, %v423
    %v425 = vlaneseq
    %v426 = vshrl.u32 %v425, 7
    %v427 = vsub.s32 3, %v426
    %v428 = vrot.slane %v411, %v427
    %v465 = vunpack.c.l.b16 %v378
    %v466 = vunpack.c.h.b16 %v378
    %v467 = vunpack.c.l.b16 %v379
    %v468 = vunpack.c.h.b16 %v379
    %v469 = vunpack.c.l.b16 %v380
    %v470 = vunpack.c.h.b16 %v380
    %v471 = vunpack.c.l.b16 %v381
    %v472 = vunpack.c.h.b16 %v381
    %v473 = vunpack.c.l.b16 %v382
    %v474 = vunpack.c.h.b16 %v382
    %v475 = vunpack.c.l.b16 %v383
    %v476 = vunpack.c.h.b16 %v383
    %v477 = vunpack.c.l.b16 %v384
    %v478 = vunpack.c.h.b16 %v384
    %v479 = vunpack.c.l.b16 %v385
    %v480 = vunpack.c.h.b16 %v385
    %v481 = vunpack.c.l.b16 %v386
    %v482 = vunpack.c.h.b16 %v386
    %v483 = vunpack.c.l.b16 %v387
    %v484 = vunpack.c.h.b16 %v387
    %v485 = vunpack.c.l.b16 %v388
    %v486 = vunpack.c.h.b16 %v388
    %v487 = vunpack.c.l.b16 %v389
    %v488 = vunpack.c.h.b16 %v389
    %v489 = vunpack.c.l.b16 %v390
    %v490 = vunpack.c.h.b16 %v390
    %v491 = vunpack.c.l.b16 %v391
    %v492 = vunpack.c.h.b16 %v391
    %v493 = vunpack.c.l.b16 %v392
    %v494 = vunpack.c.h.b16 %v392
    %v495 = vunpack.c.l.b16 %v393
    %v496 = vunpack.c.h.b16 %v393
    %v497 = vunpack.c.l.b16 %v394
    %v498 = vunpack.c.h.b16 %v394
    %v499 = vunpack.c.l.b16 %v395
    %v500 = vunpack.c.h.b16 %v395
    %v501 = vunpack.c.l.b16 %v396
    %v502 = vunpack.c.h.b16 %v396
    %v503 = vunpack.c.l.b16 %v397
    %v504 = vunpack.c.h.b16 %v397
    %v505 = vunpack.c.l.b16 %v398
    %v506 = vunpack.c.h.b16 %v398
    %v507 = vunpack.c.l.b16 %v399
    %v508 = vunpack.c.h.b16 %v399
    %v509 = vunpack.c.l.b16 %v400
    %v510 = vunpack.c.h.b16 %v400
    %v511 = vunpack.c.l.b16 %v401
    %v512 = vunpack.c.h.b16 %v401
    %v513 = vunpack.c.l.b16 %v402
    %v514 = vunpack.c.h.b16 %v402
    %v515 = vunpack.c.l.b16 %v403
    %v516 = vunpack.c.h.b16 %v403
    %v517 = vunpack.c.l.b16 %v404
    %v518 = vunpack.c.h.b16 %v404
    %v519 = vunpack.c.l.b16 %v405
    %v520 = vunpack.c.h.b16 %v405
    %v521 = vunpack.c.l.b16 %v406
    %v522 = vunpack.c.h.b16 %v406
    %v523 = vunpack.c.l.b16 %v407
    %v524 = vunpack.c.h.b16 %v407
    %v525 = vunpack.c.l.b16 %v408
    %v526 = vunpack.c.h.b16 %v408
    %v527 = vunpack.c.l.b16 %v409
    %v528 = vunpack.c.h.b16 %v409
    %v529 = vpack.c.b16 %v469, %v465
    %v530 = vpack.c.b16 %v470, %v466
    %v531 = vpack.c.b16 %v471, %v467
    %v532 = vpack.c.b16 %v472, %v468
    %v533 = vpack.c.b16 %v477, %v473
    %v534 = vpack.c.b16 %v478, %v474
    %v535 = vpack.c.b16 %v479, %v475
    %v536 = vpack.c.b16 %v480, %v476
    %v537 = vpack.c.b16 %v485, %v481
    %v538 = vpack.c.b16 %v486, %v482
    %v539 = vpack.c.b16 %v487, %v483
    %v540 = vpack.c.b16 %v488, %v484
    %v541 = vpack.c.b16 %v493, %v489
    %v542 = vpack.c.b16 %v494, %v490
    %v543 = vpack.c.b16 %v495, %v491
    %v544 = vpack.c.b16 %v496, %v492
    %v545 = vpack.c.b16 %v501, %v497
    %v546 = vpack.c.b16 %v502, %v498
    %v547 = vpack.c.b16 %v503, %v499
    %v548 = vpack.c.b16 %v504, %v500
    %v549 = vpack.c.b16 %v509, %v505
    %v550 = vpack.c.b16 %v510, %v506
    %v551 = vpack.c.b16 %v511, %v507
    %v552 = vpack.c.b16 %v512, %v508
    %v553 = vpack.c.b16 %v517, %v513
    %v554 = vpack.c.b16 %v518, %v514
    %v555 = vpack.c.b16 %v519, %v515
    %v556 = vpack.c.b16 %v520, %v516
    %v557 = vpack.c.b16 %v525, %v521
    %v558 = vpack.c.b16 %v526, %v522
    %v559 = vpack.c.b16 %v527, %v523
    %v560 = vpack.c.b16 %v528, %v524
    %593 = vmatprep.subr.bf16.mxu0 %v558
    %594 = vmatpush1.bf16.msra.mxu0 %v557
    %595 = vmatprep.subr.bf16.mxu0 %v554
    %596 = vmatpush1.bf16.msra.mxu0 %v553
    %597 = vmatprep.subr.bf16.mxu0 %v550
    %598 = vmatpush1.bf16.msra.mxu0 %v549
    %599 = vmatprep.subr.bf16.mxu0 %v546
    %600 = vmatpush1.bf16.msra.mxu0 %v545
    %601 = vmatprep.subr.bf16.mxu0 %v542
    %602 = vmatpush1.bf16.msra.mxu0 %v541
    %603 = vmatprep.subr.bf16.mxu0 %v538
    %604 = vmatpush1.bf16.msra.mxu0 %v537
    %605 = vmatprep.subr.bf16.mxu0 %v534
    %606 = vmatpush1.bf16.msra.mxu0 %v533
    %607 = vmatprep.subr.bf16.mxu0 %v530
    %608 = vmatpush1.bf16.msra.mxu0 %v529
    %609 = vmatprep.subr.bf16.mxu0 0
    %610 = vmatpush2.bf16.msra.mxu0 0
    %611 = vmatprep.subr.bf16.mxu0 0
    %612 = vmatpush2.bf16.msra.mxu0 0
    %613 = vmatprep.subr.bf16.mxu0 0
    %614 = vmatpush2.bf16.msra.mxu0 0
    %615 = vmatprep.subr.bf16.mxu0 0
    %616 = vmatpush2.bf16.msra.mxu0 0
    %617 = vmatprep.subr.bf16.mxu0 0
    %618 = vmatpush2.bf16.msra.mxu0 0
    %619 = vmatprep.subr.bf16.mxu0 0
    %620 = vmatpush2.bf16.msra.mxu0 0
    %621 = vmatprep.subr.bf16.mxu0 0
    %622 = vmatpush2.bf16.msra.mxu0 0
    %623 = vmatprep.subr.bf16.mxu0 0
    %624 = vmatpush2.bf16.msra.mxu0 0
    %625 = vmatprep.mubr.bf16.mxu0 0
    %626 = vmatmul.mubr.bf16.gmra.mxu0 %v410
    %v627 = vpop.f32.mrf.mxu0
    %v628 = vadd.f32 %v416, %v627
    %v629 = vpop.f32.mrf.mxu0
    %v630 = vadd.f32 %v420, %v629
    %v631 = vpop.f32.mrf.mxu0
    %v632 = vadd.f32 %v416, %v631
    %v633 = vpop.f32.mrf.mxu0
    %v634 = vadd.f32 %v420, %v633
    %635 = vdwg.mxu0
    %636 = vmatprep.subr.bf16.mxu0 %v560
    %637 = vmatpush1.bf16.msra.mxu0 %v559
    %638 = vmatprep.subr.bf16.mxu0 %v556
    %639 = vmatpush1.bf16.msra.mxu0 %v555
    %640 = vmatprep.subr.bf16.mxu0 %v552
    %641 = vmatpush1.bf16.msra.mxu0 %v551
    %642 = vmatprep.subr.bf16.mxu0 %v548
    %643 = vmatpush1.bf16.msra.mxu0 %v547
    %644 = vmatprep.subr.bf16.mxu0 %v544
    %645 = vmatpush1.bf16.msra.mxu0 %v543
    %646 = vmatprep.subr.bf16.mxu0 %v540
    %647 = vmatpush1.bf16.msra.mxu0 %v539
    %648 = vmatprep.subr.bf16.mxu0 %v536
    %649 = vmatpush1.bf16.msra.mxu0 %v535
    %650 = vmatprep.subr.bf16.mxu0 %v532
    %651 = vmatpush1.bf16.msra.mxu0 %v531
    %652 = vmatprep.subr.bf16.mxu0 0
    %653 = vmatpush2.bf16.msra.mxu0 0
    %654 = vmatprep.subr.bf16.mxu0 0
    %655 = vmatpush2.bf16.msra.mxu0 0
    %656 = vmatprep.subr.bf16.mxu0 0
    %657 = vmatpush2.bf16.msra.mxu0 0
    %658 = vmatprep.subr.bf16.mxu0 0
    %659 = vmatpush2.bf16.msra.mxu0 0
    %660 = vmatprep.subr.bf16.mxu0 0
    %661 = vmatpush2.bf16.msra.mxu0 0
    %662 = vmatprep.subr.bf16.mxu0 0
    %663 = vmatpush2.bf16.msra.mxu0 0
    %664 = vmatprep.subr.bf16.mxu0 0
    %665 = vmatpush2.bf16.msra.mxu0 0
    %666 = vmatprep.subr.bf16.mxu0 0
    %667 = vmatpush2.bf16.msra.mxu0 0
    %668 = vmatprep.mubr.bf16.mxu0 0
    %669 = vmatmul.mubr.bf16.gmra.mxu0 %v410
    %v670 = vpop.f32.mrf.mxu0
    %v671 = vadd.f32 %v424, %v670
    %v672 = vpop.f32.mrf.mxu0
    %v673 = vadd.f32 %v428, %v672
    %v674 = vpop.f32.mrf.mxu0
    %v675 = vadd.f32 %v424, %v674
    %v676 = vpop.f32.mrf.mxu0
    %v677 = vadd.f32 %v428, %v676
    %678 = vdwg.mxu0
    %v679 = vpack.c.bf16 %v628, %v628
    %v680 = vpack.c.bf16 %v630, %v630
    %v681 = vpack.c.bf16 %v671, %v671
    %v682 = vpack.c.bf16 %v673, %v673
    %v683 = vpack.c.bf16 %v632, %v632
    %v684 = vpack.c.bf16 %v634, %v634
    %v685 = vpack.c.bf16 %v675, %v675
    %v686 = vpack.c.bf16 %v677, %v677
    %v695 = vunpack.c.l.b16 %v679
    %v696 = vunpack.c.l.b16 %v680
    %v697 = vunpack.c.l.b16 %v681
    %v698 = vunpack.c.l.b16 %v682
    %v699 = vunpack.c.l.b16 %v683
    %v700 = vunpack.c.l.b16 %v684
    %v701 = vunpack.c.l.b16 %v685
    %v702 = vunpack.c.l.b16 %v686
    %v703 = vpack.c.b16 %v696, %v695
    %v704 = vpack.c.b16 %v698, %v697
    %v705 = vpack.c.b16 %v700, %v699
    %v706 = vpack.c.b16 %v702, %v701
    %711 = vst [vmem:[#allocation4] sm:$0xff] %v703
    %712 = vst [vmem:[#allocation4 + $0x8] sm:$0xff] %v704
    %713 = vst [vmem:[#allocation4 + $0x10] sm:$0xff] %v705
    %714 = vst [vmem:[#allocation4 + $0x18] sm:$0xff] %v706
    %v715 = vld [vmem:[%s7] sm:$0x1]
    %v716 = vld [vmem:[#allocation14] sm:$0xff]
    %v717 = vld [vmem:[#allocation14 + $0x8] sm:$0xff]
    %v718 = vld [vmem:[#allocation14 + $0x10] sm:$0xf]
    %v719 = vld [vmem:[#allocation14 + $0x14] sm:$0xff]
    %v720 = vld [vmem:[#allocation14 + $0x1c] sm:$0xff]
    %v721 = vld [vmem:[#allocation14 + $0x24] sm:$0xf]
    %v722 = vld [vmem:[#allocation14 + $0x28] sm:$0xff]
    %v723 = vld [vmem:[#allocation14 + $0x30] sm:$0xff]
    %v724 = vld [vmem:[#allocation14 + $0x38] sm:$0xf]
    %v725 = vld [vmem:[#allocation14 + $0x3c] sm:$0xff]
    %v726 = vld [vmem:[#allocation14 + $0x44] sm:$0xff]
    %v727 = vld [vmem:[#allocation14 + $0x4c] sm:$0xf]
    %v728 = vld [vmem:[#allocation14 + $0x50] sm:$0xff]
    %v729 = vld [vmem:[#allocation14 + $0x58] sm:$0xff]
    %v730 = vld [vmem:[#allocation14 + $0x60] sm:$0xf]
    %v731 = vld [vmem:[#allocation14 + $0x64] sm:$0xff]
    %v732 = vld [vmem:[#allocation14 + $0x6c] sm:$0xff]
    %v733 = vld [vmem:[#allocation14 + $0x74] sm:$0xf]
    %v734 = vld [vmem:[#allocation14 + $0x78] sm:$0xff]
    %v735 = vld [vmem:[#allocation14 + $0x80] sm:$0xff]
    %v736 = vld [vmem:[#allocation14 + $0x88] sm:$0xf]
    %v737 = vld [vmem:[#allocation14 + $0x8c] sm:$0xff]
    %v738 = vld [vmem:[#allocation14 + $0x94] sm:$0xff]
    %v739 = vld [vmem:[#allocation14 + $0x9c] sm:$0xf]
    %v740 = vld [vmem:[#allocation14 + $0xa0] sm:$0xff]
    %v741 = vld [vmem:[#allocation14 + $0xa8] sm:$0xff]
    %v742 = vld [vmem:[#allocation14 + $0xb0] sm:$0xf]
    %v743 = vld [vmem:[#allocation14 + $0xb4] sm:$0xff]
    %v744 = vld [vmem:[#allocation14 + $0xbc] sm:$0xff]
    %v745 = vld [vmem:[#allocation14 + $0xc4] sm:$0xf]
    %v746 = vld [vmem:[#allocation14 + $0xc8] sm:$0xff]
    %v747 = vld [vmem:[#allocation14 + $0xd0] sm:$0xff]
    %v748 = vld [vmem:[#allocation14 + $0xd8] sm:$0xf]
    %v749 = vld [vmem:[#allocation14 + $0xdc] sm:$0xff]
    %v750 = vld [vmem:[#allocation14 + $0xe4] sm:$0xff]
    %v751 = vld [vmem:[#allocation14 + $0xec] sm:$0xf]
    %v752 = vld [vmem:[#allocation14 + $0xf0] sm:$0xff]
    %v753 = vld [vmem:[#allocation14 + $0xf8] sm:$0xff]
    %v754 = vld [vmem:[#allocation14 + $0x100] sm:$0xf]
    %v755 = vld [vmem:[#allocation14 + $0x104] sm:$0xff]
    %v756 = vld [vmem:[#allocation14 + $0x10c] sm:$0xff]
    %v757 = vld [vmem:[#allocation14 + $0x114] sm:$0xf]
    %v758 = vld [vmem:[#allocation14 + $0x118] sm:$0xff]
    %v759 = vld [vmem:[#allocation14 + $0x120] sm:$0xff]
    %v760 = vld [vmem:[#allocation14 + $0x128] sm:$0xf]
    %v761 = vld [vmem:[#allocation14 + $0x12c] sm:$0xff]
    %v762 = vld [vmem:[#allocation14 + $0x134] sm:$0xff]
    %v763 = vld [vmem:[#allocation14 + $0x13c] sm:$0xf]
    %v812 = vunpack.c.l.b16 %v716
    %v813 = vunpack.c.h.b16 %v716
    %v814 = vunpack.c.l.b16 %v717
    %v815 = vunpack.c.h.b16 %v717
    %v816 = vunpack.c.l.b16 %v718
    %v817 = vunpack.c.l.b16 %v719
    %v818 = vunpack.c.h.b16 %v719
    %v819 = vunpack.c.l.b16 %v720
    %v820 = vunpack.c.h.b16 %v720
    %v821 = vunpack.c.l.b16 %v721
    %v822 = vunpack.c.l.b16 %v722
    %v823 = vunpack.c.h.b16 %v722
    %v824 = vunpack.c.l.b16 %v723
    %v825 = vunpack.c.h.b16 %v723
    %v826 = vunpack.c.l.b16 %v724
    %v827 = vunpack.c.l.b16 %v725
    %v828 = vunpack.c.h.b16 %v725
    %v829 = vunpack.c.l.b16 %v726
    %v830 = vunpack.c.h.b16 %v726
    %v831 = vunpack.c.l.b16 %v727
    %v832 = vunpack.c.l.b16 %v728
    %v833 = vunpack.c.h.b16 %v728
    %v834 = vunpack.c.l.b16 %v729
    %v835 = vunpack.c.h.b16 %v729
    %v836 = vunpack.c.l.b16 %v730
    %v837 = vunpack.c.l.b16 %v731
    %v838 = vunpack.c.h.b16 %v731
    %v839 = vunpack.c.l.b16 %v732
    %v840 = vunpack.c.h.b16 %v732
    %v841 = vunpack.c.l.b16 %v733
    %v842 = vunpack.c.l.b16 %v734
    %v843 = vunpack.c.h.b16 %v734
    %v844 = vunpack.c.l.b16 %v735
    %v845 = vunpack.c.h.b16 %v735
    %v846 = vunpack.c.l.b16 %v736
    %v847 = vunpack.c.l.b16 %v737
    %v848 = vunpack.c.h.b16 %v737
    %v849 = vunpack.c.l.b16 %v738
    %v850 = vunpack.c.h.b16 %v738
    %v851 = vunpack.c.l.b16 %v739
    %v852 = vunpack.c.l.b16 %v740
    %v853 = vunpack.c.h.b16 %v740
    %v854 = vunpack.c.l.b16 %v741
    %v855 = vunpack.c.h.b16 %v741
    %v856 = vunpack.c.l.b16 %v742
    %v857 = vunpack.c.l.b16 %v743
    %v858 = vunpack.c.h.b16 %v743
    %v859 = vunpack.c.l.b16 %v744
    %v860 = vunpack.c.h.b16 %v744
    %v861 = vunpack.c.l.b16 %v745
    %v862 = vunpack.c.l.b16 %v746
    %v863 = vunpack.c.h.b16 %v746
    %v864 = vunpack.c.l.b16 %v747
    %v865 = vunpack.c.h.b16 %v747
    %v866 = vunpack.c.l.b16 %v748
    %v867 = vunpack.c.l.b16 %v749
    %v868 = vunpack.c.h.b16 %v749
    %v869 = vunpack.c.l.b16 %v750
    %v870 = vunpack.c.h.b16 %v750
    %v871 = vunpack.c.l.b16 %v751
    %v872 = vunpack.c.l.b16 %v752
    %v873 = vunpack.c.h.b16 %v752
    %v874 = vunpack.c.l.b16 %v753
    %v875 = vunpack.c.h.b16 %v753
    %v876 = vunpack.c.l.b16 %v754
    %v877 = vunpack.c.l.b16 %v755
    %v878 = vunpack.c.h.b16 %v755
    %v879 = vunpack.c.l.b16 %v756
    %v880 = vunpack.c.h.b16 %v756
    %v881 = vunpack.c.l.b16 %v757
    %v882 = vunpack.c.l.b16 %v758
    %v883 = vunpack.c.h.b16 %v758
    %v884 = vunpack.c.l.b16 %v759
    %v885 = vunpack.c.h.b16 %v759
    %v886 = vunpack.c.l.b16 %v760
    %v887 = vunpack.c.l.b16 %v761
    %v888 = vunpack.c.h.b16 %v761
    %v889 = vunpack.c.l.b16 %v762
    %v890 = vunpack.c.h.b16 %v762
    %v891 = vunpack.c.l.b16 %v763
    %v892 = vpack.c.b16 %v817, %v812
    %v893 = vpack.c.b16 %v818, %v813
    %v894 = vpack.c.b16 %v819, %v814
    %v895 = vpack.c.b16 %v820, %v815
    %v896 = vpack.c.b16 %v821, %v816
    %v897 = vpack.c.b16 %v827, %v822
    %v898 = vpack.c.b16 %v828, %v823
    %v899 = vpack.c.b16 %v829, %v824
    %v900 = vpack.c.b16 %v830, %v825
    %v901 = vpack.c.b16 %v831, %v826
    %v902 = vpack.c.b16 %v837, %v832
    %v903 = vpack.c.b16 %v838, %v833
    %v904 = vpack.c.b16 %v839, %v834
    %v905 = vpack.c.b16 %v840, %v835
    %v906 = vpack.c.b16 %v841, %v836
    %v907 = vpack.c.b16 %v847, %v842
    %v908 = vpack.c.b16 %v848, %v843
    %v909 = vpack.c.b16 %v849, %v844
    %v910 = vpack.c.b16 %v850, %v845
    %v911 = vpack.c.b16 %v851, %v846
    %v912 = vpack.c.b16 %v857, %v852
    %v913 = vpack.c.b16 %v858, %v853
    %v914 = vpack.c.b16 %v859, %v854
    %v915 = vpack.c.b16 %v860, %v855
    %v916 = vpack.c.b16 %v861, %v856
    %v917 = vpack.c.b16 %v867, %v862
    %v918 = vpack.c.b16 %v868, %v863
    %v919 = vpack.c.b16 %v869, %v864
    %v920 = vpack.c.b16 %v870, %v865
    %v921 = vpack.c.b16 %v871, %v866
    %v922 = vpack.c.b16 %v877, %v872
    %v923 = vpack.c.b16 %v878, %v873
    %v924 = vpack.c.b16 %v879, %v874
    %v925 = vpack.c.b16 %v880, %v875
    %v926 = vpack.c.b16 %v881, %v876
    %v927 = vpack.c.b16 %v887, %v882
    %v928 = vpack.c.b16 %v888, %v883
    %v929 = vpack.c.b16 %v889, %v884
    %v930 = vpack.c.b16 %v890, %v885
    %v931 = vpack.c.b16 %v891, %v886
    %972 = vmatprep.subr.bf16.mxu0 %v928
    %973 = vmatpush1.bf16.msra.mxu0 %v927
    %974 = vmatprep.subr.bf16.mxu0 %v923
    %975 = vmatpush1.bf16.msra.mxu0 %v922
    %976 = vmatprep.subr.bf16.mxu0 %v918
    %977 = vmatpush1.bf16.msra.mxu0 %v917
    %978 = vmatprep.subr.bf16.mxu0 %v913
    %979 = vmatpush1.bf16.msra.mxu0 %v912
    %980 = vmatprep.subr.bf16.mxu0 %v908
    %981 = vmatpush1.bf16.msra.mxu0 %v907
    %982 = vmatprep.subr.bf16.mxu0 %v903
    %983 = vmatpush1.bf16.msra.mxu0 %v902
    %984 = vmatprep.subr.bf16.mxu0 %v898
    %985 = vmatpush1.bf16.msra.mxu0 %v897
    %986 = vmatprep.subr.bf16.mxu0 %v893
    %987 = vmatpush1.bf16.msra.mxu0 %v892
    %988 = vmatprep.subr.bf16.mxu0 0
    %989 = vmatpush2.bf16.msra.mxu0 0
    %990 = vmatprep.subr.bf16.mxu0 0
    %991 = vmatpush2.bf16.msra.mxu0 0
    %992 = vmatprep.subr.bf16.mxu0 0
    %993 = vmatpush2.bf16.msra.mxu0 0
    %994 = vmatprep.subr.bf16.mxu0 0
    %995 = vmatpush2.bf16.msra.mxu0 0
    %996 = vmatprep.subr.bf16.mxu0 0
    %997 = vmatpush2.bf16.msra.mxu0 0
    %998 = vmatprep.subr.bf16.mxu0 0
    %999 = vmatpush2.bf16.msra.mxu0 0
    %1000 = vmatprep.subr.bf16.mxu0 0
    %1001 = vmatpush2.bf16.msra.mxu0 0
    %1002 = vmatprep.subr.bf16.mxu0 0
    %1003 = vmatpush2.bf16.msra.mxu0 0
    %1004 = vmatprep.mubr.bf16.mxu0 0
    %1005 = vmatmul.mubr.bf16.gmra.mxu0 0
    %v1006 = vpop.f32.mrf.mxu0
    %v1007 = vadd.f32 0.0, %v1006
    %v1008 = vpop.f32.mrf.mxu0
    %v1009 = vadd.f32 0.0, %v1008
    %v1010 = vpop.f32.mrf.mxu0
    %v1011 = vpop.f32.mrf.mxu0
    %1012 = vdwg.mxu0
    %1013 = vmatprep.subr.bf16.mxu0 %v930
    %1014 = vmatpush1.bf16.msra.mxu0 %v929
    %1015 = vmatprep.subr.bf16.mxu0 %v925
    %1016 = vmatpush1.bf16.msra.mxu0 %v924
    %1017 = vmatprep.subr.bf16.mxu0 %v920
    %1018 = vmatpush1.bf16.msra.mxu0 %v919
    %1019 = vmatprep.subr.bf16.mxu0 %v915
    %1020 = vmatpush1.bf16.msra.mxu0 %v914
    %1021 = vmatprep.subr.bf16.mxu0 %v910
    %1022 = vmatpush1.bf16.msra.mxu0 %v909
    %1023 = vmatprep.subr.bf16.mxu0 %v905
    %1024 = vmatpush1.bf16.msra.mxu0 %v904
    %1025 = vmatprep.subr.bf16.mxu0 %v900
    %1026 = vmatpush1.bf16.msra.mxu0 %v899
    %1027 = vmatprep.subr.bf16.mxu0 %v895
    %1028 = vmatpush1.bf16.msra.mxu0 %v894
    %1029 = vmatprep.subr.bf16.mxu0 0
    %1030 = vmatpush2.bf16.msra.mxu0 0
    %1031 = vmatprep.subr.bf16.mxu0 0
    %1032 = vmatpush2.bf16.msra.mxu0 0
    %1033 = vmatprep.subr.bf16.mxu0 0
    %1034 = vmatpush2.bf16.msra.mxu0 0
    %1035 = vmatprep.subr.bf16.mxu0 0
    %1036 = vmatpush2.bf16.msra.mxu0 0
    %1037 = vmatprep.subr.bf16.mxu0 0
    %1038 = vmatpush2.bf16.msra.mxu0 0
    %1039 = vmatprep.subr.bf16.mxu0 0
    %1040 = vmatpush2.bf16.msra.mxu0 0
    %1041 = vmatprep.subr.bf16.mxu0 0
    %1042 = vmatpush2.bf16.msra.mxu0 0
    %1043 = vmatprep.subr.bf16.mxu0 0
    %1044 = vmatpush2.bf16.msra.mxu0 0
    %1045 = vmatprep.mubr.bf16.mxu0 0
    %1046 = vmatmul.mubr.bf16.gmra.mxu0 0
    %v1047 = vpop.f32.mrf.mxu0
    %v1048 = vadd.f32 0.0, %v1047
    %v1049 = vpop.f32.mrf.mxu0
    %v1050 = vadd.f32 0.0, %v1049
    %v1051 = vpop.f32.mrf.mxu0
    %v1052 = vpop.f32.mrf.mxu0
    %1053 = vdwg.mxu0
    %1054 = vmatprep.subr.bf16.mxu0 0
    %1055 = vmatpush1.bf16.msra.mxu0 %v931
    %1056 = vmatprep.subr.bf16.mxu0 0
    %1057 = vmatpush1.bf16.msra.mxu0 %v926
    %1058 = vmatprep.subr.bf16.mxu0 0
    %1059 = vmatpush1.bf16.msra.mxu0 %v921
    %1060 = vmatprep.subr.bf16.mxu0 0
    %1061 = vmatpush1.bf16.msra.mxu0 %v916
    %1062 = vmatprep.subr.bf16.mxu0 0
    %1063 = vmatpush1.bf16.msra.mxu0 %v911
    %1064 = vmatprep.subr.bf16.mxu0 0
    %1065 = vmatpush1.bf16.msra.mxu0 %v906
    %1066 = vmatprep.subr.bf16.mxu0 0
    %1067 = vmatpush1.bf16.msra.mxu0 %v901
    %1068 = vmatprep.subr.bf16.mxu0 0
    %1069 = vmatpush1.bf16.msra.mxu0 %v896
    %1070 = vmatprep.subr.bf16.mxu0 0
    %1071 = vmatpush2.bf16.msra.mxu0 0
    %1072 = vmatprep.subr.bf16.mxu0 0
    %1073 = vmatpush2.bf16.msra.mxu0 0
    %1074 = vmatprep.subr.bf16.mxu0 0
    %1075 = vmatpush2.bf16.msra.mxu0 0
    %1076 = vmatprep.subr.bf16.mxu0 0
    %1077 = vmatpush2.bf16.msra.mxu0 0
    %1078 = vmatprep.subr.bf16.mxu0 0
    %1079 = vmatpush2.bf16.msra.mxu0 0
    %1080 = vmatprep.subr.bf16.mxu0 0
    %1081 = vmatpush2.bf16.msra.mxu0 0
    %1082 = vmatprep.subr.bf16.mxu0 0
    %1083 = vmatpush2.bf16.msra.mxu0 0
    %1084 = vmatprep.subr.bf16.mxu0 0
    %1085 = vmatpush2.bf16.msra.mxu0 0
    %1086 = vmatprep.mubr.bf16.mxu0 0
    %1087 = vmatmul.mubr.bf16.gmra.mxu0 0
    %v1088 = vpop.f32.mrf.mxu0
    %v1089 = vadd.f32 0.0, %v1088
    %v1090 = vpop.f32.mrf.mxu0
    %v1091 = vpop.f32.mrf.mxu0
    %v1092 = vpop.f32.mrf.mxu0
    %1093 = vdwg.mxu0
    %v1094 = vld [vmem:[#allocation3] sm:$0xff]
    %v1095 = vld [vmem:[#allocation3 + $0x8] sm:$0xff]
    %v1098 = vunpack.c.l.s4 1966171168
    %v1099 = vunpack.c.0.s8 %v1098
    %v1100 = vlaneseq
    %v1101 = vshrl.u32 %v1100, 7
    %v1102 = vsub.s32 %v1099, %v1101
    %v1103 = vrot.slane %v1007, %v1102
    %v1104 = vcombine.high %v1103, %v1103
    %v1106 = vunpack.c.l.s4 1966171168
    %v1107 = vunpack.c.0.s8 %v1106
    %v1108 = vlaneseq
    %v1109 = vshrl.u32 %v1108, 7
    %v1110 = vsub.s32 %v1107, %v1109
    %v1111 = vrot.slane %v1103, %v1110
    %v1113 = vunpack.c.l.s4 1966171168
    %v1114 = vunpack.c.0.s8 %v1113
    %v1115 = vlaneseq
    %v1116 = vshrl.u32 %v1115, 7
    %v1117 = vsub.s32 %v1114, %v1116
    %v1118 = vrot.slane %v1104, %v1117
    %v1119 = vlaneseq
    %v1120 = vshrl.u32 %v1119, 7
    %v1121 = vsub.s32 0, %v1120
    %v1122 = vrot.slane %v1111, %v1121
    %v1123 = vlaneseq
    %v1124 = vshrl.u32 %v1123, 7
    %v1125 = vsub.s32 0, %v1124
    %v1126 = vrot.slane %v1118, %v1125
    %v1129 = vadd.f32 %v1094, %v1122
    %v1130 = vadd.f32 %v1095, %v1126
    %v1131 = vtanh.pop %v1129
    %v1132 = vtanh.pop %v1130
    %v1134 = vlaneseq
    %v1135 = vshrl.u32 %v1134, 7
    %v1136 = vsub.s32 0, %v1135
    %v1137 = vrot.slane %v715, %v1136
    %v1139 = vmul.f32 %v1131, %v1137
    %v1140 = vmul.f32 %v1132, %v1137
    %1141 = vadd.xlane.f32.xlu0 %v1139
    %v1142 = vpop.xlane.xlu0 %1141
    %1143 = vadd.xlane.f32.xlu0 %v1140
    %v1144 = vpop.xlane.xlu0 %1143
    %v1145 = vrot.slane %v1142, 4
    %v1146 = vmax.f32 %v1142, %v1145
    %v1147 = vrot.slane %v1146, 2
    %v1148 = vmax.f32 %v1146, %v1147
    %v1149 = vrot.slane %v1148, 1
    %v1150 = vmax.f32 %v1148, %v1149
    %v1151 = vrot.slane %v1144, 4
    %v1152 = vmax.f32 %v1144, %v1151
    %v1153 = vrot.slane %v1152, 2
    %v1154 = vmax.f32 %v1152, %v1153
    %v1155 = vrot.slane %v1154, 1
    %v1156 = vmax.f32 %v1154, %v1155
    %v1157 = vsub.f32 %v1142, %v1150
    %v1158 = vsub.f32 %v1144, %v1156
    %v1159 = vmul.f32 %v1157, 1.442695
    %v1160 = vpow.pop %v1159
    %v1161 = vmul.f32 %v1158, 1.442695
    %v1162 = vpow.pop %v1161
    %v1163 = vrot.slane %v1160, 4
    %v1164 = vadd.f32 %v1160, %v1163
    %v1165 = vrot.slane %v1164, 2
    %v1166 = vadd.f32 %v1164, %v1165
    %v1167 = vrot.slane %v1166, 1
    %v1168 = vadd.f32 %v1166, %v1167
    %v1169 = vrot.slane %v1162, 4
    %v1170 = vadd.f32 %v1162, %v1169
    %v1171 = vrot.slane %v1170, 2
    %v1172 = vadd.f32 %v1170, %v1171
    %v1173 = vrot.slane %v1172, 1
    %v1174 = vadd.f32 %v1172, %v1173
    %v1175 = vrcp.pop %v1168
    %v1176 = vrcp.pop %v1174
    %v1177 = vmul.f32 %v1160, %v1175
    %v1178 = vmul.f32 %v1162, %v1176
    %v1179 = vld [vmem:[#allocation2] sm:$0xff]
    %v1180 = vld [vmem:[#allocation2 + $0x8] sm:$0xff]
    %v1181 = vmul.f32 %v1177, %v1179
    %v1182 = vmul.f32 %v1178, %v1180
    %v1183 = vrot.slane %v1181, 4
    %v1184 = vadd.f32 %v1181, %v1183
    %v1185 = vrot.slane %v1184, 2
    %v1186 = vadd.f32 %v1184, %v1185
    %v1187 = vrot.slane %v1186, 1
    %v1188 = vadd.f32 %v1186, %v1187
    %v1189 = vrot.slane %v1182, 4
    %v1190 = vadd.f32 %v1182, %v1189
    %v1191 = vrot.slane %v1190, 2
    %v1192 = vadd.f32 %v1190, %v1191
    %v1193 = vrot.slane %v1192, 1
    %v1194 = vadd.f32 %v1192, %v1193
    %v1195 = vld [vmem:[#allocation15] sm:$0xff]
    %v1196 = vld [vmem:[#allocation15 + $0x8] sm:$0xff]
    %v1197 = vld [vmem:[#allocation15 + $0x10] sm:$0xff]
    %v1198 = vld [vmem:[#allocation15 + $0x18] sm:$0xff]
    %v1199 = vld [vmem:[#allocation15 + $0x20] sm:$0xff]
    %v1200 = vld [vmem:[#allocation15 + $0x28] sm:$0xff]
    %v1201 = vld [vmem:[#allocation15 + $0x30] sm:$0xff]
    %v1202 = vld [vmem:[#allocation15 + $0x38] sm:$0xff]
    %v1203 = vld [vmem:[#allocation15 + $0x40] sm:$0xff]
    %v1204 = vld [vmem:[#allocation15 + $0x48] sm:$0xff]
    %v1205 = vld [vmem:[#allocation15 + $0x50] sm:$0xff]
    %v1206 = vld [vmem:[#allocation15 + $0x58] sm:$0xff]
    %v1207 = vld [vmem:[#allocation15 + $0x60] sm:$0xff]
    %v1208 = vld [vmem:[#allocation15 + $0x68] sm:$0xff]
    %v1209 = vld [vmem:[#allocation15 + $0x70] sm:$0xff]
    %v1210 = vld [vmem:[#allocation15 + $0x78] sm:$0xff]
    %v1211 = vld [vmem:[#allocation15 + $0x80] sm:$0xff]
    %v1212 = vld [vmem:[#allocation15 + $0x88] sm:$0xff]
    %v1213 = vld [vmem:[#allocation15 + $0x90] sm:$0xff]
    %v1214 = vld [vmem:[#allocation15 + $0x98] sm:$0xff]
    %v1215 = vld [vmem:[#allocation15 + $0xa0] sm:$0xff]
    %v1216 = vld [vmem:[#allocation15 + $0xa8] sm:$0xff]
    %v1217 = vld [vmem:[#allocation15 + $0xb0] sm:$0xff]
    %v1218 = vld [vmem:[#allocation15 + $0xb8] sm:$0xff]
    %v1219 = vld [vmem:[#allocation15 + $0xc0] sm:$0xff]
    %v1220 = vld [vmem:[#allocation15 + $0xc8] sm:$0xff]
    %v1221 = vld [vmem:[#allocation15 + $0xd0] sm:$0xff]
    %v1222 = vld [vmem:[#allocation15 + $0xd8] sm:$0xff]
    %v1223 = vld [vmem:[#allocation15 + $0xe0] sm:$0xff]
    %v1224 = vld [vmem:[#allocation15 + $0xe8] sm:$0xff]
    %v1225 = vld [vmem:[#allocation15 + $0xf0] sm:$0xff]
    %v1226 = vld [vmem:[#allocation15 + $0xf8] sm:$0xff]
    %v1227 = vpack.c.bf16 %v1188, %v1188
    %v1228 = vpack.c.bf16 %v1194, %v1194
    %v1231 = vunpack.c.l.b16 %v1227
    %v1232 = vunpack.c.l.b16 %v1228
    %vm1233 = vcmask 1041409
    %v1234 = vsel %vm1233, %v1232, %v1231
    %v1235 = vpack.c.b16 %v1234, %v1234
    %v1269 = vunpack.c.l.b16 %v1195
    %v1270 = vunpack.c.h.b16 %v1195
    %v1271 = vunpack.c.l.b16 %v1196
    %v1272 = vunpack.c.h.b16 %v1196
    %v1273 = vunpack.c.l.b16 %v1197
    %v1274 = vunpack.c.h.b16 %v1197
    %v1275 = vunpack.c.l.b16 %v1198
    %v1276 = vunpack.c.h.b16 %v1198
    %v1277 = vunpack.c.l.b16 %v1199
    %v1278 = vunpack.c.h.b16 %v1199
    %v1279 = vunpack.c.l.b16 %v1200
    %v1280 = vunpack.c.h.b16 %v1200
    %v1281 = vunpack.c.l.b16 %v1201
    %v1282 = vunpack.c.h.b16 %v1201
    %v1283 = vunpack.c.l.b16 %v1202
    %v1284 = vunpack.c.h.b16 %v1202
    %v1285 = vunpack.c.l.b16 %v1203
    %v1286 = vunpack.c.h.b16 %v1203
    %v1287 = vunpack.c.l.b16 %v1204
    %v1288 = vunpack.c.h.b16 %v1204
    %v1289 = vunpack.c.l.b16 %v1205
    %v1290 = vunpack.c.h.b16 %v1205
    %v1291 = vunpack.c.l.b16 %v1206
    %v1292 = vunpack.c.h.b16 %v1206
    %v1293 = vunpack.c.l.b16 %v1207
    %v1294 = vunpack.c.h.b16 %v1207
    %v1295 = vunpack.c.l.b16 %v1208
    %v1296 = vunpack.c.h.b16 %v1208
    %v1297 = vunpack.c.l.b16 %v1209
    %v1298 = vunpack.c.h.b16 %v1209
    %v1299 = vunpack.c.l.b16 %v1210
    %v1300 = vunpack.c.h.b16 %v1210
    %v1301 = vunpack.c.l.b16 %v1211
    %v1302 = vunpack.c.h.b16 %v1211
    %v1303 = vunpack.c.l.b16 %v1212
    %v1304 = vunpack.c.h.b16 %v1212
    %v1305 = vunpack.c.l.b16 %v1213
    %v1306 = vunpack.c.h.b16 %v1213
    %v1307 = vunpack.c.l.b16 %v1214
    %v1308 = vunpack.c.h.b16 %v1214
    %v1309 = vunpack.c.l.b16 %v1215
    %v1310 = vunpack.c.h.b16 %v1215
    %v1311 = vunpack.c.l.b16 %v1216
    %v1312 = vunpack.c.h.b16 %v1216
    %v1313 = vunpack.c.l.b16 %v1217
    %v1314 = vunpack.c.h.b16 %v1217
    %v1315 = vunpack.c.l.b16 %v1218
    %v1316 = vunpack.c.h.b16 %v1218
    %v1317 = vunpack.c.l.b16 %v1219
    %v1318 = vunpack.c.h.b16 %v1219
    %v1319 = vunpack.c.l.b16 %v1220
    %v1320 = vunpack.c.h.b16 %v1220
    %v1321 = vunpack.c.l.b16 %v1221
    %v1322 = vunpack.c.h.b16 %v1221
    %v1323 = vunpack.c.l.b16 %v1222
    %v1324 = vunpack.c.h.b16 %v1222
    %v1325 = vunpack.c.l.b16 %v1223
    %v1326 = vunpack.c.h.b16 %v1223
    %v1327 = vunpack.c.l.b16 %v1224
    %v1328 = vunpack.c.h.b16 %v1224
    %v1329 = vunpack.c.l.b16 %v1225
    %v1330 = vunpack.c.h.b16 %v1225
    %v1331 = vunpack.c.l.b16 %v1226
    %v1332 = vunpack.c.h.b16 %v1226
    %v1333 = vpack.c.b16 %v1273, %v1269
    %v1334 = vpack.c.b16 %v1274, %v1270
    %v1335 = vpack.c.b16 %v1275, %v1271
    %v1336 = vpack.c.b16 %v1276, %v1272
    %v1337 = vpack.c.b16 %v1281, %v1277
    %v1338 = vpack.c.b16 %v1282, %v1278
    %v1339 = vpack.c.b16 %v1283, %v1279
    %v1340 = vpack.c.b16 %v1284, %v1280
    %v1341 = vpack.c.b16 %v1289, %v1285
    %v1342 = vpack.c.b16 %v1290, %v1286
    %v1343 = vpack.c.b16 %v1291, %v1287
    %v1344 = vpack.c.b16 %v1292, %v1288
    %v1345 = vpack.c.b16 %v1297, %v1293
    %v1346 = vpack.c.b16 %v1298, %v1294
    %v1347 = vpack.c.b16 %v1299, %v1295
    %v1348 = vpack.c.b16 %v1300, %v1296
    %v1349 = vpack.c.b16 %v1305, %v1301
    %v1350 = vpack.c.b16 %v1306, %v1302
    %v1351 = vpack.c.b16 %v1307, %v1303
    %v1352 = vpack.c.b16 %v1308, %v1304
    %v1353 = vpack.c.b16 %v1313, %v1309
    %v1354 = vpack.c.b16 %v1314, %v1310
    %v1355 = vpack.c.b16 %v1315, %v1311
    %v1356 = vpack.c.b16 %v1316, %v1312
    %v1357 = vpack.c.b16 %v1321, %v1317
    %v1358 = vpack.c.b16 %v1322, %v1318
    %v1359 = vpack.c.b16 %v1323, %v1319
    %v1360 = vpack.c.b16 %v1324, %v1320
    %v1361 = vpack.c.b16 %v1329, %v1325
    %v1362 = vpack.c.b16 %v1330, %v1326
    %v1363 = vpack.c.b16 %v1331, %v1327
    %v1364 = vpack.c.b16 %v1332, %v1328
    %1397 = vmatprep.subr.bf16.mxu0 %v1362
    %1398 = vmatpush1.bf16.msra.mxu0 %v1361
    %1399 = vmatprep.subr.bf16.mxu0 %v1358
    %1400 = vmatpush1.bf16.msra.mxu0 %v1357
    %1401 = vmatprep.subr.bf16.mxu0 %v1354
    %1402 = vmatpush1.bf16.msra.mxu0 %v1353
    %1403 = vmatprep.subr.bf16.mxu0 %v1350
    %1404 = vmatpush1.bf16.msra.mxu0 %v1349
    %1405 = vmatprep.subr.bf16.mxu0 %v1346
    %1406 = vmatpush1.bf16.msra.mxu0 %v1345
    %1407 = vmatprep.subr.bf16.mxu0 %v1342
    %1408 = vmatpush1.bf16.msra.mxu0 %v1341
    %1409 = vmatprep.subr.bf16.mxu0 %v1338
    %1410 = vmatpush1.bf16.msra.mxu0 %v1337
    %1411 = vmatprep.subr.bf16.mxu0 %v1334
    %1412 = vmatpush1.bf16.msra.mxu0 %v1333
    %1413 = vmatprep.subr.bf16.mxu0 0
    %1414 = vmatpush2.bf16.msra.mxu0 0
    %1415 = vmatprep.subr.bf16.mxu0 0
    %1416 = vmatpush2.bf16.msra.mxu0 0
    %1417 = vmatprep.subr.bf16.mxu0 0
    %1418 = vmatpush2.bf16.msra.mxu0 0
    %1419 = vmatprep.subr.bf16.mxu0 0
    %1420 = vmatpush2.bf16.msra.mxu0 0
    %1421 = vmatprep.subr.bf16.mxu0 0
    %1422 = vmatpush2.bf16.msra.mxu0 0
    %1423 = vmatprep.subr.bf16.mxu0 0
    %1424 = vmatpush2.bf16.msra.mxu0 0
    %1425 = vmatprep.subr.bf16.mxu0 0
    %1426 = vmatpush2.bf16.msra.mxu0 0
    %1427 = vmatprep.subr.bf16.mxu0 0
    %1428 = vmatpush2.bf16.msra.mxu0 0
    %1429 = vmatprep.mubr.bf16.mxu0 0
    %1430 = vmatmul.mubr.bf16.gmra.mxu0 %v1235
    %v1431 = vpop.f32.mrf.mxu0
    %v1432 = vadd.f32 %v1009, %v1431
    %v1433 = vpop.f32.mrf.mxu0
    %v1434 = vadd.f32 %v1048, %v1433
    %v1435 = vpop.f32.mrf.mxu0
    %v1436 = vpop.f32.mrf.mxu0
    %1437 = vdwg.mxu0
    %1438 = vmatprep.subr.bf16.mxu0 %v1364
    %1439 = vmatpush1.bf16.msra.mxu0 %v1363
    %1440 = vmatprep.subr.bf16.mxu0 %v1360
    %1441 = vmatpush1.bf16.msra.mxu0 %v1359
    %1442 = vmatprep.subr.bf16.mxu0 %v1356
    %1443 = vmatpush1.bf16.msra.mxu0 %v1355
    %1444 = vmatprep.subr.bf16.mxu0 %v1352
    %1445 = vmatpush1.bf16.msra.mxu0 %v1351
    %1446 = vmatprep.subr.bf16.mxu0 %v1348
    %1447 = vmatpush1.bf16.msra.mxu0 %v1347
    %1448 = vmatprep.subr.bf16.mxu0 %v1344
    %1449 = vmatpush1.bf16.msra.mxu0 %v1343
    %1450 = vmatprep.subr.bf16.mxu0 %v1340
    %1451 = vmatpush1.bf16.msra.mxu0 %v1339
    %1452 = vmatprep.subr.bf16.mxu0 %v1336
    %1453 = vmatpush1.bf16.msra.mxu0 %v1335
    %1454 = vmatprep.subr.bf16.mxu0 0
    %1455 = vmatpush2.bf16.msra.mxu0 0
    %1456 = vmatprep.subr.bf16.mxu0 0
    %1457 = vmatpush2.bf16.msra.mxu0 0
    %1458 = vmatprep.subr.bf16.mxu0 0
    %1459 = vmatpush2.bf16.msra.mxu0 0
    %1460 = vmatprep.subr.bf16.mxu0 0
    %1461 = vmatpush2.bf16.msra.mxu0 0
    %1462 = vmatprep.subr.bf16.mxu0 0
    %1463 = vmatpush2.bf16.msra.mxu0 0
    %1464 = vmatprep.subr.bf16.mxu0 0
    %1465 = vmatpush2.bf16.msra.mxu0 0
    %1466 = vmatprep.subr.bf16.mxu0 0
    %1467 = vmatpush2.bf16.msra.mxu0 0
    %1468 = vmatprep.subr.bf16.mxu0 0
    %1469 = vmatpush2.bf16.msra.mxu0 0
    %1470 = vmatprep.mubr.bf16.mxu0 0
    %1471 = vmatmul.mubr.bf16.gmra.mxu0 %v1235
    %v1472 = vpop.f32.mrf.mxu0
    %v1473 = vadd.f32 %v1050, %v1472
    %v1474 = vpop.f32.mrf.mxu0
    %v1475 = vadd.f32 %v1089, %v1474
    %v1476 = vpop.f32.mrf.mxu0
    %v1477 = vpop.f32.mrf.mxu0
    %1478 = vdwg.mxu0
    %v1479 = vld [vmem:[#allocation4] sm:$0x11]
    %v1480 = vld [vmem:[#allocation4 + $0x8] sm:$0x11]
    %v1481 = vld [vmem:[#allocation4 + $0x10] sm:$0x11]
    %v1482 = vld [vmem:[#allocation4 + $0x18] sm:$0x11]
    %v1483 = vunpack.c.l.bf16 %v1479
    %v1484 = vunpack.c.h.bf16 %v1479
    %v1485 = vunpack.c.l.bf16 %v1480
    %v1486 = vunpack.c.h.bf16 %v1480
    %v1487 = vunpack.c.l.bf16 %v1481
    %v1488 = vunpack.c.h.bf16 %v1481
    %v1489 = vunpack.c.l.bf16 %v1482
    %v1490 = vunpack.c.h.bf16 %v1482
    %v1499 = vrot.slane %v1487, 7
    %v1500 = vsel %vm1233, %v1499, %v1483
    %v1501 = vrot.slane %v1488, 7
    %v1502 = vsel %vm1233, %v1501, %v1484
    %v1503 = vrot.slane %v1489, 7
    %v1504 = vsel %vm1233, %v1503, %v1485
    %v1505 = vrot.slane %v1490, 7
    %v1506 = vsel %vm1233, %v1505, %v1486
    %v1511 = vadd.f32 %v1432, %v1500
    %v1512 = vadd.f32 %v1434, %v1502
    %v1513 = vadd.f32 %v1473, %v1504
    %v1514 = vadd.f32 %v1475, %v1506
    %v1515 = vxor.u32 %v1511, 2147483648
    %v1516 = vmul.f32 %v1515, 1.442695
    %v1517 = vpow.pop %v1516
    %v1518 = vadd.f32 %v1517, 1.0
    %v1519 = vrcp.pop %v1518
    %v1520 = vmul.f32 1.0, %v1519
    %v1521 = vxor.u32 %v1512, 2147483648
    %v1522 = vmul.f32 %v1521, 1.442695
    %v1523 = vpow.pop %v1522
    %v1524 = vadd.f32 %v1523, 1.0
    %v1525 = vrcp.pop %v1524
    %v1526 = vmul.f32 1.0, %v1525
    %v1527 = vtanh.pop %v1513
    %v1528 = vxor.u32 %v1514, 2147483648
    %v1529 = vmul.f32 %v1528, 1.442695
    %v1530 = vpow.pop %v1529
    %v1531 = vadd.f32 %v1530, 1.0
    %v1532 = vrcp.pop %v1531
    %v1533 = vmul.f32 1.0, %v1532
    %v1534 = vmul.f32 %v1526, 0.0
    %v1535 = vmul.f32 %v1520, %v1527
    %v1536 = vadd.f32 %v1534, %v1535
    %v1537 = vtanh.pop %v1536
    %v1538 = vmul.f32 %v1533, %v1537
    %v1541 = vunpack.c.l.s4 1966171168
    %v1542 = vunpack.c.0.s8 %v1541
    %v1543 = vlaneseq
    %v1544 = vshrl.u32 %v1543, 7
    %v1545 = vsub.s32 %v1542, %v1544
    %v1546 = vrot.slane %v1538, %v1545
    %v1547 = vcombine.high %v1546, %v1546
    %v1549 = vunpack.c.l.s4 1966171168
    %v1550 = vunpack.c.0.s8 %v1549
    %v1551 = vlaneseq
    %v1552 = vshrl.u32 %v1551, 7
    %v1553 = vsub.s32 %v1550, %v1552
    %v1554 = vrot.slane %v1546, %v1553
    %v1556 = vunpack.c.l.s4 1966171168
    %v1557 = vunpack.c.0.s8 %v1556
    %v1558 = vlaneseq
    %v1559 = vshrl.u32 %v1558, 7
    %v1560 = vsub.s32 %v1557, %v1559
    %v1561 = vrot.slane %v1547, %v1560
    %1564 = vst [vmem:[#allocation5] sm:$0x1] %v1554
    %1565 = vst [vmem:[#allocation5 + $0x8] sm:$0x1] %v1561
    %v1566 = vld [vmem:[#allocation14] sm:$0xff]
    %v1567 = vld [vmem:[#allocation14 + $0x8] sm:$0xff]
    %v1568 = vld [vmem:[#allocation14 + $0x10] sm:$0xf]
    %v1569 = vld [vmem:[#allocation14 + $0x14] sm:$0xff]
    %v1570 = vld [vmem:[#allocation14 + $0x1c] sm:$0xff]
    %v1571 = vld [vmem:[#allocation14 + $0x24] sm:$0xf]
    %v1572 = vld [vmem:[#allocation14 + $0x28] sm:$0xff]
    %v1573 = vld [vmem:[#allocation14 + $0x30] sm:$0xff]
    %v1574 = vld [vmem:[#allocation14 + $0x38] sm:$0xf]
    %v1575 = vld [vmem:[#allocation14 + $0x3c] sm:$0xff]
    %v1576 = vld [vmem:[#allocation14 + $0x44] sm:$0xff]
    %v1577 = vld [vmem:[#allocation14 + $0x4c] sm:$0xf]
    %v1578 = vld [vmem:[#allocation14 + $0x50] sm:$0xff]
    %v1579 = vld [vmem:[#allocation14 + $0x58] sm:$0xff]
    %v1580 = vld [vmem:[#allocation14 + $0x60] sm:$0xf]
    %v1581 = vld [vmem:[#allocation14 + $0x64] sm:$0xff]
    %v1582 = vld [vmem:[#allocation14 + $0x6c] sm:$0xff]
    %v1583 = vld [vmem:[#allocation14 + $0x74] sm:$0xf]
    %v1584 = vld [vmem:[#allocation14 + $0x78] sm:$0xff]
    %v1585 = vld [vmem:[#allocation14 + $0x80] sm:$0xff]
    %v1586 = vld [vmem:[#allocation14 + $0x88] sm:$0xf]
    %v1587 = vld [vmem:[#allocation14 + $0x8c] sm:$0xff]
    %v1588 = vld [vmem:[#allocation14 + $0x94] sm:$0xff]
    %v1589 = vld [vmem:[#allocation14 + $0x9c] sm:$0xf]
    %v1590 = vld [vmem:[#allocation14 + $0xa0] sm:$0xff]
    %v1591 = vld [vmem:[#allocation14 + $0xa8] sm:$0xff]
    %v1592 = vld [vmem:[#allocation14 + $0xb0] sm:$0xf]
    %v1593 = vld [vmem:[#allocation14 + $0xb4] sm:$0xff]
    %v1594 = vld [vmem:[#allocation14 + $0xbc] sm:$0xff]
    %v1595 = vld [vmem:[#allocation14 + $0xc4] sm:$0xf]
    %v1596 = vld [vmem:[#allocation14 + $0xc8] sm:$0xff]
    %v1597 = vld [vmem:[#allocation14 + $0xd0] sm:$0xff]
    %v1598 = vld [vmem:[#allocation14 + $0xd8] sm:$0xf]
    %v1599 = vld [vmem:[#allocation14 + $0xdc] sm:$0xff]
    %v1600 = vld [vmem:[#allocation14 + $0xe4] sm:$0xff]
    %v1601 = vld [vmem:[#allocation14 + $0xec] sm:$0xf]
    %v1602 = vld [vmem:[#allocation14 + $0xf0] sm:$0xff]
    %v1603 = vld [vmem:[#allocation14 + $0xf8] sm:$0xff]
    %v1604 = vld [vmem:[#allocation14 + $0x100] sm:$0xf]
    %v1605 = vld [vmem:[#allocation14 + $0x104] sm:$0xff]
    %v1606 = vld [vmem:[#allocation14 + $0x10c] sm:$0xff]
    %v1607 = vld [vmem:[#allocation14 + $0x114] sm:$0xf]
    %v1608 = vld [vmem:[#allocation14 + $0x118] sm:$0xff]
    %v1609 = vld [vmem:[#allocation14 + $0x120] sm:$0xff]
    %v1610 = vld [vmem:[#allocation14 + $0x128] sm:$0xf]
    %v1611 = vld [vmem:[#allocation14 + $0x12c] sm:$0xff]
    %v1612 = vld [vmem:[#allocation14 + $0x134] sm:$0xff]
    %v1613 = vld [vmem:[#allocation14 + $0x13c] sm:$0xf]
    %v1614 = vpack.c.bf16 %v1538, %v1538
    %v1663 = vunpack.c.l.b16 %v1566
    %v1664 = vunpack.c.h.b16 %v1566
    %v1665 = vunpack.c.l.b16 %v1567
    %v1666 = vunpack.c.h.b16 %v1567
    %v1667 = vunpack.c.l.b16 %v1568
    %v1668 = vunpack.c.l.b16 %v1569
    %v1669 = vunpack.c.h.b16 %v1569
    %v1670 = vunpack.c.l.b16 %v1570
    %v1671 = vunpack.c.h.b16 %v1570
    %v1672 = vunpack.c.l.b16 %v1571
    %v1673 = vunpack.c.l.b16 %v1572
    %v1674 = vunpack.c.h.b16 %v1572
    %v1675 = vunpack.c.l.b16 %v1573
    %v1676 = vunpack.c.h.b16 %v1573
    %v1677 = vunpack.c.l.b16 %v1574
    %v1678 = vunpack.c.l.b16 %v1575
    %v1679 = vunpack.c.h.b16 %v1575
    %v1680 = vunpack.c.l.b16 %v1576
    %v1681 = vunpack.c.h.b16 %v1576
    %v1682 = vunpack.c.l.b16 %v1577
    %v1683 = vunpack.c.l.b16 %v1578
    %v1684 = vunpack.c.h.b16 %v1578
    %v1685 = vunpack.c.l.b16 %v1579
    %v1686 = vunpack.c.h.b16 %v1579
    %v1687 = vunpack.c.l.b16 %v1580
    %v1688 = vunpack.c.l.b16 %v1581
    %v1689 = vunpack.c.h.b16 %v1581
    %v1690 = vunpack.c.l.b16 %v1582
    %v1691 = vunpack.c.h.b16 %v1582
    %v1692 = vunpack.c.l.b16 %v1583
    %v1693 = vunpack.c.l.b16 %v1584
    %v1694 = vunpack.c.h.b16 %v1584
    %v1695 = vunpack.c.l.b16 %v1585
    %v1696 = vunpack.c.h.b16 %v1585
    %v1697 = vunpack.c.l.b16 %v1586
    %v1698 = vunpack.c.l.b16 %v1587
    %v1699 = vunpack.c.h.b16 %v1587
    %v1700 = vunpack.c.l.b16 %v1588
    %v1701 = vunpack.c.h.b16 %v1588
    %v1702 = vunpack.c.l.b16 %v1589
    %v1703 = vunpack.c.l.b16 %v1590
    %v1704 = vunpack.c.h.b16 %v1590
    %v1705 = vunpack.c.l.b16 %v1591
    %v1706 = vunpack.c.h.b16 %v1591
    %v1707 = vunpack.c.l.b16 %v1592
    %v1708 = vunpack.c.l.b16 %v1593
    %v1709 = vunpack.c.h.b16 %v1593
    %v1710 = vunpack.c.l.b16 %v1594
    %v1711 = vunpack.c.h.b16 %v1594
    %v1712 = vunpack.c.l.b16 %v1595
    %v1713 = vunpack.c.l.b16 %v1596
    %v1714 = vunpack.c.h.b16 %v1596
    %v1715 = vunpack.c.l.b16 %v1597
    %v1716 = vunpack.c.h.b16 %v1597
    %v1717 = vunpack.c.l.b16 %v1598
    %v1718 = vunpack.c.l.b16 %v1599
    %v1719 = vunpack.c.h.b16 %v1599
    %v1720 = vunpack.c.l.b16 %v1600
    %v1721 = vunpack.c.h.b16 %v1600
    %v1722 = vunpack.c.l.b16 %v1601
    %v1723 = vunpack.c.l.b16 %v1602
    %v1724 = vunpack.c.h.b16 %v1602
    %v1725 = vunpack.c.l.b16 %v1603
    %v1726 = vunpack.c.h.b16 %v1603
    %v1727 = vunpack.c.l.b16 %v1604
    %v1728 = vunpack.c.l.b16 %v1605
    %v1729 = vunpack.c.h.b16 %v1605
    %v1730 = vunpack.c.l.b16 %v1606
    %v1731 = vunpack.c.h.b16 %v1606
    %v1732 = vunpack.c.l.b16 %v1607
    %v1733 = vunpack.c.l.b16 %v1608
    %v1734 = vunpack.c.h.b16 %v1608
    %v1735 = vunpack.c.l.b16 %v1609
    %v1736 = vunpack.c.h.b16 %v1609
    %v1737 = vunpack.c.l.b16 %v1610
    %v1738 = vunpack.c.l.b16 %v1611
    %v1739 = vunpack.c.h.b16 %v1611
    %v1740 = vunpack.c.l.b16 %v1612
    %v1741 = vunpack.c.h.b16 %v1612
    %v1742 = vunpack.c.l.b16 %v1613
    %v1743 = vpack.c.b16 %v1668, %v1663
    %v1744 = vpack.c.b16 %v1669, %v1664
    %v1745 = vpack.c.b16 %v1670, %v1665
    %v1746 = vpack.c.b16 %v1671, %v1666
    %v1747 = vpack.c.b16 %v1672, %v1667
    %v1748 = vpack.c.b16 %v1678, %v1673
    %v1749 = vpack.c.b16 %v1679, %v1674
    %v1750 = vpack.c.b16 %v1680, %v1675
    %v1751 = vpack.c.b16 %v1681, %v1676
    %v1752 = vpack.c.b16 %v1682, %v1677
    %v1753 = vpack.c.b16 %v1688, %v1683
    %v1754 = vpack.c.b16 %v1689, %v1684
    %v1755 = vpack.c.b16 %v1690, %v1685
    %v1756 = vpack.c.b16 %v1691, %v1686
    %v1757 = vpack.c.b16 %v1692, %v1687
    %v1758 = vpack.c.b16 %v1698, %v1693
    %v1759 = vpack.c.b16 %v1699, %v1694
    %v1760 = vpack.c.b16 %v1700, %v1695
    %v1761 = vpack.c.b16 %v1701, %v1696
    %v1762 = vpack.c.b16 %v1702, %v1697
    %v1763 = vpack.c.b16 %v1708, %v1703
    %v1764 = vpack.c.b16 %v1709, %v1704
    %v1765 = vpack.c.b16 %v1710, %v1705
    %v1766 = vpack.c.b16 %v1711, %v1706
    %v1767 = vpack.c.b16 %v1712, %v1707
    %v1768 = vpack.c.b16 %v1718, %v1713
    %v1769 = vpack.c.b16 %v1719, %v1714
    %v1770 = vpack.c.b16 %v1720, %v1715
    %v1771 = vpack.c.b16 %v1721, %v1716
    %v1772 = vpack.c.b16 %v1722, %v1717
    %v1773 = vpack.c.b16 %v1728, %v1723
    %v1774 = vpack.c.b16 %v1729, %v1724
    %v1775 = vpack.c.b16 %v1730, %v1725
    %v1776 = vpack.c.b16 %v1731, %v1726
    %v1777 = vpack.c.b16 %v1732, %v1727
    %v1778 = vpack.c.b16 %v1738, %v1733
    %v1779 = vpack.c.b16 %v1739, %v1734
    %v1780 = vpack.c.b16 %v1740, %v1735
    %v1781 = vpack.c.b16 %v1741, %v1736
    %v1782 = vpack.c.b16 %v1742, %v1737
    %1823 = vmatprep.subr.bf16.mxu0 %v1779
    %1824 = vmatpush1.bf16.msra.mxu0 %v1778
    %1825 = vmatprep.subr.bf16.mxu0 %v1774
    %1826 = vmatpush1.bf16.msra.mxu0 %v1773
    %1827 = vmatprep.subr.bf16.mxu0 %v1769
    %1828 = vmatpush1.bf16.msra.mxu0 %v1768
    %1829 = vmatprep.subr.bf16.mxu0 %v1764
    %1830 = vmatpush1.bf16.msra.mxu0 %v1763
    %1831 = vmatprep.subr.bf16.mxu0 %v1759
    %1832 = vmatpush1.bf16.msra.mxu0 %v1758
    %1833 = vmatprep.subr.bf16.mxu0 %v1754
    %1834 = vmatpush1.bf16.msra.mxu0 %v1753
    %1835 = vmatprep.subr.bf16.mxu0 %v1749
    %1836 = vmatpush1.bf16.msra.mxu0 %v1748
    %1837 = vmatprep.subr.bf16.mxu0 %v1744
    %1838 = vmatpush1.bf16.msra.mxu0 %v1743
    %1839 = vmatprep.subr.bf16.mxu0 0
    %1840 = vmatpush2.bf16.msra.mxu0 0
    %1841 = vmatprep.subr.bf16.mxu0 0
    %1842 = vmatpush2.bf16.msra.mxu0 0
    %1843 = vmatprep.subr.bf16.mxu0 0
    %1844 = vmatpush2.bf16.msra.mxu0 0
    %1845 = vmatprep.subr.bf16.mxu0 0
    %1846 = vmatpush2.bf16.msra.mxu0 0
    %1847 = vmatprep.subr.bf16.mxu0 0
    %1848 = vmatpush2.bf16.msra.mxu0 0
    %1849 = vmatprep.subr.bf16.mxu0 0
    %1850 = vmatpush2.bf16.msra.mxu0 0
    %1851 = vmatprep.subr.bf16.mxu0 0
    %1852 = vmatpush2.bf16.msra.mxu0 0
    %1853 = vmatprep.subr.bf16.mxu0 0
    %1854 = vmatpush2.bf16.msra.mxu0 0
    %1855 = vmatprep.mubr.bf16.mxu0 0
    %1856 = vmatmul.mubr.bf16.gmra.mxu0 %v1614
    %v1857 = vpop.f32.mrf.mxu0
    %v1858 = vadd.f32 0.0, %v1857
    %v1859 = vpop.f32.mrf.mxu0
    %v1860 = vadd.f32 0.0, %v1859
    %v1861 = vpop.f32.mrf.mxu0
    %v1862 = vpop.f32.mrf.mxu0
    %1863 = vdwg.mxu0
    %1864 = vmatprep.subr.bf16.mxu0 %v1781
    %1865 = vmatpush1.bf16.msra.mxu0 %v1780
    %1866 = vmatprep.subr.bf16.mxu0 %v1776
    %1867 = vmatpush1.bf16.msra.mxu0 %v1775
    %1868 = vmatprep.subr.bf16.mxu0 %v1771
    %1869 = vmatpush1.bf16.msra.mxu0 %v1770
    %1870 = vmatprep.subr.bf16.mxu0 %v1766
    %1871 = vmatpush1.bf16.msra.mxu0 %v1765
    %1872 = vmatprep.subr.bf16.mxu0 %v1761
    %1873 = vmatpush1.bf16.msra.mxu0 %v1760
    %1874 = vmatprep.subr.bf16.mxu0 %v1756
    %1875 = vmatpush1.bf16.msra.mxu0 %v1755
    %1876 = vmatprep.subr.bf16.mxu0 %v1751
    %1877 = vmatpush1.bf16.msra.mxu0 %v1750
    %1878 = vmatprep.subr.bf16.mxu0 %v1746
    %1879 = vmatpush1.bf16.msra.mxu0 %v1745
    %1880 = vmatprep.subr.bf16.mxu0 0
    %1881 = vmatpush2.bf16.msra.mxu0 0
    %1882 = vmatprep.subr.bf16.mxu0 0
    %1883 = vmatpush2.bf16.msra.mxu0 0
    %1884 = vmatprep.subr.bf16.mxu0 0
    %1885 = vmatpush2.bf16.msra.mxu0 0
    %1886 = vmatprep.subr.bf16.mxu0 0
    %1887 = vmatpush2.bf16.msra.mxu0 0
    %1888 = vmatprep.subr.bf16.mxu0 0
    %1889 = vmatpush2.bf16.msra.mxu0 0
    %1890 = vmatprep.subr.bf16.mxu0 0
    %1891 = vmatpush2.bf16.msra.mxu0 0
    %1892 = vmatprep.subr.bf16.mxu0 0
    %1893 = vmatpush2.bf16.msra.mxu0 0
    %1894 = vmatprep.subr.bf16.mxu0 0
    %1895 = vmatpush2.bf16.msra.mxu0 0
    %1896 = vmatprep.mubr.bf16.mxu0 0
    %1897 = vmatmul.mubr.bf16.gmra.mxu0 %v1614
    %v1898 = vpop.f32.mrf.mxu0
    %v1899 = vadd.f32 0.0, %v1898
    %v1900 = vpop.f32.mrf.mxu0
    %v1901 = vadd.f32 0.0, %v1900
    %v1902 = vpop.f32.mrf.mxu0
    %v1903 = vpop.f32.mrf.mxu0
    %1904 = vdwg.mxu0
    %1905 = vmatprep.subr.bf16.mxu0 0
    %1906 = vmatpush1.bf16.msra.mxu0 %v1782
    %1907 = vmatprep.subr.bf16.mxu0 0
    %1908 = vmatpush1.bf16.msra.mxu0 %v1777
    %1909 = vmatprep.subr.bf16.mxu0 0
    %1910 = vmatpush1.bf16.msra.mxu0 %v1772
    %1911 = vmatprep.subr.bf16.mxu0 0
    %1912 = vmatpush1.bf16.msra.mxu0 %v1767
    %1913 = vmatprep.subr.bf16.mxu0 0
    %1914 = vmatpush1.bf16.msra.mxu0 %v1762
    %1915 = vmatprep.subr.bf16.mxu0 0
    %1916 = vmatpush1.bf16.msra.mxu0 %v1757
    %1917 = vmatprep.subr.bf16.mxu0 0
    %1918 = vmatpush1.bf16.msra.mxu0 %v1752
    %1919 = vmatprep.subr.bf16.mxu0 0
    %1920 = vmatpush1.bf16.msra.mxu0 %v1747
    %1921 = vmatprep.subr.bf16.mxu0 0
    %1922 = vmatpush2.bf16.msra.mxu0 0
    %1923 = vmatprep.subr.bf16.mxu0 0
    %1924 = vmatpush2.bf16.msra.mxu0 0
    %1925 = vmatprep.subr.bf16.mxu0 0
    %1926 = vmatpush2.bf16.msra.mxu0 0
    %1927 = vmatprep.subr.bf16.mxu0 0
    %1928 = vmatpush2.bf16.msra.mxu0 0
    %1929 = vmatprep.subr.bf16.mxu0 0
    %1930 = vmatpush2.bf16.msra.mxu0 0
    %1931 = vmatprep.subr.bf16.mxu0 0
    %1932 = vmatpush2.bf16.msra.mxu0 0
    %1933 = vmatprep.subr.bf16.mxu0 0
    %1934 = vmatpush2.bf16.msra.mxu0 0
    %1935 = vmatprep.subr.bf16.mxu0 0
    %1936 = vmatpush2.bf16.msra.mxu0 0
    %1937 = vmatprep.mubr.bf16.mxu0 0
    %1938 = vmatmul.mubr.bf16.gmra.mxu0 %v1614
    %v1939 = vpop.f32.mrf.mxu0
    %v1940 = vadd.f32 0.0, %v1939
    %v1941 = vpop.f32.mrf.mxu0
    %v1942 = vpop.f32.mrf.mxu0
    %v1943 = vpop.f32.mrf.mxu0
    %1944 = vdwg.mxu0
    %v1945 = vld [vmem:[#allocation3] sm:$0xff]
    %v1946 = vld [vmem:[#allocation3 + $0x8] sm:$0xff]
    %v1949 = vunpack.c.l.s4 1966171168
    %v1950 = vunpack.c.0.s8 %v1949
    %v1951 = vlaneseq
    %v1952 = vshrl.u32 %v1951, 7
    %v1953 = vsub.s32 %v1950, %v1952
    %v1954 = vrot.slane %v1858, %v1953
    %v1955 = vcombine.high %v1954, %v1954
    %v1957 = vunpack.c.l.s4 1966171168
    %v1958 = vunpack.c.0.s8 %v1957
    %v1959 = vlaneseq
    %v1960 = vshrl.u32 %v1959, 7
    %v1961 = vsub.s32 %v1958, %v1960
    %v1962 = vrot.slane %v1954, %v1961
    %v1964 = vunpack.c.l.s4 1966171168
    %v1965 = vunpack.c.0.s8 %v1964
    %v1966 = vlaneseq
    %v1967 = vshrl.u32 %v1966, 7
    %v1968 = vsub.s32 %v1965, %v1967
    %v1969 = vrot.slane %v1955, %v1968
    %v1970 = vlaneseq
    %v1971 = vshrl.u32 %v1970, 7
    %v1972 = vsub.s32 0, %v1971
    %v1973 = vrot.slane %v1962, %v1972
    %v1974 = vlaneseq
    %v1975 = vshrl.u32 %v1974, 7
    %v1976 = vsub.s32 0, %v1975
    %v1977 = vrot.slane %v1969, %v1976
    %v1980 = vadd.f32 %v1945, %v1973
    %v1981 = vadd.f32 %v1946, %v1977
    %v1982 = vtanh.pop %v1980
    %v1983 = vtanh.pop %v1981
    %v1984 = vmul.f32 %v1982, %v1137
    %v1985 = vmul.f32 %v1983, %v1137
    %1986 = vadd.xlane.f32.xlu0 %v1984
    %v1987 = vpop.xlane.xlu0 %1986
    %1988 = vadd.xlane.f32.xlu0 %v1985
    %v1989 = vpop.xlane.xlu0 %1988
    %v1990 = vrot.slane %v1987, 4
    %v1991 = vmax.f32 %v1987, %v1990
    %v1992 = vrot.slane %v1991, 2
    %v1993 = vmax.f32 %v1991, %v1992
    %v1994 = vrot.slane %v1993, 1
    %v1995 = vmax.f32 %v1993, %v1994
    %v1996 = vrot.slane %v1989, 4
    %v1997 = vmax.f32 %v1989, %v1996
    %v1998 = vrot.slane %v1997, 2
    %v1999 = vmax.f32 %v1997, %v1998
    %v2000 = vrot.slane %v1999, 1
    %v2001 = vmax.f32 %v1999, %v2000
    %v2002 = vsub.f32 %v1987, %v1995
    %v2003 = vsub.f32 %v1989, %v2001
    %v2004 = vmul.f32 %v2002, 1.442695
    %v2005 = vpow.pop %v2004
    %v2006 = vmul.f32 %v2003, 1.442695
    %v2007 = vpow.pop %v2006
    %v2008 = vrot.slane %v2005, 4
    %v2009 = vadd.f32 %v2005, %v2008
    %v2010 = vrot.slane %v2009, 2
    %v2011 = vadd.f32 %v2009, %v2010
    %v2012 = vrot.slane %v2011, 1
    %v2013 = vadd.f32 %v2011, %v2012
    %v2014 = vrot.slane %v2007, 4
    %v2015 = vadd.f32 %v2007, %v2014
    %v2016 = vrot.slane %v2015, 2
    %v2017 = vadd.f32 %v2015, %v2016
    %v2018 = vrot.slane %v2017, 1
    %v2019 = vadd.f32 %v2017, %v2018
    %v2020 = vrcp.pop %v2013
    %v2021 = vrcp.pop %v2019
    %v2022 = vmul.f32 %v2005, %v2020
    %v2023 = vmul.f32 %v2007, %v2021
    %v2024 = vld [vmem:[#allocation2] sm:$0xff]
    %v2025 = vld [vmem:[#allocation2 + $0x8] sm:$0xff]
    %v2026 = vmul.f32 %v2022, %v2024
    %v2027 = vmul.f32 %v2023, %v2025
    %v2028 = vrot.slane %v2026, 4
    %v2029 = vadd.f32 %v2026, %v2028
    %v2030 = vrot.slane %v2029, 2
    %v2031 = vadd.f32 %v2029, %v2030
    %v2032 = vrot.slane %v2031, 1
    %v2033 = vadd.f32 %v2031, %v2032
    %v2034 = vrot.slane %v2027, 4
    %v2035 = vadd.f32 %v2027, %v2034
    %v2036 = vrot.slane %v2035, 2
    %v2037 = vadd.f32 %v2035, %v2036
    %v2038 = vrot.slane %v2037, 1
    %v2039 = vadd.f32 %v2037, %v2038
    %v2040 = vld [vmem:[#allocation15] sm:$0xff]
    %v2041 = vld [vmem:[#allocation15 + $0x8] sm:$0xff]
    %v2042 = vld [vmem:[#allocation15 + $0x10] sm:$0xff]
    %v2043 = vld [vmem:[#allocation15 + $0x18] sm:$0xff]
    %v2044 = vld [vmem:[#allocation15 + $0x20] sm:$0xff]
    %v2045 = vld [vmem:[#allocation15 + $0x28] sm:$0xff]
    %v2046 = vld [vmem:[#allocation15 + $0x30] sm:$0xff]
    %v2047 = vld [vmem:[#allocation15 + $0x38] sm:$0xff]
    %v2048 = vld [vmem:[#allocation15 + $0x40] sm:$0xff]
    %v2049 = vld [vmem:[#allocation15 + $0x48] sm:$0xff]
    %v2050 = vld [vmem:[#allocation15 + $0x50] sm:$0xff]
    %v2051 = vld [vmem:[#allocation15 + $0x58] sm:$0xff]
    %v2052 = vld [vmem:[#allocation15 + $0x60] sm:$0xff]
    %v2053 = vld [vmem:[#allocation15 + $0x68] sm:$0xff]
    %v2054 = vld [vmem:[#allocation15 + $0x70] sm:$0xff]
    %v2055 = vld [vmem:[#allocation15 + $0x78] sm:$0xff]
    %v2056 = vld [vmem:[#allocation15 + $0x80] sm:$0xff]
    %v2057 = vld [vmem:[#allocation15 + $0x88] sm:$0xff]
    %v2058 = vld [vmem:[#allocation15 + $0x90] sm:$0xff]
    %v2059 = vld [vmem:[#allocation15 + $0x98] sm:$0xff]
    %v2060 = vld [vmem:[#allocation15 + $0xa0] sm:$0xff]
    %v2061 = vld [vmem:[#allocation15 + $0xa8] sm:$0xff]
    %v2062 = vld [vmem:[#allocation15 + $0xb0] sm:$0xff]
    %v2063 = vld [vmem:[#allocation15 + $0xb8] sm:$0xff]
    %v2064 = vld [vmem:[#allocation15 + $0xc0] sm:$0xff]
    %v2065 = vld [vmem:[#allocation15 + $0xc8] sm:$0xff]
    %v2066 = vld [vmem:[#allocation15 + $0xd0] sm:$0xff]
    %v2067 = vld [vmem:[#allocation15 + $0xd8] sm:$0xff]
    %v2068 = vld [vmem:[#allocation15 + $0xe0] sm:$0xff]
    %v2069 = vld [vmem:[#allocation15 + $0xe8] sm:$0xff]
    %v2070 = vld [vmem:[#allocation15 + $0xf0] sm:$0xff]
    %v2071 = vld [vmem:[#allocation15 + $0xf8] sm:$0xff]
    %v2072 = vpack.c.bf16 %v2033, %v2033
    %v2073 = vpack.c.bf16 %v2039, %v2039
    %v2076 = vunpack.c.l.b16 %v2072
    %v2077 = vunpack.c.l.b16 %v2073
    %v2078 = vsel %vm1233, %v2077, %v2076
    %v2079 = vpack.c.b16 %v2078, %v2078
    %v2113 = vunpack.c.l.b16 %v2040
    %v2114 = vunpack.c.h.b16 %v2040
    %v2115 = vunpack.c.l.b16 %v2041
    %v2116 = vunpack.c.h.b16 %v2041
    %v2117 = vunpack.c.l.b16 %v2042
    %v2118 = vunpack.c.h.b16 %v2042
    %v2119 = vunpack.c.l.b16 %v2043
    %v2120 = vunpack.c.h.b16 %v2043
    %v2121 = vunpack.c.l.b16 %v2044
    %v2122 = vunpack.c.h.b16 %v2044
    %v2123 = vunpack.c.l.b16 %v2045
    %v2124 = vunpack.c.h.b16 %v2045
    %v2125 = vunpack.c.l.b16 %v2046
    %v2126 = vunpack.c.h.b16 %v2046
    %v2127 = vunpack.c.l.b16 %v2047
    %v2128 = vunpack.c.h.b16 %v2047
    %v2129 = vunpack.c.l.b16 %v2048
    %v2130 = vunpack.c.h.b16 %v2048
    %v2131 = vunpack.c.l.b16 %v2049
    %v2132 = vunpack.c.h.b16 %v2049
    %v2133 = vunpack.c.l.b16 %v2050
    %v2134 = vunpack.c.h.b16 %v2050
    %v2135 = vunpack.c.l.b16 %v2051
    %v2136 = vunpack.c.h.b16 %v2051
    %v2137 = vunpack.c.l.b16 %v2052
    %v2138 = vunpack.c.h.b16 %v2052
    %v2139 = vunpack.c.l.b16 %v2053
    %v2140 = vunpack.c.h.b16 %v2053
    %v2141 = vunpack.c.l.b16 %v2054
    %v2142 = vunpack.c.h.b16 %v2054
    %v2143 = vunpack.c.l.b16 %v2055
    %v2144 = vunpack.c.h.b16 %v2055
    %v2145 = vunpack.c.l.b16 %v2056
    %v2146 = vunpack.c.h.b16 %v2056
    %v2147 = vunpack.c.l.b16 %v2057
    %v2148 = vunpack.c.h.b16 %v2057
    %v2149 = vunpack.c.l.b16 %v2058
    %v2150 = vunpack.c.h.b16 %v2058
    %v2151 = vunpack.c.l.b16 %v2059
    %v2152 = vunpack.c.h.b16 %v2059
    %v2153 = vunpack.c.l.b16 %v2060
    %v2154 = vunpack.c.h.b16 %v2060
    %v2155 = vunpack.c.l.b16 %v2061
    %v2156 = vunpack.c.h.b16 %v2061
    %v2157 = vunpack.c.l.b16 %v2062
    %v2158 = vunpack.c.h.b16 %v2062
    %v2159 = vunpack.c.l.b16 %v2063
    %v2160 = vunpack.c.h.b16 %v2063
    %v2161 = vunpack.c.l.b16 %v2064
    %v2162 = vunpack.c.h.b16 %v2064
    %v2163 = vunpack.c.l.b16 %v2065
    %v2164 = vunpack.c.h.b16 %v2065
    %v2165 = vunpack.c.l.b16 %v2066
    %v2166 = vunpack.c.h.b16 %v2066
    %v2167 = vunpack.c.l.b16 %v2067
    %v2168 = vunpack.c.h.b16 %v2067
    %v2169 = vunpack.c.l.b16 %v2068
    %v2170 = vunpack.c.h.b16 %v2068
    %v2171 = vunpack.c.l.b16 %v2069
    %v2172 = vunpack.c.h.b16 %v2069
    %v2173 = vunpack.c.l.b16 %v2070
    %v2174 = vunpack.c.h.b16 %v2070
    %v2175 = vunpack.c.l.b16 %v2071
    %v2176 = vunpack.c.h.b16 %v2071
    %v2177 = vpack.c.b16 %v2117, %v2113
    %v2178 = vpack.c.b16 %v2118, %v2114
    %v2179 = vpack.c.b16 %v2119, %v2115
    %v2180 = vpack.c.b16 %v2120, %v2116
    %v2181 = vpack.c.b16 %v2125, %v2121
    %v2182 = vpack.c.b16 %v2126, %v2122
    %v2183 = vpack.c.b16 %v2127, %v2123
    %v2184 = vpack.c.b16 %v2128, %v2124
    %v2185 = vpack.c.b16 %v2133, %v2129
    %v2186 = vpack.c.b16 %v2134, %v2130
    %v2187 = vpack.c.b16 %v2135, %v2131
    %v2188 = vpack.c.b16 %v2136, %v2132
    %v2189 = vpack.c.b16 %v2141, %v2137
    %v2190 = vpack.c.b16 %v2142, %v2138
    %v2191 = vpack.c.b16 %v2143, %v2139
    %v2192 = vpack.c.b16 %v2144, %v2140
    %v2193 = vpack.c.b16 %v2149, %v2145
    %v2194 = vpack.c.b16 %v2150, %v2146
    %v2195 = vpack.c.b16 %v2151, %v2147
    %v2196 = vpack.c.b16 %v2152, %v2148
    %v2197 = vpack.c.b16 %v2157, %v2153
    %v2198 = vpack.c.b16 %v2158, %v2154
    %v2199 = vpack.c.b16 %v2159, %v2155
    %v2200 = vpack.c.b16 %v2160, %v2156
    %v2201 = vpack.c.b16 %v2165, %v2161
    %v2202 = vpack.c.b16 %v2166, %v2162
    %v2203 = vpack.c.b16 %v2167, %v2163
    %v2204 = vpack.c.b16 %v2168, %v2164
    %v2205 = vpack.c.b16 %v2173, %v2169
    %v2206 = vpack.c.b16 %v2174, %v2170
    %v2207 = vpack.c.b16 %v2175, %v2171
    %v2208 = vpack.c.b16 %v2176, %v2172
    %2241 = vmatprep.subr.bf16.mxu0 %v2206
    %2242 = vmatpush1.bf16.msra.mxu0 %v2205
    %2243 = vmatprep.subr.bf16.mxu0 %v2202
    %2244 = vmatpush1.bf16.msra.mxu0 %v2201
    %2245 = vmatprep.subr.bf16.mxu0 %v2198
    %2246 = vmatpush1.bf16.msra.mxu0 %v2197
    %2247 = vmatprep.subr.bf16.mxu0 %v2194
    %2248 = vmatpush1.bf16.msra.mxu0 %v2193
    %2249 = vmatprep.subr.bf16.mxu0 %v2190
    %2250 = vmatpush1.bf16.msra.mxu0 %v2189
    %2251 = vmatprep.subr.bf16.mxu0 %v2186
    %2252 = vmatpush1.bf16.msra.mxu0 %v2185
    %2253 = vmatprep.subr.bf16.mxu0 %v2182
    %2254 = vmatpush1.bf16.msra.mxu0 %v2181
    %2255 = vmatprep.subr.bf16.mxu0 %v2178
    %2256 = vmatpush1.bf16.msra.mxu0 %v2177
    %2257 = vmatprep.subr.bf16.mxu0 0
    %2258 = vmatpush2.bf16.msra.mxu0 0
    %2259 = vmatprep.subr.bf16.mxu0 0
    %2260 = vmatpush2.bf16.msra.mxu0 0
    %2261 = vmatprep.subr.bf16.mxu0 0
    %2262 = vmatpush2.bf16.msra.mxu0 0
    %2263 = vmatprep.subr.bf16.mxu0 0
    %2264 = vmatpush2.bf16.msra.mxu0 0
    %2265 = vmatprep.subr.bf16.mxu0 0
    %2266 = vmatpush2.bf16.msra.mxu0 0
    %2267 = vmatprep.subr.bf16.mxu0 0
    %2268 = vmatpush2.bf16.msra.mxu0 0
    %2269 = vmatprep.subr.bf16.mxu0 0
    %2270 = vmatpush2.bf16.msra.mxu0 0
    %2271 = vmatprep.subr.bf16.mxu0 0
    %2272 = vmatpush2.bf16.msra.mxu0 0
    %2273 = vmatprep.mubr.bf16.mxu0 0
    %2274 = vmatmul.mubr.bf16.gmra.mxu0 %v2079
    %v2275 = vpop.f32.mrf.mxu0
    %v2276 = vadd.f32 %v1860, %v2275
    %v2277 = vpop.f32.mrf.mxu0
    %v2278 = vadd.f32 %v1899, %v2277
    %v2279 = vpop.f32.mrf.mxu0
    %v2280 = vpop.f32.mrf.mxu0
    %2281 = vdwg.mxu0
    %2282 = vmatprep.subr.bf16.mxu0 %v2208
    %2283 = vmatpush1.bf16.msra.mxu0 %v2207
    %2284 = vmatprep.subr.bf16.mxu0 %v2204
    %2285 = vmatpush1.bf16.msra.mxu0 %v2203
    %2286 = vmatprep.subr.bf16.mxu0 %v2200
    %2287 = vmatpush1.bf16.msra.mxu0 %v2199
    %2288 = vmatprep.subr.bf16.mxu0 %v2196
    %2289 = vmatpush1.bf16.msra.mxu0 %v2195
    %2290 = vmatprep.subr.bf16.mxu0 %v2192
    %2291 = vmatpush1.bf16.msra.mxu0 %v2191
    %2292 = vmatprep.subr.bf16.mxu0 %v2188
    %2293 = vmatpush1.bf16.msra.mxu0 %v2187
    %2294 = vmatprep.subr.bf16.mxu0 %v2184
    %2295 = vmatpush1.bf16.msra.mxu0 %v2183
    %2296 = vmatprep.subr.bf16.mxu0 %v2180
    %2297 = vmatpush1.bf16.msra.mxu0 %v2179
    %2298 = vmatprep.subr.bf16.mxu0 0
    %2299 = vmatpush2.bf16.msra.mxu0 0
    %2300 = vmatprep.subr.bf16.mxu0 0
    %2301 = vmatpush2.bf16.msra.mxu0 0
    %2302 = vmatprep.subr.bf16.mxu0 0
    %2303 = vmatpush2.bf16.msra.mxu0 0
    %2304 = vmatprep.subr.bf16.mxu0 0
    %2305 = vmatpush2.bf16.msra.mxu0 0
    %2306 = vmatprep.subr.bf16.mxu0 0
    %2307 = vmatpush2.bf16.msra.mxu0 0
    %2308 = vmatprep.subr.bf16.mxu0 0
    %2309 = vmatpush2.bf16.msra.mxu0 0
    %2310 = vmatprep.subr.bf16.mxu0 0
    %2311 = vmatpush2.bf16.msra.mxu0 0
    %2312 = vmatprep.subr.bf16.mxu0 0
    %2313 = vmatpush2.bf16.msra.mxu0 0
    %2314 = vmatprep.mubr.bf16.mxu0 0
    %2315 = vmatmul.mubr.bf16.gmra.mxu0 %v2079
    %v2316 = vpop.f32.mrf.mxu0
    %v2317 = vadd.f32 %v1901, %v2316
    %v2318 = vpop.f32.mrf.mxu0
    %v2319 = vadd.f32 %v1940, %v2318
    %v2320 = vpop.f32.mrf.mxu0
    %v2321 = vpop.f32.mrf.mxu0
    %2322 = vdwg.mxu0
    %v2323 = vld [vmem:[#allocation4] sm:$0x11]
    %v2324 = vld [vmem:[#allocation4 + $0x8] sm:$0x11]
    %v2325 = vld [vmem:[#allocation4 + $0x10] sm:$0x11]
    %v2326 = vld [vmem:[#allocation4 + $0x18] sm:$0x11]
    %v2327 = vunpack.c.l.bf16 %v2323
    %v2328 = vunpack.c.h.bf16 %v2323
    %v2329 = vunpack.c.l.bf16 %v2324
    %v2330 = vunpack.c.h.bf16 %v2324
    %v2331 = vunpack.c.l.bf16 %v2325
    %v2332 = vunpack.c.h.bf16 %v2325
    %v2333 = vunpack.c.l.bf16 %v2326
    %v2334 = vunpack.c.h.bf16 %v2326
    %v2343 = vrot.slane %v2327, 1
    %v2344 = vsel %vm1233, %v2331, %v2343
    %v2345 = vrot.slane %v2328, 1
    %v2346 = vsel %vm1233, %v2332, %v2345
    %v2347 = vrot.slane %v2329, 1
    %v2348 = vsel %vm1233, %v2333, %v2347
    %v2349 = vrot.slane %v2330, 1
    %v2350 = vsel %vm1233, %v2334, %v2349
    %v2355 = vadd.f32 %v2276, %v2344
    %v2356 = vadd.f32 %v2278, %v2346
    %v2357 = vadd.f32 %v2317, %v2348
    %v2358 = vadd.f32 %v2319, %v2350
    %v2359 = vxor.u32 %v2355, 2147483648
    %v2360 = vmul.f32 %v2359, 1.442695
    %v2361 = vpow.pop %v2360
    %v2362 = vadd.f32 %v2361, 1.0
    %v2363 = vrcp.pop %v2362
    %v2364 = vmul.f32 1.0, %v2363
    %v2365 = vxor.u32 %v2356, 2147483648
    %v2366 = vmul.f32 %v2365, 1.442695
    %v2367 = vpow.pop %v2366
    %v2368 = vadd.f32 %v2367, 1.0
    %v2369 = vrcp.pop %v2368
    %v2370 = vmul.f32 1.0, %v2369
    %v2371 = vtanh.pop %v2357
    %v2372 = vxor.u32 %v2358, 2147483648
    %v2373 = vmul.f32 %v2372, 1.442695
    %v2374 = vpow.pop %v2373
    %v2375 = vadd.f32 %v2374, 1.0
    %v2376 = vrcp.pop %v2375
    %v2377 = vmul.f32 1.0, %v2376
    %v2378 = vmul.f32 %v2370, %v1536
    %v2379 = vmul.f32 %v2364, %v2371
    %v2380 = vadd.f32 %v2378, %v2379
    %v2381 = vtanh.pop %v2380
    %v2382 = vmul.f32 %v2377, %v2381
    %v2385 = vunpack.c.l.s4 1966171168
    %v2386 = vunpack.c.0.s8 %v2385
    %v2387 = vlaneseq
    %v2388 = vshrl.u32 %v2387, 7
    %v2389 = vsub.s32 %v2386, %v2388
    %v2390 = vrot.slane %v2382, %v2389
    %v2391 = vcombine.high %v2390, %v2390
    %v2393 = vunpack.c.l.s4 1966171168
    %v2394 = vunpack.c.0.s8 %v2393
    %v2395 = vlaneseq
    %v2396 = vshrl.u32 %v2395, 7
    %v2397 = vsub.s32 %v2394, %v2396
    %v2398 = vrot.slane %v2390, %v2397
    %v2400 = vunpack.c.l.s4 1966171168
    %v2401 = vunpack.c.0.s8 %v2400
    %v2402 = vlaneseq
    %v2403 = vshrl.u32 %v2402, 7
    %v2404 = vsub.s32 %v2401, %v2403
    %v2405 = vrot.slane %v2391, %v2404
    %2408 = vst [vmem:[#allocation5 + $0x1] sm:$0x1] %v2398
    %2409 = vst [vmem:[#allocation5 + $0x9] sm:$0x1] %v2405
    %v2410 = vld [vmem:[#allocation14] sm:$0xff]
    %v2411 = vld [vmem:[#allocation14 + $0x8] sm:$0xff]
    %v2412 = vld [vmem:[#allocation14 + $0x10] sm:$0xf]
    %v2413 = vld [vmem:[#allocation14 + $0x14] sm:$0xff]
    %v2414 = vld [vmem:[#allocation14 + $0x1c] sm:$0xff]
    %v2415 = vld [vmem:[#allocation14 + $0x24] sm:$0xf]
    %v2416 = vld [vmem:[#allocation14 + $0x28] sm:$0xff]
    %v2417 = vld [vmem:[#allocation14 + $0x30] sm:$0xff]
    %v2418 = vld [vmem:[#allocation14 + $0x38] sm:$0xf]
    %v2419 = vld [vmem:[#allocation14 + $0x3c] sm:$0xff]
    %v2420 = vld [vmem:[#allocation14 + $0x44] sm:$0xff]
    %v2421 = vld [vmem:[#allocation14 + $0x4c] sm:$0xf]
    %v2422 = vld [vmem:[#allocation14 + $0x50] sm:$0xff]
    %v2423 = vld [vmem:[#allocation14 + $0x58] sm:$0xff]
    %v2424 = vld [vmem:[#allocation14 + $0x60] sm:$0xf]
    %v2425 = vld [vmem:[#allocation14 + $0x64] sm:$0xff]
    %v2426 = vld [vmem:[#allocation14 + $0x6c] sm:$0xff]
    %v2427 = vld [vmem:[#allocation14 + $0x74] sm:$0xf]
    %v2428 = vld [vmem:[#allocation14 + $0x78] sm:$0xff]
    %v2429 = vld [vmem:[#allocation14 + $0x80] sm:$0xff]
    %v2430 = vld [vmem:[#allocation14 + $0x88] sm:$0xf]
    %v2431 = vld [vmem:[#allocation14 + $0x8c] sm:$0xff]
    %v2432 = vld [vmem:[#allocation14 + $0x94] sm:$0xff]
    %v2433 = vld [vmem:[#allocation14 + $0x9c] sm:$0xf]
    %v2434 = vld [vmem:[#allocation14 + $0xa0] sm:$0xff]
    %v2435 = vld [vmem:[#allocation14 + $0xa8] sm:$0xff]
    %v2436 = vld [vmem:[#allocation14 + $0xb0] sm:$0xf]
    %v2437 = vld [vmem:[#allocation14 + $0xb4] sm:$0xff]
    %v2438 = vld [vmem:[#allocation14 + $0xbc] sm:$0xff]
    %v2439 = vld [vmem:[#allocation14 + $0xc4] sm:$0xf]
    %v2440 = vld [vmem:[#allocation14 + $0xc8] sm:$0xff]
    %v2441 = vld [vmem:[#allocation14 + $0xd0] sm:$0xff]
    %v2442 = vld [vmem:[#allocation14 + $0xd8] sm:$0xf]
    %v2443 = vld [vmem:[#allocation14 + $0xdc] sm:$0xff]
    %v2444 = vld [vmem:[#allocation14 + $0xe4] sm:$0xff]
    %v2445 = vld [vmem:[#allocation14 + $0xec] sm:$0xf]
    %v2446 = vld [vmem:[#allocation14 + $0xf0] sm:$0xff]
    %v2447 = vld [vmem:[#allocation14 + $0xf8] sm:$0xff]
    %v2448 = vld [vmem:[#allocation14 + $0x100] sm:$0xf]
    %v2449 = vld [vmem:[#allocation14 + $0x104] sm:$0xff]
    %v2450 = vld [vmem:[#allocation14 + $0x10c] sm:$0xff]
    %v2451 = vld [vmem:[#allocation14 + $0x114] sm:$0xf]
    %v2452 = vld [vmem:[#allocation14 + $0x118] sm:$0xff]
    %v2453 = vld [vmem:[#allocation14 + $0x120] sm:$0xff]
    %v2454 = vld [vmem:[#allocation14 + $0x128] sm:$0xf]
    %v2455 = vld [vmem:[#allocation14 + $0x12c] sm:$0xff]
    %v2456 = vld [vmem:[#allocation14 + $0x134] sm:$0xff]
    %v2457 = vld [vmem:[#allocation14 + $0x13c] sm:$0xf]
    %v2458 = vpack.c.bf16 %v2382, %v2382
    %v2507 = vunpack.c.l.b16 %v2410
    %v2508 = vunpack.c.h.b16 %v2410
    %v2509 = vunpack.c.l.b16 %v2411
    %v2510 = vunpack.c.h.b16 %v2411
    %v2511 = vunpack.c.l.b16 %v2412
    %v2512 = vunpack.c.l.b16 %v2413
    %v2513 = vunpack.c.h.b16 %v2413
    %v2514 = vunpack.c.l.b16 %v2414
    %v2515 = vunpack.c.h.b16 %v2414
    %v2516 = vunpack.c.l.b16 %v2415
    %v2517 = vunpack.c.l.b16 %v2416
    %v2518 = vunpack.c.h.b16 %v2416
    %v2519 = vunpack.c.l.b16 %v2417
    %v2520 = vunpack.c.h.b16 %v2417
    %v2521 = vunpack.c.l.b16 %v2418
    %v2522 = vunpack.c.l.b16 %v2419
    %v2523 = vunpack.c.h.b16 %v2419
    %v2524 = vunpack.c.l.b16 %v2420
    %v2525 = vunpack.c.h.b16 %v2420
    %v2526 = vunpack.c.l.b16 %v2421
    %v2527 = vunpack.c.l.b16 %v2422
    %v2528 = vunpack.c.h.b16 %v2422
    %v2529 = vunpack.c.l.b16 %v2423
    %v2530 = vunpack.c.h.b16 %v2423
    %v2531 = vunpack.c.l.b16 %v2424
    %v2532 = vunpack.c.l.b16 %v2425
    %v2533 = vunpack.c.h.b16 %v2425
    %v2534 = vunpack.c.l.b16 %v2426
    %v2535 = vunpack.c.h.b16 %v2426
    %v2536 = vunpack.c.l.b16 %v2427
    %v2537 = vunpack.c.l.b16 %v2428
    %v2538 = vunpack.c.h.b16 %v2428
    %v2539 = vunpack.c.l.b16 %v2429
    %v2540 = vunpack.c.h.b16 %v2429
    %v2541 = vunpack.c.l.b16 %v2430
    %v2542 = vunpack.c.l.b16 %v2431
    %v2543 = vunpack.c.h.b16 %v2431
    %v2544 = vunpack.c.l.b16 %v2432
    %v2545 = vunpack.c.h.b16 %v2432
    %v2546 = vunpack.c.l.b16 %v2433
    %v2547 = vunpack.c.l.b16 %v2434
    %v2548 = vunpack.c.h.b16 %v2434
    %v2549 = vunpack.c.l.b16 %v2435
    %v2550 = vunpack.c.h.b16 %v2435
    %v2551 = vunpack.c.l.b16 %v2436
    %v2552 = vunpack.c.l.b16 %v2437
    %v2553 = vunpack.c.h.b16 %v2437
    %v2554 = vunpack.c.l.b16 %v2438
    %v2555 = vunpack.c.h.b16 %v2438
    %v2556 = vunpack.c.l.b16 %v2439
    %v2557 = vunpack.c.l.b16 %v2440
    %v2558 = vunpack.c.h.b16 %v2440
    %v2559 = vunpack.c.l.b16 %v2441
    %v2560 = vunpack.c.h.b16 %v2441
    %v2561 = vunpack.c.l.b16 %v2442
    %v2562 = vunpack.c.l.b16 %v2443
    %v2563 = vunpack.c.h.b16 %v2443
    %v2564 = vunpack.c.l.b16 %v2444
    %v2565 = vunpack.c.h.b16 %v2444
    %v2566 = vunpack.c.l.b16 %v2445
    %v2567 = vunpack.c.l.b16 %v2446
    %v2568 = vunpack.c.h.b16 %v2446
    %v2569 = vunpack.c.l.b16 %v2447
    %v2570 = vunpack.c.h.b16 %v2447
    %v2571 = vunpack.c.l.b16 %v2448
    %v2572 = vunpack.c.l.b16 %v2449
    %v2573 = vunpack.c.h.b16 %v2449
    %v2574 = vunpack.c.l.b16 %v2450
    %v2575 = vunpack.c.h.b16 %v2450
    %v2576 = vunpack.c.l.b16 %v2451
    %v2577 = vunpack.c.l.b16 %v2452
    %v2578 = vunpack.c.h.b16 %v2452
    %v2579 = vunpack.c.l.b16 %v2453
    %v2580 = vunpack.c.h.b16 %v2453
    %v2581 = vunpack.c.l.b16 %v2454
    %v2582 = vunpack.c.l.b16 %v2455
    %v2583 = vunpack.c.h.b16 %v2455
    %v2584 = vunpack.c.l.b16 %v2456
    %v2585 = vunpack.c.h.b16 %v2456
    %v2586 = vunpack.c.l.b16 %v2457
    %v2587 = vpack.c.b16 %v2512, %v2507
    %v2588 = vpack.c.b16 %v2513, %v2508
    %v2589 = vpack.c.b16 %v2514, %v2509
    %v2590 = vpack.c.b16 %v2515, %v2510
    %v2591 = vpack.c.b16 %v2516, %v2511
    %v2592 = vpack.c.b16 %v2522, %v2517
    %v2593 = vpack.c.b16 %v2523, %v2518
    %v2594 = vpack.c.b16 %v2524, %v2519
    %v2595 = vpack.c.b16 %v2525, %v2520
    %v2596 = vpack.c.b16 %v2526, %v2521
    %v2597 = vpack.c.b16 %v2532, %v2527
    %v2598 = vpack.c.b16 %v2533, %v2528
    %v2599 = vpack.c.b16 %v2534, %v2529
    %v2600 = vpack.c.b16 %v2535, %v2530
    %v2601 = vpack.c.b16 %v2536, %v2531
    %v2602 = vpack.c.b16 %v2542, %v2537
    %v2603 = vpack.c.b16 %v2543, %v2538
    %v2604 = vpack.c.b16 %v2544, %v2539
    %v2605 = vpack.c.b16 %v2545, %v2540
    %v2606 = vpack.c.b16 %v2546, %v2541
    %v2607 = vpack.c.b16 %v2552, %v2547
    %v2608 = vpack.c.b16 %v2553, %v2548
    %v2609 = vpack.c.b16 %v2554, %v2549
    %v2610 = vpack.c.b16 %v2555, %v2550
    %v2611 = vpack.c.b16 %v2556, %v2551
    %v2612 = vpack.c.b16 %v2562, %v2557
    %v2613 = vpack.c.b16 %v2563, %v2558
    %v2614 = vpack.c.b16 %v2564, %v2559
    %v2615 = vpack.c.b16 %v2565, %v2560
    %v2616 = vpack.c.b16 %v2566, %v2561
    %v2617 = vpack.c.b16 %v2572, %v2567
    %v2618 = vpack.c.b16 %v2573, %v2568
    %v2619 = vpack.c.b16 %v2574, %v2569
    %v2620 = vpack.c.b16 %v2575, %v2570
    %v2621 = vpack.c.b16 %v2576, %v2571
    %v2622 = vpack.c.b16 %v2582, %v2577
    %v2623 = vpack.c.b16 %v2583, %v2578
    %v2624 = vpack.c.b16 %v2584, %v2579
    %v2625 = vpack.c.b16 %v2585, %v2580
    %v2626 = vpack.c.b16 %v2586, %v2581
    %2667 = vmatprep.subr.bf16.mxu0 %v2623
    %2668 = vmatpush1.bf16.msra.mxu0 %v2622
    %2669 = vmatprep.subr.bf16.mxu0 %v2618
    %2670 = vmatpush1.bf16.msra.mxu0 %v2617
    %2671 = vmatprep.subr.bf16.mxu0 %v2613
    %2672 = vmatpush1.bf16.msra.mxu0 %v2612
    %2673 = vmatprep.subr.bf16.mxu0 %v2608
    %2674 = vmatpush1.bf16.msra.mxu0 %v2607
    %2675 = vmatprep.subr.bf16.mxu0 %v2603
    %2676 = vmatpush1.bf16.msra.mxu0 %v2602
    %2677 = vmatprep.subr.bf16.mxu0 %v2598
    %2678 = vmatpush1.bf16.msra.mxu0 %v2597
    %2679 = vmatprep.subr.bf16.mxu0 %v2593
    %2680 = vmatpush1.bf16.msra.mxu0 %v2592
    %2681 = vmatprep.subr.bf16.mxu0 %v2588
    %2682 = vmatpush1.bf16.msra.mxu0 %v2587
    %2683 = vmatprep.subr.bf16.mxu0 0
    %2684 = vmatpush2.bf16.msra.mxu0 0
    %2685 = vmatprep.subr.bf16.mxu0 0
    %2686 = vmatpush2.bf16.msra.mxu0 0
    %2687 = vmatprep.subr.bf16.mxu0 0
    %2688 = vmatpush2.bf16.msra.mxu0 0
    %2689 = vmatprep.subr.bf16.mxu0 0
    %2690 = vmatpush2.bf16.msra.mxu0 0
    %2691 = vmatprep.subr.bf16.mxu0 0
    %2692 = vmatpush2.bf16.msra.mxu0 0
    %2693 = vmatprep.subr.bf16.mxu0 0
    %2694 = vmatpush2.bf16.msra.mxu0 0
    %2695 = vmatprep.subr.bf16.mxu0 0
    %2696 = vmatpush2.bf16.msra.mxu0 0
    %2697 = vmatprep.subr.bf16.mxu0 0
    %2698 = vmatpush2.bf16.msra.mxu0 0
    %2699 = vmatprep.mubr.bf16.mxu0 0
    %2700 = vmatmul.mubr.bf16.gmra.mxu0 %v2458
    %v2701 = vpop.f32.mrf.mxu0
    %v2702 = vadd.f32 0.0, %v2701
    %v2703 = vpop.f32.mrf.mxu0
    %v2704 = vadd.f32 0.0, %v2703
    %v2705 = vpop.f32.mrf.mxu0
    %v2706 = vpop.f32.mrf.mxu0
    %2707 = vdwg.mxu0
    %2708 = vmatprep.subr.bf16.mxu0 %v2625
    %2709 = vmatpush1.bf16.msra.mxu0 %v2624
    %2710 = vmatprep.subr.bf16.mxu0 %v2620
    %2711 = vmatpush1.bf16.msra.mxu0 %v2619
    %2712 = vmatprep.subr.bf16.mxu0 %v2615
    %2713 = vmatpush1.bf16.msra.mxu0 %v2614
    %2714 = vmatprep.subr.bf16.mxu0 %v2610
    %2715 = vmatpush1.bf16.msra.mxu0 %v2609
    %2716 = vmatprep.subr.bf16.mxu0 %v2605
    %2717 = vmatpush1.bf16.msra.mxu0 %v2604
    %2718 = vmatprep.subr.bf16.mxu0 %v2600
    %2719 = vmatpush1.bf16.msra.mxu0 %v2599
    %2720 = vmatprep.subr.bf16.mxu0 %v2595
    %2721 = vmatpush1.bf16.msra.mxu0 %v2594
    %2722 = vmatprep.subr.bf16.mxu0 %v2590
    %2723 = vmatpush1.bf16.msra.mxu0 %v2589
    %2724 = vmatprep.subr.bf16.mxu0 0
    %2725 = vmatpush2.bf16.msra.mxu0 0
    %2726 = vmatprep.subr.bf16.mxu0 0
    %2727 = vmatpush2.bf16.msra.mxu0 0
    %2728 = vmatprep.subr.bf16.mxu0 0
    %2729 = vmatpush2.bf16.msra.mxu0 0
    %2730 = vmatprep.subr.bf16.mxu0 0
    %2731 = vmatpush2.bf16.msra.mxu0 0
    %2732 = vmatprep.subr.bf16.mxu0 0
    %2733 = vmatpush2.bf16.msra.mxu0 0
    %2734 = vmatprep.subr.bf16.mxu0 0
    %2735 = vmatpush2.bf16.msra.mxu0 0
    %2736 = vmatprep.subr.bf16.mxu0 0
    %2737 = vmatpush2.bf16.msra.mxu0 0
    %2738 = vmatprep.subr.bf16.mxu0 0
    %2739 = vmatpush2.bf16.msra.mxu0 0
    %2740 = vmatprep.mubr.bf16.mxu0 0
    %2741 = vmatmul.mubr.bf16.gmra.mxu0 %v2458
    %v2742 = vpop.f32.mrf.mxu0
    %v2743 = vadd.f32 0.0, %v2742
    %v2744 = vpop.f32.mrf.mxu0
    %v2745 = vadd.f32 0.0, %v2744
    %v2746 = vpop.f32.mrf.mxu0
    %v2747 = vpop.f32.mrf.mxu0
    %2748 = vdwg.mxu0
    %2749 = vmatprep.subr.bf16.mxu0 0
    %2750 = vmatpush1.bf16.msra.mxu0 %v2626
    %2751 = vmatprep.subr.bf16.mxu0 0
    %2752 = vmatpush1.bf16.msra.mxu0 %v2621
    %2753 = vmatprep.subr.bf16.mxu0 0
    %2754 = vmatpush1.bf16.msra.mxu0 %v2616
    %2755 = vmatprep.subr.bf16.mxu0 0
    %2756 = vmatpush1.bf16.msra.mxu0 %v2611
    %2757 = vmatprep.subr.bf16.mxu0 0
    %2758 = vmatpush1.bf16.msra.mxu0 %v2606
    %2759 = vmatprep.subr.bf16.mxu0 0
    %2760 = vmatpush1.bf16.msra.mxu0 %v2601
    %2761 = vmatprep.subr.bf16.mxu0 0
    %2762 = vmatpush1.bf16.msra.mxu0 %v2596
    %2763 = vmatprep.subr.bf16.mxu0 0
    %2764 = vmatpush1.bf16.msra.mxu0 %v2591
    %2765 = vmatprep.subr.bf16.mxu0 0
    %2766 = vmatpush2.bf16.msra.mxu0 0
    %2767 = vmatprep.subr.bf16.mxu0 0
    %2768 = vmatpush2.bf16.msra.mxu0 0
    %2769 = vmatprep.subr.bf16.mxu0 0
    %2770 = vmatpush2.bf16.msra.mxu0 0
    %2771 = vmatprep.subr.bf16.mxu0 0
    %2772 = vmatpush2.bf16.msra.mxu0 0
    %2773 = vmatprep.subr.bf16.mxu0 0
    %2774 = vmatpush2.bf16.msra.mxu0 0
    %2775 = vmatprep.subr.bf16.mxu0 0
    %2776 = vmatpush2.bf16.msra.mxu0 0
    %2777 = vmatprep.subr.bf16.mxu0 0
    %2778 = vmatpush2.bf16.msra.mxu0 0
    %2779 = vmatprep.subr.bf16.mxu0 0
    %2780 = vmatpush2.bf16.msra.mxu0 0
    %2781 = vmatprep.mubr.bf16.mxu0 0
    %2782 = vmatmul.mubr.bf16.gmra.mxu0 %v2458
    %v2783 = vpop.f32.mrf.mxu0
    %v2784 = vadd.f32 0.0, %v2783
    %v2785 = vpop.f32.mrf.mxu0
    %v2786 = vpop.f32.mrf.mxu0
    %v2787 = vpop.f32.mrf.mxu0
    %2788 = vdwg.mxu0
    %v2789 = vld [vmem:[#allocation3] sm:$0xff]
    %v2790 = vld [vmem:[#allocation3 + $0x8] sm:$0xff]
    %v2793 = vunpack.c.l.s4 1966171168
    %v2794 = vunpack.c.0.s8 %v2793
    %v2795 = vlaneseq
    %v2796 = vshrl.u32 %v2795, 7
    %v2797 = vsub.s32 %v2794, %v2796
    %v2798 = vrot.slane %v2702, %v2797
    %v2799 = vcombine.high %v2798, %v2798
    %v2801 = vunpack.c.l.s4 1966171168
    %v2802 = vunpack.c.0.s8 %v2801
    %v2803 = vlaneseq
    %v2804 = vshrl.u32 %v2803, 7
    %v2805 = vsub.s32 %v2802, %v2804
    %v2806 = vrot.slane %v2798, %v2805
    %v2808 = vunpack.c.l.s4 1966171168
    %v2809 = vunpack.c.0.s8 %v2808
    %v2810 = vlaneseq
    %v2811 = vshrl.u32 %v2810, 7
    %v2812 = vsub.s32 %v2809, %v2811
    %v2813 = vrot.slane %v2799, %v2812
    %v2814 = vlaneseq
    %v2815 = vshrl.u32 %v2814, 7
    %v2816 = vsub.s32 0, %v2815
    %v2817 = vrot.slane %v2806, %v2816
    %v2818 = vlaneseq
    %v2819 = vshrl.u32 %v2818, 7
    %v2820 = vsub.s32 0, %v2819
    %v2821 = vrot.slane %v2813, %v2820
    %v2824 = vadd.f32 %v2789, %v2817
    %v2825 = vadd.f32 %v2790, %v2821
    %v2826 = vtanh.pop %v2824
    %v2827 = vtanh.pop %v2825
    %v2828 = vmul.f32 %v2826, %v1137
    %v2829 = vmul.f32 %v2827, %v1137
    %2830 = vadd.xlane.f32.xlu0 %v2828
    %v2831 = vpop.xlane.xlu0 %2830
    %2832 = vadd.xlane.f32.xlu0 %v2829
    %v2833 = vpop.xlane.xlu0 %2832
    %v2834 = vrot.slane %v2831, 4
    %v2835 = vmax.f32 %v2831, %v2834
    %v2836 = vrot.slane %v2835, 2
    %v2837 = vmax.f32 %v2835, %v2836
    %v2838 = vrot.slane %v2837, 1
    %v2839 = vmax.f32 %v2837, %v2838
    %v2840 = vrot.slane %v2833, 4
    %v2841 = vmax.f32 %v2833, %v2840
    %v2842 = vrot.slane %v2841, 2
    %v2843 = vmax.f32 %v2841, %v2842
    %v2844 = vrot.slane %v2843, 1
    %v2845 = vmax.f32 %v2843, %v2844
    %v2846 = vsub.f32 %v2831, %v2839
    %v2847 = vsub.f32 %v2833, %v2845
    %v2848 = vmul.f32 %v2846, 1.442695
    %v2849 = vpow.pop %v2848
    %v2850 = vmul.f32 %v2847, 1.442695
    %v2851 = vpow.pop %v2850
    %v2852 = vrot.slane %v2849, 4
    %v2853 = vadd.f32 %v2849, %v2852
    %v2854 = vrot.slane %v2853, 2
    %v2855 = vadd.f32 %v2853, %v2854
    %v2856 = vrot.slane %v2855, 1
    %v2857 = vadd.f32 %v2855, %v2856
    %v2858 = vrot.slane %v2851, 4
    %v2859 = vadd.f32 %v2851, %v2858
    %v2860 = vrot.slane %v2859, 2
    %v2861 = vadd.f32 %v2859, %v2860
    %v2862 = vrot.slane %v2861, 1
    %v2863 = vadd.f32 %v2861, %v2862
    %v2864 = vrcp.pop %v2857
    %v2865 = vrcp.pop %v2863
    %v2866 = vmul.f32 %v2849, %v2864
    %v2867 = vmul.f32 %v2851, %v2865
    %v2868 = vld [vmem:[#allocation2] sm:$0xff]
    %v2869 = vld [vmem:[#allocation2 + $0x8] sm:$0xff]
    %v2870 = vmul.f32 %v2866, %v2868
    %v2871 = vmul.f32 %v2867, %v2869
    %v2872 = vrot.slane %v2870, 4
    %v2873 = vadd.f32 %v2870, %v2872
    %v2874 = vrot.slane %v2873, 2
    %v2875 = vadd.f32 %v2873, %v2874
    %v2876 = vrot.slane %v2875, 1
    %v2877 = vadd.f32 %v2875, %v2876
    %v2878 = vrot.slane %v2871, 4
    %v2879 = vadd.f32 %v2871, %v2878
    %v2880 = vrot.slane %v2879, 2
    %v2881 = vadd.f32 %v2879, %v2880
    %v2882 = vrot.slane %v2881, 1
    %v2883 = vadd.f32 %v2881, %v2882
    %v2884 = vld [vmem:[#allocation15] sm:$0xff]
    %v2885 = vld [vmem:[#allocation15 + $0x8] sm:$0xff]
    %v2886 = vld [vmem:[#allocation15 + $0x10] sm:$0xff]
    %v2887 = vld [vmem:[#allocation15 + $0x18] sm:$0xff]
    %v2888 = vld [vmem:[#allocation15 + $0x20] sm:$0xff]
    %v2889 = vld [vmem:[#allocation15 + $0x28] sm:$0xff]
    %v2890 = vld [vmem:[#allocation15 + $0x30] sm:$0xff]
    %v2891 = vld [vmem:[#allocation15 + $0x38] sm:$0xff]
    %v2892 = vld [vmem:[#allocation15 + $0x40] sm:$0xff]
    %v2893 = vld [vmem:[#allocation15 + $0x48] sm:$0xff]
    %v2894 = vld [vmem:[#allocation15 + $0x50] sm:$0xff]
    %v2895 = vld [vmem:[#allocation15 + $0x58] sm:$0xff]
    %v2896 = vld [vmem:[#allocation15 + $0x60] sm:$0xff]
    %v2897 = vld [vmem:[#allocation15 + $0x68] sm:$0xff]
    %v2898 = vld [vmem:[#allocation15 + $0x70] sm:$0xff]
    %v2899 = vld [vmem:[#allocation15 + $0x78] sm:$0xff]
    %v2900 = vld [vmem:[#allocation15 + $0x80] sm:$0xff]
    %v2901 = vld [vmem:[#allocation15 + $0x88] sm:$0xff]
    %v2902 = vld [vmem:[#allocation15 + $0x90] sm:$0xff]
    %v2903 = vld [vmem:[#allocation15 + $0x98] sm:$0xff]
    %v2904 = vld [vmem:[#allocation15 + $0xa0] sm:$0xff]
    %v2905 = vld [vmem:[#allocation15 + $0xa8] sm:$0xff]
    %v2906 = vld [vmem:[#allocation15 + $0xb0] sm:$0xff]
    %v2907 = vld [vmem:[#allocation15 + $0xb8] sm:$0xff]
    %v2908 = vld [vmem:[#allocation15 + $0xc0] sm:$0xff]
    %v2909 = vld [vmem:[#allocation15 + $0xc8] sm:$0xff]
    %v2910 = vld [vmem:[#allocation15 + $0xd0] sm:$0xff]
    %v2911 = vld [vmem:[#allocation15 + $0xd8] sm:$0xff]
    %v2912 = vld [vmem:[#allocation15 + $0xe0] sm:$0xff]
    %v2913 = vld [vmem:[#allocation15 + $0xe8] sm:$0xff]
    %v2914 = vld [vmem:[#allocation15 + $0xf0] sm:$0xff]
    %v2915 = vld [vmem:[#allocation15 + $0xf8] sm:$0xff]
    %v2916 = vpack.c.bf16 %v2877, %v2877
    %v2917 = vpack.c.bf16 %v2883, %v2883
    %v2920 = vunpack.c.l.b16 %v2916
    %v2921 = vunpack.c.l.b16 %v2917
    %v2922 = vsel %vm1233, %v2921, %v2920
    %v2923 = vpack.c.b16 %v2922, %v2922
    %v2957 = vunpack.c.l.b16 %v2884
    %v2958 = vunpack.c.h.b16 %v2884
    %v2959 = vunpack.c.l.b16 %v2885
    %v2960 = vunpack.c.h.b16 %v2885
    %v2961 = vunpack.c.l.b16 %v2886
    %v2962 = vunpack.c.h.b16 %v2886
    %v2963 = vunpack.c.l.b16 %v2887
    %v2964 = vunpack.c.h.b16 %v2887
    %v2965 = vunpack.c.l.b16 %v2888
    %v2966 = vunpack.c.h.b16 %v2888
    %v2967 = vunpack.c.l.b16 %v2889
    %v2968 = vunpack.c.h.b16 %v2889
    %v2969 = vunpack.c.l.b16 %v2890
    %v2970 = vunpack.c.h.b16 %v2890
    %v2971 = vunpack.c.l.b16 %v2891
    %v2972 = vunpack.c.h.b16 %v2891
    %v2973 = vunpack.c.l.b16 %v2892
    %v2974 = vunpack.c.h.b16 %v2892
    %v2975 = vunpack.c.l.b16 %v2893
    %v2976 = vunpack.c.h.b16 %v2893
    %v2977 = vunpack.c.l.b16 %v2894
    %v2978 = vunpack.c.h.b16 %v2894
    %v2979 = vunpack.c.l.b16 %v2895
    %v2980 = vunpack.c.h.b16 %v2895
    %v2981 = vunpack.c.l.b16 %v2896
    %v2982 = vunpack.c.h.b16 %v2896
    %v2983 = vunpack.c.l.b16 %v2897
    %v2984 = vunpack.c.h.b16 %v2897
    %v2985 = vunpack.c.l.b16 %v2898
    %v2986 = vunpack.c.h.b16 %v2898
    %v2987 = vunpack.c.l.b16 %v2899
    %v2988 = vunpack.c.h.b16 %v2899
    %v2989 = vunpack.c.l.b16 %v2900
    %v2990 = vunpack.c.h.b16 %v2900
    %v2991 = vunpack.c.l.b16 %v2901
    %v2992 = vunpack.c.h.b16 %v2901
    %v2993 = vunpack.c.l.b16 %v2902
    %v2994 = vunpack.c.h.b16 %v2902
    %v2995 = vunpack.c.l.b16 %v2903
    %v2996 = vunpack.c.h.b16 %v2903
    %v2997 = vunpack.c.l.b16 %v2904
    %v2998 = vunpack.c.h.b16 %v2904
    %v2999 = vunpack.c.l.b16 %v2905
    %v3000 = vunpack.c.h.b16 %v2905
    %v3001 = vunpack.c.l.b16 %v2906
    %v3002 = vunpack.c.h.b16 %v2906
    %v3003 = vunpack.c.l.b16 %v2907
    %v3004 = vunpack.c.h.b16 %v2907
    %v3005 = vunpack.c.l.b16 %v2908
    %v3006 = vunpack.c.h.b16 %v2908
    %v3007 = vunpack.c.l.b16 %v2909
    %v3008 = vunpack.c.h.b16 %v2909
    %v3009 = vunpack.c.l.b16 %v2910
    %v3010 = vunpack.c.h.b16 %v2910
    %v3011 = vunpack.c.l.b16 %v2911
    %v3012 = vunpack.c.h.b16 %v2911
    %v3013 = vunpack.c.l.b16 %v2912
    %v3014 = vunpack.c.h.b16 %v2912
    %v3015 = vunpack.c.l.b16 %v2913
    %v3016 = vunpack.c.h.b16 %v2913
    %v3017 = vunpack.c.l.b16 %v2914
    %v3018 = vunpack.c.h.b16 %v2914
    %v3019 = vunpack.c.l.b16 %v2915
    %v3020 = vunpack.c.h.b16 %v2915
    %v3021 = vpack.c.b16 %v2961, %v2957
    %v3022 = vpack.c.b16 %v2962, %v2958
    %v3023 = vpack.c.b16 %v2963, %v2959
    %v3024 = vpack.c.b16 %v2964, %v2960
    %v3025 = vpack.c.b16 %v2969, %v2965
    %v3026 = vpack.c.b16 %v2970, %v2966
    %v3027 = vpack.c.b16 %v2971, %v2967
    %v3028 = vpack.c.b16 %v2972, %v2968
    %v3029 = vpack.c.b16 %v2977, %v2973
    %v3030 = vpack.c.b16 %v2978, %v2974
    %v3031 = vpack.c.b16 %v2979, %v2975
    %v3032 = vpack.c.b16 %v2980, %v2976
    %v3033 = vpack.c.b16 %v2985, %v2981
    %v3034 = vpack.c.b16 %v2986, %v2982
    %v3035 = vpack.c.b16 %v2987, %v2983
    %v3036 = vpack.c.b16 %v2988, %v2984
    %v3037 = vpack.c.b16 %v2993, %v2989
    %v3038 = vpack.c.b16 %v2994, %v2990
    %v3039 = vpack.c.b16 %v2995, %v2991
    %v3040 = vpack.c.b16 %v2996, %v2992
    %v3041 = vpack.c.b16 %v3001, %v2997
    %v3042 = vpack.c.b16 %v3002, %v2998
    %v3043 = vpack.c.b16 %v3003, %v2999
    %v3044 = vpack.c.b16 %v3004, %v3000
    %v3045 = vpack.c.b16 %v3009, %v3005
    %v3046 = vpack.c.b16 %v3010, %v3006
    %v3047 = vpack.c.b16 %v3011, %v3007
    %v3048 = vpack.c.b16 %v3012, %v3008
    %v3049 = vpack.c.b16 %v3017, %v3013
    %v3050 = vpack.c.b16 %v3018, %v3014
    %v3051 = vpack.c.b16 %v3019, %v3015
    %v3052 = vpack.c.b16 %v3020, %v3016
    %3085 = vmatprep.subr.bf16.mxu0 %v3050
    %3086 = vmatpush1.bf16.msra.mxu0 %v3049
    %3087 = vmatprep.subr.bf16.mxu0 %v3046
    %3088 = vmatpush1.bf16.msra.mxu0 %v3045
    %3089 = vmatprep.subr.bf16.mxu0 %v3042
    %3090 = vmatpush1.bf16.msra.mxu0 %v3041
    %3091 = vmatprep.subr.bf16.mxu0 %v3038
    %3092 = vmatpush1.bf16.msra.mxu0 %v3037
    %3093 = vmatprep.subr.bf16.mxu0 %v3034
    %3094 = vmatpush1.bf16.msra.mxu0 %v3033
    %3095 = vmatprep.subr.bf16.mxu0 %v3030
    %3096 = vmatpush1.bf16.msra.mxu0 %v3029
    %3097 = vmatprep.subr.bf16.mxu0 %v3026
    %3098 = vmatpush1.bf16.msra.mxu0 %v3025
    %3099 = vmatprep.subr.bf16.mxu0 %v3022
    %3100 = vmatpush1.bf16.msra.mxu0 %v3021
    %3101 = vmatprep.subr.bf16.mxu0 0
    %3102 = vmatpush2.bf16.msra.mxu0 0
    %3103 = vmatprep.subr.bf16.mxu0 0
    %3104 = vmatpush2.bf16.msra.mxu0 0
    %3105 = vmatprep.subr.bf16.mxu0 0
    %3106 = vmatpush2.bf16.msra.mxu0 0
    %3107 = vmatprep.subr.bf16.mxu0 0
    %3108 = vmatpush2.bf16.msra.mxu0 0
    %3109 = vmatprep.subr.bf16.mxu0 0
    %3110 = vmatpush2.bf16.msra.mxu0 0
    %3111 = vmatprep.subr.bf16.mxu0 0
    %3112 = vmatpush2.bf16.msra.mxu0 0
    %3113 = vmatprep.subr.bf16.mxu0 0
    %3114 = vmatpush2.bf16.msra.mxu0 0
    %3115 = vmatprep.subr.bf16.mxu0 0
    %3116 = vmatpush2.bf16.msra.mxu0 0
    %3117 = vmatprep.mubr.bf16.mxu0 0
    %3118 = vmatmul.mubr.bf16.gmra.mxu0 %v2923
    %v3119 = vpop.f32.mrf.mxu0
    %v3120 = vadd.f32 %v2704, %v3119
    %v3121 = vpop.f32.mrf.mxu0
    %v3122 = vadd.f32 %v2743, %v3121
    %v3123 = vpop.f32.mrf.mxu0
    %v3124 = vpop.f32.mrf.mxu0
    %3125 = vdwg.mxu0
    %3126 = vmatprep.subr.bf16.mxu0 %v3052
    %3127 = vmatpush1.bf16.msra.mxu0 %v3051
    %3128 = vmatprep.subr.bf16.mxu0 %v3048
    %3129 = vmatpush1.bf16.msra.mxu0 %v3047
    %3130 = vmatprep.subr.bf16.mxu0 %v3044
    %3131 = vmatpush1.bf16.msra.mxu0 %v3043
    %3132 = vmatprep.subr.bf16.mxu0 %v3040
    %3133 = vmatpush1.bf16.msra.mxu0 %v3039
    %3134 = vmatprep.subr.bf16.mxu0 %v3036
    %3135 = vmatpush1.bf16.msra.mxu0 %v3035
    %3136 = vmatprep.subr.bf16.mxu0 %v3032
    %3137 = vmatpush1.bf16.msra.mxu0 %v3031
    %3138 = vmatprep.subr.bf16.mxu0 %v3028
    %3139 = vmatpush1.bf16.msra.mxu0 %v3027
    %3140 = vmatprep.subr.bf16.mxu0 %v3024
    %3141 = vmatpush1.bf16.msra.mxu0 %v3023
    %3142 = vmatprep.subr.bf16.mxu0 0
    %3143 = vmatpush2.bf16.msra.mxu0 0
    %3144 = vmatprep.subr.bf16.mxu0 0
    %3145 = vmatpush2.bf16.msra.mxu0 0
    %3146 = vmatprep.subr.bf16.mxu0 0
    %3147 = vmatpush2.bf16.msra.mxu0 0
    %3148 = vmatprep.subr.bf16.mxu0 0
    %3149 = vmatpush2.bf16.msra.mxu0 0
    %3150 = vmatprep.subr.bf16.mxu0 0
    %3151 = vmatpush2.bf16.msra.mxu0 0
    %3152 = vmatprep.subr.bf16.mxu0 0
    %3153 = vmatpush2.bf16.msra.mxu0 0
    %3154 = vmatprep.subr.bf16.mxu0 0
    %3155 = vmatpush2.bf16.msra.mxu0 0
    %3156 = vmatprep.subr.bf16.mxu0 0
    %3157 = vmatpush2.bf16.msra.mxu0 0
    %3158 = vmatprep.mubr.bf16.mxu0 0
    %3159 = vmatmul.mubr.bf16.gmra.mxu0 %v2923
    %v3160 = vpop.f32.mrf.mxu0
    %v3161 = vadd.f32 %v2745, %v3160
    %v3162 = vpop.f32.mrf.mxu0
    %v3163 = vadd.f32 %v2784, %v3162
    %v3164 = vpop.f32.mrf.mxu0
    %v3165 = vpop.f32.mrf.mxu0
    %3166 = vdwg.mxu0
    %v3167 = vld [vmem:[#allocation4] sm:$0x22]
    %v3168 = vld [vmem:[#allocation4 + $0x8] sm:$0x22]
    %v3169 = vld [vmem:[#allocation4 + $0x10] sm:$0x22]
    %v3170 = vld [vmem:[#allocation4 + $0x18] sm:$0x22]
    %v3171 = vunpack.c.l.bf16 %v3167
    %v3172 = vunpack.c.h.bf16 %v3167
    %v3173 = vunpack.c.l.bf16 %v3168
    %v3174 = vunpack.c.h.bf16 %v3168
    %v3175 = vunpack.c.l.bf16 %v3169
    %v3176 = vunpack.c.h.bf16 %v3169
    %v3177 = vunpack.c.l.bf16 %v3170
    %v3178 = vunpack.c.h.bf16 %v3170
    %v3187 = vrot.slane %v3171, 2
    %v3188 = vrot.slane %v3175, 1
    %v3189 = vsel %vm1233, %v3188, %v3187
    %v3190 = vrot.slane %v3172, 2
    %v3191 = vrot.slane %v3176, 1
    %v3192 = vsel %vm1233, %v3191, %v3190
    %v3193 = vrot.slane %v3173, 2
    %v3194 = vrot.slane %v3177, 1
    %v3195 = vsel %vm1233, %v3194, %v3193
    %v3196 = vrot.slane %v3174, 2
    %v3197 = vrot.slane %v3178, 1
    %v3198 = vsel %vm1233, %v3197, %v3196
    %v3203 = vadd.f32 %v3120, %v3189
    %v3204 = vadd.f32 %v3122, %v3192
    %v3205 = vadd.f32 %v3161, %v3195
    %v3206 = vadd.f32 %v3163, %v3198
    %v3207 = vxor.u32 %v3203, 2147483648
    %v3208 = vmul.f32 %v3207, 1.442695
    %v3209 = vpow.pop %v3208
    %v3210 = vadd.f32 %v3209, 1.0
    %v3211 = vrcp.pop %v3210
    %v3212 = vmul.f32 1.0, %v3211
    %v3213 = vxor.u32 %v3204, 2147483648
    %v3214 = vmul.f32 %v3213, 1.442695
    %v3215 = vpow.pop %v3214
    %v3216 = vadd.f32 %v3215, 1.0
    %v3217 = vrcp.pop %v3216
    %v3218 = vmul.f32 1.0, %v3217
    %v3219 = vtanh.pop %v3205
    %v3220 = vxor.u32 %v3206, 2147483648
    %v3221 = vmul.f32 %v3220, 1.442695
    %v3222 = vpow.pop %v3221
    %v3223 = vadd.f32 %v3222, 1.0
    %v3224 = vrcp.pop %v3223
    %v3225 = vmul.f32 1.0, %v3224
    %v3226 = vmul.f32 %v3218, %v2380
    %v3227 = vmul.f32 %v3212, %v3219
    %v3228 = vadd.f32 %v3226, %v3227
    %v3229 = vtanh.pop %v3228
    %v3230 = vmul.f32 %v3225, %v3229
    %v3233 = vunpack.c.l.s4 1966171168
    %v3234 = vunpack.c.0.s8 %v3233
    %v3235 = vlaneseq
    %v3236 = vshrl.u32 %v3235, 7
    %v3237 = vsub.s32 %v3234, %v3236
    %v3238 = vrot.slane %v3230, %v3237
    %v3239 = vcombine.high %v3238, %v3238
    %v3241 = vunpack.c.l.s4 1966171168
    %v3242 = vunpack.c.0.s8 %v3241
    %v3243 = vlaneseq
    %v3244 = vshrl.u32 %v3243, 7
    %v3245 = vsub.s32 %v3242, %v3244
    %v3246 = vrot.slane %v3238, %v3245
    %v3248 = vunpack.c.l.s4 1966171168
    %v3249 = vunpack.c.0.s8 %v3248
    %v3250 = vlaneseq
    %v3251 = vshrl.u32 %v3250, 7
    %v3252 = vsub.s32 %v3249, %v3251
    %v3253 = vrot.slane %v3239, %v3252
    %3256 = vst [vmem:[#allocation5 + $0x2] sm:$0x1] %v3246
    %3257 = vst [vmem:[#allocation5 + $0xa] sm:$0x1] %v3253
    %v3258 = vld [vmem:[#allocation14] sm:$0xff]
    %v3259 = vld [vmem:[#allocation14 + $0x8] sm:$0xff]
    %v3260 = vld [vmem:[#allocation14 + $0x10] sm:$0xf]
    %v3261 = vld [vmem:[#allocation14 + $0x14] sm:$0xff]
    %v3262 = vld [vmem:[#allocation14 + $0x1c] sm:$0xff]
    %v3263 = vld [vmem:[#allocation14 + $0x24] sm:$0xf]
    %v3264 = vld [vmem:[#allocation14 + $0x28] sm:$0xff]
    %v3265 = vld [vmem:[#allocation14 + $0x30] sm:$0xff]
    %v3266 = vld [vmem:[#allocation14 + $0x38] sm:$0xf]
    %v3267 = vld [vmem:[#allocation14 + $0x3c] sm:$0xff]
    %v3268 = vld [vmem:[#allocation14 + $0x44] sm:$0xff]
    %v3269 = vld [vmem:[#allocation14 + $0x4c] sm:$0xf]
    %v3270 = vld [vmem:[#allocation14 + $0x50] sm:$0xff]
    %v3271 = vld [vmem:[#allocation14 + $0x58] sm:$0xff]
    %v3272 = vld [vmem:[#allocation14 + $0x60] sm:$0xf]
    %v3273 = vld [vmem:[#allocation14 + $0x64] sm:$0xff]
    %v3274 = vld [vmem:[#allocation14 + $0x6c] sm:$0xff]
    %v3275 = vld [vmem:[#allocation14 + $0x74] sm:$0xf]
    %v3276 = vld [vmem:[#allocation14 + $0x78] sm:$0xff]
    %v3277 = vld [vmem:[#allocation14 + $0x80] sm:$0xff]
    %v3278 = vld [vmem:[#allocation14 + $0x88] sm:$0xf]
    %v3279 = vld [vmem:[#allocation14 + $0x8c] sm:$0xff]
    %v3280 = vld [vmem:[#allocation14 + $0x94] sm:$0xff]
    %v3281 = vld [vmem:[#allocation14 + $0x9c] sm:$0xf]
    %v3282 = vld [vmem:[#allocation14 + $0xa0] sm:$0xff]
    %v3283 = vld [vmem:[#allocation14 + $0xa8] sm:$0xff]
    %v3284 = vld [vmem:[#allocation14 + $0xb0] sm:$0xf]
    %v3285 = vld [vmem:[#allocation14 + $0xb4] sm:$0xff]
    %v3286 = vld [vmem:[#allocation14 + $0xbc] sm:$0xff]
    %v3287 = vld [vmem:[#allocation14 + $0xc4] sm:$0xf]
    %v3288 = vld [vmem:[#allocation14 + $0xc8] sm:$0xff]
    %v3289 = vld [vmem:[#allocation14 + $0xd0] sm:$0xff]
    %v3290 = vld [vmem:[#allocation14 + $0xd8] sm:$0xf]
    %v3291 = vld [vmem:[#allocation14 + $0xdc] sm:$0xff]
    %v3292 = vld [vmem:[#allocation14 + $0xe4] sm:$0xff]
    %v3293 = vld [vmem:[#allocation14 + $0xec] sm:$0xf]
    %v3294 = vld [vmem:[#allocation14 + $0xf0] sm:$0xff]
    %v3295 = vld [vmem:[#allocation14 + $0xf8] sm:$0xff]
    %v3296 = vld [vmem:[#allocation14 + $0x100] sm:$0xf]
    %v3297 = vld [vmem:[#allocation14 + $0x104] sm:$0xff]
    %v3298 = vld [vmem:[#allocation14 + $0x10c] sm:$0xff]
    %v3299 = vld [vmem:[#allocation14 + $0x114] sm:$0xf]
    %v3300 = vld [vmem:[#allocation14 + $0x118] sm:$0xff]
    %v3301 = vld [vmem:[#allocation14 + $0x120] sm:$0xff]
    %v3302 = vld [vmem:[#allocation14 + $0x128] sm:$0xf]
    %v3303 = vld [vmem:[#allocation14 + $0x12c] sm:$0xff]
    %v3304 = vld [vmem:[#allocation14 + $0x134] sm:$0xff]
    %v3305 = vld [vmem:[#allocation14 + $0x13c] sm:$0xf]
    %v3306 = vpack.c.bf16 %v3230, %v3230
    %v3355 = vunpack.c.l.b16 %v3258
    %v3356 = vunpack.c.h.b16 %v3258
    %v3357 = vunpack.c.l.b16 %v3259
    %v3358 = vunpack.c.h.b16 %v3259
    %v3359 = vunpack.c.l.b16 %v3260
    %v3360 = vunpack.c.l.b16 %v3261
    %v3361 = vunpack.c.h.b16 %v3261
    %v3362 = vunpack.c.l.b16 %v3262
    %v3363 = vunpack.c.h.b16 %v3262
    %v3364 = vunpack.c.l.b16 %v3263
    %v3365 = vunpack.c.l.b16 %v3264
    %v3366 = vunpack.c.h.b16 %v3264
    %v3367 = vunpack.c.l.b16 %v3265
    %v3368 = vunpack.c.h.b16 %v3265
    %v3369 = vunpack.c.l.b16 %v3266
    %v3370 = vunpack.c.l.b16 %v3267
    %v3371 = vunpack.c.h.b16 %v3267
    %v3372 = vunpack.c.l.b16 %v3268
    %v3373 = vunpack.c.h.b16 %v3268
    %v3374 = vunpack.c.l.b16 %v3269
    %v3375 = vunpack.c.l.b16 %v3270
    %v3376 = vunpack.c.h.b16 %v3270
    %v3377 = vunpack.c.l.b16 %v3271
    %v3378 = vunpack.c.h.b16 %v3271
    %v3379 = vunpack.c.l.b16 %v3272
    %v3380 = vunpack.c.l.b16 %v3273
    %v3381 = vunpack.c.h.b16 %v3273
    %v3382 = vunpack.c.l.b16 %v3274
    %v3383 = vunpack.c.h.b16 %v3274
    %v3384 = vunpack.c.l.b16 %v3275
    %v3385 = vunpack.c.l.b16 %v3276
    %v3386 = vunpack.c.h.b16 %v3276
    %v3387 = vunpack.c.l.b16 %v3277
    %v3388 = vunpack.c.h.b16 %v3277
    %v3389 = vunpack.c.l.b16 %v3278
    %v3390 = vunpack.c.l.b16 %v3279
    %v3391 = vunpack.c.h.b16 %v3279
    %v3392 = vunpack.c.l.b16 %v3280
    %v3393 = vunpack.c.h.b16 %v3280
    %v3394 = vunpack.c.l.b16 %v3281
    %v3395 = vunpack.c.l.b16 %v3282
    %v3396 = vunpack.c.h.b16 %v3282
    %v3397 = vunpack.c.l.b16 %v3283
    %v3398 = vunpack.c.h.b16 %v3283
    %v3399 = vunpack.c.l.b16 %v3284
    %v3400 = vunpack.c.l.b16 %v3285
    %v3401 = vunpack.c.h.b16 %v3285
    %v3402 = vunpack.c.l.b16 %v3286
    %v3403 = vunpack.c.h.b16 %v3286
    %v3404 = vunpack.c.l.b16 %v3287
    %v3405 = vunpack.c.l.b16 %v3288
    %v3406 = vunpack.c.h.b16 %v3288
    %v3407 = vunpack.c.l.b16 %v3289
    %v3408 = vunpack.c.h.b16 %v3289
    %v3409 = vunpack.c.l.b16 %v3290
    %v3410 = vunpack.c.l.b16 %v3291
    %v3411 = vunpack.c.h.b16 %v3291
    %v3412 = vunpack.c.l.b16 %v3292
    %v3413 = vunpack.c.h.b16 %v3292
    %v3414 = vunpack.c.l.b16 %v3293
    %v3415 = vunpack.c.l.b16 %v3294
    %v3416 = vunpack.c.h.b16 %v3294
    %v3417 = vunpack.c.l.b16 %v3295
    %v3418 = vunpack.c.h.b16 %v3295
    %v3419 = vunpack.c.l.b16 %v3296
    %v3420 = vunpack.c.l.b16 %v3297
    %v3421 = vunpack.c.h.b16 %v3297
    %v3422 = vunpack.c.l.b16 %v3298
    %v3423 = vunpack.c.h.b16 %v3298
    %v3424 = vunpack.c.l.b16 %v3299
    %v3425 = vunpack.c.l.b16 %v3300
    %v3426 = vunpack.c.h.b16 %v3300
    %v3427 = vunpack.c.l.b16 %v3301
    %v3428 = vunpack.c.h.b16 %v3301
    %v3429 = vunpack.c.l.b16 %v3302
    %v3430 = vunpack.c.l.b16 %v3303
    %v3431 = vunpack.c.h.b16 %v3303
    %v3432 = vunpack.c.l.b16 %v3304
    %v3433 = vunpack.c.h.b16 %v3304
    %v3434 = vunpack.c.l.b16 %v3305
    %v3435 = vpack.c.b16 %v3360, %v3355
    %v3436 = vpack.c.b16 %v3361, %v3356
    %v3437 = vpack.c.b16 %v3362, %v3357
    %v3438 = vpack.c.b16 %v3363, %v3358
    %v3439 = vpack.c.b16 %v3364, %v3359
    %v3440 = vpack.c.b16 %v3370, %v3365
    %v3441 = vpack.c.b16 %v3371, %v3366
    %v3442 = vpack.c.b16 %v3372, %v3367
    %v3443 = vpack.c.b16 %v3373, %v3368
    %v3444 = vpack.c.b16 %v3374, %v3369
    %v3445 = vpack.c.b16 %v3380, %v3375
    %v3446 = vpack.c.b16 %v3381, %v3376
    %v3447 = vpack.c.b16 %v3382, %v3377
    %v3448 = vpack.c.b16 %v3383, %v3378
    %v3449 = vpack.c.b16 %v3384, %v3379
    %v3450 = vpack.c.b16 %v3390, %v3385
    %v3451 = vpack.c.b16 %v3391, %v3386
    %v3452 = vpack.c.b16 %v3392, %v3387
    %v3453 = vpack.c.b16 %v3393, %v3388
    %v3454 = vpack.c.b16 %v3394, %v3389
    %v3455 = vpack.c.b16 %v3400, %v3395
    %v3456 = vpack.c.b16 %v3401, %v3396
    %v3457 = vpack.c.b16 %v3402, %v3397
    %v3458 = vpack.c.b16 %v3403, %v3398
    %v3459 = vpack.c.b16 %v3404, %v3399
    %v3460 = vpack.c.b16 %v3410, %v3405
    %v3461 = vpack.c.b16 %v3411, %v3406
    %v3462 = vpack.c.b16 %v3412, %v3407
    %v3463 = vpack.c.b16 %v3413, %v3408
    %v3464 = vpack.c.b16 %v3414, %v3409
    %v3465 = vpack.c.b16 %v3420, %v3415
    %v3466 = vpack.c.b16 %v3421, %v3416
    %v3467 = vpack.c.b16 %v3422, %v3417
    %v3468 = vpack.c.b16 %v3423, %v3418
    %v3469 = vpack.c.b16 %v3424, %v3419
    %v3470 = vpack.c.b16 %v3430, %v3425
    %v3471 = vpack.c.b16 %v3431, %v3426
    %v3472 = vpack.c.b16 %v3432, %v3427
    %v3473 = vpack.c.b16 %v3433, %v3428
    %v3474 = vpack.c.b16 %v3434, %v3429
    %3515 = vmatprep.subr.bf16.mxu0 %v3471
    %3516 = vmatpush1.bf16.msra.mxu0 %v3470
    %3517 = vmatprep.subr.bf16.mxu0 %v3466
    %3518 = vmatpush1.bf16.msra.mxu0 %v3465
    %3519 = vmatprep.subr.bf16.mxu0 %v3461
    %3520 = vmatpush1.bf16.msra.mxu0 %v3460
    %3521 = vmatprep.subr.bf16.mxu0 %v3456
    %3522 = vmatpush1.bf16.msra.mxu0 %v3455
    %3523 = vmatprep.subr.bf16.mxu0 %v3451
    %3524 = vmatpush1.bf16.msra.mxu0 %v3450
    %3525 = vmatprep.subr.bf16.mxu0 %v3446
    %3526 = vmatpush1.bf16.msra.mxu0 %v3445
    %3527 = vmatprep.subr.bf16.mxu0 %v3441
    %3528 = vmatpush1.bf16.msra.mxu0 %v3440
    %3529 = vmatprep.subr.bf16.mxu0 %v3436
    %3530 = vmatpush1.bf16.msra.mxu0 %v3435
    %3531 = vmatprep.subr.bf16.mxu0 0
    %3532 = vmatpush2.bf16.msra.mxu0 0
    %3533 = vmatprep.subr.bf16.mxu0 0
    %3534 = vmatpush2.bf16.msra.mxu0 0
    %3535 = vmatprep.subr.bf16.mxu0 0
    %3536 = vmatpush2.bf16.msra.mxu0 0
    %3537 = vmatprep.subr.bf16.mxu0 0
    %3538 = vmatpush2.bf16.msra.mxu0 0
    %3539 = vmatprep.subr.bf16.mxu0 0
    %3540 = vmatpush2.bf16.msra.mxu0 0
    %3541 = vmatprep.subr.bf16.mxu0 0
    %3542 = vmatpush2.bf16.msra.mxu0 0
    %3543 = vmatprep.subr.bf16.mxu0 0
    %3544 = vmatpush2.bf16.msra.mxu0 0
    %3545 = vmatprep.subr.bf16.mxu0 0
    %3546 = vmatpush2.bf16.msra.mxu0 0
    %3547 = vmatprep.mubr.bf16.mxu0 0
    %3548 = vmatmul.mubr.bf16.gmra.mxu0 %v3306
    %v3549 = vpop.f32.mrf.mxu0
    %v3550 = vadd.f32 0.0, %v3549
    %v3551 = vpop.f32.mrf.mxu0
    %v3552 = vadd.f32 0.0, %v3551
    %v3553 = vpop.f32.mrf.mxu0
    %v3554 = vpop.f32.mrf.mxu0
    %3555 = vdwg.mxu0
    %3556 = vmatprep.subr.bf16.mxu0 %v3473
    %3557 = vmatpush1.bf16.msra.mxu0 %v3472
    %3558 = vmatprep.subr.bf16.mxu0 %v3468
    %3559 = vmatpush1.bf16.msra.mxu0 %v3467
    %3560 = vmatprep.subr.bf16.mxu0 %v3463
    %3561 = vmatpush1.bf16.msra.mxu0 %v3462
    %3562 = vmatprep.subr.bf16.mxu0 %v3458
    %3563 = vmatpush1.bf16.msra.mxu0 %v3457
    %3564 = vmatprep.subr.bf16.mxu0 %v3453
    %3565 = vmatpush1.bf16.msra.mxu0 %v3452
    %3566 = vmatprep.subr.bf16.mxu0 %v3448
    %3567 = vmatpush1.bf16.msra.mxu0 %v3447
    %3568 = vmatprep.subr.bf16.mxu0 %v3443
    %3569 = vmatpush1.bf16.msra.mxu0 %v3442
    %3570 = vmatprep.subr.bf16.mxu0 %v3438
    %3571 = vmatpush1.bf16.msra.mxu0 %v3437
    %3572 = vmatprep.subr.bf16.mxu0 0
    %3573 = vmatpush2.bf16.msra.mxu0 0
    %3574 = vmatprep.subr.bf16.mxu0 0
    %3575 = vmatpush2.bf16.msra.mxu0 0
    %3576 = vmatprep.subr.bf16.mxu0 0
    %3577 = vmatpush2.bf16.msra.mxu0 0
    %3578 = vmatprep.subr.bf16.mxu0 0
    %3579 = vmatpush2.bf16.msra.mxu0 0
    %3580 = vmatprep.subr.bf16.mxu0 0
    %3581 = vmatpush2.bf16.msra.mxu0 0
    %3582 = vmatprep.subr.bf16.mxu0 0
    %3583 = vmatpush2.bf16.msra.mxu0 0
    %3584 = vmatprep.subr.bf16.mxu0 0
    %3585 = vmatpush2.bf16.msra.mxu0 0
    %3586 = vmatprep.subr.bf16.mxu0 0
    %3587 = vmatpush2.bf16.msra.mxu0 0
    %3588 = vmatprep.mubr.bf16.mxu0 0
    %3589 = vmatmul.mubr.bf16.gmra.mxu0 %v3306
    %v3590 = vpop.f32.mrf.mxu0
    %v3591 = vadd.f32 0.0, %v3590
    %v3592 = vpop.f32.mrf.mxu0
    %v3593 = vadd.f32 0.0, %v3592
    %v3594 = vpop.f32.mrf.mxu0
    %v3595 = vpop.f32.mrf.mxu0
    %3596 = vdwg.mxu0
    %3597 = vmatprep.subr.bf16.mxu0 0
    %3598 = vmatpush1.bf16.msra.mxu0 %v3474
    %3599 = vmatprep.subr.bf16.mxu0 0
    %3600 = vmatpush1.bf16.msra.mxu0 %v3469
    %3601 = vmatprep.subr.bf16.mxu0 0
    %3602 = vmatpush1.bf16.msra.mxu0 %v3464
    %3603 = vmatprep.subr.bf16.mxu0 0
    %3604 = vmatpush1.bf16.msra.mxu0 %v3459
    %3605 = vmatprep.subr.bf16.mxu0 0
    %3606 = vmatpush1.bf16.msra.mxu0 %v3454
    %3607 = vmatprep.subr.bf16.mxu0 0
    %3608 = vmatpush1.bf16.msra.mxu0 %v3449
    %3609 = vmatprep.subr.bf16.mxu0 0
    %3610 = vmatpush1.bf16.msra.mxu0 %v3444
    %3611 = vmatprep.subr.bf16.mxu0 0
    %3612 = vmatpush1.bf16.msra.mxu0 %v3439
    %3613 = vmatprep.subr.bf16.mxu0 0
    %3614 = vmatpush2.bf16.msra.mxu0 0
    %3615 = vmatprep.subr.bf16.mxu0 0
    %3616 = vmatpush2.bf16.msra.mxu0 0
    %3617 = vmatprep.subr.bf16.mxu0 0
    %3618 = vmatpush2.bf16.msra.mxu0 0
    %3619 = vmatprep.subr.bf16.mxu0 0
    %3620 = vmatpush2.bf16.msra.mxu0 0
    %3621 = vmatprep.subr.bf16.mxu0 0
    %3622 = vmatpush2.bf16.msra.mxu0 0
    %3623 = vmatprep.subr.bf16.mxu0 0
    %3624 = vmatpush2.bf16.msra.mxu0 0
    %3625 = vmatprep.subr.bf16.mxu0 0
    %3626 = vmatpush2.bf16.msra.mxu0 0
    %3627 = vmatprep.subr.bf16.mxu0 0
    %3628 = vmatpush2.bf16.msra.mxu0 0
    %3629 = vmatprep.mubr.bf16.mxu0 0
    %3630 = vmatmul.mubr.bf16.gmra.mxu0 %v3306
    %v3631 = vpop.f32.mrf.mxu0
    %v3632 = vadd.f32 0.0, %v3631
    %v3633 = vpop.f32.mrf.mxu0
    %v3634 = vpop.f32.mrf.mxu0
    %v3635 = vpop.f32.mrf.mxu0
    %3636 = vdwg.mxu0
    %v3637 = vld [vmem:[#allocation3] sm:$0xff]
    %v3638 = vld [vmem:[#allocation3 + $0x8] sm:$0xff]
    %v3641 = vunpack.c.l.s4 1966171168
    %v3642 = vunpack.c.0.s8 %v3641
    %v3643 = vlaneseq
    %v3644 = vshrl.u32 %v3643, 7
    %v3645 = vsub.s32 %v3642, %v3644
    %v3646 = vrot.slane %v3550, %v3645
    %v3647 = vcombine.high %v3646, %v3646
    %v3649 = vunpack.c.l.s4 1966171168
    %v3650 = vunpack.c.0.s8 %v3649
    %v3651 = vlaneseq
    %v3652 = vshrl.u32 %v3651, 7
    %v3653 = vsub.s32 %v3650, %v3652
    %v3654 = vrot.slane %v3646, %v3653
    %v3656 = vunpack.c.l.s4 1966171168
    %v3657 = vunpack.c.0.s8 %v3656
    %v3658 = vlaneseq
    %v3659 = vshrl.u32 %v3658, 7
    %v3660 = vsub.s32 %v3657, %v3659
    %v3661 = vrot.slane %v3647, %v3660
    %v3662 = vlaneseq
    %v3663 = vshrl.u32 %v3662, 7
    %v3664 = vsub.s32 0, %v3663
    %v3665 = vrot.slane %v3654, %v3664
    %v3666 = vlaneseq
    %v3667 = vshrl.u32 %v3666, 7
    %v3668 = vsub.s32 0, %v3667
    %v3669 = vrot.slane %v3661, %v3668
    %v3672 = vadd.f32 %v3637, %v3665
    %v3673 = vadd.f32 %v3638, %v3669
    %v3674 = vtanh.pop %v3672
    %v3675 = vtanh.pop %v3673
    %v3676 = vmul.f32 %v3674, %v1137
    %v3677 = vmul.f32 %v3675, %v1137
    %3678 = vadd.xlane.f32.xlu0 %v3676
    %v3679 = vpop.xlane.xlu0 %3678
    %3680 = vadd.xlane.f32.xlu0 %v3677
    %v3681 = vpop.xlane.xlu0 %3680
    %v3682 = vrot.slane %v3679, 4
    %v3683 = vmax.f32 %v3679, %v3682
    %v3684 = vrot.slane %v3683, 2
    %v3685 = vmax.f32 %v3683, %v3684
    %v3686 = vrot.slane %v3685, 1
    %v3687 = vmax.f32 %v3685, %v3686
    %v3688 = vrot.slane %v3681, 4
    %v3689 = vmax.f32 %v3681, %v3688
    %v3690 = vrot.slane %v3689, 2
    %v3691 = vmax.f32 %v3689, %v3690
    %v3692 = vrot.slane %v3691, 1
    %v3693 = vmax.f32 %v3691, %v3692
    %v3694 = vsub.f32 %v3679, %v3687
    %v3695 = vsub.f32 %v3681, %v3693
    %v3696 = vmul.f32 %v3694, 1.442695
    %v3697 = vpow.pop %v3696
    %v3698 = vmul.f32 %v3695, 1.442695
    %v3699 = vpow.pop %v3698
    %v3700 = vrot.slane %v3697, 4
    %v3701 = vadd.f32 %v3697, %v3700
    %v3702 = vrot.slane %v3701, 2
    %v3703 = vadd.f32 %v3701, %v3702
    %v3704 = vrot.slane %v3703, 1
    %v3705 = vadd.f32 %v3703, %v3704
    %v3706 = vrot.slane %v3699, 4
    %v3707 = vadd.f32 %v3699, %v3706
    %v3708 = vrot.slane %v3707, 2
    %v3709 = vadd.f32 %v3707, %v3708
    %v3710 = vrot.slane %v3709, 1
    %v3711 = vadd.f32 %v3709, %v3710
    %v3712 = vrcp.pop %v3705
    %v3713 = vrcp.pop %v3711
    %v3714 = vmul.f32 %v3697, %v3712
    %v3715 = vmul.f32 %v3699, %v3713
    %v3716 = vld [vmem:[#allocation2] sm:$0xff]
    %v3717 = vld [vmem:[#allocation2 + $0x8] sm:$0xff]
    %v3718 = vmul.f32 %v3714, %v3716
    %v3719 = vmul.f32 %v3715, %v3717
    %v3720 = vrot.slane %v3718, 4
    %v3721 = vadd.f32 %v3718, %v3720
    %v3722 = vrot.slane %v3721, 2
    %v3723 = vadd.f32 %v3721, %v3722
    %v3724 = vrot.slane %v3723, 1
    %v3725 = vadd.f32 %v3723, %v3724
    %v3726 = vrot.slane %v3719, 4
    %v3727 = vadd.f32 %v3719, %v3726
    %v3728 = vrot.slane %v3727, 2
    %v3729 = vadd.f32 %v3727, %v3728
    %v3730 = vrot.slane %v3729, 1
    %v3731 = vadd.f32 %v3729, %v3730
    %v3732 = vld [vmem:[#allocation15] sm:$0xff]
    %v3733 = vld [vmem:[#allocation15 + $0x8] sm:$0xff]
    %v3734 = vld [vmem:[#allocation15 + $0x10] sm:$0xff]
    %v3735 = vld [vmem:[#allocation15 + $0x18] sm:$0xff]
    %v3736 = vld [vmem:[#allocation15 + $0x20] sm:$0xff]
    %v3737 = vld [vmem:[#allocation15 + $0x28] sm:$0xff]
    %v3738 = vld [vmem:[#allocation15 + $0x30] sm:$0xff]
    %v3739 = vld [vmem:[#allocation15 + $0x38] sm:$0xff]
    %v3740 = vld [vmem:[#allocation15 + $0x40] sm:$0xff]
    %v3741 = vld [vmem:[#allocation15 + $0x48] sm:$0xff]
    %v3742 = vld [vmem:[#allocation15 + $0x50] sm:$0xff]
    %v3743 = vld [vmem:[#allocation15 + $0x58] sm:$0xff]
    %v3744 = vld [vmem:[#allocation15 + $0x60] sm:$0xff]
    %v3745 = vld [vmem:[#allocation15 + $0x68] sm:$0xff]
    %v3746 = vld [vmem:[#allocation15 + $0x70] sm:$0xff]
    %v3747 = vld [vmem:[#allocation15 + $0x78] sm:$0xff]
    %v3748 = vld [vmem:[#allocation15 + $0x80] sm:$0xff]
    %v3749 = vld [vmem:[#allocation15 + $0x88] sm:$0xff]
    %v3750 = vld [vmem:[#allocation15 + $0x90] sm:$0xff]
    %v3751 = vld [vmem:[#allocation15 + $0x98] sm:$0xff]
    %v3752 = vld [vmem:[#allocation15 + $0xa0] sm:$0xff]
    %v3753 = vld [vmem:[#allocation15 + $0xa8] sm:$0xff]
    %v3754 = vld [vmem:[#allocation15 + $0xb0] sm:$0xff]
    %v3755 = vld [vmem:[#allocation15 + $0xb8] sm:$0xff]
    %v3756 = vld [vmem:[#allocation15 + $0xc0] sm:$0xff]
    %v3757 = vld [vmem:[#allocation15 + $0xc8] sm:$0xff]
    %v3758 = vld [vmem:[#allocation15 + $0xd0] sm:$0xff]
    %v3759 = vld [vmem:[#allocation15 + $0xd8] sm:$0xff]
    %v3760 = vld [vmem:[#allocation15 + $0xe0] sm:$0xff]
    %v3761 = vld [vmem:[#allocation15 + $0xe8] sm:$0xff]
    %v3762 = vld [vmem:[#allocation15 + $0xf0] sm:$0xff]
    %v3763 = vld [vmem:[#allocation15 + $0xf8] sm:$0xff]
    %v3764 = vpack.c.bf16 %v3725, %v3725
    %v3765 = vpack.c.bf16 %v3731, %v3731
    %v3768 = vunpack.c.l.b16 %v3764
    %v3769 = vunpack.c.l.b16 %v3765
    %v3770 = vsel %vm1233, %v3769, %v3768
    %v3771 = vpack.c.b16 %v3770, %v3770
    %v3805 = vunpack.c.l.b16 %v3732
    %v3806 = vunpack.c.h.b16 %v3732
    %v3807 = vunpack.c.l.b16 %v3733
    %v3808 = vunpack.c.h.b16 %v3733
    %v3809 = vunpack.c.l.b16 %v3734
    %v3810 = vunpack.c.h.b16 %v3734
    %v3811 = vunpack.c.l.b16 %v3735
    %v3812 = vunpack.c.h.b16 %v3735
    %v3813 = vunpack.c.l.b16 %v3736
    %v3814 = vunpack.c.h.b16 %v3736
    %v3815 = vunpack.c.l.b16 %v3737
    %v3816 = vunpack.c.h.b16 %v3737
    %v3817 = vunpack.c.l.b16 %v3738
    %v3818 = vunpack.c.h.b16 %v3738
    %v3819 = vunpack.c.l.b16 %v3739
    %v3820 = vunpack.c.h.b16 %v3739
    %v3821 = vunpack.c.l.b16 %v3740
    %v3822 = vunpack.c.h.b16 %v3740
    %v3823 = vunpack.c.l.b16 %v3741
    %v3824 = vunpack.c.h.b16 %v3741
    %v3825 = vunpack.c.l.b16 %v3742
    %v3826 = vunpack.c.h.b16 %v3742
    %v3827 = vunpack.c.l.b16 %v3743
    %v3828 = vunpack.c.h.b16 %v3743
    %v3829 = vunpack.c.l.b16 %v3744
    %v3830 = vunpack.c.h.b16 %v3744
    %v3831 = vunpack.c.l.b16 %v3745
    %v3832 = vunpack.c.h.b16 %v3745
    %v3833 = vunpack.c.l.b16 %v3746
    %v3834 = vunpack.c.h.b16 %v3746
    %v3835 = vunpack.c.l.b16 %v3747
    %v3836 = vunpack.c.h.b16 %v3747
    %v3837 = vunpack.c.l.b16 %v3748
    %v3838 = vunpack.c.h.b16 %v3748
    %v3839 = vunpack.c.l.b16 %v3749
    %v3840 = vunpack.c.h.b16 %v3749
    %v3841 = vunpack.c.l.b16 %v3750
    %v3842 = vunpack.c.h.b16 %v3750
    %v3843 = vunpack.c.l.b16 %v3751
    %v3844 = vunpack.c.h.b16 %v3751
    %v3845 = vunpack.c.l.b16 %v3752
    %v3846 = vunpack.c.h.b16 %v3752
    %v3847 = vunpack.c.l.b16 %v3753
    %v3848 = vunpack.c.h.b16 %v3753
    %v3849 = vunpack.c.l.b16 %v3754
    %v3850 = vunpack.c.h.b16 %v3754
    %v3851 = vunpack.c.l.b16 %v3755
    %v3852 = vunpack.c.h.b16 %v3755
    %v3853 = vunpack.c.l.b16 %v3756
    %v3854 = vunpack.c.h.b16 %v3756
    %v3855 = vunpack.c.l.b16 %v3757
    %v3856 = vunpack.c.h.b16 %v3757
    %v3857 = vunpack.c.l.b16 %v3758
    %v3858 = vunpack.c.h.b16 %v3758
    %v3859 = vunpack.c.l.b16 %v3759
    %v3860 = vunpack.c.h.b16 %v3759
    %v3861 = vunpack.c.l.b16 %v3760
    %v3862 = vunpack.c.h.b16 %v3760
    %v3863 = vunpack.c.l.b16 %v3761
    %v3864 = vunpack.c.h.b16 %v3761
    %v3865 = vunpack.c.l.b16 %v3762
    %v3866 = vunpack.c.h.b16 %v3762
    %v3867 = vunpack.c.l.b16 %v3763
    %v3868 = vunpack.c.h.b16 %v3763
    %v3869 = vpack.c.b16 %v3809, %v3805
    %v3870 = vpack.c.b16 %v3810, %v3806
    %v3871 = vpack.c.b16 %v3811, %v3807
    %v3872 = vpack.c.b16 %v3812, %v3808
    %v3873 = vpack.c.b16 %v3817, %v3813
    %v3874 = vpack.c.b16 %v3818, %v3814
    %v3875 = vpack.c.b16 %v3819, %v3815
    %v3876 = vpack.c.b16 %v3820, %v3816
    %v3877 = vpack.c.b16 %v3825, %v3821
    %v3878 = vpack.c.b16 %v3826, %v3822
    %v3879 = vpack.c.b16 %v3827, %v3823
    %v3880 = vpack.c.b16 %v3828, %v3824
    %v3881 = vpack.c.b16 %v3833, %v3829
    %v3882 = vpack.c.b16 %v3834, %v3830
    %v3883 = vpack.c.b16 %v3835, %v3831
    %v3884 = vpack.c.b16 %v3836, %v3832
    %v3885 = vpack.c.b16 %v3841, %v3837
    %v3886 = vpack.c.b16 %v3842, %v3838
    %v3887 = vpack.c.b16 %v3843, %v3839
    %v3888 = vpack.c.b16 %v3844, %v3840
    %v3889 = vpack.c.b16 %v3849, %v3845
    %v3890 = vpack.c.b16 %v3850, %v3846
    %v3891 = vpack.c.b16 %v3851, %v3847
    %v3892 = vpack.c.b16 %v3852, %v3848
    %v3893 = vpack.c.b16 %v3857, %v3853
    %v3894 = vpack.c.b16 %v3858, %v3854
    %v3895 = vpack.c.b16 %v3859, %v3855
    %v3896 = vpack.c.b16 %v3860, %v3856
    %v3897 = vpack.c.b16 %v3865, %v3861
    %v3898 = vpack.c.b16 %v3866, %v3862
    %v3899 = vpack.c.b16 %v3867, %v3863
    %v3900 = vpack.c.b16 %v3868, %v3864
    %3933 = vmatprep.subr.bf16.mxu0 %v3898
    %3934 = vmatpush1.bf16.msra.mxu0 %v3897
    %3935 = vmatprep.subr.bf16.mxu0 %v3894
    %3936 = vmatpush1.bf16.msra.mxu0 %v3893
    %3937 = vmatprep.subr.bf16.mxu0 %v3890
    %3938 = vmatpush1.bf16.msra.mxu0 %v3889
    %3939 = vmatprep.subr.bf16.mxu0 %v3886
    %3940 = vmatpush1.bf16.msra.mxu0 %v3885
    %3941 = vmatprep.subr.bf16.mxu0 %v3882
    %3942 = vmatpush1.bf16.msra.mxu0 %v3881
    %3943 = vmatprep.subr.bf16.mxu0 %v3878
    %3944 = vmatpush1.bf16.msra.mxu0 %v3877
    %3945 = vmatprep.subr.bf16.mxu0 %v3874
    %3946 = vmatpush1.bf16.msra.mxu0 %v3873
    %3947 = vmatprep.subr.bf16.mxu0 %v3870
    %3948 = vmatpush1.bf16.msra.mxu0 %v3869
    %3949 = vmatprep.subr.bf16.mxu0 0
    %3950 = vmatpush2.bf16.msra.mxu0 0
    %3951 = vmatprep.subr.bf16.mxu0 0
    %3952 = vmatpush2.bf16.msra.mxu0 0
    %3953 = vmatprep.subr.bf16.mxu0 0
    %3954 = vmatpush2.bf16.msra.mxu0 0
    %3955 = vmatprep.subr.bf16.mxu0 0
    %3956 = vmatpush2.bf16.msra.mxu0 0
    %3957 = vmatprep.subr.bf16.mxu0 0
    %3958 = vmatpush2.bf16.msra.mxu0 0
    %3959 = vmatprep.subr.bf16.mxu0 0
    %3960 = vmatpush2.bf16.msra.mxu0 0
    %3961 = vmatprep.subr.bf16.mxu0 0
    %3962 = vmatpush2.bf16.msra.mxu0 0
    %3963 = vmatprep.subr.bf16.mxu0 0
    %3964 = vmatpush2.bf16.msra.mxu0 0
    %3965 = vmatprep.mubr.bf16.mxu0 0
    %3966 = vmatmul.mubr.bf16.gmra.mxu0 %v3771
    %v3967 = vpop.f32.mrf.mxu0
    %v3968 = vadd.f32 %v3552, %v3967
    %v3969 = vpop.f32.mrf.mxu0
    %v3970 = vadd.f32 %v3591, %v3969
    %v3971 = vpop.f32.mrf.mxu0
    %v3972 = vpop.f32.mrf.mxu0
    %3973 = vdwg.mxu0
    %3974 = vmatprep.subr.bf16.mxu0 %v3900
    %3975 = vmatpush1.bf16.msra.mxu0 %v3899
    %3976 = vmatprep.subr.bf16.mxu0 %v3896
    %3977 = vmatpush1.bf16.msra.mxu0 %v3895
    %3978 = vmatprep.subr.bf16.mxu0 %v3892
    %3979 = vmatpush1.bf16.msra.mxu0 %v3891
    %3980 = vmatprep.subr.bf16.mxu0 %v3888
    %3981 = vmatpush1.bf16.msra.mxu0 %v3887
    %3982 = vmatprep.subr.bf16.mxu0 %v3884
    %3983 = vmatpush1.bf16.msra.mxu0 %v3883
    %3984 = vmatprep.subr.bf16.mxu0 %v3880
    %3985 = vmatpush1.bf16.msra.mxu0 %v3879
    %3986 = vmatprep.subr.bf16.mxu0 %v3876
    %3987 = vmatpush1.bf16.msra.mxu0 %v3875
    %3988 = vmatprep.subr.bf16.mxu0 %v3872
    %3989 = vmatpush1.bf16.msra.mxu0 %v3871
    %3990 = vmatprep.subr.bf16.mxu0 0
    %3991 = vmatpush2.bf16.msra.mxu0 0
    %3992 = vmatprep.subr.bf16.mxu0 0
    %3993 = vmatpush2.bf16.msra.mxu0 0
    %3994 = vmatprep.subr.bf16.mxu0 0
    %3995 = vmatpush2.bf16.msra.mxu0 0
    %3996 = vmatprep.subr.bf16.mxu0 0
    %3997 = vmatpush2.bf16.msra.mxu0 0
    %3998 = vmatprep.subr.bf16.mxu0 0
    %3999 = vmatpush2.bf16.msra.mxu0 0
    %4000 = vmatprep.subr.bf16.mxu0 0
    %4001 = vmatpush2.bf16.msra.mxu0 0
    %4002 = vmatprep.subr.bf16.mxu0 0
    %4003 = vmatpush2.bf16.msra.mxu0 0
    %4004 = vmatprep.subr.bf16.mxu0 0
    %4005 = vmatpush2.bf16.msra.mxu0 0
    %4006 = vmatprep.mubr.bf16.mxu0 0
    %4007 = vmatmul.mubr.bf16.gmra.mxu0 %v3771
    %v4008 = vpop.f32.mrf.mxu0
    %v4009 = vadd.f32 %v3593, %v4008
    %v4010 = vpop.f32.mrf.mxu0
    %v4011 = vadd.f32 %v3632, %v4010
    %v4012 = vpop.f32.mrf.mxu0
    %v4013 = vpop.f32.mrf.mxu0
    %4014 = vdwg.mxu0
    %v4015 = vld [vmem:[#allocation4] sm:$0x22]
    %v4016 = vld [vmem:[#allocation4 + $0x8] sm:$0x22]
    %v4017 = vld [vmem:[#allocation4 + $0x10] sm:$0x22]
    %v4018 = vld [vmem:[#allocation4 + $0x18] sm:$0x22]
    %v4019 = vunpack.c.l.bf16 %v4015
    %v4020 = vunpack.c.h.bf16 %v4015
    %v4021 = vunpack.c.l.bf16 %v4016
    %v4022 = vunpack.c.h.bf16 %v4016
    %v4023 = vunpack.c.l.bf16 %v4017
    %v4024 = vunpack.c.h.bf16 %v4017
    %v4025 = vunpack.c.l.bf16 %v4018
    %v4026 = vunpack.c.h.bf16 %v4018
    %v4035 = vrot.slane %v4019, 3
    %v4036 = vrot.slane %v4023, 2
    %v4037 = vsel %vm1233, %v4036, %v4035
    %v4038 = vrot.slane %v4020, 3
    %v4039 = vrot.slane %v4024, 2
    %v4040 = vsel %vm1233, %v4039, %v4038
    %v4041 = vrot.slane %v4021, 3
    %v4042 = vrot.slane %v4025, 2
    %v4043 = vsel %vm1233, %v4042, %v4041
    %v4044 = vrot.slane %v4022, 3
    %v4045 = vrot.slane %v4026, 2
    %v4046 = vsel %vm1233, %v4045, %v4044
    %v4051 = vadd.f32 %v3968, %v4037
    %v4052 = vadd.f32 %v3970, %v4040
    %v4053 = vadd.f32 %v4009, %v4043
    %v4054 = vadd.f32 %v4011, %v4046
    %v4055 = vxor.u32 %v4051, 2147483648
    %v4056 = vmul.f32 %v4055, 1.442695
    %v4057 = vpow.pop %v4056
    %v4058 = vadd.f32 %v4057, 1.0
    %v4059 = vrcp.pop %v4058
    %v4060 = vmul.f32 1.0, %v4059
    %v4061 = vxor.u32 %v4052, 2147483648
    %v4062 = vmul.f32 %v4061, 1.442695
    %v4063 = vpow.pop %v4062
    %v4064 = vadd.f32 %v4063, 1.0
    %v4065 = vrcp.pop %v4064
    %v4066 = vmul.f32 1.0, %v4065
    %v4067 = vtanh.pop %v4053
    %v4068 = vxor.u32 %v4054, 2147483648
    %v4069 = vmul.f32 %v4068, 1.442695
    %v4070 = vpow.pop %v4069
    %v4071 = vadd.f32 %v4070, 1.0
    %v4072 = vrcp.pop %v4071
    %v4073 = vmul.f32 1.0, %v4072
    %v4074 = vmul.f32 %v4066, %v3228
    %v4075 = vmul.f32 %v4060, %v4067
    %v4076 = vadd.f32 %v4074, %v4075
    %v4077 = vtanh.pop %v4076
    %v4078 = vmul.f32 %v4073, %v4077
    %v4081 = vunpack.c.l.s4 1966171168
    %v4082 = vunpack.c.0.s8 %v4081
    %v4083 = vlaneseq
    %v4084 = vshrl.u32 %v4083, 7
    %v4085 = vsub.s32 %v4082, %v4084
    %v4086 = vrot.slane %v4078, %v4085
    %v4087 = vcombine.high %v4086, %v4086
    %v4089 = vunpack.c.l.s4 1966171168
    %v4090 = vunpack.c.0.s8 %v4089
    %v4091 = vlaneseq
    %v4092 = vshrl.u32 %v4091, 7
    %v4093 = vsub.s32 %v4090, %v4092
    %v4094 = vrot.slane %v4086, %v4093
    %v4096 = vunpack.c.l.s4 1966171168
    %v4097 = vunpack.c.0.s8 %v4096
    %v4098 = vlaneseq
    %v4099 = vshrl.u32 %v4098, 7
    %v4100 = vsub.s32 %v4097, %v4099
    %v4101 = vrot.slane %v4087, %v4100
    %4104 = vst [vmem:[#allocation5 + $0x3] sm:$0x1] %v4094
    %4105 = vst [vmem:[#allocation5 + $0xb] sm:$0x1] %v4101
    %v4106 = vld [vmem:[#allocation14] sm:$0xff]
    %v4107 = vld [vmem:[#allocation14 + $0x8] sm:$0xff]
    %v4108 = vld [vmem:[#allocation14 + $0x10] sm:$0xf]
    %v4109 = vld [vmem:[#allocation14 + $0x14] sm:$0xff]
    %v4110 = vld [vmem:[#allocation14 + $0x1c] sm:$0xff]
    %v4111 = vld [vmem:[#allocation14 + $0x24] sm:$0xf]
    %v4112 = vld [vmem:[#allocation14 + $0x28] sm:$0xff]
    %v4113 = vld [vmem:[#allocation14 + $0x30] sm:$0xff]
    %v4114 = vld [vmem:[#allocation14 + $0x38] sm:$0xf]
    %v4115 = vld [vmem:[#allocation14 + $0x3c] sm:$0xff]
    %v4116 = vld [vmem:[#allocation14 + $0x44] sm:$0xff]
    %v4117 = vld [vmem:[#allocation14 + $0x4c] sm:$0xf]
    %v4118 = vld [vmem:[#allocation14 + $0x50] sm:$0xff]
    %v4119 = vld [vmem:[#allocation14 + $0x58] sm:$0xff]
    %v4120 = vld [vmem:[#allocation14 + $0x60] sm:$0xf]
    %v4121 = vld [vmem:[#allocation14 + $0x64] sm:$0xff]
    %v4122 = vld [vmem:[#allocation14 + $0x6c] sm:$0xff]
    %v4123 = vld [vmem:[#allocation14 + $0x74] sm:$0xf]
    %v4124 = vld [vmem:[#allocation14 + $0x78] sm:$0xff]
    %v4125 = vld [vmem:[#allocation14 + $0x80] sm:$0xff]
    %v4126 = vld [vmem:[#allocation14 + $0x88] sm:$0xf]
    %v4127 = vld [vmem:[#allocation14 + $0x8c] sm:$0xff]
    %v4128 = vld [vmem:[#allocation14 + $0x94] sm:$0xff]
    %v4129 = vld [vmem:[#allocation14 + $0x9c] sm:$0xf]
    %v4130 = vld [vmem:[#allocation14 + $0xa0] sm:$0xff]
    %v4131 = vld [vmem:[#allocation14 + $0xa8] sm:$0xff]
    %v4132 = vld [vmem:[#allocation14 + $0xb0] sm:$0xf]
    %v4133 = vld [vmem:[#allocation14 + $0xb4] sm:$0xff]
    %v4134 = vld [vmem:[#allocation14 + $0xbc] sm:$0xff]
    %v4135 = vld [vmem:[#allocation14 + $0xc4] sm:$0xf]
    %v4136 = vld [vmem:[#allocation14 + $0xc8] sm:$0xff]
    %v4137 = vld [vmem:[#allocation14 + $0xd0] sm:$0xff]
    %v4138 = vld [vmem:[#allocation14 + $0xd8] sm:$0xf]
    %v4139 = vld [vmem:[#allocation14 + $0xdc] sm:$0xff]
    %v4140 = vld [vmem:[#allocation14 + $0xe4] sm:$0xff]
    %v4141 = vld [vmem:[#allocation14 + $0xec] sm:$0xf]
    %v4142 = vld [vmem:[#allocation14 + $0xf0] sm:$0xff]
    %v4143 = vld [vmem:[#allocation14 + $0xf8] sm:$0xff]
    %v4144 = vld [vmem:[#allocation14 + $0x100] sm:$0xf]
    %v4145 = vld [vmem:[#allocation14 + $0x104] sm:$0xff]
    %v4146 = vld [vmem:[#allocation14 + $0x10c] sm:$0xff]
    %v4147 = vld [vmem:[#allocation14 + $0x114] sm:$0xf]
    %v4148 = vld [vmem:[#allocation14 + $0x118] sm:$0xff]
    %v4149 = vld [vmem:[#allocation14 + $0x120] sm:$0xff]
    %v4150 = vld [vmem:[#allocation14 + $0x128] sm:$0xf]
    %v4151 = vld [vmem:[#allocation14 + $0x12c] sm:$0xff]
    %v4152 = vld [vmem:[#allocation14 + $0x134] sm:$0xff]
    %v4153 = vld [vmem:[#allocation14 + $0x13c] sm:$0xf]
    %v4154 = vpack.c.bf16 %v4078, %v4078
    %v4203 = vunpack.c.l.b16 %v4106
    %v4204 = vunpack.c.h.b16 %v4106
    %v4205 = vunpack.c.l.b16 %v4107
    %v4206 = vunpack.c.h.b16 %v4107
    %v4207 = vunpack.c.l.b16 %v4108
    %v4208 = vunpack.c.l.b16 %v4109
    %v4209 = vunpack.c.h.b16 %v4109
    %v4210 = vunpack.c.l.b16 %v4110
    %v4211 = vunpack.c.h.b16 %v4110
    %v4212 = vunpack.c.l.b16 %v4111
    %v4213 = vunpack.c.l.b16 %v4112
    %v4214 = vunpack.c.h.b16 %v4112
    %v4215 = vunpack.c.l.b16 %v4113
    %v4216 = vunpack.c.h.b16 %v4113
    %v4217 = vunpack.c.l.b16 %v4114
    %v4218 = vunpack.c.l.b16 %v4115
    %v4219 = vunpack.c.h.b16 %v4115
    %v4220 = vunpack.c.l.b16 %v4116
    %v4221 = vunpack.c.h.b16 %v4116
    %v4222 = vunpack.c.l.b16 %v4117
    %v4223 = vunpack.c.l.b16 %v4118
    %v4224 = vunpack.c.h.b16 %v4118
    %v4225 = vunpack.c.l.b16 %v4119
    %v4226 = vunpack.c.h.b16 %v4119
    %v4227 = vunpack.c.l.b16 %v4120
    %v4228 = vunpack.c.l.b16 %v4121
    %v4229 = vunpack.c.h.b16 %v4121
    %v4230 = vunpack.c.l.b16 %v4122
    %v4231 = vunpack.c.h.b16 %v4122
    %v4232 = vunpack.c.l.b16 %v4123
    %v4233 = vunpack.c.l.b16 %v4124
    %v4234 = vunpack.c.h.b16 %v4124
    %v4235 = vunpack.c.l.b16 %v4125
    %v4236 = vunpack.c.h.b16 %v4125
    %v4237 = vunpack.c.l.b16 %v4126
    %v4238 = vunpack.c.l.b16 %v4127
    %v4239 = vunpack.c.h.b16 %v4127
    %v4240 = vunpack.c.l.b16 %v4128
    %v4241 = vunpack.c.h.b16 %v4128
    %v4242 = vunpack.c.l.b16 %v4129
    %v4243 = vunpack.c.l.b16 %v4130
    %v4244 = vunpack.c.h.b16 %v4130
    %v4245 = vunpack.c.l.b16 %v4131
    %v4246 = vunpack.c.h.b16 %v4131
    %v4247 = vunpack.c.l.b16 %v4132
    %v4248 = vunpack.c.l.b16 %v4133
    %v4249 = vunpack.c.h.b16 %v4133
    %v4250 = vunpack.c.l.b16 %v4134
    %v4251 = vunpack.c.h.b16 %v4134
    %v4252 = vunpack.c.l.b16 %v4135
    %v4253 = vunpack.c.l.b16 %v4136
    %v4254 = vunpack.c.h.b16 %v4136
    %v4255 = vunpack.c.l.b16 %v4137
    %v4256 = vunpack.c.h.b16 %v4137
    %v4257 = vunpack.c.l.b16 %v4138
    %v4258 = vunpack.c.l.b16 %v4139
    %v4259 = vunpack.c.h.b16 %v4139
    %v4260 = vunpack.c.l.b16 %v4140
    %v4261 = vunpack.c.h.b16 %v4140
    %v4262 = vunpack.c.l.b16 %v4141
    %v4263 = vunpack.c.l.b16 %v4142
    %v4264 = vunpack.c.h.b16 %v4142
    %v4265 = vunpack.c.l.b16 %v4143
    %v4266 = vunpack.c.h.b16 %v4143
    %v4267 = vunpack.c.l.b16 %v4144
    %v4268 = vunpack.c.l.b16 %v4145
    %v4269 = vunpack.c.h.b16 %v4145
    %v4270 = vunpack.c.l.b16 %v4146
    %v4271 = vunpack.c.h.b16 %v4146
    %v4272 = vunpack.c.l.b16 %v4147
    %v4273 = vunpack.c.l.b16 %v4148
    %v4274 = vunpack.c.h.b16 %v4148
    %v4275 = vunpack.c.l.b16 %v4149
    %v4276 = vunpack.c.h.b16 %v4149
    %v4277 = vunpack.c.l.b16 %v4150
    %v4278 = vunpack.c.l.b16 %v4151
    %v4279 = vunpack.c.h.b16 %v4151
    %v4280 = vunpack.c.l.b16 %v4152
    %v4281 = vunpack.c.h.b16 %v4152
    %v4282 = vunpack.c.l.b16 %v4153
    %v4283 = vpack.c.b16 %v4208, %v4203
    %v4284 = vpack.c.b16 %v4209, %v4204
    %v4285 = vpack.c.b16 %v4210, %v4205
    %v4286 = vpack.c.b16 %v4211, %v4206
    %v4287 = vpack.c.b16 %v4212, %v4207
    %v4288 = vpack.c.b16 %v4218, %v4213
    %v4289 = vpack.c.b16 %v4219, %v4214
    %v4290 = vpack.c.b16 %v4220, %v4215
    %v4291 = vpack.c.b16 %v4221, %v4216
    %v4292 = vpack.c.b16 %v4222, %v4217
    %v4293 = vpack.c.b16 %v4228, %v4223
    %v4294 = vpack.c.b16 %v4229, %v4224
    %v4295 = vpack.c.b16 %v4230, %v4225
    %v4296 = vpack.c.b16 %v4231, %v4226
    %v4297 = vpack.c.b16 %v4232, %v4227
    %v4298 = vpack.c.b16 %v4238, %v4233
    %v4299 = vpack.c.b16 %v4239, %v4234
    %v4300 = vpack.c.b16 %v4240, %v4235
    %v4301 = vpack.c.b16 %v4241, %v4236
    %v4302 = vpack.c.b16 %v4242, %v4237
    %v4303 = vpack.c.b16 %v4248, %v4243
    %v4304 = vpack.c.b16 %v4249, %v4244
    %v4305 = vpack.c.b16 %v4250, %v4245
    %v4306 = vpack.c.b16 %v4251, %v4246
    %v4307 = vpack.c.b16 %v4252, %v4247
    %v4308 = vpack.c.b16 %v4258, %v4253
    %v4309 = vpack.c.b16 %v4259, %v4254
    %v4310 = vpack.c.b16 %v4260, %v4255
    %v4311 = vpack.c.b16 %v4261, %v4256
    %v4312 = vpack.c.b16 %v4262, %v4257
    %v4313 = vpack.c.b16 %v4268, %v4263
    %v4314 = vpack.c.b16 %v4269, %v4264
    %v4315 = vpack.c.b16 %v4270, %v4265
    %v4316 = vpack.c.b16 %v4271, %v4266
    %v4317 = vpack.c.b16 %v4272, %v4267
    %v4318 = vpack.c.b16 %v4278, %v4273
    %v4319 = vpack.c.b16 %v4279, %v4274
    %v4320 = vpack.c.b16 %v4280, %v4275
    %v4321 = vpack.c.b16 %v4281, %v4276
    %v4322 = vpack.c.b16 %v4282, %v4277
    %4363 = vmatprep.subr.bf16.mxu0 %v4319
    %4364 = vmatpush1.bf16.msra.mxu0 %v4318
    %4365 = vmatprep.subr.bf16.mxu0 %v4314
    %4366 = vmatpush1.bf16.msra.mxu0 %v4313
    %4367 = vmatprep.subr.bf16.mxu0 %v4309
    %4368 = vmatpush1.bf16.msra.mxu0 %v4308
    %4369 = vmatprep.subr.bf16.mxu0 %v4304
    %4370 = vmatpush1.bf16.msra.mxu0 %v4303
    %4371 = vmatprep.subr.bf16.mxu0 %v4299
    %4372 = vmatpush1.bf16.msra.mxu0 %v4298
    %4373 = vmatprep.subr.bf16.mxu0 %v4294
    %4374 = vmatpush1.bf16.msra.mxu0 %v4293
    %4375 = vmatprep.subr.bf16.mxu0 %v4289
    %4376 = vmatpush1.bf16.msra.mxu0 %v4288
    %4377 = vmatprep.subr.bf16.mxu0 %v4284
    %4378 = vmatpush1.bf16.msra.mxu0 %v4283
    %4379 = vmatprep.subr.bf16.mxu0 0
    %4380 = vmatpush2.bf16.msra.mxu0 0
    %4381 = vmatprep.subr.bf16.mxu0 0
    %4382 = vmatpush2.bf16.msra.mxu0 0
    %4383 = vmatprep.subr.bf16.mxu0 0
    %4384 = vmatpush2.bf16.msra.mxu0 0
    %4385 = vmatprep.subr.bf16.mxu0 0
    %4386 = vmatpush2.bf16.msra.mxu0 0
    %4387 = vmatprep.subr.bf16.mxu0 0
    %4388 = vmatpush2.bf16.msra.mxu0 0
    %4389 = vmatprep.subr.bf16.mxu0 0
    %4390 = vmatpush2.bf16.msra.mxu0 0
    %4391 = vmatprep.subr.bf16.mxu0 0
    %4392 = vmatpush2.bf16.msra.mxu0 0
    %4393 = vmatprep.subr.bf16.mxu0 0
    %4394 = vmatpush2.bf16.msra.mxu0 0
    %4395 = vmatprep.mubr.bf16.mxu0 0
    %4396 = vmatmul.mubr.bf16.gmra.mxu0 %v4154
    %v4397 = vpop.f32.mrf.mxu0
    %v4398 = vadd.f32 0.0, %v4397
    %v4399 = vpop.f32.mrf.mxu0
    %v4400 = vadd.f32 0.0, %v4399
    %v4401 = vpop.f32.mrf.mxu0
    %v4402 = vpop.f32.mrf.mxu0
    %4403 = vdwg.mxu0
    %4404 = vmatprep.subr.bf16.mxu0 %v4321
    %4405 = vmatpush1.bf16.msra.mxu0 %v4320
    %4406 = vmatprep.subr.bf16.mxu0 %v4316
    %4407 = vmatpush1.bf16.msra.mxu0 %v4315
    %4408 = vmatprep.subr.bf16.mxu0 %v4311
    %4409 = vmatpush1.bf16.msra.mxu0 %v4310
    %4410 = vmatprep.subr.bf16.mxu0 %v4306
    %4411 = vmatpush1.bf16.msra.mxu0 %v4305
    %4412 = vmatprep.subr.bf16.mxu0 %v4301
    %4413 = vmatpush1.bf16.msra.mxu0 %v4300
    %4414 = vmatprep.subr.bf16.mxu0 %v4296
    %4415 = vmatpush1.bf16.msra.mxu0 %v4295
    %4416 = vmatprep.subr.bf16.mxu0 %v4291
    %4417 = vmatpush1.bf16.msra.mxu0 %v4290
    %4418 = vmatprep.subr.bf16.mxu0 %v4286
    %4419 = vmatpush1.bf16.msra.mxu0 %v4285
    %4420 = vmatprep.subr.bf16.mxu0 0
    %4421 = vmatpush2.bf16.msra.mxu0 0
    %4422 = vmatprep.subr.bf16.mxu0 0
    %4423 = vmatpush2.bf16.msra.mxu0 0
    %4424 = vmatprep.subr.bf16.mxu0 0
    %4425 = vmatpush2.bf16.msra.mxu0 0
    %4426 = vmatprep.subr.bf16.mxu0 0
    %4427 = vmatpush2.bf16.msra.mxu0 0
    %4428 = vmatprep.subr.bf16.mxu0 0
    %4429 = vmatpush2.bf16.msra.mxu0 0
    %4430 = vmatprep.subr.bf16.mxu0 0
    %4431 = vmatpush2.bf16.msra.mxu0 0
    %4432 = vmatprep.subr.bf16.mxu0 0
    %4433 = vmatpush2.bf16.msra.mxu0 0
    %4434 = vmatprep.subr.bf16.mxu0 0
    %4435 = vmatpush2.bf16.msra.mxu0 0
    %4436 = vmatprep.mubr.bf16.mxu0 0
    %4437 = vmatmul.mubr.bf16.gmra.mxu0 %v4154
    %v4438 = vpop.f32.mrf.mxu0
    %v4439 = vadd.f32 0.0, %v4438
    %v4440 = vpop.f32.mrf.mxu0
    %v4441 = vadd.f32 0.0, %v4440
    %v4442 = vpop.f32.mrf.mxu0
    %v4443 = vpop.f32.mrf.mxu0
    %4444 = vdwg.mxu0
    %4445 = vmatprep.subr.bf16.mxu0 0
    %4446 = vmatpush1.bf16.msra.mxu0 %v4322
    %4447 = vmatprep.subr.bf16.mxu0 0
    %4448 = vmatpush1.bf16.msra.mxu0 %v4317
    %4449 = vmatprep.subr.bf16.mxu0 0
    %4450 = vmatpush1.bf16.msra.mxu0 %v4312
    %4451 = vmatprep.subr.bf16.mxu0 0
    %4452 = vmatpush1.bf16.msra.mxu0 %v4307
    %4453 = vmatprep.subr.bf16.mxu0 0
    %4454 = vmatpush1.bf16.msra.mxu0 %v4302
    %4455 = vmatprep.subr.bf16.mxu0 0
    %4456 = vmatpush1.bf16.msra.mxu0 %v4297
    %4457 = vmatprep.subr.bf16.mxu0 0
    %4458 = vmatpush1.bf16.msra.mxu0 %v4292
    %4459 = vmatprep.subr.bf16.mxu0 0
    %4460 = vmatpush1.bf16.msra.mxu0 %v4287
    %4461 = vmatprep.subr.bf16.mxu0 0
    %4462 = vmatpush2.bf16.msra.mxu0 0
    %4463 = vmatprep.subr.bf16.mxu0 0
    %4464 = vmatpush2.bf16.msra.mxu0 0
    %4465 = vmatprep.subr.bf16.mxu0 0
    %4466 = vmatpush2.bf16.msra.mxu0 0
    %4467 = vmatprep.subr.bf16.mxu0 0
    %4468 = vmatpush2.bf16.msra.mxu0 0
    %4469 = vmatprep.subr.bf16.mxu0 0
    %4470 = vmatpush2.bf16.msra.mxu0 0
    %4471 = vmatprep.subr.bf16.mxu0 0
    %4472 = vmatpush2.bf16.msra.mxu0 0
    %4473 = vmatprep.subr.bf16.mxu0 0
    %4474 = vmatpush2.bf16.msra.mxu0 0
    %4475 = vmatprep.subr.bf16.mxu0 0
    %4476 = vmatpush2.bf16.msra.mxu0 0
    %4477 = vmatprep.mubr.bf16.mxu0 0
    %4478 = vmatmul.mubr.bf16.gmra.mxu0 %v4154
    %v4479 = vpop.f32.mrf.mxu0
    %v4480 = vadd.f32 0.0, %v4479
    %v4481 = vpop.f32.mrf.mxu0
    %v4482 = vpop.f32.mrf.mxu0
    %v4483 = vpop.f32.mrf.mxu0
    %4484 = vdwg.mxu0
    %v4485 = vld [vmem:[#allocation3] sm:$0xff]
    %v4486 = vld [vmem:[#allocation3 + $0x8] sm:$0xff]
    %v4489 = vunpack.c.l.s4 1966171168
    %v4490 = vunpack.c.0.s8 %v4489
    %v4491 = vlaneseq
    %v4492 = vshrl.u32 %v4491, 7
    %v4493 = vsub.s32 %v4490, %v4492
    %v4494 = vrot.slane %v4398, %v4493
    %v4495 = vcombine.high %v4494, %v4494
    %v4497 = vunpack.c.l.s4 1966171168
    %v4498 = vunpack.c.0.s8 %v4497
    %v4499 = vlaneseq
    %v4500 = vshrl.u32 %v4499, 7
    %v4501 = vsub.s32 %v4498, %v4500
    %v4502 = vrot.slane %v4494, %v4501
    %v4504 = vunpack.c.l.s4 1966171168
    %v4505 = vunpack.c.0.s8 %v4504
    %v4506 = vlaneseq
    %v4507 = vshrl.u32 %v4506, 7
    %v4508 = vsub.s32 %v4505, %v4507
    %v4509 = vrot.slane %v4495, %v4508
    %v4510 = vlaneseq
    %v4511 = vshrl.u32 %v4510, 7
    %v4512 = vsub.s32 0, %v4511
    %v4513 = vrot.slane %v4502, %v4512
    %v4514 = vlaneseq
    %v4515 = vshrl.u32 %v4514, 7
    %v4516 = vsub.s32 0, %v4515
    %v4517 = vrot.slane %v4509, %v4516
    %v4520 = vadd.f32 %v4485, %v4513
    %v4521 = vadd.f32 %v4486, %v4517
    %v4522 = vtanh.pop %v4520
    %v4523 = vtanh.pop %v4521
    %v4524 = vmul.f32 %v4522, %v1137
    %v4525 = vmul.f32 %v4523, %v1137
    %4526 = vadd.xlane.f32.xlu0 %v4524
    %v4527 = vpop.xlane.xlu0 %4526
    %4528 = vadd.xlane.f32.xlu0 %v4525
    %v4529 = vpop.xlane.xlu0 %4528
    %v4530 = vrot.slane %v4527, 4
    %v4531 = vmax.f32 %v4527, %v4530
    %v4532 = vrot.slane %v4531, 2
    %v4533 = vmax.f32 %v4531, %v4532
    %v4534 = vrot.slane %v4533, 1
    %v4535 = vmax.f32 %v4533, %v4534
    %v4536 = vrot.slane %v4529, 4
    %v4537 = vmax.f32 %v4529, %v4536
    %v4538 = vrot.slane %v4537, 2
    %v4539 = vmax.f32 %v4537, %v4538
    %v4540 = vrot.slane %v4539, 1
    %v4541 = vmax.f32 %v4539, %v4540
    %v4542 = vsub.f32 %v4527, %v4535
    %v4543 = vsub.f32 %v4529, %v4541
    %v4544 = vmul.f32 %v4542, 1.442695
    %v4545 = vpow.pop %v4544
    %v4546 = vmul.f32 %v4543, 1.442695
    %v4547 = vpow.pop %v4546
    %v4548 = vrot.slane %v4545, 4
    %v4549 = vadd.f32 %v4545, %v4548
    %v4550 = vrot.slane %v4549, 2
    %v4551 = vadd.f32 %v4549, %v4550
    %v4552 = vrot.slane %v4551, 1
    %v4553 = vadd.f32 %v4551, %v4552
    %v4554 = vrot.slane %v4547, 4
    %v4555 = vadd.f32 %v4547, %v4554
    %v4556 = vrot.slane %v4555, 2
    %v4557 = vadd.f32 %v4555, %v4556
    %v4558 = vrot.slane %v4557, 1
    %v4559 = vadd.f32 %v4557, %v4558
    %v4560 = vrcp.pop %v4553
    %v4561 = vrcp.pop %v4559
    %v4562 = vmul.f32 %v4545, %v4560
    %v4563 = vmul.f32 %v4547, %v4561
    %v4564 = vld [vmem:[#allocation2] sm:$0xff]
    %v4565 = vld [vmem:[#allocation2 + $0x8] sm:$0xff]
    %v4566 = vmul.f32 %v4562, %v4564
    %v4567 = vmul.f32 %v4563, %v4565
    %v4568 = vrot.slane %v4566, 4
    %v4569 = vadd.f32 %v4566, %v4568
    %v4570 = vrot.slane %v4569, 2
    %v4571 = vadd.f32 %v4569, %v4570
    %v4572 = vrot.slane %v4571, 1
    %v4573 = vadd.f32 %v4571, %v4572
    %v4574 = vrot.slane %v4567, 4
    %v4575 = vadd.f32 %v4567, %v4574
    %v4576 = vrot.slane %v4575, 2
    %v4577 = vadd.f32 %v4575, %v4576
    %v4578 = vrot.slane %v4577, 1
    %v4579 = vadd.f32 %v4577, %v4578
    %v4580 = vld [vmem:[#allocation15] sm:$0xff]
    %v4581 = vld [vmem:[#allocation15 + $0x8] sm:$0xff]
    %v4582 = vld [vmem:[#allocation15 + $0x10] sm:$0xff]
    %v4583 = vld [vmem:[#allocation15 + $0x18] sm:$0xff]
    %v4584 = vld [vmem:[#allocation15 + $0x20] sm:$0xff]
    %v4585 = vld [vmem:[#allocation15 + $0x28] sm:$0xff]
    %v4586 = vld [vmem:[#allocation15 + $0x30] sm:$0xff]
    %v4587 = vld [vmem:[#allocation15 + $0x38] sm:$0xff]
    %v4588 = vld [vmem:[#allocation15 + $0x40] sm:$0xff]
    %v4589 = vld [vmem:[#allocation15 + $0x48] sm:$0xff]
    %v4590 = vld [vmem:[#allocation15 + $0x50] sm:$0xff]
    %v4591 = vld [vmem:[#allocation15 + $0x58] sm:$0xff]
    %v4592 = vld [vmem:[#allocation15 + $0x60] sm:$0xff]
    %v4593 = vld [vmem:[#allocation15 + $0x68] sm:$0xff]
    %v4594 = vld [vmem:[#allocation15 + $0x70] sm:$0xff]
    %v4595 = vld [vmem:[#allocation15 + $0x78] sm:$0xff]
    %v4596 = vld [vmem:[#allocation15 + $0x80] sm:$0xff]
    %v4597 = vld [vmem:[#allocation15 + $0x88] sm:$0xff]
    %v4598 = vld [vmem:[#allocation15 + $0x90] sm:$0xff]
    %v4599 = vld [vmem:[#allocation15 + $0x98] sm:$0xff]
    %v4600 = vld [vmem:[#allocation15 + $0xa0] sm:$0xff]
    %v4601 = vld [vmem:[#allocation15 + $0xa8] sm:$0xff]
    %v4602 = vld [vmem:[#allocation15 + $0xb0] sm:$0xff]
    %v4603 = vld [vmem:[#allocation15 + $0xb8] sm:$0xff]
    %v4604 = vld [vmem:[#allocation15 + $0xc0] sm:$0xff]
    %v4605 = vld [vmem:[#allocation15 + $0xc8] sm:$0xff]
    %v4606 = vld [vmem:[#allocation15 + $0xd0] sm:$0xff]
    %v4607 = vld [vmem:[#allocation15 + $0xd8] sm:$0xff]
    %v4608 = vld [vmem:[#allocation15 + $0xe0] sm:$0xff]
    %v4609 = vld [vmem:[#allocation15 + $0xe8] sm:$0xff]
    %v4610 = vld [vmem:[#allocation15 + $0xf0] sm:$0xff]
    %v4611 = vld [vmem:[#allocation15 + $0xf8] sm:$0xff]
    %v4612 = vpack.c.bf16 %v4573, %v4573
    %v4613 = vpack.c.bf16 %v4579, %v4579
    %v4616 = vunpack.c.l.b16 %v4612
    %v4617 = vunpack.c.l.b16 %v4613
    %v4618 = vsel %vm1233, %v4617, %v4616
    %v4619 = vpack.c.b16 %v4618, %v4618
    %v4653 = vunpack.c.l.b16 %v4580
    %v4654 = vunpack.c.h.b16 %v4580
    %v4655 = vunpack.c.l.b16 %v4581
    %v4656 = vunpack.c.h.b16 %v4581
    %v4657 = vunpack.c.l.b16 %v4582
    %v4658 = vunpack.c.h.b16 %v4582
    %v4659 = vunpack.c.l.b16 %v4583
    %v4660 = vunpack.c.h.b16 %v4583
    %v4661 = vunpack.c.l.b16 %v4584
    %v4662 = vunpack.c.h.b16 %v4584
    %v4663 = vunpack.c.l.b16 %v4585
    %v4664 = vunpack.c.h.b16 %v4585
    %v4665 = vunpack.c.l.b16 %v4586
    %v4666 = vunpack.c.h.b16 %v4586
    %v4667 = vunpack.c.l.b16 %v4587
    %v4668 = vunpack.c.h.b16 %v4587
    %v4669 = vunpack.c.l.b16 %v4588
    %v4670 = vunpack.c.h.b16 %v4588
    %v4671 = vunpack.c.l.b16 %v4589
    %v4672 = vunpack.c.h.b16 %v4589
    %v4673 = vunpack.c.l.b16 %v4590
    %v4674 = vunpack.c.h.b16 %v4590
    %v4675 = vunpack.c.l.b16 %v4591
    %v4676 = vunpack.c.h.b16 %v4591
    %v4677 = vunpack.c.l.b16 %v4592
    %v4678 = vunpack.c.h.b16 %v4592
    %v4679 = vunpack.c.l.b16 %v4593
    %v4680 = vunpack.c.h.b16 %v4593
    %v4681 = vunpack.c.l.b16 %v4594
    %v4682 = vunpack.c.h.b16 %v4594
    %v4683 = vunpack.c.l.b16 %v4595
    %v4684 = vunpack.c.h.b16 %v4595
    %v4685 = vunpack.c.l.b16 %v4596
    %v4686 = vunpack.c.h.b16 %v4596
    %v4687 = vunpack.c.l.b16 %v4597
    %v4688 = vunpack.c.h.b16 %v4597
    %v4689 = vunpack.c.l.b16 %v4598
    %v4690 = vunpack.c.h.b16 %v4598
    %v4691 = vunpack.c.l.b16 %v4599
    %v4692 = vunpack.c.h.b16 %v4599
    %v4693 = vunpack.c.l.b16 %v4600
    %v4694 = vunpack.c.h.b16 %v4600
    %v4695 = vunpack.c.l.b16 %v4601
    %v4696 = vunpack.c.h.b16 %v4601
    %v4697 = vunpack.c.l.b16 %v4602
    %v4698 = vunpack.c.h.b16 %v4602
    %v4699 = vunpack.c.l.b16 %v4603
    %v4700 = vunpack.c.h.b16 %v4603
    %v4701 = vunpack.c.l.b16 %v4604
    %v4702 = vunpack.c.h.b16 %v4604
    %v4703 = vunpack.c.l.b16 %v4605
    %v4704 = vunpack.c.h.b16 %v4605
    %v4705 = vunpack.c.l.b16 %v4606
    %v4706 = vunpack.c.h.b16 %v4606
    %v4707 = vunpack.c.l.b16 %v4607
    %v4708 = vunpack.c.h.b16 %v4607
    %v4709 = vunpack.c.l.b16 %v4608
    %v4710 = vunpack.c.h.b16 %v4608
    %v4711 = vunpack.c.l.b16 %v4609
    %v4712 = vunpack.c.h.b16 %v4609
    %v4713 = vunpack.c.l.b16 %v4610
    %v4714 = vunpack.c.h.b16 %v4610
    %v4715 = vunpack.c.l.b16 %v4611
    %v4716 = vunpack.c.h.b16 %v4611
    %v4717 = vpack.c.b16 %v4657, %v4653
    %v4718 = vpack.c.b16 %v4658, %v4654
    %v4719 = vpack.c.b16 %v4659, %v4655
    %v4720 = vpack.c.b16 %v4660, %v4656
    %v4721 = vpack.c.b16 %v4665, %v4661
    %v4722 = vpack.c.b16 %v4666, %v4662
    %v4723 = vpack.c.b16 %v4667, %v4663
    %v4724 = vpack.c.b16 %v4668, %v4664
    %v4725 = vpack.c.b16 %v4673, %v4669
    %v4726 = vpack.c.b16 %v4674, %v4670
    %v4727 = vpack.c.b16 %v4675, %v4671
    %v4728 = vpack.c.b16 %v4676, %v4672
    %v4729 = vpack.c.b16 %v4681, %v4677
    %v4730 = vpack.c.b16 %v4682, %v4678
    %v4731 = vpack.c.b16 %v4683, %v4679
    %v4732 = vpack.c.b16 %v4684, %v4680
    %v4733 = vpack.c.b16 %v4689, %v4685
    %v4734 = vpack.c.b16 %v4690, %v4686
    %v4735 = vpack.c.b16 %v4691, %v4687
    %v4736 = vpack.c.b16 %v4692, %v4688
    %v4737 = vpack.c.b16 %v4697, %v4693
    %v4738 = vpack.c.b16 %v4698, %v4694
    %v4739 = vpack.c.b16 %v4699, %v4695
    %v4740 = vpack.c.b16 %v4700, %v4696
    %v4741 = vpack.c.b16 %v4705, %v4701
    %v4742 = vpack.c.b16 %v4706, %v4702
    %v4743 = vpack.c.b16 %v4707, %v4703
    %v4744 = vpack.c.b16 %v4708, %v4704
    %v4745 = vpack.c.b16 %v4713, %v4709
    %v4746 = vpack.c.b16 %v4714, %v4710
    %v4747 = vpack.c.b16 %v4715, %v4711
    %v4748 = vpack.c.b16 %v4716, %v4712
    %4781 = vmatprep.subr.bf16.mxu0 %v4746
    %4782 = vmatpush1.bf16.msra.mxu0 %v4745
    %4783 = vmatprep.subr.bf16.mxu0 %v4742
    %4784 = vmatpush1.bf16.msra.mxu0 %v4741
    %4785 = vmatprep.subr.bf16.mxu0 %v4738
    %4786 = vmatpush1.bf16.msra.mxu0 %v4737
    %4787 = vmatprep.subr.bf16.mxu0 %v4734
    %4788 = vmatpush1.bf16.msra.mxu0 %v4733
    %4789 = vmatprep.subr.bf16.mxu0 %v4730
    %4790 = vmatpush1.bf16.msra.mxu0 %v4729
    %4791 = vmatprep.subr.bf16.mxu0 %v4726
    %4792 = vmatpush1.bf16.msra.mxu0 %v4725
    %4793 = vmatprep.subr.bf16.mxu0 %v4722
    %4794 = vmatpush1.bf16.msra.mxu0 %v4721
    %4795 = vmatprep.subr.bf16.mxu0 %v4718
    %4796 = vmatpush1.bf16.msra.mxu0 %v4717
    %4797 = vmatprep.subr.bf16.mxu0 0
    %4798 = vmatpush2.bf16.msra.mxu0 0
    %4799 = vmatprep.subr.bf16.mxu0 0
    %4800 = vmatpush2.bf16.msra.mxu0 0
    %4801 = vmatprep.subr.bf16.mxu0 0
    %4802 = vmatpush2.bf16.msra.mxu0 0
    %4803 = vmatprep.subr.bf16.mxu0 0
    %4804 = vmatpush2.bf16.msra.mxu0 0
    %4805 = vmatprep.subr.bf16.mxu0 0
    %4806 = vmatpush2.bf16.msra.mxu0 0
    %4807 = vmatprep.subr.bf16.mxu0 0
    %4808 = vmatpush2.bf16.msra.mxu0 0
    %4809 = vmatprep.subr.bf16.mxu0 0
    %4810 = vmatpush2.bf16.msra.mxu0 0
    %4811 = vmatprep.subr.bf16.mxu0 0
    %4812 = vmatpush2.bf16.msra.mxu0 0
    %4813 = vmatprep.mubr.bf16.mxu0 0
    %4814 = vmatmul.mubr.bf16.gmra.mxu0 %v4619
    %v4815 = vpop.f32.mrf.mxu0
    %v4816 = vadd.f32 %v4400, %v4815
    %v4817 = vpop.f32.mrf.mxu0
    %v4818 = vadd.f32 %v4439, %v4817
    %v4819 = vpop.f32.mrf.mxu0
    %v4820 = vpop.f32.mrf.mxu0
    %4821 = vdwg.mxu0
    %4822 = vmatprep.subr.bf16.mxu0 %v4748
    %4823 = vmatpush1.bf16.msra.mxu0 %v4747
    %4824 = vmatprep.subr.bf16.mxu0 %v4744
    %4825 = vmatpush1.bf16.msra.mxu0 %v4743
    %4826 = vmatprep.subr.bf16.mxu0 %v4740
    %4827 = vmatpush1.bf16.msra.mxu0 %v4739
    %4828 = vmatprep.subr.bf16.mxu0 %v4736
    %4829 = vmatpush1.bf16.msra.mxu0 %v4735
    %4830 = vmatprep.subr.bf16.mxu0 %v4732
    %4831 = vmatpush1.bf16.msra.mxu0 %v4731
    %4832 = vmatprep.subr.bf16.mxu0 %v4728
    %4833 = vmatpush1.bf16.msra.mxu0 %v4727
    %4834 = vmatprep.subr.bf16.mxu0 %v4724
    %4835 = vmatpush1.bf16.msra.mxu0 %v4723
    %4836 = vmatprep.subr.bf16.mxu0 %v4720
    %4837 = vmatpush1.bf16.msra.mxu0 %v4719
    %4838 = vmatprep.subr.bf16.mxu0 0
    %4839 = vmatpush2.bf16.msra.mxu0 0
    %4840 = vmatprep.subr.bf16.mxu0 0
    %4841 = vmatpush2.bf16.msra.mxu0 0
    %4842 = vmatprep.subr.bf16.mxu0 0
    %4843 = vmatpush2.bf16.msra.mxu0 0
    %4844 = vmatprep.subr.bf16.mxu0 0
    %4845 = vmatpush2.bf16.msra.mxu0 0
    %4846 = vmatprep.subr.bf16.mxu0 0
    %4847 = vmatpush2.bf16.msra.mxu0 0
    %4848 = vmatprep.subr.bf16.mxu0 0
    %4849 = vmatpush2.bf16.msra.mxu0 0
    %4850 = vmatprep.subr.bf16.mxu0 0
    %4851 = vmatpush2.bf16.msra.mxu0 0
    %4852 = vmatprep.subr.bf16.mxu0 0
    %4853 = vmatpush2.bf16.msra.mxu0 0
    %4854 = vmatprep.mubr.bf16.mxu0 0
    %4855 = vmatmul.mubr.bf16.gmra.mxu0 %v4619
    %v4856 = vpop.f32.mrf.mxu0
    %v4857 = vadd.f32 %v4441, %v4856
    %v4858 = vpop.f32.mrf.mxu0
    %v4859 = vadd.f32 %v4480, %v4858
    %v4860 = vpop.f32.mrf.mxu0
    %v4861 = vpop.f32.mrf.mxu0
    %4862 = vdwg.mxu0
    %v4863 = vld [vmem:[#allocation4] sm:$0x44]
    %v4864 = vld [vmem:[#allocation4 + $0x8] sm:$0x44]
    %v4865 = vld [vmem:[#allocation4 + $0x10] sm:$0x44]
    %v4866 = vld [vmem:[#allocation4 + $0x18] sm:$0x44]
    %v4867 = vunpack.c.l.bf16 %v4863
    %v4868 = vunpack.c.h.bf16 %v4863
    %v4869 = vunpack.c.l.bf16 %v4864
    %v4870 = vunpack.c.h.bf16 %v4864
    %v4871 = vunpack.c.l.bf16 %v4865
    %v4872 = vunpack.c.h.bf16 %v4865
    %v4873 = vunpack.c.l.bf16 %v4866
    %v4874 = vunpack.c.h.bf16 %v4866
    %v4883 = vrot.slane %v4867, 4
    %v4884 = vrot.slane %v4871, 3
    %v4885 = vsel %vm1233, %v4884, %v4883
    %v4886 = vrot.slane %v4868, 4
    %v4887 = vrot.slane %v4872, 3
    %v4888 = vsel %vm1233, %v4887, %v4886
    %v4889 = vrot.slane %v4869, 4
    %v4890 = vrot.slane %v4873, 3
    %v4891 = vsel %vm1233, %v4890, %v4889
    %v4892 = vrot.slane %v4870, 4
    %v4893 = vrot.slane %v4874, 3
    %v4894 = vsel %vm1233, %v4893, %v4892
    %v4899 = vadd.f32 %v4816, %v4885
    %v4900 = vadd.f32 %v4818, %v4888
    %v4901 = vadd.f32 %v4857, %v4891
    %v4902 = vadd.f32 %v4859, %v4894
    %v4903 = vxor.u32 %v4899, 2147483648
    %v4904 = vmul.f32 %v4903, 1.442695
    %v4905 = vpow.pop %v4904
    %v4906 = vadd.f32 %v4905, 1.0
    %v4907 = vrcp.pop %v4906
    %v4908 = vmul.f32 1.0, %v4907
    %v4909 = vxor.u32 %v4900, 2147483648
    %v4910 = vmul.f32 %v4909, 1.442695
    %v4911 = vpow.pop %v4910
    %v4912 = vadd.f32 %v4911, 1.0
    %v4913 = vrcp.pop %v4912
    %v4914 = vmul.f32 1.0, %v4913
    %v4915 = vtanh.pop %v4901
    %v4916 = vxor.u32 %v4902, 2147483648
    %v4917 = vmul.f32 %v4916, 1.442695
    %v4918 = vpow.pop %v4917
    %v4919 = vadd.f32 %v4918, 1.0
    %v4920 = vrcp.pop %v4919
    %v4921 = vmul.f32 1.0, %v4920
    %v4922 = vmul.f32 %v4914, %v4076
    %v4923 = vmul.f32 %v4908, %v4915
    %v4924 = vadd.f32 %v4922, %v4923
    %v4925 = vtanh.pop %v4924
    %v4926 = vmul.f32 %v4921, %v4925
    %v4929 = vunpack.c.l.s4 1966171168
    %v4930 = vunpack.c.0.s8 %v4929
    %v4931 = vlaneseq
    %v4932 = vshrl.u32 %v4931, 7
    %v4933 = vsub.s32 %v4930, %v4932
    %v4934 = vrot.slane %v4926, %v4933
    %v4935 = vcombine.high %v4934, %v4934
    %v4937 = vunpack.c.l.s4 1966171168
    %v4938 = vunpack.c.0.s8 %v4937
    %v4939 = vlaneseq
    %v4940 = vshrl.u32 %v4939, 7
    %v4941 = vsub.s32 %v4938, %v4940
    %v4942 = vrot.slane %v4934, %v4941
    %v4944 = vunpack.c.l.s4 1966171168
    %v4945 = vunpack.c.0.s8 %v4944
    %v4946 = vlaneseq
    %v4947 = vshrl.u32 %v4946, 7
    %v4948 = vsub.s32 %v4945, %v4947
    %v4949 = vrot.slane %v4935, %v4948
    %4952 = vst [vmem:[#allocation5 + $0x4] sm:$0x1] %v4942
    %4953 = vst [vmem:[#allocation5 + $0xc] sm:$0x1] %v4949
    %v4954 = vld [vmem:[#allocation14] sm:$0xff]
    %v4955 = vld [vmem:[#allocation14 + $0x8] sm:$0xff]
    %v4956 = vld [vmem:[#allocation14 + $0x10] sm:$0xf]
    %v4957 = vld [vmem:[#allocation14 + $0x14] sm:$0xff]
    %v4958 = vld [vmem:[#allocation14 + $0x1c] sm:$0xff]
    %v4959 = vld [vmem:[#allocation14 + $0x24] sm:$0xf]
    %v4960 = vld [vmem:[#allocation14 + $0x28] sm:$0xff]
    %v4961 = vld [vmem:[#allocation14 + $0x30] sm:$0xff]
    %v4962 = vld [vmem:[#allocation14 + $0x38] sm:$0xf]
    %v4963 = vld [vmem:[#allocation14 + $0x3c] sm:$0xff]
    %v4964 = vld [vmem:[#allocation14 + $0x44] sm:$0xff]
    %v4965 = vld [vmem:[#allocation14 + $0x4c] sm:$0xf]
    %v4966 = vld [vmem:[#allocation14 + $0x50] sm:$0xff]
    %v4967 = vld [vmem:[#allocation14 + $0x58] sm:$0xff]
    %v4968 = vld [vmem:[#allocation14 + $0x60] sm:$0xf]
    %v4969 = vld [vmem:[#allocation14 + $0x64] sm:$0xff]
    %v4970 = vld [vmem:[#allocation14 + $0x6c] sm:$0xff]
    %v4971 = vld [vmem:[#allocation14 + $0x74] sm:$0xf]
    %v4972 = vld [vmem:[#allocation14 + $0x78] sm:$0xff]
    %v4973 = vld [vmem:[#allocation14 + $0x80] sm:$0xff]
    %v4974 = vld [vmem:[#allocation14 + $0x88] sm:$0xf]
    %v4975 = vld [vmem:[#allocation14 + $0x8c] sm:$0xff]
    %v4976 = vld [vmem:[#allocation14 + $0x94] sm:$0xff]
    %v4977 = vld [vmem:[#allocation14 + $0x9c] sm:$0xf]
    %v4978 = vld [vmem:[#allocation14 + $0xa0] sm:$0xff]
    %v4979 = vld [vmem:[#allocation14 + $0xa8] sm:$0xff]
    %v4980 = vld [vmem:[#allocation14 + $0xb0] sm:$0xf]
    %v4981 = vld [vmem:[#allocation14 + $0xb4] sm:$0xff]
    %v4982 = vld [vmem:[#allocation14 + $0xbc] sm:$0xff]
    %v4983 = vld [vmem:[#allocation14 + $0xc4] sm:$0xf]
    %v4984 = vld [vmem:[#allocation14 + $0xc8] sm:$0xff]
    %v4985 = vld [vmem:[#allocation14 + $0xd0] sm:$0xff]
    %v4986 = vld [vmem:[#allocation14 + $0xd8] sm:$0xf]
    %v4987 = vld [vmem:[#allocation14 + $0xdc] sm:$0xff]
    %v4988 = vld [vmem:[#allocation14 + $0xe4] sm:$0xff]
    %v4989 = vld [vmem:[#allocation14 + $0xec] sm:$0xf]
    %v4990 = vld [vmem:[#allocation14 + $0xf0] sm:$0xff]
    %v4991 = vld [vmem:[#allocation14 + $0xf8] sm:$0xff]
    %v4992 = vld [vmem:[#allocation14 + $0x100] sm:$0xf]
    %v4993 = vld [vmem:[#allocation14 + $0x104] sm:$0xff]
    %v4994 = vld [vmem:[#allocation14 + $0x10c] sm:$0xff]
    %v4995 = vld [vmem:[#allocation14 + $0x114] sm:$0xf]
    %v4996 = vld [vmem:[#allocation14 + $0x118] sm:$0xff]
    %v4997 = vld [vmem:[#allocation14 + $0x120] sm:$0xff]
    %v4998 = vld [vmem:[#allocation14 + $0x128] sm:$0xf]
    %v4999 = vld [vmem:[#allocation14 + $0x12c] sm:$0xff]
    %v5000 = vld [vmem:[#allocation14 + $0x134] sm:$0xff]
    %v5001 = vld [vmem:[#allocation14 + $0x13c] sm:$0xf]
    %v5002 = vpack.c.bf16 %v4926, %v4926
    %v5051 = vunpack.c.l.b16 %v4954
    %v5052 = vunpack.c.h.b16 %v4954
    %v5053 = vunpack.c.l.b16 %v4955
    %v5054 = vunpack.c.h.b16 %v4955
    %v5055 = vunpack.c.l.b16 %v4956
    %v5056 = vunpack.c.l.b16 %v4957
    %v5057 = vunpack.c.h.b16 %v4957
    %v5058 = vunpack.c.l.b16 %v4958
    %v5059 = vunpack.c.h.b16 %v4958
    %v5060 = vunpack.c.l.b16 %v4959
    %v5061 = vunpack.c.l.b16 %v4960
    %v5062 = vunpack.c.h.b16 %v4960
    %v5063 = vunpack.c.l.b16 %v4961
    %v5064 = vunpack.c.h.b16 %v4961
    %v5065 = vunpack.c.l.b16 %v4962
    %v5066 = vunpack.c.l.b16 %v4963
    %v5067 = vunpack.c.h.b16 %v4963
    %v5068 = vunpack.c.l.b16 %v4964
    %v5069 = vunpack.c.h.b16 %v4964
    %v5070 = vunpack.c.l.b16 %v4965
    %v5071 = vunpack.c.l.b16 %v4966
    %v5072 = vunpack.c.h.b16 %v4966
    %v5073 = vunpack.c.l.b16 %v4967
    %v5074 = vunpack.c.h.b16 %v4967
    %v5075 = vunpack.c.l.b16 %v4968
    %v5076 = vunpack.c.l.b16 %v4969
    %v5077 = vunpack.c.h.b16 %v4969
    %v5078 = vunpack.c.l.b16 %v4970
    %v5079 = vunpack.c.h.b16 %v4970
    %v5080 = vunpack.c.l.b16 %v4971
    %v5081 = vunpack.c.l.b16 %v4972
    %v5082 = vunpack.c.h.b16 %v4972
    %v5083 = vunpack.c.l.b16 %v4973
    %v5084 = vunpack.c.h.b16 %v4973
    %v5085 = vunpack.c.l.b16 %v4974
    %v5086 = vunpack.c.l.b16 %v4975
    %v5087 = vunpack.c.h.b16 %v4975
    %v5088 = vunpack.c.l.b16 %v4976
    %v5089 = vunpack.c.h.b16 %v4976
    %v5090 = vunpack.c.l.b16 %v4977
    %v5091 = vunpack.c.l.b16 %v4978
    %v5092 = vunpack.c.h.b16 %v4978
    %v5093 = vunpack.c.l.b16 %v4979
    %v5094 = vunpack.c.h.b16 %v4979
    %v5095 = vunpack.c.l.b16 %v4980
    %v5096 = vunpack.c.l.b16 %v4981
    %v5097 = vunpack.c.h.b16 %v4981
    %v5098 = vunpack.c.l.b16 %v4982
    %v5099 = vunpack.c.h.b16 %v4982
    %v5100 = vunpack.c.l.b16 %v4983
    %v5101 = vunpack.c.l.b16 %v4984
    %v5102 = vunpack.c.h.b16 %v4984
    %v5103 = vunpack.c.l.b16 %v4985
    %v5104 = vunpack.c.h.b16 %v4985
    %v5105 = vunpack.c.l.b16 %v4986
    %v5106 = vunpack.c.l.b16 %v4987
    %v5107 = vunpack.c.h.b16 %v4987
    %v5108 = vunpack.c.l.b16 %v4988
    %v5109 = vunpack.c.h.b16 %v4988
    %v5110 = vunpack.c.l.b16 %v4989
    %v5111 = vunpack.c.l.b16 %v4990
    %v5112 = vunpack.c.h.b16 %v4990
    %v5113 = vunpack.c.l.b16 %v4991
    %v5114 = vunpack.c.h.b16 %v4991
    %v5115 = vunpack.c.l.b16 %v4992
    %v5116 = vunpack.c.l.b16 %v4993
    %v5117 = vunpack.c.h.b16 %v4993
    %v5118 = vunpack.c.l.b16 %v4994
    %v5119 = vunpack.c.h.b16 %v4994
    %v5120 = vunpack.c.l.b16 %v4995
    %v5121 = vunpack.c.l.b16 %v4996
    %v5122 = vunpack.c.h.b16 %v4996
    %v5123 = vunpack.c.l.b16 %v4997
    %v5124 = vunpack.c.h.b16 %v4997
    %v5125 = vunpack.c.l.b16 %v4998
    %v5126 = vunpack.c.l.b16 %v4999
    %v5127 = vunpack.c.h.b16 %v4999
    %v5128 = vunpack.c.l.b16 %v5000
    %v5129 = vunpack.c.h.b16 %v5000
    %v5130 = vunpack.c.l.b16 %v5001
    %v5131 = vpack.c.b16 %v5056, %v5051
    %v5132 = vpack.c.b16 %v5057, %v5052
    %v5133 = vpack.c.b16 %v5058, %v5053
    %v5134 = vpack.c.b16 %v5059, %v5054
    %v5135 = vpack.c.b16 %v5060, %v5055
    %v5136 = vpack.c.b16 %v5066, %v5061
    %v5137 = vpack.c.b16 %v5067, %v5062
    %v5138 = vpack.c.b16 %v5068, %v5063
    %v5139 = vpack.c.b16 %v5069, %v5064
    %v5140 = vpack.c.b16 %v5070, %v5065
    %v5141 = vpack.c.b16 %v5076, %v5071
    %v5142 = vpack.c.b16 %v5077, %v5072
    %v5143 = vpack.c.b16 %v5078, %v5073
    %v5144 = vpack.c.b16 %v5079, %v5074
    %v5145 = vpack.c.b16 %v5080, %v5075
    %v5146 = vpack.c.b16 %v5086, %v5081
    %v5147 = vpack.c.b16 %v5087, %v5082
    %v5148 = vpack.c.b16 %v5088, %v5083
    %v5149 = vpack.c.b16 %v5089, %v5084
    %v5150 = vpack.c.b16 %v5090, %v5085
    %v5151 = vpack.c.b16 %v5096, %v5091
    %v5152 = vpack.c.b16 %v5097, %v5092
    %v5153 = vpack.c.b16 %v5098, %v5093
    %v5154 = vpack.c.b16 %v5099, %v5094
    %v5155 = vpack.c.b16 %v5100, %v5095
    %v5156 = vpack.c.b16 %v5106, %v5101
    %v5157 = vpack.c.b16 %v5107, %v5102
    %v5158 = vpack.c.b16 %v5108, %v5103
    %v5159 = vpack.c.b16 %v5109, %v5104
    %v5160 = vpack.c.b16 %v5110, %v5105
    %v5161 = vpack.c.b16 %v5116, %v5111
    %v5162 = vpack.c.b16 %v5117, %v5112
    %v5163 = vpack.c.b16 %v5118, %v5113
    %v5164 = vpack.c.b16 %v5119, %v5114
    %v5165 = vpack.c.b16 %v5120, %v5115
    %v5166 = vpack.c.b16 %v5126, %v5121
    %v5167 = vpack.c.b16 %v5127, %v5122
    %v5168 = vpack.c.b16 %v5128, %v5123
    %v5169 = vpack.c.b16 %v5129, %v5124
    %v5170 = vpack.c.b16 %v5130, %v5125
    %5211 = vmatprep.subr.bf16.mxu0 %v5167
    %5212 = vmatpush1.bf16.msra.mxu0 %v5166
    %5213 = vmatprep.subr.bf16.mxu0 %v5162
    %5214 = vmatpush1.bf16.msra.mxu0 %v5161
    %5215 = vmatprep.subr.bf16.mxu0 %v5157
    %5216 = vmatpush1.bf16.msra.mxu0 %v5156
    %5217 = vmatprep.subr.bf16.mxu0 %v5152
    %5218 = vmatpush1.bf16.msra.mxu0 %v5151
    %5219 = vmatprep.subr.bf16.mxu0 %v5147
    %5220 = vmatpush1.bf16.msra.mxu0 %v5146
    %5221 = vmatprep.subr.bf16.mxu0 %v5142
    %5222 = vmatpush1.bf16.msra.mxu0 %v5141
    %5223 = vmatprep.subr.bf16.mxu0 %v5137
    %5224 = vmatpush1.bf16.msra.mxu0 %v5136
    %5225 = vmatprep.subr.bf16.mxu0 %v5132
    %5226 = vmatpush1.bf16.msra.mxu0 %v5131
    %5227 = vmatprep.subr.bf16.mxu0 0
    %5228 = vmatpush2.bf16.msra.mxu0 0
    %5229 = vmatprep.subr.bf16.mxu0 0
    %5230 = vmatpush2.bf16.msra.mxu0 0
    %5231 = vmatprep.subr.bf16.mxu0 0
    %5232 = vmatpush2.bf16.msra.mxu0 0
    %5233 = vmatprep.subr.bf16.mxu0 0
    %5234 = vmatpush2.bf16.msra.mxu0 0
    %5235 = vmatprep.subr.bf16.mxu0 0
    %5236 = vmatpush2.bf16.msra.mxu0 0
    %5237 = vmatprep.subr.bf16.mxu0 0
    %5238 = vmatpush2.bf16.msra.mxu0 0
    %5239 = vmatprep.subr.bf16.mxu0 0
    %5240 = vmatpush2.bf16.msra.mxu0 0
    %5241 = vmatprep.subr.bf16.mxu0 0
    %5242 = vmatpush2.bf16.msra.mxu0 0
    %5243 = vmatprep.mubr.bf16.mxu0 0
    %5244 = vmatmul.mubr.bf16.gmra.mxu0 %v5002
    %v5245 = vpop.f32.mrf.mxu0
    %v5246 = vadd.f32 0.0, %v5245
    %v5247 = vpop.f32.mrf.mxu0
    %v5248 = vadd.f32 0.0, %v5247
    %v5249 = vpop.f32.mrf.mxu0
    %v5250 = vpop.f32.mrf.mxu0
    %5251 = vdwg.mxu0
    %5252 = vmatprep.subr.bf16.mxu0 %v5169
    %5253 = vmatpush1.bf16.msra.mxu0 %v5168
    %5254 = vmatprep.subr.bf16.mxu0 %v5164
    %5255 = vmatpush1.bf16.msra.mxu0 %v5163
    %5256 = vmatprep.subr.bf16.mxu0 %v5159
    %5257 = vmatpush1.bf16.msra.mxu0 %v5158
    %5258 = vmatprep.subr.bf16.mxu0 %v5154
    %5259 = vmatpush1.bf16.msra.mxu0 %v5153
    %5260 = vmatprep.subr.bf16.mxu0 %v5149
    %5261 = vmatpush1.bf16.msra.mxu0 %v5148
    %5262 = vmatprep.subr.bf16.mxu0 %v5144
    %5263 = vmatpush1.bf16.msra.mxu0 %v5143
    %5264 = vmatprep.subr.bf16.mxu0 %v5139
    %5265 = vmatpush1.bf16.msra.mxu0 %v5138
    %5266 = vmatprep.subr.bf16.mxu0 %v5134
    %5267 = vmatpush1.bf16.msra.mxu0 %v5133
    %5268 = vmatprep.subr.bf16.mxu0 0
    %5269 = vmatpush2.bf16.msra.mxu0 0
    %5270 = vmatprep.subr.bf16.mxu0 0
    %5271 = vmatpush2.bf16.msra.mxu0 0
    %5272 = vmatprep.subr.bf16.mxu0 0
    %5273 = vmatpush2.bf16.msra.mxu0 0
    %5274 = vmatprep.subr.bf16.mxu0 0
    %5275 = vmatpush2.bf16.msra.mxu0 0
    %5276 = vmatprep.subr.bf16.mxu0 0
    %5277 = vmatpush2.bf16.msra.mxu0 0
    %5278 = vmatprep.subr.bf16.mxu0 0
    %5279 = vmatpush2.bf16.msra.mxu0 0
    %5280 = vmatprep.subr.bf16.mxu0 0
    %5281 = vmatpush2.bf16.msra.mxu0 0
    %5282 = vmatprep.subr.bf16.mxu0 0
    %5283 = vmatpush2.bf16.msra.mxu0 0
    %5284 = vmatprep.mubr.bf16.mxu0 0
    %5285 = vmatmul.mubr.bf16.gmra.mxu0 %v5002
    %v5286 = vpop.f32.mrf.mxu0
    %v5287 = vadd.f32 0.0, %v5286
    %v5288 = vpop.f32.mrf.mxu0
    %v5289 = vadd.f32 0.0, %v5288
    %v5290 = vpop.f32.mrf.mxu0
    %v5291 = vpop.f32.mrf.mxu0
    %5292 = vdwg.mxu0
    %5293 = vmatprep.subr.bf16.mxu0 0
    %5294 = vmatpush1.bf16.msra.mxu0 %v5170
    %5295 = vmatprep.subr.bf16.mxu0 0
    %5296 = vmatpush1.bf16.msra.mxu0 %v5165
    %5297 = vmatprep.subr.bf16.mxu0 0
    %5298 = vmatpush1.bf16.msra.mxu0 %v5160
    %5299 = vmatprep.subr.bf16.mxu0 0
    %5300 = vmatpush1.bf16.msra.mxu0 %v5155
    %5301 = vmatprep.subr.bf16.mxu0 0
    %5302 = vmatpush1.bf16.msra.mxu0 %v5150
    %5303 = vmatprep.subr.bf16.mxu0 0
    %5304 = vmatpush1.bf16.msra.mxu0 %v5145
    %5305 = vmatprep.subr.bf16.mxu0 0
    %5306 = vmatpush1.bf16.msra.mxu0 %v5140
    %5307 = vmatprep.subr.bf16.mxu0 0
    %5308 = vmatpush1.bf16.msra.mxu0 %v5135
    %5309 = vmatprep.subr.bf16.mxu0 0
    %5310 = vmatpush2.bf16.msra.mxu0 0
    %5311 = vmatprep.subr.bf16.mxu0 0
    %5312 = vmatpush2.bf16.msra.mxu0 0
    %5313 = vmatprep.subr.bf16.mxu0 0
    %5314 = vmatpush2.bf16.msra.mxu0 0
    %5315 = vmatprep.subr.bf16.mxu0 0
    %5316 = vmatpush2.bf16.msra.mxu0 0
    %5317 = vmatprep.subr.bf16.mxu0 0
    %5318 = vmatpush2.bf16.msra.mxu0 0
    %5319 = vmatprep.subr.bf16.mxu0 0
    %5320 = vmatpush2.bf16.msra.mxu0 0
    %5321 = vmatprep.subr.bf16.mxu0 0
    %5322 = vmatpush2.bf16.msra.mxu0 0
    %5323 = vmatprep.subr.bf16.mxu0 0
    %5324 = vmatpush2.bf16.msra.mxu0 0
    %5325 = vmatprep.mubr.bf16.mxu0 0
    %5326 = vmatmul.mubr.bf16.gmra.mxu0 %v5002
    %v5327 = vpop.f32.mrf.mxu0
    %v5328 = vadd.f32 0.0, %v5327
    %v5329 = vpop.f32.mrf.mxu0
    %v5330 = vpop.f32.mrf.mxu0
    %v5331 = vpop.f32.mrf.mxu0
    %5332 = vdwg.mxu0
    %v5333 = vld [vmem:[#allocation3] sm:$0xff]
    %v5334 = vld [vmem:[#allocation3 + $0x8] sm:$0xff]
    %v5337 = vunpack.c.l.s4 1966171168
    %v5338 = vunpack.c.0.s8 %v5337
    %v5339 = vlaneseq
    %v5340 = vshrl.u32 %v5339, 7
    %v5341 = vsub.s32 %v5338, %v5340
    %v5342 = vrot.slane %v5246, %v5341
    %v5343 = vcombine.high %v5342, %v5342
    %v5345 = vunpack.c.l.s4 1966171168
    %v5346 = vunpack.c.0.s8 %v5345
    %v5347 = vlaneseq
    %v5348 = vshrl.u32 %v5347, 7
    %v5349 = vsub.s32 %v5346, %v5348
    %v5350 = vrot.slane %v5342, %v5349
    %v5352 = vunpack.c.l.s4 1966171168
    %v5353 = vunpack.c.0.s8 %v5352
    %v5354 = vlaneseq
    %v5355 = vshrl.u32 %v5354, 7
    %v5356 = vsub.s32 %v5353, %v5355
    %v5357 = vrot.slane %v5343, %v5356
    %v5358 = vlaneseq
    %v5359 = vshrl.u32 %v5358, 7
    %v5360 = vsub.s32 0, %v5359
    %v5361 = vrot.slane %v5350, %v5360
    %v5362 = vlaneseq
    %v5363 = vshrl.u32 %v5362, 7
    %v5364 = vsub.s32 0, %v5363
    %v5365 = vrot.slane %v5357, %v5364
    %v5368 = vadd.f32 %v5333, %v5361
    %v5369 = vadd.f32 %v5334, %v5365
    %v5370 = vtanh.pop %v5368
    %v5371 = vtanh.pop %v5369
    %v5372 = vmul.f32 %v5370, %v1137
    %v5373 = vmul.f32 %v5371, %v1137
    %5374 = vadd.xlane.f32.xlu0 %v5372
    %v5375 = vpop.xlane.xlu0 %5374
    %5376 = vadd.xlane.f32.xlu0 %v5373
    %v5377 = vpop.xlane.xlu0 %5376
    %v5378 = vrot.slane %v5375, 4
    %v5379 = vmax.f32 %v5375, %v5378
    %v5380 = vrot.slane %v5379, 2
    %v5381 = vmax.f32 %v5379, %v5380
    %v5382 = vrot.slane %v5381, 1
    %v5383 = vmax.f32 %v5381, %v5382
    %v5384 = vrot.slane %v5377, 4
    %v5385 = vmax.f32 %v5377, %v5384
    %v5386 = vrot.slane %v5385, 2
    %v5387 = vmax.f32 %v5385, %v5386
    %v5388 = vrot.slane %v5387, 1
    %v5389 = vmax.f32 %v5387, %v5388
    %v5390 = vsub.f32 %v5375, %v5383
    %v5391 = vsub.f32 %v5377, %v5389
    %v5392 = vmul.f32 %v5390, 1.442695
    %v5393 = vpow.pop %v5392
    %v5394 = vmul.f32 %v5391, 1.442695
    %v5395 = vpow.pop %v5394
    %v5396 = vrot.slane %v5393, 4
    %v5397 = vadd.f32 %v5393, %v5396
    %v5398 = vrot.slane %v5397, 2
    %v5399 = vadd.f32 %v5397, %v5398
    %v5400 = vrot.slane %v5399, 1
    %v5401 = vadd.f32 %v5399, %v5400
    %v5402 = vrot.slane %v5395, 4
    %v5403 = vadd.f32 %v5395, %v5402
    %v5404 = vrot.slane %v5403, 2
    %v5405 = vadd.f32 %v5403, %v5404
    %v5406 = vrot.slane %v5405, 1
    %v5407 = vadd.f32 %v5405, %v5406
    %v5408 = vrcp.pop %v5401
    %v5409 = vrcp.pop %v5407
    %v5410 = vmul.f32 %v5393, %v5408
    %v5411 = vmul.f32 %v5395, %v5409
    %v5412 = vld [vmem:[#allocation2] sm:$0xff]
    %v5413 = vld [vmem:[#allocation2 + $0x8] sm:$0xff]
    %v5414 = vmul.f32 %v5410, %v5412
    %v5415 = vmul.f32 %v5411, %v5413
    %v5416 = vrot.slane %v5414, 4
    %v5417 = vadd.f32 %v5414, %v5416
    %v5418 = vrot.slane %v5417, 2
    %v5419 = vadd.f32 %v5417, %v5418
    %v5420 = vrot.slane %v5419, 1
    %v5421 = vadd.f32 %v5419, %v5420
    %v5422 = vrot.slane %v5415, 4
    %v5423 = vadd.f32 %v5415, %v5422
    %v5424 = vrot.slane %v5423, 2
    %v5425 = vadd.f32 %v5423, %v5424
    %v5426 = vrot.slane %v5425, 1
    %v5427 = vadd.f32 %v5425, %v5426
    %v5428 = vld [vmem:[#allocation15] sm:$0xff]
    %v5429 = vld [vmem:[#allocation15 + $0x8] sm:$0xff]
    %v5430 = vld [vmem:[#allocation15 + $0x10] sm:$0xff]
    %v5431 = vld [vmem:[#allocation15 + $0x18] sm:$0xff]
    %v5432 = vld [vmem:[#allocation15 + $0x20] sm:$0xff]
    %v5433 = vld [vmem:[#allocation15 + $0x28] sm:$0xff]
    %v5434 = vld [vmem:[#allocation15 + $0x30] sm:$0xff]
    %v5435 = vld [vmem:[#allocation15 + $0x38] sm:$0xff]
    %v5436 = vld [vmem:[#allocation15 + $0x40] sm:$0xff]
    %v5437 = vld [vmem:[#allocation15 + $0x48] sm:$0xff]
    %v5438 = vld [vmem:[#allocation15 + $0x50] sm:$0xff]
    %v5439 = vld [vmem:[#allocation15 + $0x58] sm:$0xff]
    %v5440 = vld [vmem:[#allocation15 + $0x60] sm:$0xff]
    %v5441 = vld [vmem:[#allocation15 + $0x68] sm:$0xff]
    %v5442 = vld [vmem:[#allocation15 + $0x70] sm:$0xff]
    %v5443 = vld [vmem:[#allocation15 + $0x78] sm:$0xff]
    %v5444 = vld [vmem:[#allocation15 + $0x80] sm:$0xff]
    %v5445 = vld [vmem:[#allocation15 + $0x88] sm:$0xff]
    %v5446 = vld [vmem:[#allocation15 + $0x90] sm:$0xff]
    %v5447 = vld [vmem:[#allocation15 + $0x98] sm:$0xff]
    %v5448 = vld [vmem:[#allocation15 + $0xa0] sm:$0xff]
    %v5449 = vld [vmem:[#allocation15 + $0xa8] sm:$0xff]
    %v5450 = vld [vmem:[#allocation15 + $0xb0] sm:$0xff]
    %v5451 = vld [vmem:[#allocation15 + $0xb8] sm:$0xff]
    %v5452 = vld [vmem:[#allocation15 + $0xc0] sm:$0xff]
    %v5453 = vld [vmem:[#allocation15 + $0xc8] sm:$0xff]
    %v5454 = vld [vmem:[#allocation15 + $0xd0] sm:$0xff]
    %v5455 = vld [vmem:[#allocation15 + $0xd8] sm:$0xff]
    %v5456 = vld [vmem:[#allocation15 + $0xe0] sm:$0xff]
    %v5457 = vld [vmem:[#allocation15 + $0xe8] sm:$0xff]
    %v5458 = vld [vmem:[#allocation15 + $0xf0] sm:$0xff]
    %v5459 = vld [vmem:[#allocation15 + $0xf8] sm:$0xff]
    %v5460 = vpack.c.bf16 %v5421, %v5421
    %v5461 = vpack.c.bf16 %v5427, %v5427
    %v5464 = vunpack.c.l.b16 %v5460
    %v5465 = vunpack.c.l.b16 %v5461
    %v5466 = vsel %vm1233, %v5465, %v5464
    %v5467 = vpack.c.b16 %v5466, %v5466
    %v5501 = vunpack.c.l.b16 %v5428
    %v5502 = vunpack.c.h.b16 %v5428
    %v5503 = vunpack.c.l.b16 %v5429
    %v5504 = vunpack.c.h.b16 %v5429
    %v5505 = vunpack.c.l.b16 %v5430
    %v5506 = vunpack.c.h.b16 %v5430
    %v5507 = vunpack.c.l.b16 %v5431
    %v5508 = vunpack.c.h.b16 %v5431
    %v5509 = vunpack.c.l.b16 %v5432
    %v5510 = vunpack.c.h.b16 %v5432
    %v5511 = vunpack.c.l.b16 %v5433
    %v5512 = vunpack.c.h.b16 %v5433
    %v5513 = vunpack.c.l.b16 %v5434
    %v5514 = vunpack.c.h.b16 %v5434
    %v5515 = vunpack.c.l.b16 %v5435
    %v5516 = vunpack.c.h.b16 %v5435
    %v5517 = vunpack.c.l.b16 %v5436
    %v5518 = vunpack.c.h.b16 %v5436
    %v5519 = vunpack.c.l.b16 %v5437
    %v5520 = vunpack.c.h.b16 %v5437
    %v5521 = vunpack.c.l.b16 %v5438
    %v5522 = vunpack.c.h.b16 %v5438
    %v5523 = vunpack.c.l.b16 %v5439
    %v5524 = vunpack.c.h.b16 %v5439
    %v5525 = vunpack.c.l.b16 %v5440
    %v5526 = vunpack.c.h.b16 %v5440
    %v5527 = vunpack.c.l.b16 %v5441
    %v5528 = vunpack.c.h.b16 %v5441
    %v5529 = vunpack.c.l.b16 %v5442
    %v5530 = vunpack.c.h.b16 %v5442
    %v5531 = vunpack.c.l.b16 %v5443
    %v5532 = vunpack.c.h.b16 %v5443
    %v5533 = vunpack.c.l.b16 %v5444
    %v5534 = vunpack.c.h.b16 %v5444
    %v5535 = vunpack.c.l.b16 %v5445
    %v5536 = vunpack.c.h.b16 %v5445
    %v5537 = vunpack.c.l.b16 %v5446
    %v5538 = vunpack.c.h.b16 %v5446
    %v5539 = vunpack.c.l.b16 %v5447
    %v5540 = vunpack.c.h.b16 %v5447
    %v5541 = vunpack.c.l.b16 %v5448
    %v5542 = vunpack.c.h.b16 %v5448
    %v5543 = vunpack.c.l.b16 %v5449
    %v5544 = vunpack.c.h.b16 %v5449
    %v5545 = vunpack.c.l.b16 %v5450
    %v5546 = vunpack.c.h.b16 %v5450
    %v5547 = vunpack.c.l.b16 %v5451
    %v5548 = vunpack.c.h.b16 %v5451
    %v5549 = vunpack.c.l.b16 %v5452
    %v5550 = vunpack.c.h.b16 %v5452
    %v5551 = vunpack.c.l.b16 %v5453
    %v5552 = vunpack.c.h.b16 %v5453
    %v5553 = vunpack.c.l.b16 %v5454
    %v5554 = vunpack.c.h.b16 %v5454
    %v5555 = vunpack.c.l.b16 %v5455
    %v5556 = vunpack.c.h.b16 %v5455
    %v5557 = vunpack.c.l.b16 %v5456
    %v5558 = vunpack.c.h.b16 %v5456
    %v5559 = vunpack.c.l.b16 %v5457
    %v5560 = vunpack.c.h.b16 %v5457
    %v5561 = vunpack.c.l.b16 %v5458
    %v5562 = vunpack.c.h.b16 %v5458
    %v5563 = vunpack.c.l.b16 %v5459
    %v5564 = vunpack.c.h.b16 %v5459
    %v5565 = vpack.c.b16 %v5505, %v5501
    %v5566 = vpack.c.b16 %v5506, %v5502
    %v5567 = vpack.c.b16 %v5507, %v5503
    %v5568 = vpack.c.b16 %v5508, %v5504
    %v5569 = vpack.c.b16 %v5513, %v5509
    %v5570 = vpack.c.b16 %v5514, %v5510
    %v5571 = vpack.c.b16 %v5515, %v5511
    %v5572 = vpack.c.b16 %v5516, %v5512
    %v5573 = vpack.c.b16 %v5521, %v5517
    %v5574 = vpack.c.b16 %v5522, %v5518
    %v5575 = vpack.c.b16 %v5523, %v5519
    %v5576 = vpack.c.b16 %v5524, %v5520
    %v5577 = vpack.c.b16 %v5529, %v5525
    %v5578 = vpack.c.b16 %v5530, %v5526
    %v5579 = vpack.c.b16 %v5531, %v5527
    %v5580 = vpack.c.b16 %v5532, %v5528
    %v5581 = vpack.c.b16 %v5537, %v5533
    %v5582 = vpack.c.b16 %v5538, %v5534
    %v5583 = vpack.c.b16 %v5539, %v5535
    %v5584 = vpack.c.b16 %v5540, %v5536
    %v5585 = vpack.c.b16 %v5545, %v5541
    %v5586 = vpack.c.b16 %v5546, %v5542
    %v5587 = vpack.c.b16 %v5547, %v5543
    %v5588 = vpack.c.b16 %v5548, %v5544
    %v5589 = vpack.c.b16 %v5553, %v5549
    %v5590 = vpack.c.b16 %v5554, %v5550
    %v5591 = vpack.c.b16 %v5555, %v5551
    %v5592 = vpack.c.b16 %v5556, %v5552
    %v5593 = vpack.c.b16 %v5561, %v5557
    %v5594 = vpack.c.b16 %v5562, %v5558
    %v5595 = vpack.c.b16 %v5563, %v5559
    %v5596 = vpack.c.b16 %v5564, %v5560
    %5629 = vmatprep.subr.bf16.mxu0 %v5594
    %5630 = vmatpush1.bf16.msra.mxu0 %v5593
    %5631 = vmatprep.subr.bf16.mxu0 %v5590
    %5632 = vmatpush1.bf16.msra.mxu0 %v5589
    %5633 = vmatprep.subr.bf16.mxu0 %v5586
    %5634 = vmatpush1.bf16.msra.mxu0 %v5585
    %5635 = vmatprep.subr.bf16.mxu0 %v5582
    %5636 = vmatpush1.bf16.msra.mxu0 %v5581
    %5637 = vmatprep.subr.bf16.mxu0 %v5578
    %5638 = vmatpush1.bf16.msra.mxu0 %v5577
    %5639 = vmatprep.subr.bf16.mxu0 %v5574
    %5640 = vmatpush1.bf16.msra.mxu0 %v5573
    %5641 = vmatprep.subr.bf16.mxu0 %v5570
    %5642 = vmatpush1.bf16.msra.mxu0 %v5569
    %5643 = vmatprep.subr.bf16.mxu0 %v5566
    %5644 = vmatpush1.bf16.msra.mxu0 %v5565
    %5645 = vmatprep.subr.bf16.mxu0 0
    %5646 = vmatpush2.bf16.msra.mxu0 0
    %5647 = vmatprep.subr.bf16.mxu0 0
    %5648 = vmatpush2.bf16.msra.mxu0 0
    %5649 = vmatprep.subr.bf16.mxu0 0
    %5650 = vmatpush2.bf16.msra.mxu0 0
    %5651 = vmatprep.subr.bf16.mxu0 0
    %5652 = vmatpush2.bf16.msra.mxu0 0
    %5653 = vmatprep.subr.bf16.mxu0 0
    %5654 = vmatpush2.bf16.msra.mxu0 0
    %5655 = vmatprep.subr.bf16.mxu0 0
    %5656 = vmatpush2.bf16.msra.mxu0 0
    %5657 = vmatprep.subr.bf16.mxu0 0
    %5658 = vmatpush2.bf16.msra.mxu0 0
    %5659 = vmatprep.subr.bf16.mxu0 0
    %5660 = vmatpush2.bf16.msra.mxu0 0
    %5661 = vmatprep.mubr.bf16.mxu0 0
    %5662 = vmatmul.mubr.bf16.gmra.mxu0 %v5467
    %v5663 = vpop.f32.mrf.mxu0
    %v5664 = vadd.f32 %v5248, %v5663
    %v5665 = vpop.f32.mrf.mxu0
    %v5666 = vadd.f32 %v5287, %v5665
    %v5667 = vpop.f32.mrf.mxu0
    %v5668 = vpop.f32.mrf.mxu0
    %5669 = vdwg.mxu0
    %5670 = vmatprep.subr.bf16.mxu0 %v5596
    %5671 = vmatpush1.bf16.msra.mxu0 %v5595
    %5672 = vmatprep.subr.bf16.mxu0 %v5592
    %5673 = vmatpush1.bf16.msra.mxu0 %v5591
    %5674 = vmatprep.subr.bf16.mxu0 %v5588
    %5675 = vmatpush1.bf16.msra.mxu0 %v5587
    %5676 = vmatprep.subr.bf16.mxu0 %v5584
    %5677 = vmatpush1.bf16.msra.mxu0 %v5583
    %5678 = vmatprep.subr.bf16.mxu0 %v5580
    %5679 = vmatpush1.bf16.msra.mxu0 %v5579
    %5680 = vmatprep.subr.bf16.mxu0 %v5576
    %5681 = vmatpush1.bf16.msra.mxu0 %v5575
    %5682 = vmatprep.subr.bf16.mxu0 %v5572
    %5683 = vmatpush1.bf16.msra.mxu0 %v5571
    %5684 = vmatprep.subr.bf16.mxu0 %v5568
    %5685 = vmatpush1.bf16.msra.mxu0 %v5567
    %5686 = vmatprep.subr.bf16.mxu0 0
    %5687 = vmatpush2.bf16.msra.mxu0 0
    %5688 = vmatprep.subr.bf16.mxu0 0
    %5689 = vmatpush2.bf16.msra.mxu0 0
    %5690 = vmatprep.subr.bf16.mxu0 0
    %5691 = vmatpush2.bf16.msra.mxu0 0
    %5692 = vmatprep.subr.bf16.mxu0 0
    %5693 = vmatpush2.bf16.msra.mxu0 0
    %5694 = vmatprep.subr.bf16.mxu0 0
    %5695 = vmatpush2.bf16.msra.mxu0 0
    %5696 = vmatprep.subr.bf16.mxu0 0
    %5697 = vmatpush2.bf16.msra.mxu0 0
    %5698 = vmatprep.subr.bf16.mxu0 0
    %5699 = vmatpush2.bf16.msra.mxu0 0
    %5700 = vmatprep.subr.bf16.mxu0 0
    %5701 = vmatpush2.bf16.msra.mxu0 0
    %5702 = vmatprep.mubr.bf16.mxu0 0
    %5703 = vmatmul.mubr.bf16.gmra.mxu0 %v5467
    %v5704 = vpop.f32.mrf.mxu0
    %v5705 = vadd.f32 %v5289, %v5704
    %v5706 = vpop.f32.mrf.mxu0
    %v5707 = vadd.f32 %v5328, %v5706
    %v5708 = vpop.f32.mrf.mxu0
    %v5709 = vpop.f32.mrf.mxu0
    %5710 = vdwg.mxu0
    %v5711 = vld [vmem:[#allocation4] sm:$0x44]
    %v5712 = vld [vmem:[#allocation4 + $0x8] sm:$0x44]
    %v5713 = vld [vmem:[#allocation4 + $0x10] sm:$0x44]
    %v5714 = vld [vmem:[#allocation4 + $0x18] sm:$0x44]
    %v5715 = vunpack.c.l.bf16 %v5711
    %v5716 = vunpack.c.h.bf16 %v5711
    %v5717 = vunpack.c.l.bf16 %v5712
    %v5718 = vunpack.c.h.bf16 %v5712
    %v5719 = vunpack.c.l.bf16 %v5713
    %v5720 = vunpack.c.h.bf16 %v5713
    %v5721 = vunpack.c.l.bf16 %v5714
    %v5722 = vunpack.c.h.bf16 %v5714
    %v5731 = vrot.slane %v5715, 5
    %v5732 = vrot.slane %v5719, 4
    %v5733 = vsel %vm1233, %v5732, %v5731
    %v5734 = vrot.slane %v5716, 5
    %v5735 = vrot.slane %v5720, 4
    %v5736 = vsel %vm1233, %v5735, %v5734
    %v5737 = vrot.slane %v5717, 5
    %v5738 = vrot.slane %v5721, 4
    %v5739 = vsel %vm1233, %v5738, %v5737
    %v5740 = vrot.slane %v5718, 5
    %v5741 = vrot.slane %v5722, 4
    %v5742 = vsel %vm1233, %v5741, %v5740
    %v5747 = vadd.f32 %v5664, %v5733
    %v5748 = vadd.f32 %v5666, %v5736
    %v5749 = vadd.f32 %v5705, %v5739
    %v5750 = vadd.f32 %v5707, %v5742
    %v5751 = vxor.u32 %v5747, 2147483648
    %v5752 = vmul.f32 %v5751, 1.442695
    %v5753 = vpow.pop %v5752
    %v5754 = vadd.f32 %v5753, 1.0
    %v5755 = vrcp.pop %v5754
    %v5756 = vmul.f32 1.0, %v5755
    %v5757 = vxor.u32 %v5748, 2147483648
    %v5758 = vmul.f32 %v5757, 1.442695
    %v5759 = vpow.pop %v5758
    %v5760 = vadd.f32 %v5759, 1.0
    %v5761 = vrcp.pop %v5760
    %v5762 = vmul.f32 1.0, %v5761
    %v5763 = vtanh.pop %v5749
    %v5764 = vxor.u32 %v5750, 2147483648
    %v5765 = vmul.f32 %v5764, 1.442695
    %v5766 = vpow.pop %v5765
    %v5767 = vadd.f32 %v5766, 1.0
    %v5768 = vrcp.pop %v5767
    %v5769 = vmul.f32 1.0, %v5768
    %v5770 = vmul.f32 %v5762, %v4924
    %v5771 = vmul.f32 %v5756, %v5763
    %v5772 = vadd.f32 %v5770, %v5771
    %v5773 = vtanh.pop %v5772
    %v5774 = vmul.f32 %v5769, %v5773
    %v5777 = vunpack.c.l.s4 1966171168
    %v5778 = vunpack.c.0.s8 %v5777
    %v5779 = vlaneseq
    %v5780 = vshrl.u32 %v5779, 7
    %v5781 = vsub.s32 %v5778, %v5780
    %v5782 = vrot.slane %v5774, %v5781
    %v5783 = vcombine.high %v5782, %v5782
    %v5785 = vunpack.c.l.s4 1966171168
    %v5786 = vunpack.c.0.s8 %v5785
    %v5787 = vlaneseq
    %v5788 = vshrl.u32 %v5787, 7
    %v5789 = vsub.s32 %v5786, %v5788
    %v5790 = vrot.slane %v5782, %v5789
    %v5792 = vunpack.c.l.s4 1966171168
    %v5793 = vunpack.c.0.s8 %v5792
    %v5794 = vlaneseq
    %v5795 = vshrl.u32 %v5794, 7
    %v5796 = vsub.s32 %v5793, %v5795
    %v5797 = vrot.slane %v5783, %v5796
    %5800 = vst [vmem:[#allocation5 + $0x5] sm:$0x1] %v5790
    %5801 = vst [vmem:[#allocation5 + $0xd] sm:$0x1] %v5797
    %v5802 = vld [vmem:[#allocation14] sm:$0xff]
    %v5803 = vld [vmem:[#allocation14 + $0x8] sm:$0xff]
    %v5804 = vld [vmem:[#allocation14 + $0x10] sm:$0xf]
    %v5805 = vld [vmem:[#allocation14 + $0x14] sm:$0xff]
    %v5806 = vld [vmem:[#allocation14 + $0x1c] sm:$0xff]
    %v5807 = vld [vmem:[#allocation14 + $0x24] sm:$0xf]
    %v5808 = vld [vmem:[#allocation14 + $0x28] sm:$0xff]
    %v5809 = vld [vmem:[#allocation14 + $0x30] sm:$0xff]
    %v5810 = vld [vmem:[#allocation14 + $0x38] sm:$0xf]
    %v5811 = vld [vmem:[#allocation14 + $0x3c] sm:$0xff]
    %v5812 = vld [vmem:[#allocation14 + $0x44] sm:$0xff]
    %v5813 = vld [vmem:[#allocation14 + $0x4c] sm:$0xf]
    %v5814 = vld [vmem:[#allocation14 + $0x50] sm:$0xff]
    %v5815 = vld [vmem:[#allocation14 + $0x58] sm:$0xff]
    %v5816 = vld [vmem:[#allocation14 + $0x60] sm:$0xf]
    %v5817 = vld [vmem:[#allocation14 + $0x64] sm:$0xff]
    %v5818 = vld [vmem:[#allocation14 + $0x6c] sm:$0xff]
    %v5819 = vld [vmem:[#allocation14 + $0x74] sm:$0xf]
    %v5820 = vld [vmem:[#allocation14 + $0x78] sm:$0xff]
    %v5821 = vld [vmem:[#allocation14 + $0x80] sm:$0xff]
    %v5822 = vld [vmem:[#allocation14 + $0x88] sm:$0xf]
    %v5823 = vld [vmem:[#allocation14 + $0x8c] sm:$0xff]
    %v5824 = vld [vmem:[#allocation14 + $0x94] sm:$0xff]
    %v5825 = vld [vmem:[#allocation14 + $0x9c] sm:$0xf]
    %v5826 = vld [vmem:[#allocation14 + $0xa0] sm:$0xff]
    %v5827 = vld [vmem:[#allocation14 + $0xa8] sm:$0xff]
    %v5828 = vld [vmem:[#allocation14 + $0xb0] sm:$0xf]
    %v5829 = vld [vmem:[#allocation14 + $0xb4] sm:$0xff]
    %v5830 = vld [vmem:[#allocation14 + $0xbc] sm:$0xff]
    %v5831 = vld [vmem:[#allocation14 + $0xc4] sm:$0xf]
    %v5832 = vld [vmem:[#allocation14 + $0xc8] sm:$0xff]
    %v5833 = vld [vmem:[#allocation14 + $0xd0] sm:$0xff]
    %v5834 = vld [vmem:[#allocation14 + $0xd8] sm:$0xf]
    %v5835 = vld [vmem:[#allocation14 + $0xdc] sm:$0xff]
    %v5836 = vld [vmem:[#allocation14 + $0xe4] sm:$0xff]
    %v5837 = vld [vmem:[#allocation14 + $0xec] sm:$0xf]
    %v5838 = vld [vmem:[#allocation14 + $0xf0] sm:$0xff]
    %v5839 = vld [vmem:[#allocation14 + $0xf8] sm:$0xff]
    %v5840 = vld [vmem:[#allocation14 + $0x100] sm:$0xf]
    %v5841 = vld [vmem:[#allocation14 + $0x104] sm:$0xff]
    %v5842 = vld [vmem:[#allocation14 + $0x10c] sm:$0xff]
    %v5843 = vld [vmem:[#allocation14 + $0x114] sm:$0xf]
    %v5844 = vld [vmem:[#allocation14 + $0x118] sm:$0xff]
    %v5845 = vld [vmem:[#allocation14 + $0x120] sm:$0xff]
    %v5846 = vld [vmem:[#allocation14 + $0x128] sm:$0xf]
    %v5847 = vld [vmem:[#allocation14 + $0x12c] sm:$0xff]
    %v5848 = vld [vmem:[#allocation14 + $0x134] sm:$0xff]
    %v5849 = vld [vmem:[#allocation14 + $0x13c] sm:$0xf]
    %v5850 = vpack.c.bf16 %v5774, %v5774
    %v5899 = vunpack.c.l.b16 %v5802
    %v5900 = vunpack.c.h.b16 %v5802
    %v5901 = vunpack.c.l.b16 %v5803
    %v5902 = vunpack.c.h.b16 %v5803
    %v5903 = vunpack.c.l.b16 %v5804
    %v5904 = vunpack.c.l.b16 %v5805
    %v5905 = vunpack.c.h.b16 %v5805
    %v5906 = vunpack.c.l.b16 %v5806
    %v5907 = vunpack.c.h.b16 %v5806
    %v5908 = vunpack.c.l.b16 %v5807
    %v5909 = vunpack.c.l.b16 %v5808
    %v5910 = vunpack.c.h.b16 %v5808
    %v5911 = vunpack.c.l.b16 %v5809
    %v5912 = vunpack.c.h.b16 %v5809
    %v5913 = vunpack.c.l.b16 %v5810
    %v5914 = vunpack.c.l.b16 %v5811
    %v5915 = vunpack.c.h.b16 %v5811
    %v5916 = vunpack.c.l.b16 %v5812
    %v5917 = vunpack.c.h.b16 %v5812
    %v5918 = vunpack.c.l.b16 %v5813
    %v5919 = vunpack.c.l.b16 %v5814
    %v5920 = vunpack.c.h.b16 %v5814
    %v5921 = vunpack.c.l.b16 %v5815
    %v5922 = vunpack.c.h.b16 %v5815
    %v5923 = vunpack.c.l.b16 %v5816
    %v5924 = vunpack.c.l.b16 %v5817
    %v5925 = vunpack.c.h.b16 %v5817
    %v5926 = vunpack.c.l.b16 %v5818
    %v5927 = vunpack.c.h.b16 %v5818
    %v5928 = vunpack.c.l.b16 %v5819
    %v5929 = vunpack.c.l.b16 %v5820
    %v5930 = vunpack.c.h.b16 %v5820
    %v5931 = vunpack.c.l.b16 %v5821
    %v5932 = vunpack.c.h.b16 %v5821
    %v5933 = vunpack.c.l.b16 %v5822
    %v5934 = vunpack.c.l.b16 %v5823
    %v5935 = vunpack.c.h.b16 %v5823
    %v5936 = vunpack.c.l.b16 %v5824
    %v5937 = vunpack.c.h.b16 %v5824
    %v5938 = vunpack.c.l.b16 %v5825
    %v5939 = vunpack.c.l.b16 %v5826
    %v5940 = vunpack.c.h.b16 %v5826
    %v5941 = vunpack.c.l.b16 %v5827
    %v5942 = vunpack.c.h.b16 %v5827
    %v5943 = vunpack.c.l.b16 %v5828
    %v5944 = vunpack.c.l.b16 %v5829
    %v5945 = vunpack.c.h.b16 %v5829
    %v5946 = vunpack.c.l.b16 %v5830
    %v5947 = vunpack.c.h.b16 %v5830
    %v5948 = vunpack.c.l.b16 %v5831
    %v5949 = vunpack.c.l.b16 %v5832
    %v5950 = vunpack.c.h.b16 %v5832
    %v5951 = vunpack.c.l.b16 %v5833
    %v5952 = vunpack.c.h.b16 %v5833
    %v5953 = vunpack.c.l.b16 %v5834
    %v5954 = vunpack.c.l.b16 %v5835
    %v5955 = vunpack.c.h.b16 %v5835
    %v5956 = vunpack.c.l.b16 %v5836
    %v5957 = vunpack.c.h.b16 %v5836
    %v5958 = vunpack.c.l.b16 %v5837
    %v5959 = vunpack.c.l.b16 %v5838
    %v5960 = vunpack.c.h.b16 %v5838
    %v5961 = vunpack.c.l.b16 %v5839
    %v5962 = vunpack.c.h.b16 %v5839
    %v5963 = vunpack.c.l.b16 %v5840
    %v5964 = vunpack.c.l.b16 %v5841
    %v5965 = vunpack.c.h.b16 %v5841
    %v5966 = vunpack.c.l.b16 %v5842
    %v5967 = vunpack.c.h.b16 %v5842
    %v5968 = vunpack.c.l.b16 %v5843
    %v5969 = vunpack.c.l.b16 %v5844
    %v5970 = vunpack.c.h.b16 %v5844
    %v5971 = vunpack.c.l.b16 %v5845
    %v5972 = vunpack.c.h.b16 %v5845
    %v5973 = vunpack.c.l.b16 %v5846
    %v5974 = vunpack.c.l.b16 %v5847
    %v5975 = vunpack.c.h.b16 %v5847
    %v5976 = vunpack.c.l.b16 %v5848
    %v5977 = vunpack.c.h.b16 %v5848
    %v5978 = vunpack.c.l.b16 %v5849
    %v5979 = vpack.c.b16 %v5904, %v5899
    %v5980 = vpack.c.b16 %v5905, %v5900
    %v5981 = vpack.c.b16 %v5906, %v5901
    %v5982 = vpack.c.b16 %v5907, %v5902
    %v5983 = vpack.c.b16 %v5908, %v5903
    %v5984 = vpack.c.b16 %v5914, %v5909
    %v5985 = vpack.c.b16 %v5915, %v5910
    %v5986 = vpack.c.b16 %v5916, %v5911
    %v5987 = vpack.c.b16 %v5917, %v5912
    %v5988 = vpack.c.b16 %v5918, %v5913
    %v5989 = vpack.c.b16 %v5924, %v5919
    %v5990 = vpack.c.b16 %v5925, %v5920
    %v5991 = vpack.c.b16 %v5926, %v5921
    %v5992 = vpack.c.b16 %v5927, %v5922
    %v5993 = vpack.c.b16 %v5928, %v5923
    %v5994 = vpack.c.b16 %v5934, %v5929
    %v5995 = vpack.c.b16 %v5935, %v5930
    %v5996 = vpack.c.b16 %v5936, %v5931
    %v5997 = vpack.c.b16 %v5937, %v5932
    %v5998 = vpack.c.b16 %v5938, %v5933
    %v5999 = vpack.c.b16 %v5944, %v5939
    %v6000 = vpack.c.b16 %v5945, %v5940
    %v6001 = vpack.c.b16 %v5946, %v5941
    %v6002 = vpack.c.b16 %v5947, %v5942
    %v6003 = vpack.c.b16 %v5948, %v5943
    %v6004 = vpack.c.b16 %v5954, %v5949
    %v6005 = vpack.c.b16 %v5955, %v5950
    %v6006 = vpack.c.b16 %v5956, %v5951
    %v6007 = vpack.c.b16 %v5957, %v5952
    %v6008 = vpack.c.b16 %v5958, %v5953
    %v6009 = vpack.c.b16 %v5964, %v5959
    %v6010 = vpack.c.b16 %v5965, %v5960
    %v6011 = vpack.c.b16 %v5966, %v5961
    %v6012 = vpack.c.b16 %v5967, %v5962
    %v6013 = vpack.c.b16 %v5968, %v5963
    %v6014 = vpack.c.b16 %v5974, %v5969
    %v6015 = vpack.c.b16 %v5975, %v5970
    %v6016 = vpack.c.b16 %v5976, %v5971
    %v6017 = vpack.c.b16 %v5977, %v5972
    %v6018 = vpack.c.b16 %v5978, %v5973
    %6059 = vmatprep.subr.bf16.mxu0 %v6015
    %6060 = vmatpush1.bf16.msra.mxu0 %v6014
    %6061 = vmatprep.subr.bf16.mxu0 %v6010
    %6062 = vmatpush1.bf16.msra.mxu0 %v6009
    %6063 = vmatprep.subr.bf16.mxu0 %v6005
    %6064 = vmatpush1.bf16.msra.mxu0 %v6004
    %6065 = vmatprep.subr.bf16.mxu0 %v6000
    %6066 = vmatpush1.bf16.msra.mxu0 %v5999
    %6067 = vmatprep.subr.bf16.mxu0 %v5995
    %6068 = vmatpush1.bf16.msra.mxu0 %v5994
    %6069 = vmatprep.subr.bf16.mxu0 %v5990
    %6070 = vmatpush1.bf16.msra.mxu0 %v5989
    %6071 = vmatprep.subr.bf16.mxu0 %v5985
    %6072 = vmatpush1.bf16.msra.mxu0 %v5984
    %6073 = vmatprep.subr.bf16.mxu0 %v5980
    %6074 = vmatpush1.bf16.msra.mxu0 %v5979
    %6075 = vmatprep.subr.bf16.mxu0 0
    %6076 = vmatpush2.bf16.msra.mxu0 0
    %6077 = vmatprep.subr.bf16.mxu0 0
    %6078 = vmatpush2.bf16.msra.mxu0 0
    %6079 = vmatprep.subr.bf16.mxu0 0
    %6080 = vmatpush2.bf16.msra.mxu0 0
    %6081 = vmatprep.subr.bf16.mxu0 0
    %6082 = vmatpush2.bf16.msra.mxu0 0
    %6083 = vmatprep.subr.bf16.mxu0 0
    %6084 = vmatpush2.bf16.msra.mxu0 0
    %6085 = vmatprep.subr.bf16.mxu0 0
    %6086 = vmatpush2.bf16.msra.mxu0 0
    %6087 = vmatprep.subr.bf16.mxu0 0
    %6088 = vmatpush2.bf16.msra.mxu0 0
    %6089 = vmatprep.subr.bf16.mxu0 0
    %6090 = vmatpush2.bf16.msra.mxu0 0
    %6091 = vmatprep.mubr.bf16.mxu0 0
    %6092 = vmatmul.mubr.bf16.gmra.mxu0 %v5850
    %v6093 = vpop.f32.mrf.mxu0
    %v6094 = vadd.f32 0.0, %v6093
    %v6095 = vpop.f32.mrf.mxu0
    %v6096 = vadd.f32 0.0, %v6095
    %v6097 = vpop.f32.mrf.mxu0
    %v6098 = vpop.f32.mrf.mxu0
    %6099 = vdwg.mxu0
    %6100 = vmatprep.subr.bf16.mxu0 %v6017
    %6101 = vmatpush1.bf16.msra.mxu0 %v6016
    %6102 = vmatprep.subr.bf16.mxu0 %v6012
    %6103 = vmatpush1.bf16.msra.mxu0 %v6011
    %6104 = vmatprep.subr.bf16.mxu0 %v6007
    %6105 = vmatpush1.bf16.msra.mxu0 %v6006
    %6106 = vmatprep.subr.bf16.mxu0 %v6002
    %6107 = vmatpush1.bf16.msra.mxu0 %v6001
    %6108 = vmatprep.subr.bf16.mxu0 %v5997
    %6109 = vmatpush1.bf16.msra.mxu0 %v5996
    %6110 = vmatprep.subr.bf16.mxu0 %v5992
    %6111 = vmatpush1.bf16.msra.mxu0 %v5991
    %6112 = vmatprep.subr.bf16.mxu0 %v5987
    %6113 = vmatpush1.bf16.msra.mxu0 %v5986
    %6114 = vmatprep.subr.bf16.mxu0 %v5982
    %6115 = vmatpush1.bf16.msra.mxu0 %v5981
    %6116 = vmatprep.subr.bf16.mxu0 0
    %6117 = vmatpush2.bf16.msra.mxu0 0
    %6118 = vmatprep.subr.bf16.mxu0 0
    %6119 = vmatpush2.bf16.msra.mxu0 0
    %6120 = vmatprep.subr.bf16.mxu0 0
    %6121 = vmatpush2.bf16.msra.mxu0 0
    %6122 = vmatprep.subr.bf16.mxu0 0
    %6123 = vmatpush2.bf16.msra.mxu0 0
    %6124 = vmatprep.subr.bf16.mxu0 0
    %6125 = vmatpush2.bf16.msra.mxu0 0
    %6126 = vmatprep.subr.bf16.mxu0 0
    %6127 = vmatpush2.bf16.msra.mxu0 0
    %6128 = vmatprep.subr.bf16.mxu0 0
    %6129 = vmatpush2.bf16.msra.mxu0 0
    %6130 = vmatprep.subr.bf16.mxu0 0
    %6131 = vmatpush2.bf16.msra.mxu0 0
    %6132 = vmatprep.mubr.bf16.mxu0 0
    %6133 = vmatmul.mubr.bf16.gmra.mxu0 %v5850
    %v6134 = vpop.f32.mrf.mxu0
    %v6135 = vadd.f32 0.0, %v6134
    %v6136 = vpop.f32.mrf.mxu0
    %v6137 = vadd.f32 0.0, %v6136
    %v6138 = vpop.f32.mrf.mxu0
    %v6139 = vpop.f32.mrf.mxu0
    %6140 = vdwg.mxu0
    %6141 = vmatprep.subr.bf16.mxu0 0
    %6142 = vmatpush1.bf16.msra.mxu0 %v6018
    %6143 = vmatprep.subr.bf16.mxu0 0
    %6144 = vmatpush1.bf16.msra.mxu0 %v6013
    %6145 = vmatprep.subr.bf16.mxu0 0
    %6146 = vmatpush1.bf16.msra.mxu0 %v6008
    %6147 = vmatprep.subr.bf16.mxu0 0
    %6148 = vmatpush1.bf16.msra.mxu0 %v6003
    %6149 = vmatprep.subr.bf16.mxu0 0
    %6150 = vmatpush1.bf16.msra.mxu0 %v5998
    %6151 = vmatprep.subr.bf16.mxu0 0
    %6152 = vmatpush1.bf16.msra.mxu0 %v5993
    %6153 = vmatprep.subr.bf16.mxu0 0
    %6154 = vmatpush1.bf16.msra.mxu0 %v5988
    %6155 = vmatprep.subr.bf16.mxu0 0
    %6156 = vmatpush1.bf16.msra.mxu0 %v5983
    %6157 = vmatprep.subr.bf16.mxu0 0
    %6158 = vmatpush2.bf16.msra.mxu0 0
    %6159 = vmatprep.subr.bf16.mxu0 0
    %6160 = vmatpush2.bf16.msra.mxu0 0
    %6161 = vmatprep.subr.bf16.mxu0 0
    %6162 = vmatpush2.bf16.msra.mxu0 0
    %6163 = vmatprep.subr.bf16.mxu0 0
    %6164 = vmatpush2.bf16.msra.mxu0 0
    %6165 = vmatprep.subr.bf16.mxu0 0
    %6166 = vmatpush2.bf16.msra.mxu0 0
    %6167 = vmatprep.subr.bf16.mxu0 0
    %6168 = vmatpush2.bf16.msra.mxu0 0
    %6169 = vmatprep.subr.bf16.mxu0 0
    %6170 = vmatpush2.bf16.msra.mxu0 0
    %6171 = vmatprep.subr.bf16.mxu0 0
    %6172 = vmatpush2.bf16.msra.mxu0 0
    %6173 = vmatprep.mubr.bf16.mxu0 0
    %6174 = vmatmul.mubr.bf16.gmra.mxu0 %v5850
    %v6175 = vpop.f32.mrf.mxu0
    %v6176 = vadd.f32 0.0, %v6175
    %v6177 = vpop.f32.mrf.mxu0
    %v6178 = vpop.f32.mrf.mxu0
    %v6179 = vpop.f32.mrf.mxu0
    %6180 = vdwg.mxu0
    %v6181 = vld [vmem:[#allocation3] sm:$0xff]
    %v6182 = vld [vmem:[#allocation3 + $0x8] sm:$0xff]
    %v6185 = vunpack.c.l.s4 1966171168
    %v6186 = vunpack.c.0.s8 %v6185
    %v6187 = vlaneseq
    %v6188 = vshrl.u32 %v6187, 7
    %v6189 = vsub.s32 %v6186, %v6188
    %v6190 = vrot.slane %v6094, %v6189
    %v6191 = vcombine.high %v6190, %v6190
    %v6193 = vunpack.c.l.s4 1966171168
    %v6194 = vunpack.c.0.s8 %v6193
    %v6195 = vlaneseq
    %v6196 = vshrl.u32 %v6195, 7
    %v6197 = vsub.s32 %v6194, %v6196
    %v6198 = vrot.slane %v6190, %v6197
    %v6200 = vunpack.c.l.s4 1966171168
    %v6201 = vunpack.c.0.s8 %v6200
    %v6202 = vlaneseq
    %v6203 = vshrl.u32 %v6202, 7
    %v6204 = vsub.s32 %v6201, %v6203
    %v6205 = vrot.slane %v6191, %v6204
    %v6206 = vlaneseq
    %v6207 = vshrl.u32 %v6206, 7
    %v6208 = vsub.s32 0, %v6207
    %v6209 = vrot.slane %v6198, %v6208
    %v6210 = vlaneseq
    %v6211 = vshrl.u32 %v6210, 7
    %v6212 = vsub.s32 0, %v6211
    %v6213 = vrot.slane %v6205, %v6212
    %v6216 = vadd.f32 %v6181, %v6209
    %v6217 = vadd.f32 %v6182, %v6213
    %v6218 = vtanh.pop %v6216
    %v6219 = vtanh.pop %v6217
    %v6220 = vmul.f32 %v6218, %v1137
    %v6221 = vmul.f32 %v6219, %v1137
    %6222 = vadd.xlane.f32.xlu0 %v6220
    %v6223 = vpop.xlane.xlu0 %6222
    %6224 = vadd.xlane.f32.xlu0 %v6221
    %v6225 = vpop.xlane.xlu0 %6224
    %v6226 = vrot.slane %v6223, 4
    %v6227 = vmax.f32 %v6223, %v6226
    %v6228 = vrot.slane %v6227, 2
    %v6229 = vmax.f32 %v6227, %v6228
    %v6230 = vrot.slane %v6229, 1
    %v6231 = vmax.f32 %v6229, %v6230
    %v6232 = vrot.slane %v6225, 4
    %v6233 = vmax.f32 %v6225, %v6232
    %v6234 = vrot.slane %v6233, 2
    %v6235 = vmax.f32 %v6233, %v6234
    %v6236 = vrot.slane %v6235, 1
    %v6237 = vmax.f32 %v6235, %v6236
    %v6238 = vsub.f32 %v6223, %v6231
    %v6239 = vsub.f32 %v6225, %v6237
    %v6240 = vmul.f32 %v6238, 1.442695
    %v6241 = vpow.pop %v6240
    %v6242 = vmul.f32 %v6239, 1.442695
    %v6243 = vpow.pop %v6242
    %v6244 = vrot.slane %v6241, 4
    %v6245 = vadd.f32 %v6241, %v6244
    %v6246 = vrot.slane %v6245, 2
    %v6247 = vadd.f32 %v6245, %v6246
    %v6248 = vrot.slane %v6247, 1
    %v6249 = vadd.f32 %v6247, %v6248
    %v6250 = vrot.slane %v6243, 4
    %v6251 = vadd.f32 %v6243, %v6250
    %v6252 = vrot.slane %v6251, 2
    %v6253 = vadd.f32 %v6251, %v6252
    %v6254 = vrot.slane %v6253, 1
    %v6255 = vadd.f32 %v6253, %v6254
    %v6256 = vrcp.pop %v6249
    %v6257 = vrcp.pop %v6255
    %v6258 = vmul.f32 %v6241, %v6256
    %v6259 = vmul.f32 %v6243, %v6257
    %v6260 = vld [vmem:[#allocation2] sm:$0xff]
    %v6261 = vld [vmem:[#allocation2 + $0x8] sm:$0xff]
    %v6262 = vmul.f32 %v6258, %v6260
    %v6263 = vmul.f32 %v6259, %v6261
    %v6264 = vrot.slane %v6262, 4
    %v6265 = vadd.f32 %v6262, %v6264
    %v6266 = vrot.slane %v6265, 2
    %v6267 = vadd.f32 %v6265, %v6266
    %v6268 = vrot.slane %v6267, 1
    %v6269 = vadd.f32 %v6267, %v6268
    %v6270 = vrot.slane %v6263, 4
    %v6271 = vadd.f32 %v6263, %v6270
    %v6272 = vrot.slane %v6271, 2
    %v6273 = vadd.f32 %v6271, %v6272
    %v6274 = vrot.slane %v6273, 1
    %v6275 = vadd.f32 %v6273, %v6274
    %v6276 = vld [vmem:[#allocation15] sm:$0xff]
    %v6277 = vld [vmem:[#allocation15 + $0x8] sm:$0xff]
    %v6278 = vld [vmem:[#allocation15 + $0x10] sm:$0xff]
    %v6279 = vld [vmem:[#allocation15 + $0x18] sm:$0xff]
    %v6280 = vld [vmem:[#allocation15 + $0x20] sm:$0xff]
    %v6281 = vld [vmem:[#allocation15 + $0x28] sm:$0xff]
    %v6282 = vld [vmem:[#allocation15 + $0x30] sm:$0xff]
    %v6283 = vld [vmem:[#allocation15 + $0x38] sm:$0xff]
    %v6284 = vld [vmem:[#allocation15 + $0x40] sm:$0xff]
    %v6285 = vld [vmem:[#allocation15 + $0x48] sm:$0xff]
    %v6286 = vld [vmem:[#allocation15 + $0x50] sm:$0xff]
    %v6287 = vld [vmem:[#allocation15 + $0x58] sm:$0xff]
    %v6288 = vld [vmem:[#allocation15 + $0x60] sm:$0xff]
    %v6289 = vld [vmem:[#allocation15 + $0x68] sm:$0xff]
    %v6290 = vld [vmem:[#allocation15 + $0x70] sm:$0xff]
    %v6291 = vld [vmem:[#allocation15 + $0x78] sm:$0xff]
    %v6292 = vld [vmem:[#allocation15 + $0x80] sm:$0xff]
    %v6293 = vld [vmem:[#allocation15 + $0x88] sm:$0xff]
    %v6294 = vld [vmem:[#allocation15 + $0x90] sm:$0xff]
    %v6295 = vld [vmem:[#allocation15 + $0x98] sm:$0xff]
    %v6296 = vld [vmem:[#allocation15 + $0xa0] sm:$0xff]
    %v6297 = vld [vmem:[#allocation15 + $0xa8] sm:$0xff]
    %v6298 = vld [vmem:[#allocation15 + $0xb0] sm:$0xff]
    %v6299 = vld [vmem:[#allocation15 + $0xb8] sm:$0xff]
    %v6300 = vld [vmem:[#allocation15 + $0xc0] sm:$0xff]
    %v6301 = vld [vmem:[#allocation15 + $0xc8] sm:$0xff]
    %v6302 = vld [vmem:[#allocation15 + $0xd0] sm:$0xff]
    %v6303 = vld [vmem:[#allocation15 + $0xd8] sm:$0xff]
    %v6304 = vld [vmem:[#allocation15 + $0xe0] sm:$0xff]
    %v6305 = vld [vmem:[#allocation15 + $0xe8] sm:$0xff]
    %v6306 = vld [vmem:[#allocation15 + $0xf0] sm:$0xff]
    %v6307 = vld [vmem:[#allocation15 + $0xf8] sm:$0xff]
    %v6308 = vpack.c.bf16 %v6269, %v6269
    %v6309 = vpack.c.bf16 %v6275, %v6275
    %v6312 = vunpack.c.l.b16 %v6308
    %v6313 = vunpack.c.l.b16 %v6309
    %v6314 = vsel %vm1233, %v6313, %v6312
    %v6315 = vpack.c.b16 %v6314, %v6314
    %v6349 = vunpack.c.l.b16 %v6276
    %v6350 = vunpack.c.h.b16 %v6276
    %v6351 = vunpack.c.l.b16 %v6277
    %v6352 = vunpack.c.h.b16 %v6277
    %v6353 = vunpack.c.l.b16 %v6278
    %v6354 = vunpack.c.h.b16 %v6278
    %v6355 = vunpack.c.l.b16 %v6279
    %v6356 = vunpack.c.h.b16 %v6279
    %v6357 = vunpack.c.l.b16 %v6280
    %v6358 = vunpack.c.h.b16 %v6280
    %v6359 = vunpack.c.l.b16 %v6281
    %v6360 = vunpack.c.h.b16 %v6281
    %v6361 = vunpack.c.l.b16 %v6282
    %v6362 = vunpack.c.h.b16 %v6282
    %v6363 = vunpack.c.l.b16 %v6283
    %v6364 = vunpack.c.h.b16 %v6283
    %v6365 = vunpack.c.l.b16 %v6284
    %v6366 = vunpack.c.h.b16 %v6284
    %v6367 = vunpack.c.l.b16 %v6285
    %v6368 = vunpack.c.h.b16 %v6285
    %v6369 = vunpack.c.l.b16 %v6286
    %v6370 = vunpack.c.h.b16 %v6286
    %v6371 = vunpack.c.l.b16 %v6287
    %v6372 = vunpack.c.h.b16 %v6287
    %v6373 = vunpack.c.l.b16 %v6288
    %v6374 = vunpack.c.h.b16 %v6288
    %v6375 = vunpack.c.l.b16 %v6289
    %v6376 = vunpack.c.h.b16 %v6289
    %v6377 = vunpack.c.l.b16 %v6290
    %v6378 = vunpack.c.h.b16 %v6290
    %v6379 = vunpack.c.l.b16 %v6291
    %v6380 = vunpack.c.h.b16 %v6291
    %v6381 = vunpack.c.l.b16 %v6292
    %v6382 = vunpack.c.h.b16 %v6292
    %v6383 = vunpack.c.l.b16 %v6293
    %v6384 = vunpack.c.h.b16 %v6293
    %v6385 = vunpack.c.l.b16 %v6294
    %v6386 = vunpack.c.h.b16 %v6294
    %v6387 = vunpack.c.l.b16 %v6295
    %v6388 = vunpack.c.h.b16 %v6295
    %v6389 = vunpack.c.l.b16 %v6296
    %v6390 = vunpack.c.h.b16 %v6296
    %v6391 = vunpack.c.l.b16 %v6297
    %v6392 = vunpack.c.h.b16 %v6297
    %v6393 = vunpack.c.l.b16 %v6298
    %v6394 = vunpack.c.h.b16 %v6298
    %v6395 = vunpack.c.l.b16 %v6299
    %v6396 = vunpack.c.h.b16 %v6299
    %v6397 = vunpack.c.l.b16 %v6300
    %v6398 = vunpack.c.h.b16 %v6300
    %v6399 = vunpack.c.l.b16 %v6301
    %v6400 = vunpack.c.h.b16 %v6301
    %v6401 = vunpack.c.l.b16 %v6302
    %v6402 = vunpack.c.h.b16 %v6302
    %v6403 = vunpack.c.l.b16 %v6303
    %v6404 = vunpack.c.h.b16 %v6303
    %v6405 = vunpack.c.l.b16 %v6304
    %v6406 = vunpack.c.h.b16 %v6304
    %v6407 = vunpack.c.l.b16 %v6305
    %v6408 = vunpack.c.h.b16 %v6305
    %v6409 = vunpack.c.l.b16 %v6306
    %v6410 = vunpack.c.h.b16 %v6306
    %v6411 = vunpack.c.l.b16 %v6307
    %v6412 = vunpack.c.h.b16 %v6307
    %v6413 = vpack.c.b16 %v6353, %v6349
    %v6414 = vpack.c.b16 %v6354, %v6350
    %v6415 = vpack.c.b16 %v6355, %v6351
    %v6416 = vpack.c.b16 %v6356, %v6352
    %v6417 = vpack.c.b16 %v6361, %v6357
    %v6418 = vpack.c.b16 %v6362, %v6358
    %v6419 = vpack.c.b16 %v6363, %v6359
    %v6420 = vpack.c.b16 %v6364, %v6360
    %v6421 = vpack.c.b16 %v6369, %v6365
    %v6422 = vpack.c.b16 %v6370, %v6366
    %v6423 = vpack.c.b16 %v6371, %v6367
    %v6424 = vpack.c.b16 %v6372, %v6368
    %v6425 = vpack.c.b16 %v6377, %v6373
    %v6426 = vpack.c.b16 %v6378, %v6374
    %v6427 = vpack.c.b16 %v6379, %v6375
    %v6428 = vpack.c.b16 %v6380, %v6376
    %v6429 = vpack.c.b16 %v6385, %v6381
    %v6430 = vpack.c.b16 %v6386, %v6382
    %v6431 = vpack.c.b16 %v6387, %v6383
    %v6432 = vpack.c.b16 %v6388, %v6384
    %v6433 = vpack.c.b16 %v6393, %v6389
    %v6434 = vpack.c.b16 %v6394, %v6390
    %v6435 = vpack.c.b16 %v6395, %v6391
    %v6436 = vpack.c.b16 %v6396, %v6392
    %v6437 = vpack.c.b16 %v6401, %v6397
    %v6438 = vpack.c.b16 %v6402, %v6398
    %v6439 = vpack.c.b16 %v6403, %v6399
    %v6440 = vpack.c.b16 %v6404, %v6400
    %v6441 = vpack.c.b16 %v6409, %v6405
    %v6442 = vpack.c.b16 %v6410, %v6406
    %v6443 = vpack.c.b16 %v6411, %v6407
    %v6444 = vpack.c.b16 %v6412, %v6408
    %6477 = vmatprep.subr.bf16.mxu0 %v6442
    %6478 = vmatpush1.bf16.msra.mxu0 %v6441
    %6479 = vmatprep.subr.bf16.mxu0 %v6438
    %6480 = vmatpush1.bf16.msra.mxu0 %v6437
    %6481 = vmatprep.subr.bf16.mxu0 %v6434
    %6482 = vmatpush1.bf16.msra.mxu0 %v6433
    %6483 = vmatprep.subr.bf16.mxu0 %v6430
    %6484 = vmatpush1.bf16.msra.mxu0 %v6429
    %6485 = vmatprep.subr.bf16.mxu0 %v6426
    %6486 = vmatpush1.bf16.msra.mxu0 %v6425
    %6487 = vmatprep.subr.bf16.mxu0 %v6422
    %6488 = vmatpush1.bf16.msra.mxu0 %v6421
    %6489 = vmatprep.subr.bf16.mxu0 %v6418
    %6490 = vmatpush1.bf16.msra.mxu0 %v6417
    %6491 = vmatprep.subr.bf16.mxu0 %v6414
    %6492 = vmatpush1.bf16.msra.mxu0 %v6413
    %6493 = vmatprep.subr.bf16.mxu0 0
    %6494 = vmatpush2.bf16.msra.mxu0 0
    %6495 = vmatprep.subr.bf16.mxu0 0
    %6496 = vmatpush2.bf16.msra.mxu0 0
    %6497 = vmatprep.subr.bf16.mxu0 0
    %6498 = vmatpush2.bf16.msra.mxu0 0
    %6499 = vmatprep.subr.bf16.mxu0 0
    %6500 = vmatpush2.bf16.msra.mxu0 0
    %6501 = vmatprep.subr.bf16.mxu0 0
    %6502 = vmatpush2.bf16.msra.mxu0 0
    %6503 = vmatprep.subr.bf16.mxu0 0
    %6504 = vmatpush2.bf16.msra.mxu0 0
    %6505 = vmatprep.subr.bf16.mxu0 0
    %6506 = vmatpush2.bf16.msra.mxu0 0
    %6507 = vmatprep.subr.bf16.mxu0 0
    %6508 = vmatpush2.bf16.msra.mxu0 0
    %6509 = vmatprep.mubr.bf16.mxu0 0
    %6510 = vmatmul.mubr.bf16.gmra.mxu0 %v6315
    %v6511 = vpop.f32.mrf.mxu0
    %v6512 = vadd.f32 %v6096, %v6511
    %v6513 = vpop.f32.mrf.mxu0
    %v6514 = vadd.f32 %v6135, %v6513
    %v6515 = vpop.f32.mrf.mxu0
    %v6516 = vpop.f32.mrf.mxu0
    %6517 = vdwg.mxu0
    %6518 = vmatprep.subr.bf16.mxu0 %v6444
    %6519 = vmatpush1.bf16.msra.mxu0 %v6443
    %6520 = vmatprep.subr.bf16.mxu0 %v6440
    %6521 = vmatpush1.bf16.msra.mxu0 %v6439
    %6522 = vmatprep.subr.bf16.mxu0 %v6436
    %6523 = vmatpush1.bf16.msra.mxu0 %v6435
    %6524 = vmatprep.subr.bf16.mxu0 %v6432
    %6525 = vmatpush1.bf16.msra.mxu0 %v6431
    %6526 = vmatprep.subr.bf16.mxu0 %v6428
    %6527 = vmatpush1.bf16.msra.mxu0 %v6427
    %6528 = vmatprep.subr.bf16.mxu0 %v6424
    %6529 = vmatpush1.bf16.msra.mxu0 %v6423
    %6530 = vmatprep.subr.bf16.mxu0 %v6420
    %6531 = vmatpush1.bf16.msra.mxu0 %v6419
    %6532 = vmatprep.subr.bf16.mxu0 %v6416
    %6533 = vmatpush1.bf16.msra.mxu0 %v6415
    %6534 = vmatprep.subr.bf16.mxu0 0
    %6535 = vmatpush2.bf16.msra.mxu0 0
    %6536 = vmatprep.subr.bf16.mxu0 0
    %6537 = vmatpush2.bf16.msra.mxu0 0
    %6538 = vmatprep.subr.bf16.mxu0 0
    %6539 = vmatpush2.bf16.msra.mxu0 0
    %6540 = vmatprep.subr.bf16.mxu0 0
    %6541 = vmatpush2.bf16.msra.mxu0 0
    %6542 = vmatprep.subr.bf16.mxu0 0
    %6543 = vmatpush2.bf16.msra.mxu0 0
    %6544 = vmatprep.subr.bf16.mxu0 0
    %6545 = vmatpush2.bf16.msra.mxu0 0
    %6546 = vmatprep.subr.bf16.mxu0 0
    %6547 = vmatpush2.bf16.msra.mxu0 0
    %6548 = vmatprep.subr.bf16.mxu0 0
    %6549 = vmatpush2.bf16.msra.mxu0 0
    %6550 = vmatprep.mubr.bf16.mxu0 0
    %6551 = vmatmul.mubr.bf16.gmra.mxu0 %v6315
    %v6552 = vpop.f32.mrf.mxu0
    %v6553 = vadd.f32 %v6137, %v6552
    %v6554 = vpop.f32.mrf.mxu0
    %v6555 = vadd.f32 %v6176, %v6554
    %v6556 = vpop.f32.mrf.mxu0
    %v6557 = vpop.f32.mrf.mxu0
    %6558 = vdwg.mxu0
    %v6559 = vld [vmem:[#allocation4] sm:$0x88]
    %v6560 = vld [vmem:[#allocation4 + $0x8] sm:$0x88]
    %v6561 = vld [vmem:[#allocation4 + $0x10] sm:$0x88]
    %v6562 = vld [vmem:[#allocation4 + $0x18] sm:$0x88]
    %v6563 = vunpack.c.l.bf16 %v6559
    %v6564 = vunpack.c.h.bf16 %v6559
    %v6565 = vunpack.c.l.bf16 %v6560
    %v6566 = vunpack.c.h.bf16 %v6560
    %v6567 = vunpack.c.l.bf16 %v6561
    %v6568 = vunpack.c.h.bf16 %v6561
    %v6569 = vunpack.c.l.bf16 %v6562
    %v6570 = vunpack.c.h.bf16 %v6562
    %v6579 = vrot.slane %v6563, 6
    %v6580 = vrot.slane %v6567, 5
    %v6581 = vsel %vm1233, %v6580, %v6579
    %v6582 = vrot.slane %v6564, 6
    %v6583 = vrot.slane %v6568, 5
    %v6584 = vsel %vm1233, %v6583, %v6582
    %v6585 = vrot.slane %v6565, 6
    %v6586 = vrot.slane %v6569, 5
    %v6587 = vsel %vm1233, %v6586, %v6585
    %v6588 = vrot.slane %v6566, 6
    %v6589 = vrot.slane %v6570, 5
    %v6590 = vsel %vm1233, %v6589, %v6588
    %v6595 = vadd.f32 %v6512, %v6581
    %v6596 = vadd.f32 %v6514, %v6584
    %v6597 = vadd.f32 %v6553, %v6587
    %v6598 = vadd.f32 %v6555, %v6590
    %v6599 = vxor.u32 %v6595, 2147483648
    %v6600 = vmul.f32 %v6599, 1.442695
    %v6601 = vpow.pop %v6600
    %v6602 = vadd.f32 %v6601, 1.0
    %v6603 = vrcp.pop %v6602
    %v6604 = vmul.f32 1.0, %v6603
    %v6605 = vxor.u32 %v6596, 2147483648
    %v6606 = vmul.f32 %v6605, 1.442695
    %v6607 = vpow.pop %v6606
    %v6608 = vadd.f32 %v6607, 1.0
    %v6609 = vrcp.pop %v6608
    %v6610 = vmul.f32 1.0, %v6609
    %v6611 = vtanh.pop %v6597
    %v6612 = vxor.u32 %v6598, 2147483648
    %v6613 = vmul.f32 %v6612, 1.442695
    %v6614 = vpow.pop %v6613
    %v6615 = vadd.f32 %v6614, 1.0
    %v6616 = vrcp.pop %v6615
    %v6617 = vmul.f32 1.0, %v6616
    %v6618 = vmul.f32 %v6610, %v5772
    %v6619 = vmul.f32 %v6604, %v6611
    %v6620 = vadd.f32 %v6618, %v6619
    %v6621 = vtanh.pop %v6620
    %v6622 = vmul.f32 %v6617, %v6621
    %v6625 = vunpack.c.l.s4 1966171168
    %v6626 = vunpack.c.0.s8 %v6625
    %v6627 = vlaneseq
    %v6628 = vshrl.u32 %v6627, 7
    %v6629 = vsub.s32 %v6626, %v6628
    %v6630 = vrot.slane %v6622, %v6629
    %v6631 = vcombine.high %v6630, %v6630
    %v6633 = vunpack.c.l.s4 1966171168
    %v6634 = vunpack.c.0.s8 %v6633
    %v6635 = vlaneseq
    %v6636 = vshrl.u32 %v6635, 7
    %v6637 = vsub.s32 %v6634, %v6636
    %v6638 = vrot.slane %v6630, %v6637
    %v6640 = vunpack.c.l.s4 1966171168
    %v6641 = vunpack.c.0.s8 %v6640
    %v6642 = vlaneseq
    %v6643 = vshrl.u32 %v6642, 7
    %v6644 = vsub.s32 %v6641, %v6643
    %v6645 = vrot.slane %v6631, %v6644
    %6648 = vst [vmem:[#allocation5 + $0x6] sm:$0x1] %v6638
    %6649 = vst [vmem:[#allocation5 + $0xe] sm:$0x1] %v6645
    %v6650 = vld [vmem:[#allocation14] sm:$0xff]
    %v6651 = vld [vmem:[#allocation14 + $0x8] sm:$0xff]
    %v6652 = vld [vmem:[#allocation14 + $0x10] sm:$0xf]
    %v6653 = vld [vmem:[#allocation14 + $0x14] sm:$0xff]
    %v6654 = vld [vmem:[#allocation14 + $0x1c] sm:$0xff]
    %v6655 = vld [vmem:[#allocation14 + $0x24] sm:$0xf]
    %v6656 = vld [vmem:[#allocation14 + $0x28] sm:$0xff]
    %v6657 = vld [vmem:[#allocation14 + $0x30] sm:$0xff]
    %v6658 = vld [vmem:[#allocation14 + $0x38] sm:$0xf]
    %v6659 = vld [vmem:[#allocation14 + $0x3c] sm:$0xff]
    %v6660 = vld [vmem:[#allocation14 + $0x44] sm:$0xff]
    %v6661 = vld [vmem:[#allocation14 + $0x4c] sm:$0xf]
    %v6662 = vld [vmem:[#allocation14 + $0x50] sm:$0xff]
    %v6663 = vld [vmem:[#allocation14 + $0x58] sm:$0xff]
    %v6664 = vld [vmem:[#allocation14 + $0x60] sm:$0xf]
    %v6665 = vld [vmem:[#allocation14 + $0x64] sm:$0xff]
    %v6666 = vld [vmem:[#allocation14 + $0x6c] sm:$0xff]
    %v6667 = vld [vmem:[#allocation14 + $0x74] sm:$0xf]
    %v6668 = vld [vmem:[#allocation14 + $0x78] sm:$0xff]
    %v6669 = vld [vmem:[#allocation14 + $0x80] sm:$0xff]
    %v6670 = vld [vmem:[#allocation14 + $0x88] sm:$0xf]
    %v6671 = vld [vmem:[#allocation14 + $0x8c] sm:$0xff]
    %v6672 = vld [vmem:[#allocation14 + $0x94] sm:$0xff]
    %v6673 = vld [vmem:[#allocation14 + $0x9c] sm:$0xf]
    %v6674 = vld [vmem:[#allocation14 + $0xa0] sm:$0xff]
    %v6675 = vld [vmem:[#allocation14 + $0xa8] sm:$0xff]
    %v6676 = vld [vmem:[#allocation14 + $0xb0] sm:$0xf]
    %v6677 = vld [vmem:[#allocation14 + $0xb4] sm:$0xff]
    %v6678 = vld [vmem:[#allocation14 + $0xbc] sm:$0xff]
    %v6679 = vld [vmem:[#allocation14 + $0xc4] sm:$0xf]
    %v6680 = vld [vmem:[#allocation14 + $0xc8] sm:$0xff]
    %v6681 = vld [vmem:[#allocation14 + $0xd0] sm:$0xff]
    %v6682 = vld [vmem:[#allocation14 + $0xd8] sm:$0xf]
    %v6683 = vld [vmem:[#allocation14 + $0xdc] sm:$0xff]
    %v6684 = vld [vmem:[#allocation14 + $0xe4] sm:$0xff]
    %v6685 = vld [vmem:[#allocation14 + $0xec] sm:$0xf]
    %v6686 = vld [vmem:[#allocation14 + $0xf0] sm:$0xff]
    %v6687 = vld [vmem:[#allocation14 + $0xf8] sm:$0xff]
    %v6688 = vld [vmem:[#allocation14 + $0x100] sm:$0xf]
    %v6689 = vld [vmem:[#allocation14 + $0x104] sm:$0xff]
    %v6690 = vld [vmem:[#allocation14 + $0x10c] sm:$0xff]
    %v6691 = vld [vmem:[#allocation14 + $0x114] sm:$0xf]
    %v6692 = vld [vmem:[#allocation14 + $0x118] sm:$0xff]
    %v6693 = vld [vmem:[#allocation14 + $0x120] sm:$0xff]
    %v6694 = vld [vmem:[#allocation14 + $0x128] sm:$0xf]
    %v6695 = vld [vmem:[#allocation14 + $0x12c] sm:$0xff]
    %v6696 = vld [vmem:[#allocation14 + $0x134] sm:$0xff]
    %v6697 = vld [vmem:[#allocation14 + $0x13c] sm:$0xf]
    %v6698 = vpack.c.bf16 %v6622, %v6622
    %v6747 = vunpack.c.l.b16 %v6650
    %v6748 = vunpack.c.h.b16 %v6650
    %v6749 = vunpack.c.l.b16 %v6651
    %v6750 = vunpack.c.h.b16 %v6651
    %v6751 = vunpack.c.l.b16 %v6652
    %v6752 = vunpack.c.l.b16 %v6653
    %v6753 = vunpack.c.h.b16 %v6653
    %v6754 = vunpack.c.l.b16 %v6654
    %v6755 = vunpack.c.h.b16 %v6654
    %v6756 = vunpack.c.l.b16 %v6655
    %v6757 = vunpack.c.l.b16 %v6656
    %v6758 = vunpack.c.h.b16 %v6656
    %v6759 = vunpack.c.l.b16 %v6657
    %v6760 = vunpack.c.h.b16 %v6657
    %v6761 = vunpack.c.l.b16 %v6658
    %v6762 = vunpack.c.l.b16 %v6659
    %v6763 = vunpack.c.h.b16 %v6659
    %v6764 = vunpack.c.l.b16 %v6660
    %v6765 = vunpack.c.h.b16 %v6660
    %v6766 = vunpack.c.l.b16 %v6661
    %v6767 = vunpack.c.l.b16 %v6662
    %v6768 = vunpack.c.h.b16 %v6662
    %v6769 = vunpack.c.l.b16 %v6663
    %v6770 = vunpack.c.h.b16 %v6663
    %v6771 = vunpack.c.l.b16 %v6664
    %v6772 = vunpack.c.l.b16 %v6665
    %v6773 = vunpack.c.h.b16 %v6665
    %v6774 = vunpack.c.l.b16 %v6666
    %v6775 = vunpack.c.h.b16 %v6666
    %v6776 = vunpack.c.l.b16 %v6667
    %v6777 = vunpack.c.l.b16 %v6668
    %v6778 = vunpack.c.h.b16 %v6668
    %v6779 = vunpack.c.l.b16 %v6669
    %v6780 = vunpack.c.h.b16 %v6669
    %v6781 = vunpack.c.l.b16 %v6670
    %v6782 = vunpack.c.l.b16 %v6671
    %v6783 = vunpack.c.h.b16 %v6671
    %v6784 = vunpack.c.l.b16 %v6672
    %v6785 = vunpack.c.h.b16 %v6672
    %v6786 = vunpack.c.l.b16 %v6673
    %v6787 = vunpack.c.l.b16 %v6674
    %v6788 = vunpack.c.h.b16 %v6674
    %v6789 = vunpack.c.l.b16 %v6675
    %v6790 = vunpack.c.h.b16 %v6675
    %v6791 = vunpack.c.l.b16 %v6676
    %v6792 = vunpack.c.l.b16 %v6677
    %v6793 = vunpack.c.h.b16 %v6677
    %v6794 = vunpack.c.l.b16 %v6678
    %v6795 = vunpack.c.h.b16 %v6678
    %v6796 = vunpack.c.l.b16 %v6679
    %v6797 = vunpack.c.l.b16 %v6680
    %v6798 = vunpack.c.h.b16 %v6680
    %v6799 = vunpack.c.l.b16 %v6681
    %v6800 = vunpack.c.h.b16 %v6681
    %v6801 = vunpack.c.l.b16 %v6682
    %v6802 = vunpack.c.l.b16 %v6683
    %v6803 = vunpack.c.h.b16 %v6683
    %v6804 = vunpack.c.l.b16 %v6684
    %v6805 = vunpack.c.h.b16 %v6684
    %v6806 = vunpack.c.l.b16 %v6685
    %v6807 = vunpack.c.l.b16 %v6686
    %v6808 = vunpack.c.h.b16 %v6686
    %v6809 = vunpack.c.l.b16 %v6687
    %v6810 = vunpack.c.h.b16 %v6687
    %v6811 = vunpack.c.l.b16 %v6688
    %v6812 = vunpack.c.l.b16 %v6689
    %v6813 = vunpack.c.h.b16 %v6689
    %v6814 = vunpack.c.l.b16 %v6690
    %v6815 = vunpack.c.h.b16 %v6690
    %v6816 = vunpack.c.l.b16 %v6691
    %v6817 = vunpack.c.l.b16 %v6692
    %v6818 = vunpack.c.h.b16 %v6692
    %v6819 = vunpack.c.l.b16 %v6693
    %v6820 = vunpack.c.h.b16 %v6693
    %v6821 = vunpack.c.l.b16 %v6694
    %v6822 = vunpack.c.l.b16 %v6695
    %v6823 = vunpack.c.h.b16 %v6695
    %v6824 = vunpack.c.l.b16 %v6696
    %v6825 = vunpack.c.h.b16 %v6696
    %v6826 = vunpack.c.l.b16 %v6697
    %v6827 = vpack.c.b16 %v6752, %v6747
    %v6828 = vpack.c.b16 %v6753, %v6748
    %v6829 = vpack.c.b16 %v6754, %v6749
    %v6830 = vpack.c.b16 %v6755, %v6750
    %v6831 = vpack.c.b16 %v6756, %v6751
    %v6832 = vpack.c.b16 %v6762, %v6757
    %v6833 = vpack.c.b16 %v6763, %v6758
    %v6834 = vpack.c.b16 %v6764, %v6759
    %v6835 = vpack.c.b16 %v6765, %v6760
    %v6836 = vpack.c.b16 %v6766, %v6761
    %v6837 = vpack.c.b16 %v6772, %v6767
    %v6838 = vpack.c.b16 %v6773, %v6768
    %v6839 = vpack.c.b16 %v6774, %v6769
    %v6840 = vpack.c.b16 %v6775, %v6770
    %v6841 = vpack.c.b16 %v6776, %v6771
    %v6842 = vpack.c.b16 %v6782, %v6777
    %v6843 = vpack.c.b16 %v6783, %v6778
    %v6844 = vpack.c.b16 %v6784, %v6779
    %v6845 = vpack.c.b16 %v6785, %v6780
    %v6846 = vpack.c.b16 %v6786, %v6781
    %v6847 = vpack.c.b16 %v6792, %v6787
    %v6848 = vpack.c.b16 %v6793, %v6788
    %v6849 = vpack.c.b16 %v6794, %v6789
    %v6850 = vpack.c.b16 %v6795, %v6790
    %v6851 = vpack.c.b16 %v6796, %v6791
    %v6852 = vpack.c.b16 %v6802, %v6797
    %v6853 = vpack.c.b16 %v6803, %v6798
    %v6854 = vpack.c.b16 %v6804, %v6799
    %v6855 = vpack.c.b16 %v6805, %v6800
    %v6856 = vpack.c.b16 %v6806, %v6801
    %v6857 = vpack.c.b16 %v6812, %v6807
    %v6858 = vpack.c.b16 %v6813, %v6808
    %v6859 = vpack.c.b16 %v6814, %v6809
    %v6860 = vpack.c.b16 %v6815, %v6810
    %v6861 = vpack.c.b16 %v6816, %v6811
    %v6862 = vpack.c.b16 %v6822, %v6817
    %v6863 = vpack.c.b16 %v6823, %v6818
    %v6864 = vpack.c.b16 %v6824, %v6819
    %v6865 = vpack.c.b16 %v6825, %v6820
    %v6866 = vpack.c.b16 %v6826, %v6821
    %6907 = vmatprep.subr.bf16.mxu0 %v6863
    %6908 = vmatpush1.bf16.msra.mxu0 %v6862
    %6909 = vmatprep.subr.bf16.mxu0 %v6858
    %6910 = vmatpush1.bf16.msra.mxu0 %v6857
    %6911 = vmatprep.subr.bf16.mxu0 %v6853
    %6912 = vmatpush1.bf16.msra.mxu0 %v6852
    %6913 = vmatprep.subr.bf16.mxu0 %v6848
    %6914 = vmatpush1.bf16.msra.mxu0 %v6847
    %6915 = vmatprep.subr.bf16.mxu0 %v6843
    %6916 = vmatpush1.bf16.msra.mxu0 %v6842
    %6917 = vmatprep.subr.bf16.mxu0 %v6838
    %6918 = vmatpush1.bf16.msra.mxu0 %v6837
    %6919 = vmatprep.subr.bf16.mxu0 %v6833
    %6920 = vmatpush1.bf16.msra.mxu0 %v6832
    %6921 = vmatprep.subr.bf16.mxu0 %v6828
    %6922 = vmatpush1.bf16.msra.mxu0 %v6827
    %6923 = vmatprep.subr.bf16.mxu0 0
    %6924 = vmatpush2.bf16.msra.mxu0 0
    %6925 = vmatprep.subr.bf16.mxu0 0
    %6926 = vmatpush2.bf16.msra.mxu0 0
    %6927 = vmatprep.subr.bf16.mxu0 0
    %6928 = vmatpush2.bf16.msra.mxu0 0
    %6929 = vmatprep.subr.bf16.mxu0 0
    %6930 = vmatpush2.bf16.msra.mxu0 0
    %6931 = vmatprep.subr.bf16.mxu0 0
    %6932 = vmatpush2.bf16.msra.mxu0 0
    %6933 = vmatprep.subr.bf16.mxu0 0
    %6934 = vmatpush2.bf16.msra.mxu0 0
    %6935 = vmatprep.subr.bf16.mxu0 0
    %6936 = vmatpush2.bf16.msra.mxu0 0
    %6937 = vmatprep.subr.bf16.mxu0 0
    %6938 = vmatpush2.bf16.msra.mxu0 0
    %6939 = vmatprep.mubr.bf16.mxu0 0
    %6940 = vmatmul.mubr.bf16.gmra.mxu0 %v6698
    %v6941 = vpop.f32.mrf.mxu0
    %v6942 = vadd.f32 0.0, %v6941
    %v6943 = vpop.f32.mrf.mxu0
    %v6944 = vadd.f32 0.0, %v6943
    %v6945 = vpop.f32.mrf.mxu0
    %v6946 = vpop.f32.mrf.mxu0
    %6947 = vdwg.mxu0
    %6948 = vmatprep.subr.bf16.mxu0 %v6865
    %6949 = vmatpush1.bf16.msra.mxu0 %v6864
    %6950 = vmatprep.subr.bf16.mxu0 %v6860
    %6951 = vmatpush1.bf16.msra.mxu0 %v6859
    %6952 = vmatprep.subr.bf16.mxu0 %v6855
    %6953 = vmatpush1.bf16.msra.mxu0 %v6854
    %6954 = vmatprep.subr.bf16.mxu0 %v6850
    %6955 = vmatpush1.bf16.msra.mxu0 %v6849
    %6956 = vmatprep.subr.bf16.mxu0 %v6845
    %6957 = vmatpush1.bf16.msra.mxu0 %v6844
    %6958 = vmatprep.subr.bf16.mxu0 %v6840
    %6959 = vmatpush1.bf16.msra.mxu0 %v6839
    %6960 = vmatprep.subr.bf16.mxu0 %v6835
    %6961 = vmatpush1.bf16.msra.mxu0 %v6834
    %6962 = vmatprep.subr.bf16.mxu0 %v6830
    %6963 = vmatpush1.bf16.msra.mxu0 %v6829
    %6964 = vmatprep.subr.bf16.mxu0 0
    %6965 = vmatpush2.bf16.msra.mxu0 0
    %6966 = vmatprep.subr.bf16.mxu0 0
    %6967 = vmatpush2.bf16.msra.mxu0 0
    %6968 = vmatprep.subr.bf16.mxu0 0
    %6969 = vmatpush2.bf16.msra.mxu0 0
    %6970 = vmatprep.subr.bf16.mxu0 0
    %6971 = vmatpush2.bf16.msra.mxu0 0
    %6972 = vmatprep.subr.bf16.mxu0 0
    %6973 = vmatpush2.bf16.msra.mxu0 0
    %6974 = vmatprep.subr.bf16.mxu0 0
    %6975 = vmatpush2.bf16.msra.mxu0 0
    %6976 = vmatprep.subr.bf16.mxu0 0
    %6977 = vmatpush2.bf16.msra.mxu0 0
    %6978 = vmatprep.subr.bf16.mxu0 0
    %6979 = vmatpush2.bf16.msra.mxu0 0
    %6980 = vmatprep.mubr.bf16.mxu0 0
    %6981 = vmatmul.mubr.bf16.gmra.mxu0 %v6698
    %v6982 = vpop.f32.mrf.mxu0
    %v6983 = vadd.f32 0.0, %v6982
    %v6984 = vpop.f32.mrf.mxu0
    %v6985 = vadd.f32 0.0, %v6984
    %v6986 = vpop.f32.mrf.mxu0
    %v6987 = vpop.f32.mrf.mxu0
    %6988 = vdwg.mxu0
    %6989 = vmatprep.subr.bf16.mxu0 0
    %6990 = vmatpush1.bf16.msra.mxu0 %v6866
    %6991 = vmatprep.subr.bf16.mxu0 0
    %6992 = vmatpush1.bf16.msra.mxu0 %v6861
    %6993 = vmatprep.subr.bf16.mxu0 0
    %6994 = vmatpush1.bf16.msra.mxu0 %v6856
    %6995 = vmatprep.subr.bf16.mxu0 0
    %6996 = vmatpush1.bf16.msra.mxu0 %v6851
    %6997 = vmatprep.subr.bf16.mxu0 0
    %6998 = vmatpush1.bf16.msra.mxu0 %v6846
    %6999 = vmatprep.subr.bf16.mxu0 0
    %7000 = vmatpush1.bf16.msra.mxu0 %v6841
    %7001 = vmatprep.subr.bf16.mxu0 0
    %7002 = vmatpush1.bf16.msra.mxu0 %v6836
    %7003 = vmatprep.subr.bf16.mxu0 0
    %7004 = vmatpush1.bf16.msra.mxu0 %v6831
    %7005 = vmatprep.subr.bf16.mxu0 0
    %7006 = vmatpush2.bf16.msra.mxu0 0
    %7007 = vmatprep.subr.bf16.mxu0 0
    %7008 = vmatpush2.bf16.msra.mxu0 0
    %7009 = vmatprep.subr.bf16.mxu0 0
    %7010 = vmatpush2.bf16.msra.mxu0 0
    %7011 = vmatprep.subr.bf16.mxu0 0
    %7012 = vmatpush2.bf16.msra.mxu0 0
    %7013 = vmatprep.subr.bf16.mxu0 0
    %7014 = vmatpush2.bf16.msra.mxu0 0
    %7015 = vmatprep.subr.bf16.mxu0 0
    %7016 = vmatpush2.bf16.msra.mxu0 0
    %7017 = vmatprep.subr.bf16.mxu0 0
    %7018 = vmatpush2.bf16.msra.mxu0 0
    %7019 = vmatprep.subr.bf16.mxu0 0
    %7020 = vmatpush2.bf16.msra.mxu0 0
    %7021 = vmatprep.mubr.bf16.mxu0 0
    %7022 = vmatmul.mubr.bf16.gmra.mxu0 %v6698
    %v7023 = vpop.f32.mrf.mxu0
    %v7024 = vadd.f32 0.0, %v7023
    %v7025 = vpop.f32.mrf.mxu0
    %v7026 = vpop.f32.mrf.mxu0
    %v7027 = vpop.f32.mrf.mxu0
    %7028 = vdwg.mxu0
    %v7029 = vld [vmem:[#allocation3] sm:$0xff]
    %v7030 = vld [vmem:[#allocation3 + $0x8] sm:$0xff]
    %v7033 = vunpack.c.l.s4 1966171168
    %v7034 = vunpack.c.0.s8 %v7033
    %v7035 = vlaneseq
    %v7036 = vshrl.u32 %v7035, 7
    %v7037 = vsub.s32 %v7034, %v7036
    %v7038 = vrot.slane %v6942, %v7037
    %v7039 = vcombine.high %v7038, %v7038
    %v7041 = vunpack.c.l.s4 1966171168
    %v7042 = vunpack.c.0.s8 %v7041
    %v7043 = vlaneseq
    %v7044 = vshrl.u32 %v7043, 7
    %v7045 = vsub.s32 %v7042, %v7044
    %v7046 = vrot.slane %v7038, %v7045
    %v7048 = vunpack.c.l.s4 1966171168
    %v7049 = vunpack.c.0.s8 %v7048
    %v7050 = vlaneseq
    %v7051 = vshrl.u32 %v7050, 7
    %v7052 = vsub.s32 %v7049, %v7051
    %v7053 = vrot.slane %v7039, %v7052
    %v7054 = vlaneseq
    %v7055 = vshrl.u32 %v7054, 7
    %v7056 = vsub.s32 0, %v7055
    %v7057 = vrot.slane %v7046, %v7056
    %v7058 = vlaneseq
    %v7059 = vshrl.u32 %v7058, 7
    %v7060 = vsub.s32 0, %v7059
    %v7061 = vrot.slane %v7053, %v7060
    %v7064 = vadd.f32 %v7029, %v7057
    %v7065 = vadd.f32 %v7030, %v7061
    %v7066 = vtanh.pop %v7064
    %v7067 = vtanh.pop %v7065
    %v7068 = vmul.f32 %v7066, %v1137
    %v7069 = vmul.f32 %v7067, %v1137
    %7070 = vadd.xlane.f32.xlu0 %v7068
    %v7071 = vpop.xlane.xlu0 %7070
    %7072 = vadd.xlane.f32.xlu0 %v7069
    %v7073 = vpop.xlane.xlu0 %7072
    %v7074 = vrot.slane %v7071, 4
    %v7075 = vmax.f32 %v7071, %v7074
    %v7076 = vrot.slane %v7075, 2
    %v7077 = vmax.f32 %v7075, %v7076
    %v7078 = vrot.slane %v7077, 1
    %v7079 = vmax.f32 %v7077, %v7078
    %v7080 = vrot.slane %v7073, 4
    %v7081 = vmax.f32 %v7073, %v7080
    %v7082 = vrot.slane %v7081, 2
    %v7083 = vmax.f32 %v7081, %v7082
    %v7084 = vrot.slane %v7083, 1
    %v7085 = vmax.f32 %v7083, %v7084
    %v7086 = vsub.f32 %v7071, %v7079
    %v7087 = vsub.f32 %v7073, %v7085
    %v7088 = vmul.f32 %v7086, 1.442695
    %v7089 = vpow.pop %v7088
    %v7090 = vmul.f32 %v7087, 1.442695
    %v7091 = vpow.pop %v7090
    %v7092 = vrot.slane %v7089, 4
    %v7093 = vadd.f32 %v7089, %v7092
    %v7094 = vrot.slane %v7093, 2
    %v7095 = vadd.f32 %v7093, %v7094
    %v7096 = vrot.slane %v7095, 1
    %v7097 = vadd.f32 %v7095, %v7096
    %v7098 = vrot.slane %v7091, 4
    %v7099 = vadd.f32 %v7091, %v7098
    %v7100 = vrot.slane %v7099, 2
    %v7101 = vadd.f32 %v7099, %v7100
    %v7102 = vrot.slane %v7101, 1
    %v7103 = vadd.f32 %v7101, %v7102
    %v7104 = vrcp.pop %v7097
    %v7105 = vrcp.pop %v7103
    %v7106 = vmul.f32 %v7089, %v7104
    %v7107 = vmul.f32 %v7091, %v7105
    %v7108 = vld [vmem:[#allocation2] sm:$0xff]
    %v7109 = vld [vmem:[#allocation2 + $0x8] sm:$0xff]
    %v7110 = vmul.f32 %v7106, %v7108
    %v7111 = vmul.f32 %v7107, %v7109
    %v7112 = vrot.slane %v7110, 4
    %v7113 = vadd.f32 %v7110, %v7112
    %v7114 = vrot.slane %v7113, 2
    %v7115 = vadd.f32 %v7113, %v7114
    %v7116 = vrot.slane %v7115, 1
    %v7117 = vadd.f32 %v7115, %v7116
    %v7118 = vrot.slane %v7111, 4
    %v7119 = vadd.f32 %v7111, %v7118
    %v7120 = vrot.slane %v7119, 2
    %v7121 = vadd.f32 %v7119, %v7120
    %v7122 = vrot.slane %v7121, 1
    %v7123 = vadd.f32 %v7121, %v7122
    %v7124 = vld [vmem:[#allocation15] sm:$0xff]
    %v7125 = vld [vmem:[#allocation15 + $0x8] sm:$0xff]
    %v7126 = vld [vmem:[#allocation15 + $0x10] sm:$0xff]
    %v7127 = vld [vmem:[#allocation15 + $0x18] sm:$0xff]
    %v7128 = vld [vmem:[#allocation15 + $0x20] sm:$0xff]
    %v7129 = vld [vmem:[#allocation15 + $0x28] sm:$0xff]
    %v7130 = vld [vmem:[#allocation15 + $0x30] sm:$0xff]
    %v7131 = vld [vmem:[#allocation15 + $0x38] sm:$0xff]
    %v7132 = vld [vmem:[#allocation15 + $0x40] sm:$0xff]
    %v7133 = vld [vmem:[#allocation15 + $0x48] sm:$0xff]
    %v7134 = vld [vmem:[#allocation15 + $0x50] sm:$0xff]
    %v7135 = vld [vmem:[#allocation15 + $0x58] sm:$0xff]
    %v7136 = vld [vmem:[#allocation15 + $0x60] sm:$0xff]
    %v7137 = vld [vmem:[#allocation15 + $0x68] sm:$0xff]
    %v7138 = vld [vmem:[#allocation15 + $0x70] sm:$0xff]
    %v7139 = vld [vmem:[#allocation15 + $0x78] sm:$0xff]
    %v7140 = vld [vmem:[#allocation15 + $0x80] sm:$0xff]
    %v7141 = vld [vmem:[#allocation15 + $0x88] sm:$0xff]
    %v7142 = vld [vmem:[#allocation15 + $0x90] sm:$0xff]
    %v7143 = vld [vmem:[#allocation15 + $0x98] sm:$0xff]
    %v7144 = vld [vmem:[#allocation15 + $0xa0] sm:$0xff]
    %v7145 = vld [vmem:[#allocation15 + $0xa8] sm:$0xff]
    %v7146 = vld [vmem:[#allocation15 + $0xb0] sm:$0xff]
    %v7147 = vld [vmem:[#allocation15 + $0xb8] sm:$0xff]
    %v7148 = vld [vmem:[#allocation15 + $0xc0] sm:$0xff]
    %v7149 = vld [vmem:[#allocation15 + $0xc8] sm:$0xff]
    %v7150 = vld [vmem:[#allocation15 + $0xd0] sm:$0xff]
    %v7151 = vld [vmem:[#allocation15 + $0xd8] sm:$0xff]
    %v7152 = vld [vmem:[#allocation15 + $0xe0] sm:$0xff]
    %v7153 = vld [vmem:[#allocation15 + $0xe8] sm:$0xff]
    %v7154 = vld [vmem:[#allocation15 + $0xf0] sm:$0xff]
    %v7155 = vld [vmem:[#allocation15 + $0xf8] sm:$0xff]
    %v7156 = vpack.c.bf16 %v7117, %v7117
    %v7157 = vpack.c.bf16 %v7123, %v7123
    %v7160 = vunpack.c.l.b16 %v7156
    %v7161 = vunpack.c.l.b16 %v7157
    %v7162 = vsel %vm1233, %v7161, %v7160
    %v7163 = vpack.c.b16 %v7162, %v7162
    %v7197 = vunpack.c.l.b16 %v7124
    %v7198 = vunpack.c.h.b16 %v7124
    %v7199 = vunpack.c.l.b16 %v7125
    %v7200 = vunpack.c.h.b16 %v7125
    %v7201 = vunpack.c.l.b16 %v7126
    %v7202 = vunpack.c.h.b16 %v7126
    %v7203 = vunpack.c.l.b16 %v7127
    %v7204 = vunpack.c.h.b16 %v7127
    %v7205 = vunpack.c.l.b16 %v7128
    %v7206 = vunpack.c.h.b16 %v7128
    %v7207 = vunpack.c.l.b16 %v7129
    %v7208 = vunpack.c.h.b16 %v7129
    %v7209 = vunpack.c.l.b16 %v7130
    %v7210 = vunpack.c.h.b16 %v7130
    %v7211 = vunpack.c.l.b16 %v7131
    %v7212 = vunpack.c.h.b16 %v7131
    %v7213 = vunpack.c.l.b16 %v7132
    %v7214 = vunpack.c.h.b16 %v7132
    %v7215 = vunpack.c.l.b16 %v7133
    %v7216 = vunpack.c.h.b16 %v7133
    %v7217 = vunpack.c.l.b16 %v7134
    %v7218 = vunpack.c.h.b16 %v7134
    %v7219 = vunpack.c.l.b16 %v7135
    %v7220 = vunpack.c.h.b16 %v7135
    %v7221 = vunpack.c.l.b16 %v7136
    %v7222 = vunpack.c.h.b16 %v7136
    %v7223 = vunpack.c.l.b16 %v7137
    %v7224 = vunpack.c.h.b16 %v7137
    %v7225 = vunpack.c.l.b16 %v7138
    %v7226 = vunpack.c.h.b16 %v7138
    %v7227 = vunpack.c.l.b16 %v7139
    %v7228 = vunpack.c.h.b16 %v7139
    %v7229 = vunpack.c.l.b16 %v7140
    %v7230 = vunpack.c.h.b16 %v7140
    %v7231 = vunpack.c.l.b16 %v7141
    %v7232 = vunpack.c.h.b16 %v7141
    %v7233 = vunpack.c.l.b16 %v7142
    %v7234 = vunpack.c.h.b16 %v7142
    %v7235 = vunpack.c.l.b16 %v7143
    %v7236 = vunpack.c.h.b16 %v7143
    %v7237 = vunpack.c.l.b16 %v7144
    %v7238 = vunpack.c.h.b16 %v7144
    %v7239 = vunpack.c.l.b16 %v7145
    %v7240 = vunpack.c.h.b16 %v7145
    %v7241 = vunpack.c.l.b16 %v7146
    %v7242 = vunpack.c.h.b16 %v7146
    %v7243 = vunpack.c.l.b16 %v7147
    %v7244 = vunpack.c.h.b16 %v7147
    %v7245 = vunpack.c.l.b16 %v7148
    %v7246 = vunpack.c.h.b16 %v7148
    %v7247 = vunpack.c.l.b16 %v7149
    %v7248 = vunpack.c.h.b16 %v7149
    %v7249 = vunpack.c.l.b16 %v7150
    %v7250 = vunpack.c.h.b16 %v7150
    %v7251 = vunpack.c.l.b16 %v7151
    %v7252 = vunpack.c.h.b16 %v7151
    %v7253 = vunpack.c.l.b16 %v7152
    %v7254 = vunpack.c.h.b16 %v7152
    %v7255 = vunpack.c.l.b16 %v7153
    %v7256 = vunpack.c.h.b16 %v7153
    %v7257 = vunpack.c.l.b16 %v7154
    %v7258 = vunpack.c.h.b16 %v7154
    %v7259 = vunpack.c.l.b16 %v7155
    %v7260 = vunpack.c.h.b16 %v7155
    %v7261 = vpack.c.b16 %v7201, %v7197
    %v7262 = vpack.c.b16 %v7202, %v7198
    %v7263 = vpack.c.b16 %v7203, %v7199
    %v7264 = vpack.c.b16 %v7204, %v7200
    %v7265 = vpack.c.b16 %v7209, %v7205
    %v7266 = vpack.c.b16 %v7210, %v7206
    %v7267 = vpack.c.b16 %v7211, %v7207
    %v7268 = vpack.c.b16 %v7212, %v7208
    %v7269 = vpack.c.b16 %v7217, %v7213
    %v7270 = vpack.c.b16 %v7218, %v7214
    %v7271 = vpack.c.b16 %v7219, %v7215
    %v7272 = vpack.c.b16 %v7220, %v7216
    %v7273 = vpack.c.b16 %v7225, %v7221
    %v7274 = vpack.c.b16 %v7226, %v7222
    %v7275 = vpack.c.b16 %v7227, %v7223
    %v7276 = vpack.c.b16 %v7228, %v7224
    %v7277 = vpack.c.b16 %v7233, %v7229
    %v7278 = vpack.c.b16 %v7234, %v7230
    %v7279 = vpack.c.b16 %v7235, %v7231
    %v7280 = vpack.c.b16 %v7236, %v7232
    %v7281 = vpack.c.b16 %v7241, %v7237
    %v7282 = vpack.c.b16 %v7242, %v7238
    %v7283 = vpack.c.b16 %v7243, %v7239
    %v7284 = vpack.c.b16 %v7244, %v7240
    %v7285 = vpack.c.b16 %v7249, %v7245
    %v7286 = vpack.c.b16 %v7250, %v7246
    %v7287 = vpack.c.b16 %v7251, %v7247
    %v7288 = vpack.c.b16 %v7252, %v7248
    %v7289 = vpack.c.b16 %v7257, %v7253
    %v7290 = vpack.c.b16 %v7258, %v7254
    %v7291 = vpack.c.b16 %v7259, %v7255
    %v7292 = vpack.c.b16 %v7260, %v7256
    %7325 = vmatprep.subr.bf16.mxu0 %v7290
    %7326 = vmatpush1.bf16.msra.mxu0 %v7289
    %7327 = vmatprep.subr.bf16.mxu0 %v7286
    %7328 = vmatpush1.bf16.msra.mxu0 %v7285
    %7329 = vmatprep.subr.bf16.mxu0 %v7282
    %7330 = vmatpush1.bf16.msra.mxu0 %v7281
    %7331 = vmatprep.subr.bf16.mxu0 %v7278
    %7332 = vmatpush1.bf16.msra.mxu0 %v7277
    %7333 = vmatprep.subr.bf16.mxu0 %v7274
    %7334 = vmatpush1.bf16.msra.mxu0 %v7273
    %7335 = vmatprep.subr.bf16.mxu0 %v7270
    %7336 = vmatpush1.bf16.msra.mxu0 %v7269
    %7337 = vmatprep.subr.bf16.mxu0 %v7266
    %7338 = vmatpush1.bf16.msra.mxu0 %v7265
    %7339 = vmatprep.subr.bf16.mxu0 %v7262
    %7340 = vmatpush1.bf16.msra.mxu0 %v7261
    %7341 = vmatprep.subr.bf16.mxu0 0
    %7342 = vmatpush2.bf16.msra.mxu0 0
    %7343 = vmatprep.subr.bf16.mxu0 0
    %7344 = vmatpush2.bf16.msra.mxu0 0
    %7345 = vmatprep.subr.bf16.mxu0 0
    %7346 = vmatpush2.bf16.msra.mxu0 0
    %7347 = vmatprep.subr.bf16.mxu0 0
    %7348 = vmatpush2.bf16.msra.mxu0 0
    %7349 = vmatprep.subr.bf16.mxu0 0
    %7350 = vmatpush2.bf16.msra.mxu0 0
    %7351 = vmatprep.subr.bf16.mxu0 0
    %7352 = vmatpush2.bf16.msra.mxu0 0
    %7353 = vmatprep.subr.bf16.mxu0 0
    %7354 = vmatpush2.bf16.msra.mxu0 0
    %7355 = vmatprep.subr.bf16.mxu0 0
    %7356 = vmatpush2.bf16.msra.mxu0 0
    %7357 = vmatprep.mubr.bf16.mxu0 0
    %7358 = vmatmul.mubr.bf16.gmra.mxu0 %v7163
    %v7359 = vpop.f32.mrf.mxu0
    %v7360 = vadd.f32 %v6944, %v7359
    %v7361 = vpop.f32.mrf.mxu0
    %v7362 = vadd.f32 %v6983, %v7361
    %v7363 = vpop.f32.mrf.mxu0
    %v7364 = vpop.f32.mrf.mxu0
    %7365 = vdwg.mxu0
    %7366 = vmatprep.subr.bf16.mxu0 %v7292
    %7367 = vmatpush1.bf16.msra.mxu0 %v7291
    %7368 = vmatprep.subr.bf16.mxu0 %v7288
    %7369 = vmatpush1.bf16.msra.mxu0 %v7287
    %7370 = vmatprep.subr.bf16.mxu0 %v7284
    %7371 = vmatpush1.bf16.msra.mxu0 %v7283
    %7372 = vmatprep.subr.bf16.mxu0 %v7280
    %7373 = vmatpush1.bf16.msra.mxu0 %v7279
    %7374 = vmatprep.subr.bf16.mxu0 %v7276
    %7375 = vmatpush1.bf16.msra.mxu0 %v7275
    %7376 = vmatprep.subr.bf16.mxu0 %v7272
    %7377 = vmatpush1.bf16.msra.mxu0 %v7271
    %7378 = vmatprep.subr.bf16.mxu0 %v7268
    %7379 = vmatpush1.bf16.msra.mxu0 %v7267
    %7380 = vmatprep.subr.bf16.mxu0 %v7264
    %7381 = vmatpush1.bf16.msra.mxu0 %v7263
    %7382 = vmatprep.subr.bf16.mxu0 0
    %7383 = vmatpush2.bf16.msra.mxu0 0
    %7384 = vmatprep.subr.bf16.mxu0 0
    %7385 = vmatpush2.bf16.msra.mxu0 0
    %7386 = vmatprep.subr.bf16.mxu0 0
    %7387 = vmatpush2.bf16.msra.mxu0 0
    %7388 = vmatprep.subr.bf16.mxu0 0
    %7389 = vmatpush2.bf16.msra.mxu0 0
    %7390 = vmatprep.subr.bf16.mxu0 0
    %7391 = vmatpush2.bf16.msra.mxu0 0
    %7392 = vmatprep.subr.bf16.mxu0 0
    %7393 = vmatpush2.bf16.msra.mxu0 0
    %7394 = vmatprep.subr.bf16.mxu0 0
    %7395 = vmatpush2.bf16.msra.mxu0 0
    %7396 = vmatprep.subr.bf16.mxu0 0
    %7397 = vmatpush2.bf16.msra.mxu0 0
    %7398 = vmatprep.mubr.bf16.mxu0 0
    %7399 = vmatmul.mubr.bf16.gmra.mxu0 %v7163
    %v7400 = vpop.f32.mrf.mxu0
    %v7401 = vadd.f32 %v6985, %v7400
    %v7402 = vpop.f32.mrf.mxu0
    %v7403 = vadd.f32 %v7024, %v7402
    %v7404 = vpop.f32.mrf.mxu0
    %v7405 = vpop.f32.mrf.mxu0
    %7406 = vdwg.mxu0
    %v7407 = vld [vmem:[#allocation4] sm:$0x88]
    %v7408 = vld [vmem:[#allocation4 + $0x8] sm:$0x88]
    %v7409 = vld [vmem:[#allocation4 + $0x10] sm:$0x88]
    %v7410 = vld [vmem:[#allocation4 + $0x18] sm:$0x88]
    %v7411 = vunpack.c.l.bf16 %v7407
    %v7412 = vunpack.c.h.bf16 %v7407
    %v7413 = vunpack.c.l.bf16 %v7408
    %v7414 = vunpack.c.h.bf16 %v7408
    %v7415 = vunpack.c.l.bf16 %v7409
    %v7416 = vunpack.c.h.bf16 %v7409
    %v7417 = vunpack.c.l.bf16 %v7410
    %v7418 = vunpack.c.h.bf16 %v7410
    %v7427 = vrot.slane %v7411, 7
    %v7428 = vrot.slane %v7415, 6
    %v7429 = vsel %vm1233, %v7428, %v7427
    %v7430 = vrot.slane %v7412, 7
    %v7431 = vrot.slane %v7416, 6
    %v7432 = vsel %vm1233, %v7431, %v7430
    %v7433 = vrot.slane %v7413, 7
    %v7434 = vrot.slane %v7417, 6
    %v7435 = vsel %vm1233, %v7434, %v7433
    %v7436 = vrot.slane %v7414, 7
    %v7437 = vrot.slane %v7418, 6
    %v7438 = vsel %vm1233, %v7437, %v7436
    %v7443 = vadd.f32 %v7360, %v7429
    %v7444 = vadd.f32 %v7362, %v7432
    %v7445 = vadd.f32 %v7401, %v7435
    %v7446 = vadd.f32 %v7403, %v7438
    %v7447 = vxor.u32 %v7443, 2147483648
    %v7448 = vmul.f32 %v7447, 1.442695
    %v7449 = vpow.pop %v7448
    %v7450 = vadd.f32 %v7449, 1.0
    %v7451 = vrcp.pop %v7450
    %v7452 = vmul.f32 1.0, %v7451
    %v7453 = vxor.u32 %v7444, 2147483648
    %v7454 = vmul.f32 %v7453, 1.442695
    %v7455 = vpow.pop %v7454
    %v7456 = vadd.f32 %v7455, 1.0
    %v7457 = vrcp.pop %v7456
    %v7458 = vmul.f32 1.0, %v7457
    %v7459 = vtanh.pop %v7445
    %v7460 = vxor.u32 %v7446, 2147483648
    %v7461 = vmul.f32 %v7460, 1.442695
    %v7462 = vpow.pop %v7461
    %v7463 = vadd.f32 %v7462, 1.0
    %v7464 = vrcp.pop %v7463
    %v7465 = vmul.f32 1.0, %v7464
    %v7466 = vmul.f32 %v7458, %v6620
    %v7467 = vmul.f32 %v7452, %v7459
    %v7468 = vadd.f32 %v7466, %v7467
    %v7469 = vtanh.pop %v7468
    %v7470 = vmul.f32 %v7465, %v7469
    %v7473 = vunpack.c.l.s4 1966171168
    %v7474 = vunpack.c.0.s8 %v7473
    %v7475 = vlaneseq
    %v7476 = vshrl.u32 %v7475, 7
    %v7477 = vsub.s32 %v7474, %v7476
    %v7478 = vrot.slane %v7470, %v7477
    %v7479 = vcombine.high %v7478, %v7478
    %v7481 = vunpack.c.l.s4 1966171168
    %v7482 = vunpack.c.0.s8 %v7481
    %v7483 = vlaneseq
    %v7484 = vshrl.u32 %v7483, 7
    %v7485 = vsub.s32 %v7482, %v7484
    %v7486 = vrot.slane %v7478, %v7485
    %v7488 = vunpack.c.l.s4 1966171168
    %v7489 = vunpack.c.0.s8 %v7488
    %v7490 = vlaneseq
    %v7491 = vshrl.u32 %v7490, 7
    %v7492 = vsub.s32 %v7489, %v7491
    %v7493 = vrot.slane %v7479, %v7492
    %7496 = vst [vmem:[#allocation5 + $0x7] sm:$0x1] %v7486
    %7497 = vst [vmem:[#allocation5 + $0xf] sm:$0x1] %v7493
    %v7498 = vld [vmem:[#allocation5] sm:$0xff]
    %v7499 = vld [vmem:[#allocation5 + $0x8] sm:$0xff]
    %v7500 = vld [vmem:[#allocation18] sm:$0xf]
    %v7501 = vld [vmem:[#allocation18 + $0x4] sm:$0xf]
    %v7502 = vld [vmem:[#allocation18 + $0x8] sm:$0xf]
    %v7503 = vld [vmem:[#allocation18 + $0xc] sm:$0xf]
    %v7504 = vld [vmem:[#allocation18 + $0x10] sm:$0xf]
    %v7505 = vld [vmem:[#allocation18 + $0x14] sm:$0xf]
    %v7506 = vld [vmem:[#allocation18 + $0x18] sm:$0xf]
    %v7507 = vld [vmem:[#allocation18 + $0x1c] sm:$0xf]
    %v7508 = vld [vmem:[#allocation18 + $0x20] sm:$0xf]
    %v7509 = vld [vmem:[#allocation18 + $0x24] sm:$0xf]
    %v7510 = vld [vmem:[#allocation18 + $0x28] sm:$0xf]
    %v7511 = vld [vmem:[#allocation18 + $0x2c] sm:$0xf]
    %v7512 = vld [vmem:[#allocation18 + $0x30] sm:$0xf]
    %v7513 = vld [vmem:[#allocation18 + $0x34] sm:$0xf]
    %v7514 = vld [vmem:[#allocation18 + $0x38] sm:$0xf]
    %v7515 = vld [vmem:[#allocation18 + $0x3c] sm:$0xf]
    %v7516 = vpack.c.bf16 %v7499, %v7498
    %v7517 = vld [vmem:[%s12] sm:$0x1]
    %v7519 = vlaneseq
    %v7520 = vshrl.u32 %v7519, 7
    %v7521 = vsub.s32 0, %v7520
    %v7522 = vrot.slane %v7517, %v7521
    %v7540 = vunpack.c.l.b16 %v7500
    %v7541 = vunpack.c.l.b16 %v7501
    %v7542 = vunpack.c.l.b16 %v7502
    %v7543 = vunpack.c.l.b16 %v7503
    %v7544 = vunpack.c.l.b16 %v7504
    %v7545 = vunpack.c.l.b16 %v7505
    %v7546 = vunpack.c.l.b16 %v7506
    %v7547 = vunpack.c.l.b16 %v7507
    %v7548 = vunpack.c.l.b16 %v7508
    %v7549 = vunpack.c.l.b16 %v7509
    %v7550 = vunpack.c.l.b16 %v7510
    %v7551 = vunpack.c.l.b16 %v7511
    %v7552 = vunpack.c.l.b16 %v7512
    %v7553 = vunpack.c.l.b16 %v7513
    %v7554 = vunpack.c.l.b16 %v7514
    %v7555 = vunpack.c.l.b16 %v7515
    %v7556 = vpack.c.b16 %v7541, %v7540
    %v7557 = vpack.c.b16 %v7543, %v7542
    %v7558 = vpack.c.b16 %v7545, %v7544
    %v7559 = vpack.c.b16 %v7547, %v7546
    %v7560 = vpack.c.b16 %v7549, %v7548
    %v7561 = vpack.c.b16 %v7551, %v7550
    %v7562 = vpack.c.b16 %v7553, %v7552
    %v7563 = vpack.c.b16 %v7555, %v7554
    %7572 = vmatprep.subr.bf16.mxu0 0
    %7573 = vmatpush1.bf16.msra.mxu0 %v7563
    %7574 = vmatprep.subr.bf16.mxu0 0
    %7575 = vmatpush1.bf16.msra.mxu0 %v7562
    %7576 = vmatprep.subr.bf16.mxu0 0
    %7577 = vmatpush1.bf16.msra.mxu0 %v7561
    %7578 = vmatprep.subr.bf16.mxu0 0
    %7579 = vmatpush1.bf16.msra.mxu0 %v7560
    %7580 = vmatprep.subr.bf16.mxu0 0
    %7581 = vmatpush1.bf16.msra.mxu0 %v7559
    %7582 = vmatprep.subr.bf16.mxu0 0
    %7583 = vmatpush1.bf16.msra.mxu0 %v7558
    %7584 = vmatprep.subr.bf16.mxu0 0
    %7585 = vmatpush1.bf16.msra.mxu0 %v7557
    %7586 = vmatprep.subr.bf16.mxu0 0
    %7587 = vmatpush1.bf16.msra.mxu0 %v7556
    %7588 = vmatprep.subr.bf16.mxu0 0
    %7589 = vmatpush2.bf16.msra.mxu0 0
    %7590 = vmatprep.subr.bf16.mxu0 0
    %7591 = vmatpush2.bf16.msra.mxu0 0
    %7592 = vmatprep.subr.bf16.mxu0 0
    %7593 = vmatpush2.bf16.msra.mxu0 0
    %7594 = vmatprep.subr.bf16.mxu0 0
    %7595 = vmatpush2.bf16.msra.mxu0 0
    %7596 = vmatprep.subr.bf16.mxu0 0
    %7597 = vmatpush2.bf16.msra.mxu0 0
    %7598 = vmatprep.subr.bf16.mxu0 0
    %7599 = vmatpush2.bf16.msra.mxu0 0
    %7600 = vmatprep.subr.bf16.mxu0 0
    %7601 = vmatpush2.bf16.msra.mxu0 0
    %7602 = vmatprep.subr.bf16.mxu0 0
    %7603 = vmatpush2.bf16.msra.mxu0 0
    %7604 = vmatprep.mubr.bf16.mxu0 0
    %7605 = vmatmul.mubr.bf16.gmra.mxu0 %v7516
    %v7606 = vpop.f32.mrf.mxu0
    %v7607 = vadd.f32 %v7522, %v7606
    %v7608 = vpop.f32.mrf.mxu0
    %v7609 = vpop.f32.mrf.mxu0
    %v7610 = vadd.f32 %v7522, %v7609
    %v7611 = vpop.f32.mrf.mxu0
    %7612 = vdwg.mxu0
    %7613 = vst [vmem:[#allocation20] sm:$0xff] %v7607
    %7614 = vst [vmem:[#allocation20 + $0x8] sm:$0xff] %v7610
    // Predicated region
    $region86: #{tpu_custom_call.1} parent=1 // pred_check
      _
    $region87: #{tpu_custom_call.1} parent=1 // pred_check_branch
      %7616 = sbr.rel (0) target = $region89
    $region88: #{tpu_custom_call.1} parent=1 // pred_region
      %s7618 = ssub.s32 256, 256
      %7619 = vsyncadd [#allocation8], %s7618
      %s7620 = sshll.u32 [#allocation20], 4
      %s7621 = int_to_ptr.vmem [resolvable:$true] %s7620
      %7626 = dma.vmem_to_hbm [thread:$0]  %s7621, 256, %s13, [#allocation8], 128, 128, 8
    $region89: #{tpu_custom_call.1} parent=1 // pred_fallthru
      _
    // Predicated region
    $region90: #{tpu_custom_call.1} parent=1 // pred_check
      _
    $region91: #{tpu_custom_call.1} parent=1 // pred_check_branch
      %7628 = sbr.rel (0) target = $region93
    $region92: #{tpu_custom_call.1} parent=1 // pred_region
      %7629 = dma.done [#allocation8], 256
    $region93: #{tpu_custom_call.1} parent=1 // pred_fallthru
      _
    %7630 = vsyncpa [#allocation7], 1
    %7631 = vsyncpa [#allocation10], 1
    %7632 = vsyncpa [#allocation13], 1
    %7633 = vsyncpa [#allocation16], 1
    %7634 = vsyncpa [#allocation19], 1
    %7635 = vsyncpa [#allocation8], 1

</llo_original>
